<compile_context>
chip_gen: v7x
topology: tpu7x:2x2x1
jax: 0.10.0
libtpu: 0.0.40
codegen_flags: <defaults>
</compile_context>

<pallas_src>
import jax
import jax.numpy as jnp
import numpy as np
from jax import lax
from jax.experimental import pallas as pl
from jax.experimental.pallas import tpu as pltpu

# ---- config (small, consistent with the module) ----
STATE = 16        # state size
ACTION = 4        # action space
BELIEF = 32       # belief size
EMBED = 16        # embedding size
HIDDEN = 32       # hidden size
MIN_STD = 0.1     # minimum standard deviation
T = 8             # number of actions (sequence length)
B = 2             # batch (raise to >=8 for throughput; 2 keeps the test small)

# packed-input lane offsets: [obs | noise_prior | noise_post | action | nonterm]
_OB0, _OB1 = 0, EMBED                       # 0:16
_NP0, _NP1 = _OB1, _OB1 + STATE             # 16:32
_NQ0, _NQ1 = _NP1, _NP1 + STATE             # 32:48
_AC0, _AC1 = _NQ1, _NQ1 + ACTION            # 48:52
_NT0, _NT1 = _AC1, _AC1 + 1                 # 52:53
SEQ_F = _NT1                                # 53

# packed-output lane layout (exactly 128 lanes -> lane-dense writeback)
OUT_W = BELIEF + 6 * STATE                  # 128

# ---- weight slab layout: one (W_ROWS, 128) f32 tensor, single DMA ----
_R_WIH = 0        # (32, 96)  GRU input->hidden, lane order [r|z|n]
_R_WHH = 32       # (32, 96)  GRU hidden->hidden
_R_WBPRE = 64     # (32, 32)  embed_belief_pre
_R_WBPB = 96      # (32, 32)  embed_belief_post (belief columns)
_R_WSP = 128      # (32, 32)  state_pre, lane order [mean|std]
_R_WSQ = 160      # (32, 32)  state_post, lane order [mean|std]
_R_WES = 192      # (16, 32)  embed_state_act (state columns)
_R_WBPO = 208     # (16, 32)  embed_belief_post (observation columns)
_R_WEA = 224      # (4, 32)   embed_state_act (action columns), rows padded to 8
_R_BIAS = 232     # 7 bias rows (see pack_kernel_params)
W_ROWS = 240


def transition_kernel(
    seq_ref,            # (T, B, 53) packed time-varying inputs
    prev_state_ref,     # (B, STATE)
    prev_belief_ref,    # (B, BELIEF)
    w_ref,              # (W_ROWS, 128) packed weights / biases
    out_ref,            # (T, B, 128) packed outputs
    act_sc,             # (T, B, BELIEF)  precomputed action projection
    obs_sc,             # (T, B, HIDDEN)  precomputed observation projection
    bel_sc,             # (T, B, BELIEF)  per-step beliefs
    post_sc,            # (T, B, 3*STATE) per-step [post_s | post_m | post_sd]
):
    Tn = seq_ref.shape[0]
    H, S, Hd = BELIEF, STATE, HIDDEN

    def mm(a, b):
        return jnp.dot(a, b, preferred_element_type=jnp.float32)

    def sigmoid(x):
        # sigmoid(x) == 0.5*tanh(x/2) + 0.5 : one EUP op, no exp + divide.
        return 0.5 * jnp.tanh(0.5 * x) + 0.5

    def softplus(x):
        # numerically stable: max(x,0) + log1p(exp(-|x|))
        return jnp.maximum(x, 0.0) + jnp.log1p(jnp.exp(-jnp.abs(x)))

    # ---- recurrence-critical weights only: hoisted into vregs once (~21 vregs) ----
    Wes = w_ref[_R_WES:_R_WES + S, 0:H]
    Wih = w_ref[_R_WIH:_R_WIH + H, 0:3 * H]
    Whh = w_ref[_R_WHH:_R_WHH + H, 0:3 * H]
    Wbpb = w_ref[_R_WBPB:_R_WBPB + H, 0:Hd]
    Wsq = w_ref[_R_WSQ:_R_WSQ + Hd, 0:2 * S]
    Bg = w_ref[_R_BIAS + 1:_R_BIAS + 2, 0:3 * H]
    Bhn = w_ref[_R_BIAS + 2:_R_BIAS + 3, 0:H]
    Bsq = w_ref[_R_BIAS + 6:_R_BIAS + 7, 0:2 * S]

    # ---- hoisted non-recurrent projections (never touch the carry) ----
    # Static trace-time loop: 2*T independent tiny matmuls, MXU-pipelined,
    # entirely off the serial dependency chain.
    Wea = w_ref[_R_WEA:_R_WEA + ACTION, 0:H]
    Besa = w_ref[_R_BIAS + 0:_R_BIAS + 1, 0:H]
    Wbpo = w_ref[_R_WBPO:_R_WBPO + EMBED, 0:Hd]
    Bbp = w_ref[_R_BIAS + 4:_R_BIAS + 5, 0:Hd]
    for t in range(Tn):
        s = seq_ref[t]                        # (B, 53)
        act_sc[t] = mm(s[:, _AC0:_AC1], Wea) + Besa
        obs_sc[t] = mm(s[:, _OB0:_OB1], Wbpo) + Bbp

    # ---- serial recurrence: only carry-dependent work (5 matmuls / step) ----
    def step(t, carry):
        belief, state = carry                 # (B, BELIEF), (B, STATE)
        s = seq_ref[t]
        npost = s[:, _NQ0:_NQ1]
        nterm = s[:, _NT0:_NT1]

        # state = posterior_states[t] * nonterminals[t]  (observations provided)
        st = state * nterm

        # hidden = relu(embed_state_act(cat([state, action]))) -- action half hoisted
        x = jnp.maximum(mm(st, Wes) + act_sc[t], 0.0)

        # GRUCell(x, belief) -- PyTorch gate order (r, z, n), fused matmuls
        gi = mm(x, Wih) + Bg                  # (B, 3H) lanes [r|z|n]
        gh = mm(belief, Whh)                  # (B, 3H)
        r = sigmoid(gi[:, :H] + gh[:, :H])
        z = sigmoid(gi[:, H:2 * H] + gh[:, H:2 * H])
        n = jnp.tanh(gi[:, 2 * H:] + r * (gh[:, 2 * H:] + Bhn))
        belief = (1.0 - z) * n + z * belief

        # posterior head (observation half hoisted; fused mean|std)
        h_post = jnp.maximum(mm(belief, Wbpb) + obs_sc[t], 0.0)
        post = mm(h_post, Wsq) + Bsq          # (B, 2S) lanes [mean|std]
        post_m = post[:, :S]
        post_sd = softplus(post[:, S:]) + MIN_STD
        post_s = post_m + post_sd * npost

        # small off-chain scratch stores (32 / 48 lanes)
        bel_sc[t] = belief
        post_sc[t] = jnp.concatenate([post_s, post_m, post_sd], axis=-1)
        return belief, post_s

    lax.fori_loop(0, Tn, step,
                  (prev_belief_ref[...], prev_state_ref[...]),
                  unroll=True)

    # ---- prior head hoisted out of the recurrence (never feeds the carry) ----
    Wbpre = w_ref[_R_WBPRE:_R_WBPRE + H, 0:Hd]
    Bbpre = w_ref[_R_BIAS + 3:_R_BIAS + 4, 0:Hd]
    Wsp = w_ref[_R_WSP:_R_WSP + Hd, 0:2 * S]
    Bsp = w_ref[_R_BIAS + 5:_R_BIAS + 6, 0:2 * S]
    for t in range(Tn):                       # static loop: per-t work is independent
        belief = bel_sc[t]
        npri = seq_ref[t][:, _NP0:_NP1]
        h_pre = jnp.maximum(mm(belief, Wbpre) + Bbpre, 0.0)
        pre = mm(h_pre, Wsp) + Bsp            # (B, 2S) lanes [mean|std]
        pri_m = pre[:, :S]
        pri_sd = softplus(pre[:, S:]) + MIN_STD
        pri_s = pri_m + pri_sd * npri
        # lane-dense 128-wide output row assembled off the critical chain
        out_ref[t] = jnp.concatenate(
            [belief, pri_s, pri_m, pri_sd, post_sc[t]], axis=-1)


def transition_model(prev_state, actions, prev_belief, observations, nonterminals,
                     noise_prior, noise_post, w_slab):
    T_, B_ = actions.shape[0], actions.shape[1]

    # pack the 5 time-varying inputs into one VMEM-resident slab
    seq = jnp.concatenate(
        [observations, noise_prior, noise_post, actions, nonterminals], axis=-1)

    vmem = pl.BlockSpec(memory_space=pltpu.MemorySpace.VMEM)

    packed = pl.pallas_call(
        transition_kernel,
        out_shape=jax.ShapeDtypeStruct((T_, B_, OUT_W), jnp.float32),
        in_specs=[vmem, vmem, vmem, vmem],
        out_specs=vmem,
        scratch_shapes=[
            pltpu.VMEM((T_, B_, BELIEF), jnp.float32),     # act_sc
            pltpu.VMEM((T_, B_, HIDDEN), jnp.float32),     # obs_sc
            pltpu.VMEM((T_, B_, BELIEF), jnp.float32),     # bel_sc
            pltpu.VMEM((T_, B_, 3 * STATE), jnp.float32),  # post_sc
        ],
    )(seq, prev_state, prev_belief, w_slab)

    # split the packed lane-dense output back into the 7 tensors
    beliefs = packed[..., 0:BELIEF]
    pri_s = packed[..., BELIEF:BELIEF + STATE]
    pri_m = packed[..., BELIEF + STATE:BELIEF + 2 * STATE]
    pri_sd = packed[..., BELIEF + 2 * STATE:BELIEF + 3 * STATE]
    post_s = packed[..., BELIEF + 3 * STATE:BELIEF + 4 * STATE]
    post_m = packed[..., BELIEF + 4 * STATE:BELIEF + 5 * STATE]
    post_sd = packed[..., BELIEF + 5 * STATE:BELIEF + 6 * STATE]
    return beliefs, pri_s, pri_m, pri_sd, post_s, post_m, post_sd


def init_params(key):
    """Deterministic PyTorch-style Linear/GRUCell init. Returns raw (out,in)/(out,) tensors."""
    def linear(k, out_dim, in_dim):
        k1, k2 = jax.random.split(k)
        bound = 1.0 / np.sqrt(in_dim)
        w = jax.random.uniform(k1, (out_dim, in_dim), jnp.float32, -bound, bound)
        b = jax.random.uniform(k2, (out_dim,), jnp.float32, -bound, bound)
        return w, b

    keys = jax.random.split(key, 7)
    return {
        "esa": linear(keys[0], BELIEF, STATE + ACTION),
        "ih": linear(keys[1], 3 * BELIEF, BELIEF),       # GRU input->hidden (r,z,n)
        "hh": linear(keys[2], 3 * BELIEF, BELIEF),       # GRU hidden->hidden (r,z,n)
        "bpre": linear(keys[3], HIDDEN, BELIEF),
        "bpost": linear(keys[4], HIDDEN, BELIEF + EMBED),
        "spre": linear(keys[5], 2 * STATE, HIDDEN),
        "spost": linear(keys[6], 2 * STATE, HIDDEN),
    }


def pack_kernel_params(raw):
    """Re-layout to (in,out), fuse GRU gates / head chunks, fold r,z biases,
    and pack everything into ONE lane-dense (W_ROWS, 128) f32 slab (single DMA)."""
    W_esa, b_esa = raw["esa"]
    W_ih, b_ih = raw["ih"]
    W_hh, b_hh = raw["hh"]
    W_bpre, b_bpre = raw["bpre"]
    W_bpost, b_bpost = raw["bpost"]
    W_spre, b_spre = raw["spre"]
    W_spost, b_spost = raw["spost"]
    H = BELIEF
    # fused gate bias: r,z fold input+hidden biases; n keeps only b_in (b_hn separate,
    # it sits inside r * (h @ W_hn + b_hn), matching PyTorch GRUCell semantics)
    b_g = np.concatenate([np.asarray(b_ih[:H] + b_hh[:H]),
                          np.asarray(b_ih[H:2 * H] + b_hh[H:2 * H]),
                          np.asarray(b_ih[2 * H:])])

    slab = np.zeros((W_ROWS, 128), np.float32)

    def put(row, arr):
        a = np.asarray(arr, np.float32)
        if a.ndim == 1:
            a = a[None, :]
        slab[row:row + a.shape[0], :a.shape[1]] = a

    put(_R_WIH, np.asarray(W_ih).T)                    # (32, 96)
    put(_R_WHH, np.asarray(W_hh).T)                    # (32, 96)
    put(_R_WBPRE, np.asarray(W_bpre).T)                # (32, 32)
    put(_R_WBPB, np.asarray(W_bpost)[:, :BELIEF].T)    # (32, 32)
    put(_R_WSP, np.asarray(W_spre).T)                  # (32, 32)
    put(_R_WSQ, np.asarray(W_spost).T)                 # (32, 32)
    put(_R_WES, np.asarray(W_esa)[:, :STATE].T)        # (16, 32)
    put(_R_WBPO, np.asarray(W_bpost)[:, BELIEF:].T)    # (16, 32)
    put(_R_WEA, np.asarray(W_esa)[:, STATE:].T)        # (4, 32)
    put(_R_BIAS + 0, b_esa)                            # embed_state_act bias
    put(_R_BIAS + 1, b_g)                              # fused GRU gate bias [r|z|n]
    put(_R_BIAS + 2, np.asarray(b_hh)[2 * H:])         # b_hn
    put(_R_BIAS + 3, b_bpre)
    put(_R_BIAS + 4, b_bpost)
    put(_R_BIAS + 5, b_spre)
    put(_R_BIAS + 6, b_spost)
    return jnp.asarray(slab)


def reference(prev_state, actions, prev_belief, observations, nonterminals,
              noise_prior, noise_post, raw):
    """Pure-JAX f32 reference mirroring the PyTorch forward (observations provided)."""
    W_esa, b_esa = raw["esa"]
    W_ih, b_ih = raw["ih"]
    W_hh, b_hh = raw["hh"]
    W_bpre, b_bpre = raw["bpre"]
    W_bpost, b_bpost = raw["bpost"]
    W_spre, b_spre = raw["spre"]
    W_spost, b_spost = raw["spost"]
    H = BELIEF
    hi = jax.lax.Precision.HIGHEST

    def lin(x, W, b):
        return jnp.dot(x, W.T, precision=hi) + b

    def sig(x):
        return 1.0 / (1.0 + jnp.exp(-x))

    def sp(x):
        return jnp.maximum(x, 0.0) + jnp.log1p(jnp.exp(-jnp.abs(x)))

    bel, st = prev_belief, prev_state
    outs = [[] for _ in range(7)]
    for t in range(actions.shape[0]):
        state = st * nonterminals[t]
        x = jnp.maximum(
            lin(jnp.concatenate([state, actions[t]], axis=1), W_esa, b_esa), 0.0)
        gi = jnp.dot(x, W_ih.T, precision=hi) + b_ih
        gh = jnp.dot(bel, W_hh.T, precision=hi) + b_hh
        r = sig(gi[:, :H] + gh[:, :H])
        z = sig(gi[:, H:2 * H] + gh[:, H:2 * H])
        n = jnp.tanh(gi[:, 2 * H:] + r * gh[:, 2 * H:])
        bel = (1.0 - z) * n + z * bel
        h = jnp.maximum(lin(bel, W_bpre, b_bpre), 0.0)
        pre = lin(h, W_spre, b_spre)
        pm, psd = pre[:, :STATE], sp(pre[:, STATE:]) + MIN_STD
        ps = pm + psd * noise_prior[t]
        h2 = jnp.maximum(
            lin(jnp.concatenate([bel, observations[t]], axis=1), W_bpost, b_bpost), 0.0)
        post = lin(h2, W_spost, b_spost)
        qm, qsd = post[:, :STATE], sp(post[:, STATE:]) + MIN_STD
        qs = qm + qsd * noise_post[t]
        st = qs
        for lst, v in zip(outs, (bel, ps, pm, psd, qs, qm, qsd)):
            lst.append(v)
    return tuple(jnp.stack(o, axis=0) for o in outs)


if __name__ == "__main__":
    key = jax.random.PRNGKey(0)
    kp, kd = jax.random.split(key)
    raw = init_params(kp)
    w_slab = pack_kernel_params(raw)

    ks = jax.random.split(kd, 7)
    prev_state = jax.random.normal(ks[0], (B, STATE), jnp.float32)
    prev_belief = jax.random.normal(ks[1], (B, BELIEF), jnp.float32)
    actions = jax.random.normal(ks[2], (T, B, ACTION), jnp.float32)
    observations = jax.random.normal(ks[3], (T, B, EMBED), jnp.float32)
    nonterminals = (jax.random.uniform(ks[4], (T, B, 1)) > 0.1).astype(jnp.float32)
    # TODO(synk): torch.randn_like is stateful in-graph RNG; noise is precomputed
    # host-side and passed in so kernel and reference consume identical samples.
    noise_prior = jax.random.normal(ks[5], (T, B, STATE), jnp.float32)
    noise_post = jax.random.normal(ks[6], (T, B, STATE), jnp.float32)

    outs = jax.block_until_ready(
        transition_model(prev_state, actions, prev_belief, observations,
                         nonterminals, noise_prior, noise_post, w_slab))

    refs = reference(prev_state, actions, prev_belief, observations,
                     nonterminals, noise_prior, noise_post, raw)
    # all-f32 kernel vs Precision.HIGHEST reference: tight tolerance
    for o_, r_ in zip(outs, refs):
        np.testing.assert_allclose(np.asarray(o_), np.asarray(r_),
                                   rtol=1e-4, atol=1e-4)

    print("KERNEL_OK")
</pallas_src>

<mosaic_0001>
module attributes {stable_mosaic.version = 11 : i64} {
  func.func @transition_kernel(%arg0: memref<8x2x53xf32, #tpu.memory_space<vmem>>, %arg1: memref<2x16xf32, #tpu.memory_space<vmem>>, %arg2: memref<2x32xf32, #tpu.memory_space<vmem>>, %arg3: memref<240x128xf32, #tpu.memory_space<vmem>>, %arg4: memref<8x2x128xf32, #tpu.memory_space<vmem>>, %arg5: memref<8x2x32xf32, #tpu.memory_space<vmem>>, %arg6: memref<8x2x32xf32, #tpu.memory_space<vmem>>, %arg7: memref<8x2x32xf32, #tpu.memory_space<vmem>>, %arg8: memref<8x2x48xf32, #tpu.memory_space<vmem>>) attributes {dimension_semantics = [], scalar_prefetch = 0 : i64, scratch_operands = 4 : i64, tpu.core_type = #tpu.core_type<tc>} {
    %c192 = arith.constant 192 : index
    %c0 = arith.constant 0 : index
    %0 = vector.load %arg3[%c192, %c0] : memref<240x128xf32, #tpu.memory_space<vmem>>, vector<16x32xf32>
    %c0_0 = arith.constant 0 : index
    %c0_1 = arith.constant 0 : index
    %1 = vector.load %arg3[%c0_0, %c0_1] : memref<240x128xf32, #tpu.memory_space<vmem>>, vector<32x96xf32>
    %c32 = arith.constant 32 : index
    %c0_2 = arith.constant 0 : index
    %2 = vector.load %arg3[%c32, %c0_2] : memref<240x128xf32, #tpu.memory_space<vmem>>, vector<32x96xf32>
    %c96 = arith.constant 96 : index
    %c0_3 = arith.constant 0 : index
    %3 = vector.load %arg3[%c96, %c0_3] : memref<240x128xf32, #tpu.memory_space<vmem>>, vector<32x32xf32>
    %c160 = arith.constant 160 : index
    %c0_4 = arith.constant 0 : index
    %4 = vector.load %arg3[%c160, %c0_4] : memref<240x128xf32, #tpu.memory_space<vmem>>, vector<32x32xf32>
    %c233 = arith.constant 233 : index
    %c0_5 = arith.constant 0 : index
    %5 = vector.load %arg3[%c233, %c0_5] : memref<240x128xf32, #tpu.memory_space<vmem>>, vector<1x96xf32>
    %c234 = arith.constant 234 : index
    %c0_6 = arith.constant 0 : index
    %6 = vector.load %arg3[%c234, %c0_6] : memref<240x128xf32, #tpu.memory_space<vmem>>, vector<1x32xf32>
    %c238 = arith.constant 238 : index
    %c0_7 = arith.constant 0 : index
    %7 = vector.load %arg3[%c238, %c0_7] : memref<240x128xf32, #tpu.memory_space<vmem>>, vector<1x32xf32>
    %c224 = arith.constant 224 : index
    %c0_8 = arith.constant 0 : index
    %8 = vector.load %arg3[%c224, %c0_8] : memref<240x128xf32, #tpu.memory_space<vmem>>, vector<4x32xf32>
    %c232 = arith.constant 232 : index
    %c0_9 = arith.constant 0 : index
    %9 = vector.load %arg3[%c232, %c0_9] : memref<240x128xf32, #tpu.memory_space<vmem>>, vector<1x32xf32>
    %c208 = arith.constant 208 : index
    %c0_10 = arith.constant 0 : index
    %10 = vector.load %arg3[%c208, %c0_10] : memref<240x128xf32, #tpu.memory_space<vmem>>, vector<16x32xf32>
    %c236 = arith.constant 236 : index
    %c0_11 = arith.constant 0 : index
    %11 = vector.load %arg3[%c236, %c0_11] : memref<240x128xf32, #tpu.memory_space<vmem>>, vector<1x32xf32>
    %c0_12 = arith.constant 0 : index
    %c0_13 = arith.constant 0 : index
    %c0_14 = arith.constant 0 : index
    %12 = vector.load %arg0[%c0_12, %c0_13, %c0_14] : memref<8x2x53xf32, #tpu.memory_space<vmem>>, vector<1x2x53xf32>
    %13 = vector.shape_cast %12 : vector<1x2x53xf32> to vector<2x53xf32>
    %14 = vector.extract_strided_slice %13 {offsets = [0, 48], sizes = [2, 4], strides = [1, 1]} : vector<2x53xf32> to vector<2x4xf32>
    %cst = arith.constant dense<0.000000e+00> : vector<2x32xf32>
    %15 = tpu.matmul %14, %8, %cst {dimension_numbers = #tpu.dot_dimension_numbers<[1], [0], [0], [1], [0, 0, 1, 1], [], []>} : vector<2x4xf32>, vector<4x32xf32>, vector<2x32xf32> -> vector<2x32xf32>
    %16 = vector.broadcast %9 : vector<1x32xf32> to vector<2x32xf32>
    %17 = arith.addf %15, %16 : vector<2x32xf32>
    %c0_15 = arith.constant 0 : index
    %c0_16 = arith.constant 0 : index
    %c0_17 = arith.constant 0 : index
    %18 = vector.load %arg5[%c0_15, %c0_16, %c0_17] : memref<8x2x32xf32, #tpu.memory_space<vmem>>, vector<1x2x32xf32>
    %19 = vector.shape_cast %18 : vector<1x2x32xf32> to vector<2x32xf32>
    %20 = vector.shape_cast %17 : vector<2x32xf32> to vector<1x2x32xf32>
    tpu.vector_store %arg5[%c0_15, %c0_16, %c0_17], %20 {strides = array<i32>} : memref<8x2x32xf32, #tpu.memory_space<vmem>>, vector<1x2x32xf32>,
    %21 = vector.extract_strided_slice %13 {offsets = [0, 0], sizes = [2, 16], strides = [1, 1]} : vector<2x53xf32> to vector<2x16xf32>
    %cst_18 = arith.constant dense<0.000000e+00> : vector<2x32xf32>
    %22 = tpu.matmul %21, %10, %cst_18 {dimension_numbers = #tpu.dot_dimension_numbers<[1], [0], [0], [1], [0, 0, 1, 1], [], []>} : vector<2x16xf32>, vector<16x32xf32>, vector<2x32xf32> -> vector<2x32xf32>
    %23 = vector.broadcast %11 : vector<1x32xf32> to vector<2x32xf32>
    %24 = arith.addf %22, %23 : vector<2x32xf32>
    %c0_19 = arith.constant 0 : index
    %c0_20 = arith.constant 0 : index
    %c0_21 = arith.constant 0 : index
    %25 = vector.load %arg6[%c0_19, %c0_20, %c0_21] : memref<8x2x32xf32, #tpu.memory_space<vmem>>, vector<1x2x32xf32>
    %26 = vector.shape_cast %25 : vector<1x2x32xf32> to vector<2x32xf32>
    %27 = vector.shape_cast %24 : vector<2x32xf32> to vector<1x2x32xf32>
    tpu.vector_store %arg6[%c0_19, %c0_20, %c0_21], %27 {strides = array<i32>} : memref<8x2x32xf32, #tpu.memory_space<vmem>>, vector<1x2x32xf32>,
    %c1 = arith.constant 1 : index
    %c0_22 = arith.constant 0 : index
    %c0_23 = arith.constant 0 : index
    %28 = vector.load %arg0[%c1, %c0_22, %c0_23] : memref<8x2x53xf32, #tpu.memory_space<vmem>>, vector<1x2x53xf32>
    %29 = vector.shape_cast %28 : vector<1x2x53xf32> to vector<2x53xf32>
    %30 = vector.extract_strided_slice %29 {offsets = [0, 48], sizes = [2, 4], strides = [1, 1]} : vector<2x53xf32> to vector<2x4xf32>
    %cst_24 = arith.constant dense<0.000000e+00> : vector<2x32xf32>
    %31 = tpu.matmul %30, %8, %cst_24 {dimension_numbers = #tpu.dot_dimension_numbers<[1], [0], [0], [1], [0, 0, 1, 1], [], []>} : vector<2x4xf32>, vector<4x32xf32>, vector<2x32xf32> -> vector<2x32xf32>
    %32 = vector.broadcast %9 : vector<1x32xf32> to vector<2x32xf32>
    %33 = arith.addf %31, %32 : vector<2x32xf32>
    %c1_25 = arith.constant 1 : index
    %c0_26 = arith.constant 0 : index
    %c0_27 = arith.constant 0 : index
    %34 = vector.load %arg5[%c1_25, %c0_26, %c0_27] : memref<8x2x32xf32, #tpu.memory_space<vmem>>, vector<1x2x32xf32>
    %35 = vector.shape_cast %34 : vector<1x2x32xf32> to vector<2x32xf32>
    %36 = vector.shape_cast %33 : vector<2x32xf32> to vector<1x2x32xf32>
    tpu.vector_store %arg5[%c1_25, %c0_26, %c0_27], %36 {strides = array<i32>} : memref<8x2x32xf32, #tpu.memory_space<vmem>>, vector<1x2x32xf32>,
    %37 = vector.extract_strided_slice %29 {offsets = [0, 0], sizes = [2, 16], strides = [1, 1]} : vector<2x53xf32> to vector<2x16xf32>
    %cst_28 = arith.constant dense<0.000000e+00> : vector<2x32xf32>
    %38 = tpu.matmul %37, %10, %cst_28 {dimension_numbers = #tpu.dot_dimension_numbers<[1], [0], [0], [1], [0, 0, 1, 1], [], []>} : vector<2x16xf32>, vector<16x32xf32>, vector<2x32xf32> -> vector<2x32xf32>
    %39 = vector.broadcast %11 : vector<1x32xf32> to vector<2x32xf32>
    %40 = arith.addf %38, %39 : vector<2x32xf32>
    %c1_29 = arith.constant 1 : index
    %c0_30 = arith.constant 0 : index
    %c0_31 = arith.constant 0 : index
    %41 = vector.load %arg6[%c1_29, %c0_30, %c0_31] : memref<8x2x32xf32, #tpu.memory_space<vmem>>, vector<1x2x32xf32>
    %42 = vector.shape_cast %41 : vector<1x2x32xf32> to vector<2x32xf32>
    %43 = vector.shape_cast %40 : vector<2x32xf32> to vector<1x2x32xf32>
    tpu.vector_store %arg6[%c1_29, %c0_30, %c0_31], %43 {strides = array<i32>} : memref<8x2x32xf32, #tpu.memory_space<vmem>>, vector<1x2x32xf32>,
    %c2 = arith.constant 2 : index
    %c0_32 = arith.constant 0 : index
    %c0_33 = arith.constant 0 : index
    %44 = vector.load %arg0[%c2, %c0_32, %c0_33] : memref<8x2x53xf32, #tpu.memory_space<vmem>>, vector<1x2x53xf32>
    %45 = vector.shape_cast %44 : vector<1x2x53xf32> to vector<2x53xf32>
    %46 = vector.extract_strided_slice %45 {offsets = [0, 48], sizes = [2, 4], strides = [1, 1]} : vector<2x53xf32> to vector<2x4xf32>
    %cst_34 = arith.constant dense<0.000000e+00> : vector<2x32xf32>
    %47 = tpu.matmul %46, %8, %cst_34 {dimension_numbers = #tpu.dot_dimension_numbers<[1], [0], [0], [1], [0, 0, 1, 1], [], []>} : vector<2x4xf32>, vector<4x32xf32>, vector<2x32xf32> -> vector<2x32xf32>
    %48 = vector.broadcast %9 : vector<1x32xf32> to vector<2x32xf32>
    %49 = arith.addf %47, %48 : vector<2x32xf32>
    %c2_35 = arith.constant 2 : index
    %c0_36 = arith.constant 0 : index
    %c0_37 = arith.constant 0 : index
    %50 = vector.load %arg5[%c2_35, %c0_36, %c0_37] : memref<8x2x32xf32, #tpu.memory_space<vmem>>, vector<1x2x32xf32>
    %51 = vector.shape_cast %50 : vector<1x2x32xf32> to vector<2x32xf32>
    %52 = vector.shape_cast %49 : vector<2x32xf32> to vector<1x2x32xf32>
    tpu.vector_store %arg5[%c2_35, %c0_36, %c0_37], %52 {strides = array<i32>} : memref<8x2x32xf32, #tpu.memory_space<vmem>>, vector<1x2x32xf32>,
    %53 = vector.extract_strided_slice %45 {offsets = [0, 0], sizes = [2, 16], strides = [1, 1]} : vector<2x53xf32> to vector<2x16xf32>
    %cst_38 = arith.constant dense<0.000000e+00> : vector<2x32xf32>
    %54 = tpu.matmul %53, %10, %cst_38 {dimension_numbers = #tpu.dot_dimension_numbers<[1], [0], [0], [1], [0, 0, 1, 1], [], []>} : vector<2x16xf32>, vector<16x32xf32>, vector<2x32xf32> -> vector<2x32xf32>
    %55 = vector.broadcast %11 : vector<1x32xf32> to vector<2x32xf32>
    %56 = arith.addf %54, %55 : vector<2x32xf32>
    %c2_39 = arith.constant 2 : index
    %c0_40 = arith.constant 0 : index
    %c0_41 = arith.constant 0 : index
    %57 = vector.load %arg6[%c2_39, %c0_40, %c0_41] : memref<8x2x32xf32, #tpu.memory_space<vmem>>, vector<1x2x32xf32>
    %58 = vector.shape_cast %57 : vector<1x2x32xf32> to vector<2x32xf32>
    %59 = vector.shape_cast %56 : vector<2x32xf32> to vector<1x2x32xf32>
    tpu.vector_store %arg6[%c2_39, %c0_40, %c0_41], %59 {strides = array<i32>} : memref<8x2x32xf32, #tpu.memory_space<vmem>>, vector<1x2x32xf32>,
    %c3 = arith.constant 3 : index
    %c0_42 = arith.constant 0 : index
    %c0_43 = arith.constant 0 : index
    %60 = vector.load %arg0[%c3, %c0_42, %c0_43] : memref<8x2x53xf32, #tpu.memory_space<vmem>>, vector<1x2x53xf32>
    %61 = vector.shape_cast %60 : vector<1x2x53xf32> to vector<2x53xf32>
    %62 = vector.extract_strided_slice %61 {offsets = [0, 48], sizes = [2, 4], strides = [1, 1]} : vector<2x53xf32> to vector<2x4xf32>
    %cst_44 = arith.constant dense<0.000000e+00> : vector<2x32xf32>
    %63 = tpu.matmul %62, %8, %cst_44 {dimension_numbers = #tpu.dot_dimension_numbers<[1], [0], [0], [1], [0, 0, 1, 1], [], []>} : vector<2x4xf32>, vector<4x32xf32>, vector<2x32xf32> -> vector<2x32xf32>
    %64 = vector.broadcast %9 : vector<1x32xf32> to vector<2x32xf32>
    %65 = arith.addf %63, %64 : vector<2x32xf32>
    %c3_45 = arith.constant 3 : index
    %c0_46 = arith.constant 0 : index
    %c0_47 = arith.constant 0 : index
    %66 = vector.load %arg5[%c3_45, %c0_46, %c0_47] : memref<8x2x32xf32, #tpu.memory_space<vmem>>, vector<1x2x32xf32>
    %67 = vector.shape_cast %66 : vector<1x2x32xf32> to vector<2x32xf32>
    %68 = vector.shape_cast %65 : vector<2x32xf32> to vector<1x2x32xf32>
    tpu.vector_store %arg5[%c3_45, %c0_46, %c0_47], %68 {strides = array<i32>} : memref<8x2x32xf32, #tpu.memory_space<vmem>>, vector<1x2x32xf32>,
    %69 = vector.extract_strided_slice %61 {offsets = [0, 0], sizes = [2, 16], strides = [1, 1]} : vector<2x53xf32> to vector<2x16xf32>
    %cst_48 = arith.constant dense<0.000000e+00> : vector<2x32xf32>
    %70 = tpu.matmul %69, %10, %cst_48 {dimension_numbers = #tpu.dot_dimension_numbers<[1], [0], [0], [1], [0, 0, 1, 1], [], []>} : vector<2x16xf32>, vector<16x32xf32>, vector<2x32xf32> -> vector<2x32xf32>
    %71 = vector.broadcast %11 : vector<1x32xf32> to vector<2x32xf32>
    %72 = arith.addf %70, %71 : vector<2x32xf32>
    %c3_49 = arith.constant 3 : index
    %c0_50 = arith.constant 0 : index
    %c0_51 = arith.constant 0 : index
    %73 = vector.load %arg6[%c3_49, %c0_50, %c0_51] : memref<8x2x32xf32, #tpu.memory_space<vmem>>, vector<1x2x32xf32>
    %74 = vector.shape_cast %73 : vector<1x2x32xf32> to vector<2x32xf32>
    %75 = vector.shape_cast %72 : vector<2x32xf32> to vector<1x2x32xf32>
    tpu.vector_store %arg6[%c3_49, %c0_50, %c0_51], %75 {strides = array<i32>} : memref<8x2x32xf32, #tpu.memory_space<vmem>>, vector<1x2x32xf32>,
    %c4 = arith.constant 4 : index
    %c0_52 = arith.constant 0 : index
    %c0_53 = arith.constant 0 : index
    %76 = vector.load %arg0[%c4, %c0_52, %c0_53] : memref<8x2x53xf32, #tpu.memory_space<vmem>>, vector<1x2x53xf32>
    %77 = vector.shape_cast %76 : vector<1x2x53xf32> to vector<2x53xf32>
    %78 = vector.extract_strided_slice %77 {offsets = [0, 48], sizes = [2, 4], strides = [1, 1]} : vector<2x53xf32> to vector<2x4xf32>
    %cst_54 = arith.constant dense<0.000000e+00> : vector<2x32xf32>
    %79 = tpu.matmul %78, %8, %cst_54 {dimension_numbers = #tpu.dot_dimension_numbers<[1], [0], [0], [1], [0, 0, 1, 1], [], []>} : vector<2x4xf32>, vector<4x32xf32>, vector<2x32xf32> -> vector<2x32xf32>
    %80 = vector.broadcast %9 : vector<1x32xf32> to vector<2x32xf32>
    %81 = arith.addf %79, %80 : vector<2x32xf32>
    %c4_55 = arith.constant 4 : index
    %c0_56 = arith.constant 0 : index
    %c0_57 = arith.constant 0 : index
    %82 = vector.load %arg5[%c4_55, %c0_56, %c0_57] : memref<8x2x32xf32, #tpu.memory_space<vmem>>, vector<1x2x32xf32>
    %83 = vector.shape_cast %82 : vector<1x2x32xf32> to vector<2x32xf32>
    %84 = vector.shape_cast %81 : vector<2x32xf32> to vector<1x2x32xf32>
    tpu.vector_store %arg5[%c4_55, %c0_56, %c0_57], %84 {strides = array<i32>} : memref<8x2x32xf32, #tpu.memory_space<vmem>>, vector<1x2x32xf32>,
    %85 = vector.extract_strided_slice %77 {offsets = [0, 0], sizes = [2, 16], strides = [1, 1]} : vector<2x53xf32> to vector<2x16xf32>
    %cst_58 = arith.constant dense<0.000000e+00> : vector<2x32xf32>
    %86 = tpu.matmul %85, %10, %cst_58 {dimension_numbers = #tpu.dot_dimension_numbers<[1], [0], [0], [1], [0, 0, 1, 1], [], []>} : vector<2x16xf32>, vector<16x32xf32>, vector<2x32xf32> -> vector<2x32xf32>
    %87 = vector.broadcast %11 : vector<1x32xf32> to vector<2x32xf32>
    %88 = arith.addf %86, %87 : vector<2x32xf32>
    %c4_59 = arith.constant 4 : index
    %c0_60 = arith.constant 0 : index
    %c0_61 = arith.constant 0 : index
    %89 = vector.load %arg6[%c4_59, %c0_60, %c0_61] : memref<8x2x32xf32, #tpu.memory_space<vmem>>, vector<1x2x32xf32>
    %90 = vector.shape_cast %89 : vector<1x2x32xf32> to vector<2x32xf32>
    %91 = vector.shape_cast %88 : vector<2x32xf32> to vector<1x2x32xf32>
    tpu.vector_store %arg6[%c4_59, %c0_60, %c0_61], %91 {strides = array<i32>} : memref<8x2x32xf32, #tpu.memory_space<vmem>>, vector<1x2x32xf32>,
    %c5 = arith.constant 5 : index
    %c0_62 = arith.constant 0 : index
    %c0_63 = arith.constant 0 : index
    %92 = vector.load %arg0[%c5, %c0_62, %c0_63] : memref<8x2x53xf32, #tpu.memory_space<vmem>>, vector<1x2x53xf32>
    %93 = vector.shape_cast %92 : vector<1x2x53xf32> to vector<2x53xf32>
    %94 = vector.extract_strided_slice %93 {offsets = [0, 48], sizes = [2, 4], strides = [1, 1]} : vector<2x53xf32> to vector<2x4xf32>
    %cst_64 = arith.constant dense<0.000000e+00> : vector<2x32xf32>
    %95 = tpu.matmul %94, %8, %cst_64 {dimension_numbers = #tpu.dot_dimension_numbers<[1], [0], [0], [1], [0, 0, 1, 1], [], []>} : vector<2x4xf32>, vector<4x32xf32>, vector<2x32xf32> -> vector<2x32xf32>
    %96 = vector.broadcast %9 : vector<1x32xf32> to vector<2x32xf32>
    %97 = arith.addf %95, %96 : vector<2x32xf32>
    %c5_65 = arith.constant 5 : index
    %c0_66 = arith.constant 0 : index
    %c0_67 = arith.constant 0 : index
    %98 = vector.load %arg5[%c5_65, %c0_66, %c0_67] : memref<8x2x32xf32, #tpu.memory_space<vmem>>, vector<1x2x32xf32>
    %99 = vector.shape_cast %98 : vector<1x2x32xf32> to vector<2x32xf32>
    %100 = vector.shape_cast %97 : vector<2x32xf32> to vector<1x2x32xf32>
    tpu.vector_store %arg5[%c5_65, %c0_66, %c0_67], %100 {strides = array<i32>} : memref<8x2x32xf32, #tpu.memory_space<vmem>>, vector<1x2x32xf32>,
    %101 = vector.extract_strided_slice %93 {offsets = [0, 0], sizes = [2, 16], strides = [1, 1]} : vector<2x53xf32> to vector<2x16xf32>
    %cst_68 = arith.constant dense<0.000000e+00> : vector<2x32xf32>
    %102 = tpu.matmul %101, %10, %cst_68 {dimension_numbers = #tpu.dot_dimension_numbers<[1], [0], [0], [1], [0, 0, 1, 1], [], []>} : vector<2x16xf32>, vector<16x32xf32>, vector<2x32xf32> -> vector<2x32xf32>
    %103 = vector.broadcast %11 : vector<1x32xf32> to vector<2x32xf32>
    %104 = arith.addf %102, %103 : vector<2x32xf32>
    %c5_69 = arith.constant 5 : index
    %c0_70 = arith.constant 0 : index
    %c0_71 = arith.constant 0 : index
    %105 = vector.load %arg6[%c5_69, %c0_70, %c0_71] : memref<8x2x32xf32, #tpu.memory_space<vmem>>, vector<1x2x32xf32>
    %106 = vector.shape_cast %105 : vector<1x2x32xf32> to vector<2x32xf32>
    %107 = vector.shape_cast %104 : vector<2x32xf32> to vector<1x2x32xf32>
    tpu.vector_store %arg6[%c5_69, %c0_70, %c0_71], %107 {strides = array<i32>} : memref<8x2x32xf32, #tpu.memory_space<vmem>>, vector<1x2x32xf32>,
    %c6 = arith.constant 6 : index
    %c0_72 = arith.constant 0 : index
    %c0_73 = arith.constant 0 : index
    %108 = vector.load %arg0[%c6, %c0_72, %c0_73] : memref<8x2x53xf32, #tpu.memory_space<vmem>>, vector<1x2x53xf32>
    %109 = vector.shape_cast %108 : vector<1x2x53xf32> to vector<2x53xf32>
    %110 = vector.extract_strided_slice %109 {offsets = [0, 48], sizes = [2, 4], strides = [1, 1]} : vector<2x53xf32> to vector<2x4xf32>
    %cst_74 = arith.constant dense<0.000000e+00> : vector<2x32xf32>
    %111 = tpu.matmul %110, %8, %cst_74 {dimension_numbers = #tpu.dot_dimension_numbers<[1], [0], [0], [1], [0, 0, 1, 1], [], []>} : vector<2x4xf32>, vector<4x32xf32>, vector<2x32xf32> -> vector<2x32xf32>
    %112 = vector.broadcast %9 : vector<1x32xf32> to vector<2x32xf32>
    %113 = arith.addf %111, %112 : vector<2x32xf32>
    %c6_75 = arith.constant 6 : index
    %c0_76 = arith.constant 0 : index
    %c0_77 = arith.constant 0 : index
    %114 = vector.load %arg5[%c6_75, %c0_76, %c0_77] : memref<8x2x32xf32, #tpu.memory_space<vmem>>, vector<1x2x32xf32>
    %115 = vector.shape_cast %114 : vector<1x2x32xf32> to vector<2x32xf32>
    %116 = vector.shape_cast %113 : vector<2x32xf32> to vector<1x2x32xf32>
    tpu.vector_store %arg5[%c6_75, %c0_76, %c0_77], %116 {strides = array<i32>} : memref<8x2x32xf32, #tpu.memory_space<vmem>>, vector<1x2x32xf32>,
    %117 = vector.extract_strided_slice %109 {offsets = [0, 0], sizes = [2, 16], strides = [1, 1]} : vector<2x53xf32> to vector<2x16xf32>
    %cst_78 = arith.constant dense<0.000000e+00> : vector<2x32xf32>
    %118 = tpu.matmul %117, %10, %cst_78 {dimension_numbers = #tpu.dot_dimension_numbers<[1], [0], [0], [1], [0, 0, 1, 1], [], []>} : vector<2x16xf32>, vector<16x32xf32>, vector<2x32xf32> -> vector<2x32xf32>
    %119 = vector.broadcast %11 : vector<1x32xf32> to vector<2x32xf32>
    %120 = arith.addf %118, %119 : vector<2x32xf32>
    %c6_79 = arith.constant 6 : index
    %c0_80 = arith.constant 0 : index
    %c0_81 = arith.constant 0 : index
    %121 = vector.load %arg6[%c6_79, %c0_80, %c0_81] : memref<8x2x32xf32, #tpu.memory_space<vmem>>, vector<1x2x32xf32>
    %122 = vector.shape_cast %121 : vector<1x2x32xf32> to vector<2x32xf32>
    %123 = vector.shape_cast %120 : vector<2x32xf32> to vector<1x2x32xf32>
    tpu.vector_store %arg6[%c6_79, %c0_80, %c0_81], %123 {strides = array<i32>} : memref<8x2x32xf32, #tpu.memory_space<vmem>>, vector<1x2x32xf32>,
    %c7 = arith.constant 7 : index
    %c0_82 = arith.constant 0 : index
    %c0_83 = arith.constant 0 : index
    %124 = vector.load %arg0[%c7, %c0_82, %c0_83] : memref<8x2x53xf32, #tpu.memory_space<vmem>>, vector<1x2x53xf32>
    %125 = vector.shape_cast %124 : vector<1x2x53xf32> to vector<2x53xf32>
    %126 = vector.extract_strided_slice %125 {offsets = [0, 48], sizes = [2, 4], strides = [1, 1]} : vector<2x53xf32> to vector<2x4xf32>
    %cst_84 = arith.constant dense<0.000000e+00> : vector<2x32xf32>
    %127 = tpu.matmul %126, %8, %cst_84 {dimension_numbers = #tpu.dot_dimension_numbers<[1], [0], [0], [1], [0, 0, 1, 1], [], []>} : vector<2x4xf32>, vector<4x32xf32>, vector<2x32xf32> -> vector<2x32xf32>
    %128 = vector.broadcast %9 : vector<1x32xf32> to vector<2x32xf32>
    %129 = arith.addf %127, %128 : vector<2x32xf32>
    %c7_85 = arith.constant 7 : index
    %c0_86 = arith.constant 0 : index
    %c0_87 = arith.constant 0 : index
    %130 = vector.load %arg5[%c7_85, %c0_86, %c0_87] : memref<8x2x32xf32, #tpu.memory_space<vmem>>, vector<1x2x32xf32>
    %131 = vector.shape_cast %130 : vector<1x2x32xf32> to vector<2x32xf32>
    %132 = vector.shape_cast %129 : vector<2x32xf32> to vector<1x2x32xf32>
    tpu.vector_store %arg5[%c7_85, %c0_86, %c0_87], %132 {strides = array<i32>} : memref<8x2x32xf32, #tpu.memory_space<vmem>>, vector<1x2x32xf32>,
    %133 = vector.extract_strided_slice %125 {offsets = [0, 0], sizes = [2, 16], strides = [1, 1]} : vector<2x53xf32> to vector<2x16xf32>
    %cst_88 = arith.constant dense<0.000000e+00> : vector<2x32xf32>
    %134 = tpu.matmul %133, %10, %cst_88 {dimension_numbers = #tpu.dot_dimension_numbers<[1], [0], [0], [1], [0, 0, 1, 1], [], []>} : vector<2x16xf32>, vector<16x32xf32>, vector<2x32xf32> -> vector<2x32xf32>
    %135 = vector.broadcast %11 : vector<1x32xf32> to vector<2x32xf32>
    %136 = arith.addf %134, %135 : vector<2x32xf32>
    %c7_89 = arith.constant 7 : index
    %c0_90 = arith.constant 0 : index
    %c0_91 = arith.constant 0 : index
    %137 = vector.load %arg6[%c7_89, %c0_90, %c0_91] : memref<8x2x32xf32, #tpu.memory_space<vmem>>, vector<1x2x32xf32>
    %138 = vector.shape_cast %137 : vector<1x2x32xf32> to vector<2x32xf32>
    %139 = vector.shape_cast %136 : vector<2x32xf32> to vector<1x2x32xf32>
    tpu.vector_store %arg6[%c7_89, %c0_90, %c0_91], %139 {strides = array<i32>} : memref<8x2x32xf32, #tpu.memory_space<vmem>>, vector<1x2x32xf32>,
    %c0_92 = arith.constant 0 : index
    %c0_93 = arith.constant 0 : index
    %140 = vector.load %arg2[%c0_92, %c0_93] : memref<2x32xf32, #tpu.memory_space<vmem>>, vector<2x32xf32>
    %c0_94 = arith.constant 0 : index
    %c0_95 = arith.constant 0 : index
    %141 = vector.load %arg1[%c0_94, %c0_95] : memref<2x16xf32, #tpu.memory_space<vmem>>, vector<2x16xf32>
    %c0_i32 = arith.constant 0 : i32
    %142 = arith.index_cast %c0_i32 : i32 to index
    %c0_96 = arith.constant 0 : index
    %c0_97 = arith.constant 0 : index
    %143 = vector.load %arg0[%142, %c0_96, %c0_97] : memref<8x2x53xf32, #tpu.memory_space<vmem>>, vector<1x2x53xf32>
    %144 = vector.shape_cast %143 : vector<1x2x53xf32> to vector<2x53xf32>
    %145 = vector.extract_strided_slice %144 {offsets = [0, 32], sizes = [2, 16], strides = [1, 1]} : vector<2x53xf32> to vector<2x16xf32>
    %146 = vector.extract_strided_slice %144 {offsets = [0, 52], sizes = [2, 1], strides = [1, 1]} : vector<2x53xf32> to vector<2x1xf32>
    %147 = vector.broadcast %146 : vector<2x1xf32> to vector<2x16xf32>
    %148 = arith.mulf %141, %147 : vector<2x16xf32>
    %cst_98 = arith.constant dense<0.000000e+00> : vector<2x32xf32>
    %149 = tpu.matmul %148, %0, %cst_98 {dimension_numbers = #tpu.dot_dimension_numbers<[1], [0], [0], [1], [0, 0, 1, 1], [], []>} : vector<2x16xf32>, vector<16x32xf32>, vector<2x32xf32> -> vector<2x32xf32>
    %150 = arith.index_cast %c0_i32 : i32 to index
    %c0_99 = arith.constant 0 : index
    %c0_100 = arith.constant 0 : index
    %151 = vector.load %arg5[%150, %c0_99, %c0_100] : memref<8x2x32xf32, #tpu.memory_space<vmem>>, vector<1x2x32xf32>
    %152 = vector.shape_cast %151 : vector<1x2x32xf32> to vector<2x32xf32>
    %153 = arith.addf %149, %152 : vector<2x32xf32>
    %cst_101 = arith.constant 0.000000e+00 : f32
    %154 = vector.broadcast %cst_101 : f32 to vector<2x32xf32>
    %155 = arith.maximumf %153, %154 : vector<2x32xf32>
    %cst_102 = arith.constant dense<0.000000e+00> : vector<2x96xf32>
    %156 = tpu.matmul %155, %1, %cst_102 {dimension_numbers = #tpu.dot_dimension_numbers<[1], [0], [0], [1], [0, 0, 1, 1], [], []>} : vector<2x32xf32>, vector<32x96xf32>, vector<2x96xf32> -> vector<2x96xf32>
    %157 = vector.broadcast %5 : vector<1x96xf32> to vector<2x96xf32>
    %158 = arith.addf %156, %157 : vector<2x96xf32>
    %cst_103 = arith.constant dense<0.000000e+00> : vector<2x96xf32>
    %159 = tpu.matmul %140, %2, %cst_103 {dimension_numbers = #tpu.dot_dimension_numbers<[1], [0], [0], [1], [0, 0, 1, 1], [], []>} : vector<2x32xf32>, vector<32x96xf32>, vector<2x96xf32> -> vector<2x96xf32>
    %160 = vector.extract_strided_slice %158 {offsets = [0, 0], sizes = [2, 32], strides = [1, 1]} : vector<2x96xf32> to vector<2x32xf32>
    %161 = vector.extract_strided_slice %159 {offsets = [0, 0], sizes = [2, 32], strides = [1, 1]} : vector<2x96xf32> to vector<2x32xf32>
    %162 = arith.addf %160, %161 : vector<2x32xf32>
    %cst_104 = arith.constant 5.000000e-01 : f32
    %163 = vector.broadcast %cst_104 : f32 to vector<2x32xf32>
    %164 = arith.mulf %163, %162 : vector<2x32xf32>
    %165 = math.tanh %164 : vector<2x32xf32>
    %cst_105 = arith.constant 5.000000e-01 : f32
    %166 = vector.broadcast %cst_105 : f32 to vector<2x32xf32>
    %167 = arith.mulf %166, %165 : vector<2x32xf32>
    %cst_106 = arith.constant 5.000000e-01 : f32
    %168 = vector.broadcast %cst_106 : f32 to vector<2x32xf32>
    %169 = arith.addf %167, %168 : vector<2x32xf32>
    %170 = vector.extract_strided_slice %158 {offsets = [0, 32], sizes = [2, 32], strides = [1, 1]} : vector<2x96xf32> to vector<2x32xf32>
    %171 = vector.extract_strided_slice %159 {offsets = [0, 32], sizes = [2, 32], strides = [1, 1]} : vector<2x96xf32> to vector<2x32xf32>
    %172 = arith.addf %170, %171 : vector<2x32xf32>
    %cst_107 = arith.constant 5.000000e-01 : f32
    %173 = vector.broadcast %cst_107 : f32 to vector<2x32xf32>
    %174 = arith.mulf %173, %172 : vector<2x32xf32>
    %175 = math.tanh %174 : vector<2x32xf32>
    %cst_108 = arith.constant 5.000000e-01 : f32
    %176 = vector.broadcast %cst_108 : f32 to vector<2x32xf32>
    %177 = arith.mulf %176, %175 : vector<2x32xf32>
    %cst_109 = arith.constant 5.000000e-01 : f32
    %178 = vector.broadcast %cst_109 : f32 to vector<2x32xf32>
    %179 = arith.addf %177, %178 : vector<2x32xf32>
    %180 = vector.extract_strided_slice %158 {offsets = [0, 64], sizes = [2, 32], strides = [1, 1]} : vector<2x96xf32> to vector<2x32xf32>
    %181 = vector.extract_strided_slice %159 {offsets = [0, 64], sizes = [2, 32], strides = [1, 1]} : vector<2x96xf32> to vector<2x32xf32>
    %182 = vector.broadcast %6 : vector<1x32xf32> to vector<2x32xf32>
    %183 = arith.addf %181, %182 : vector<2x32xf32>
    %184 = arith.mulf %169, %183 : vector<2x32xf32>
    %185 = arith.addf %180, %184 : vector<2x32xf32>
    %186 = math.tanh %185 : vector<2x32xf32>
    %cst_110 = arith.constant 1.000000e+00 : f32
    %187 = vector.broadcast %cst_110 : f32 to vector<2x32xf32>
    %188 = arith.subf %187, %179 : vector<2x32xf32>
    %189 = arith.mulf %188, %186 : vector<2x32xf32>
    %190 = arith.mulf %179, %140 : vector<2x32xf32>
    %191 = arith.addf %189, %190 : vector<2x32xf32>
    %cst_111 = arith.constant dense<0.000000e+00> : vector<2x32xf32>
    %192 = tpu.matmul %191, %3, %cst_111 {dimension_numbers = #tpu.dot_dimension_numbers<[1], [0], [0], [1], [0, 0, 1, 1], [], []>} : vector<2x32xf32>, vector<32x32xf32>, vector<2x32xf32> -> vector<2x32xf32>
    %193 = arith.index_cast %c0_i32 : i32 to index
    %c0_112 = arith.constant 0 : index
    %c0_113 = arith.constant 0 : index
    %194 = vector.load %arg6[%193, %c0_112, %c0_113] : memref<8x2x32xf32, #tpu.memory_space<vmem>>, vector<1x2x32xf32>
    %195 = vector.shape_cast %194 : vector<1x2x32xf32> to vector<2x32xf32>
    %196 = arith.addf %192, %195 : vector<2x32xf32>
    %cst_114 = arith.constant 0.000000e+00 : f32
    %197 = vector.broadcast %cst_114 : f32 to vector<2x32xf32>
    %198 = arith.maximumf %196, %197 : vector<2x32xf32>
    %cst_115 = arith.constant dense<0.000000e+00> : vector<2x32xf32>
    %199 = tpu.matmul %198, %4, %cst_115 {dimension_numbers = #tpu.dot_dimension_numbers<[1], [0], [0], [1], [0, 0, 1, 1], [], []>} : vector<2x32xf32>, vector<32x32xf32>, vector<2x32xf32> -> vector<2x32xf32>
    %200 = vector.broadcast %7 : vector<1x32xf32> to vector<2x32xf32>
    %201 = arith.addf %199, %200 : vector<2x32xf32>
    %202 = vector.extract_strided_slice %201 {offsets = [0, 0], sizes = [2, 16], strides = [1, 1]} : vector<2x32xf32> to vector<2x16xf32>
    %203 = vector.extract_strided_slice %201 {offsets = [0, 16], sizes = [2, 16], strides = [1, 1]} : vector<2x32xf32> to vector<2x16xf32>
    %cst_116 = arith.constant 0.000000e+00 : f32
    %204 = vector.broadcast %cst_116 : f32 to vector<2x16xf32>
    %205 = arith.maximumf %203, %204 : vector<2x16xf32>
    %206 = math.absf %203 : vector<2x16xf32>
    %cst_117 = arith.constant 0.000000e+00 : f32
    %207 = vector.broadcast %cst_117 : f32 to vector<2x16xf32>
    %208 = arith.subf %207, %206 : vector<2x16xf32>
    %209 = math.exp %208 : vector<2x16xf32>
    %210 = math.log1p %209 : vector<2x16xf32>
    %211 = arith.addf %205, %210 : vector<2x16xf32>
    %cst_118 = arith.constant 1.000000e-01 : f32
    %212 = vector.broadcast %cst_118 : f32 to vector<2x16xf32>
    %213 = arith.addf %211, %212 : vector<2x16xf32>
    %214 = arith.mulf %213, %145 : vector<2x16xf32>
    %215 = arith.addf %202, %214 : vector<2x16xf32>
    %216 = arith.index_cast %c0_i32 : i32 to index
    %c0_119 = arith.constant 0 : index
    %c0_120 = arith.constant 0 : index
    %217 = vector.load %arg7[%216, %c0_119, %c0_120] : memref<8x2x32xf32, #tpu.memory_space<vmem>>, vector<1x2x32xf32>
    %218 = vector.shape_cast %217 : vector<1x2x32xf32> to vector<2x32xf32>
    %219 = vector.shape_cast %191 : vector<2x32xf32> to vector<1x2x32xf32>
    tpu.vector_store %arg7[%216, %c0_119, %c0_120], %219 {strides = array<i32>} : memref<8x2x32xf32, #tpu.memory_space<vmem>>, vector<1x2x32xf32>,
    %220 = tpu.concatenate %215, %202, %213 in 1 : vector<2x16xf32>, vector<2x16xf32>, vector<2x16xf32> -> vector<2x48xf32>
    %221 = arith.index_cast %c0_i32 : i32 to index
    %c0_121 = arith.constant 0 : index
    %c0_122 = arith.constant 0 : index
    %222 = vector.load %arg8[%221, %c0_121, %c0_122] : memref<8x2x48xf32, #tpu.memory_space<vmem>>, vector<1x2x48xf32>
    %223 = vector.shape_cast %222 : vector<1x2x48xf32> to vector<2x48xf32>
    %224 = vector.shape_cast %220 : vector<2x48xf32> to vector<1x2x48xf32>
    tpu.vector_store %arg8[%221, %c0_121, %c0_122], %224 {strides = array<i32>} : memref<8x2x48xf32, #tpu.memory_space<vmem>>, vector<1x2x48xf32>,
    %c1_i32 = arith.constant 1 : i32
    %225 = arith.index_cast %c1_i32 : i32 to index
    %c0_123 = arith.constant 0 : index
    %c0_124 = arith.constant 0 : index
    %226 = vector.load %arg0[%225, %c0_123, %c0_124] : memref<8x2x53xf32, #tpu.memory_space<vmem>>, vector<1x2x53xf32>
    %227 = vector.shape_cast %226 : vector<1x2x53xf32> to vector<2x53xf32>
    %228 = vector.extract_strided_slice %227 {offsets = [0, 32], sizes = [2, 16], strides = [1, 1]} : vector<2x53xf32> to vector<2x16xf32>
    %229 = vector.extract_strided_slice %227 {offsets = [0, 52], sizes = [2, 1], strides = [1, 1]} : vector<2x53xf32> to vector<2x1xf32>
    %230 = vector.broadcast %229 : vector<2x1xf32> to vector<2x16xf32>
    %231 = arith.mulf %215, %230 : vector<2x16xf32>
    %cst_125 = arith.constant dense<0.000000e+00> : vector<2x32xf32>
    %232 = tpu.matmul %231, %0, %cst_125 {dimension_numbers = #tpu.dot_dimension_numbers<[1], [0], [0], [1], [0, 0, 1, 1], [], []>} : vector<2x16xf32>, vector<16x32xf32>, vector<2x32xf32> -> vector<2x32xf32>
    %233 = arith.index_cast %c1_i32 : i32 to index
    %c0_126 = arith.constant 0 : index
    %c0_127 = arith.constant 0 : index
    %234 = vector.load %arg5[%233, %c0_126, %c0_127] : memref<8x2x32xf32, #tpu.memory_space<vmem>>, vector<1x2x32xf32>
    %235 = vector.shape_cast %234 : vector<1x2x32xf32> to vector<2x32xf32>
    %236 = arith.addf %232, %235 : vector<2x32xf32>
    %cst_128 = arith.constant 0.000000e+00 : f32
    %237 = vector.broadcast %cst_128 : f32 to vector<2x32xf32>
    %238 = arith.maximumf %236, %237 : vector<2x32xf32>
    %cst_129 = arith.constant dense<0.000000e+00> : vector<2x96xf32>
    %239 = tpu.matmul %238, %1, %cst_129 {dimension_numbers = #tpu.dot_dimension_numbers<[1], [0], [0], [1], [0, 0, 1, 1], [], []>} : vector<2x32xf32>, vector<32x96xf32>, vector<2x96xf32> -> vector<2x96xf32>
    %240 = vector.broadcast %5 : vector<1x96xf32> to vector<2x96xf32>
    %241 = arith.addf %239, %240 : vector<2x96xf32>
    %cst_130 = arith.constant dense<0.000000e+00> : vector<2x96xf32>
    %242 = tpu.matmul %191, %2, %cst_130 {dimension_numbers = #tpu.dot_dimension_numbers<[1], [0], [0], [1], [0, 0, 1, 1], [], []>} : vector<2x32xf32>, vector<32x96xf32>, vector<2x96xf32> -> vector<2x96xf32>
    %243 = vector.extract_strided_slice %241 {offsets = [0, 0], sizes = [2, 32], strides = [1, 1]} : vector<2x96xf32> to vector<2x32xf32>
    %244 = vector.extract_strided_slice %242 {offsets = [0, 0], sizes = [2, 32], strides = [1, 1]} : vector<2x96xf32> to vector<2x32xf32>
    %245 = arith.addf %243, %244 : vector<2x32xf32>
    %cst_131 = arith.constant 5.000000e-01 : f32
    %246 = vector.broadcast %cst_131 : f32 to vector<2x32xf32>
    %247 = arith.mulf %246, %245 : vector<2x32xf32>
    %248 = math.tanh %247 : vector<2x32xf32>
    %cst_132 = arith.constant 5.000000e-01 : f32
    %249 = vector.broadcast %cst_132 : f32 to vector<2x32xf32>
    %250 = arith.mulf %249, %248 : vector<2x32xf32>
    %cst_133 = arith.constant 5.000000e-01 : f32
    %251 = vector.broadcast %cst_133 : f32 to vector<2x32xf32>
    %252 = arith.addf %250, %251 : vector<2x32xf32>
    %253 = vector.extract_strided_slice %241 {offsets = [0, 32], sizes = [2, 32], strides = [1, 1]} : vector<2x96xf32> to vector<2x32xf32>
    %254 = vector.extract_strided_slice %242 {offsets = [0, 32], sizes = [2, 32], strides = [1, 1]} : vector<2x96xf32> to vector<2x32xf32>
    %255 = arith.addf %253, %254 : vector<2x32xf32>
    %cst_134 = arith.constant 5.000000e-01 : f32
    %256 = vector.broadcast %cst_134 : f32 to vector<2x32xf32>
    %257 = arith.mulf %256, %255 : vector<2x32xf32>
    %258 = math.tanh %257 : vector<2x32xf32>
    %cst_135 = arith.constant 5.000000e-01 : f32
    %259 = vector.broadcast %cst_135 : f32 to vector<2x32xf32>
    %260 = arith.mulf %259, %258 : vector<2x32xf32>
    %cst_136 = arith.constant 5.000000e-01 : f32
    %261 = vector.broadcast %cst_136 : f32 to vector<2x32xf32>
    %262 = arith.addf %260, %261 : vector<2x32xf32>
    %263 = vector.extract_strided_slice %241 {offsets = [0, 64], sizes = [2, 32], strides = [1, 1]} : vector<2x96xf32> to vector<2x32xf32>
    %264 = vector.extract_strided_slice %242 {offsets = [0, 64], sizes = [2, 32], strides = [1, 1]} : vector<2x96xf32> to vector<2x32xf32>
    %265 = vector.broadcast %6 : vector<1x32xf32> to vector<2x32xf32>
    %266 = arith.addf %264, %265 : vector<2x32xf32>
    %267 = arith.mulf %252, %266 : vector<2x32xf32>
    %268 = arith.addf %263, %267 : vector<2x32xf32>
    %269 = math.tanh %268 : vector<2x32xf32>
    %cst_137 = arith.constant 1.000000e+00 : f32
    %270 = vector.broadcast %cst_137 : f32 to vector<2x32xf32>
    %271 = arith.subf %270, %262 : vector<2x32xf32>
    %272 = arith.mulf %271, %269 : vector<2x32xf32>
    %273 = arith.mulf %262, %191 : vector<2x32xf32>
    %274 = arith.addf %272, %273 : vector<2x32xf32>
    %cst_138 = arith.constant dense<0.000000e+00> : vector<2x32xf32>
    %275 = tpu.matmul %274, %3, %cst_138 {dimension_numbers = #tpu.dot_dimension_numbers<[1], [0], [0], [1], [0, 0, 1, 1], [], []>} : vector<2x32xf32>, vector<32x32xf32>, vector<2x32xf32> -> vector<2x32xf32>
    %276 = arith.index_cast %c1_i32 : i32 to index
    %c0_139 = arith.constant 0 : index
    %c0_140 = arith.constant 0 : index
    %277 = vector.load %arg6[%276, %c0_139, %c0_140] : memref<8x2x32xf32, #tpu.memory_space<vmem>>, vector<1x2x32xf32>
    %278 = vector.shape_cast %277 : vector<1x2x32xf32> to vector<2x32xf32>
    %279 = arith.addf %275, %278 : vector<2x32xf32>
    %cst_141 = arith.constant 0.000000e+00 : f32
    %280 = vector.broadcast %cst_141 : f32 to vector<2x32xf32>
    %281 = arith.maximumf %279, %280 : vector<2x32xf32>
    %cst_142 = arith.constant dense<0.000000e+00> : vector<2x32xf32>
    %282 = tpu.matmul %281, %4, %cst_142 {dimension_numbers = #tpu.dot_dimension_numbers<[1], [0], [0], [1], [0, 0, 1, 1], [], []>} : vector<2x32xf32>, vector<32x32xf32>, vector<2x32xf32> -> vector<2x32xf32>
    %283 = vector.broadcast %7 : vector<1x32xf32> to vector<2x32xf32>
    %284 = arith.addf %282, %283 : vector<2x32xf32>
    %285 = vector.extract_strided_slice %284 {offsets = [0, 0], sizes = [2, 16], strides = [1, 1]} : vector<2x32xf32> to vector<2x16xf32>
    %286 = vector.extract_strided_slice %284 {offsets = [0, 16], sizes = [2, 16], strides = [1, 1]} : vector<2x32xf32> to vector<2x16xf32>
    %cst_143 = arith.constant 0.000000e+00 : f32
    %287 = vector.broadcast %cst_143 : f32 to vector<2x16xf32>
    %288 = arith.maximumf %286, %287 : vector<2x16xf32>
    %289 = math.absf %286 : vector<2x16xf32>
    %cst_144 = arith.constant 0.000000e+00 : f32
    %290 = vector.broadcast %cst_144 : f32 to vector<2x16xf32>
    %291 = arith.subf %290, %289 : vector<2x16xf32>
    %292 = math.exp %291 : vector<2x16xf32>
    %293 = math.log1p %292 : vector<2x16xf32>
    %294 = arith.addf %288, %293 : vector<2x16xf32>
    %cst_145 = arith.constant 1.000000e-01 : f32
    %295 = vector.broadcast %cst_145 : f32 to vector<2x16xf32>
    %296 = arith.addf %294, %295 : vector<2x16xf32>
    %297 = arith.mulf %296, %228 : vector<2x16xf32>
    %298 = arith.addf %285, %297 : vector<2x16xf32>
    %299 = arith.index_cast %c1_i32 : i32 to index
    %c0_146 = arith.constant 0 : index
    %c0_147 = arith.constant 0 : index
    %300 = vector.load %arg7[%299, %c0_146, %c0_147] : memref<8x2x32xf32, #tpu.memory_space<vmem>>, vector<1x2x32xf32>
    %301 = vector.shape_cast %300 : vector<1x2x32xf32> to vector<2x32xf32>
    %302 = vector.shape_cast %274 : vector<2x32xf32> to vector<1x2x32xf32>
    tpu.vector_store %arg7[%299, %c0_146, %c0_147], %302 {strides = array<i32>} : memref<8x2x32xf32, #tpu.memory_space<vmem>>, vector<1x2x32xf32>,
    %303 = tpu.concatenate %298, %285, %296 in 1 : vector<2x16xf32>, vector<2x16xf32>, vector<2x16xf32> -> vector<2x48xf32>
    %304 = arith.index_cast %c1_i32 : i32 to index
    %c0_148 = arith.constant 0 : index
    %c0_149 = arith.constant 0 : index
    %305 = vector.load %arg8[%304, %c0_148, %c0_149] : memref<8x2x48xf32, #tpu.memory_space<vmem>>, vector<1x2x48xf32>
    %306 = vector.shape_cast %305 : vector<1x2x48xf32> to vector<2x48xf32>
    %307 = vector.shape_cast %303 : vector<2x48xf32> to vector<1x2x48xf32>
    tpu.vector_store %arg8[%304, %c0_148, %c0_149], %307 {strides = array<i32>} : memref<8x2x48xf32, #tpu.memory_space<vmem>>, vector<1x2x48xf32>,
    %c2_i32 = arith.constant 2 : i32
    %308 = arith.index_cast %c2_i32 : i32 to index
    %c0_150 = arith.constant 0 : index
    %c0_151 = arith.constant 0 : index
    %309 = vector.load %arg0[%308, %c0_150, %c0_151] : memref<8x2x53xf32, #tpu.memory_space<vmem>>, vector<1x2x53xf32>
    %310 = vector.shape_cast %309 : vector<1x2x53xf32> to vector<2x53xf32>
    %311 = vector.extract_strided_slice %310 {offsets = [0, 32], sizes = [2, 16], strides = [1, 1]} : vector<2x53xf32> to vector<2x16xf32>
    %312 = vector.extract_strided_slice %310 {offsets = [0, 52], sizes = [2, 1], strides = [1, 1]} : vector<2x53xf32> to vector<2x1xf32>
    %313 = vector.broadcast %312 : vector<2x1xf32> to vector<2x16xf32>
    %314 = arith.mulf %298, %313 : vector<2x16xf32>
    %cst_152 = arith.constant dense<0.000000e+00> : vector<2x32xf32>
    %315 = tpu.matmul %314, %0, %cst_152 {dimension_numbers = #tpu.dot_dimension_numbers<[1], [0], [0], [1], [0, 0, 1, 1], [], []>} : vector<2x16xf32>, vector<16x32xf32>, vector<2x32xf32> -> vector<2x32xf32>
    %316 = arith.index_cast %c2_i32 : i32 to index
    %c0_153 = arith.constant 0 : index
    %c0_154 = arith.constant 0 : index
    %317 = vector.load %arg5[%316, %c0_153, %c0_154] : memref<8x2x32xf32, #tpu.memory_space<vmem>>, vector<1x2x32xf32>
    %318 = vector.shape_cast %317 : vector<1x2x32xf32> to vector<2x32xf32>
    %319 = arith.addf %315, %318 : vector<2x32xf32>
    %cst_155 = arith.constant 0.000000e+00 : f32
    %320 = vector.broadcast %cst_155 : f32 to vector<2x32xf32>
    %321 = arith.maximumf %319, %320 : vector<2x32xf32>
    %cst_156 = arith.constant dense<0.000000e+00> : vector<2x96xf32>
    %322 = tpu.matmul %321, %1, %cst_156 {dimension_numbers = #tpu.dot_dimension_numbers<[1], [0], [0], [1], [0, 0, 1, 1], [], []>} : vector<2x32xf32>, vector<32x96xf32>, vector<2x96xf32> -> vector<2x96xf32>
    %323 = vector.broadcast %5 : vector<1x96xf32> to vector<2x96xf32>
    %324 = arith.addf %322, %323 : vector<2x96xf32>
    %cst_157 = arith.constant dense<0.000000e+00> : vector<2x96xf32>
    %325 = tpu.matmul %274, %2, %cst_157 {dimension_numbers = #tpu.dot_dimension_numbers<[1], [0], [0], [1], [0, 0, 1, 1], [], []>} : vector<2x32xf32>, vector<32x96xf32>, vector<2x96xf32> -> vector<2x96xf32>
    %326 = vector.extract_strided_slice %324 {offsets = [0, 0], sizes = [2, 32], strides = [1, 1]} : vector<2x96xf32> to vector<2x32xf32>
    %327 = vector.extract_strided_slice %325 {offsets = [0, 0], sizes = [2, 32], strides = [1, 1]} : vector<2x96xf32> to vector<2x32xf32>
    %328 = arith.addf %326, %327 : vector<2x32xf32>
    %cst_158 = arith.constant 5.000000e-01 : f32
    %329 = vector.broadcast %cst_158 : f32 to vector<2x32xf32>
    %330 = arith.mulf %329, %328 : vector<2x32xf32>
    %331 = math.tanh %330 : vector<2x32xf32>
    %cst_159 = arith.constant 5.000000e-01 : f32
    %332 = vector.broadcast %cst_159 : f32 to vector<2x32xf32>
    %333 = arith.mulf %332, %331 : vector<2x32xf32>
    %cst_160 = arith.constant 5.000000e-01 : f32
    %334 = vector.broadcast %cst_160 : f32 to vector<2x32xf32>
    %335 = arith.addf %333, %334 : vector<2x32xf32>
    %336 = vector.extract_strided_slice %324 {offsets = [0, 32], sizes = [2, 32], strides = [1, 1]} : vector<2x96xf32> to vector<2x32xf32>
    %337 = vector.extract_strided_slice %325 {offsets = [0, 32], sizes = [2, 32], strides = [1, 1]} : vector<2x96xf32> to vector<2x32xf32>
    %338 = arith.addf %336, %337 : vector<2x32xf32>
    %cst_161 = arith.constant 5.000000e-01 : f32
    %339 = vector.broadcast %cst_161 : f32 to vector<2x32xf32>
    %340 = arith.mulf %339, %338 : vector<2x32xf32>
    %341 = math.tanh %340 : vector<2x32xf32>
    %cst_162 = arith.constant 5.000000e-01 : f32
    %342 = vector.broadcast %cst_162 : f32 to vector<2x32xf32>
    %343 = arith.mulf %342, %341 : vector<2x32xf32>
    %cst_163 = arith.constant 5.000000e-01 : f32
    %344 = vector.broadcast %cst_163 : f32 to vector<2x32xf32>
    %345 = arith.addf %343, %344 : vector<2x32xf32>
    %346 = vector.extract_strided_slice %324 {offsets = [0, 64], sizes = [2, 32], strides = [1, 1]} : vector<2x96xf32> to vector<2x32xf32>
    %347 = vector.extract_strided_slice %325 {offsets = [0, 64], sizes = [2, 32], strides = [1, 1]} : vector<2x96xf32> to vector<2x32xf32>
    %348 = vector.broadcast %6 : vector<1x32xf32> to vector<2x32xf32>
    %349 = arith.addf %347, %348 : vector<2x32xf32>
    %350 = arith.mulf %335, %349 : vector<2x32xf32>
    %351 = arith.addf %346, %350 : vector<2x32xf32>
    %352 = math.tanh %351 : vector<2x32xf32>
    %cst_164 = arith.constant 1.000000e+00 : f32
    %353 = vector.broadcast %cst_164 : f32 to vector<2x32xf32>
    %354 = arith.subf %353, %345 : vector<2x32xf32>
    %355 = arith.mulf %354, %352 : vector<2x32xf32>
    %356 = arith.mulf %345, %274 : vector<2x32xf32>
    %357 = arith.addf %355, %356 : vector<2x32xf32>
    %cst_165 = arith.constant dense<0.000000e+00> : vector<2x32xf32>
    %358 = tpu.matmul %357, %3, %cst_165 {dimension_numbers = #tpu.dot_dimension_numbers<[1], [0], [0], [1], [0, 0, 1, 1], [], []>} : vector<2x32xf32>, vector<32x32xf32>, vector<2x32xf32> -> vector<2x32xf32>
    %359 = arith.index_cast %c2_i32 : i32 to index
    %c0_166 = arith.constant 0 : index
    %c0_167 = arith.constant 0 : index
    %360 = vector.load %arg6[%359, %c0_166, %c0_167] : memref<8x2x32xf32, #tpu.memory_space<vmem>>, vector<1x2x32xf32>
    %361 = vector.shape_cast %360 : vector<1x2x32xf32> to vector<2x32xf32>
    %362 = arith.addf %358, %361 : vector<2x32xf32>
    %cst_168 = arith.constant 0.000000e+00 : f32
    %363 = vector.broadcast %cst_168 : f32 to vector<2x32xf32>
    %364 = arith.maximumf %362, %363 : vector<2x32xf32>
    %cst_169 = arith.constant dense<0.000000e+00> : vector<2x32xf32>
    %365 = tpu.matmul %364, %4, %cst_169 {dimension_numbers = #tpu.dot_dimension_numbers<[1], [0], [0], [1], [0, 0, 1, 1], [], []>} : vector<2x32xf32>, vector<32x32xf32>, vector<2x32xf32> -> vector<2x32xf32>
    %366 = vector.broadcast %7 : vector<1x32xf32> to vector<2x32xf32>
    %367 = arith.addf %365, %366 : vector<2x32xf32>
    %368 = vector.extract_strided_slice %367 {offsets = [0, 0], sizes = [2, 16], strides = [1, 1]} : vector<2x32xf32> to vector<2x16xf32>
    %369 = vector.extract_strided_slice %367 {offsets = [0, 16], sizes = [2, 16], strides = [1, 1]} : vector<2x32xf32> to vector<2x16xf32>
    %cst_170 = arith.constant 0.000000e+00 : f32
    %370 = vector.broadcast %cst_170 : f32 to vector<2x16xf32>
    %371 = arith.maximumf %369, %370 : vector<2x16xf32>
    %372 = math.absf %369 : vector<2x16xf32>
    %cst_171 = arith.constant 0.000000e+00 : f32
    %373 = vector.broadcast %cst_171 : f32 to vector<2x16xf32>
    %374 = arith.subf %373, %372 : vector<2x16xf32>
    %375 = math.exp %374 : vector<2x16xf32>
    %376 = math.log1p %375 : vector<2x16xf32>
    %377 = arith.addf %371, %376 : vector<2x16xf32>
    %cst_172 = arith.constant 1.000000e-01 : f32
    %378 = vector.broadcast %cst_172 : f32 to vector<2x16xf32>
    %379 = arith.addf %377, %378 : vector<2x16xf32>
    %380 = arith.mulf %379, %311 : vector<2x16xf32>
    %381 = arith.addf %368, %380 : vector<2x16xf32>
    %382 = arith.index_cast %c2_i32 : i32 to index
    %c0_173 = arith.constant 0 : index
    %c0_174 = arith.constant 0 : index
    %383 = vector.load %arg7[%382, %c0_173, %c0_174] : memref<8x2x32xf32, #tpu.memory_space<vmem>>, vector<1x2x32xf32>
    %384 = vector.shape_cast %383 : vector<1x2x32xf32> to vector<2x32xf32>
    %385 = vector.shape_cast %357 : vector<2x32xf32> to vector<1x2x32xf32>
    tpu.vector_store %arg7[%382, %c0_173, %c0_174], %385 {strides = array<i32>} : memref<8x2x32xf32, #tpu.memory_space<vmem>>, vector<1x2x32xf32>,
    %386 = tpu.concatenate %381, %368, %379 in 1 : vector<2x16xf32>, vector<2x16xf32>, vector<2x16xf32> -> vector<2x48xf32>
    %387 = arith.index_cast %c2_i32 : i32 to index
    %c0_175 = arith.constant 0 : index
    %c0_176 = arith.constant 0 : index
    %388 = vector.load %arg8[%387, %c0_175, %c0_176] : memref<8x2x48xf32, #tpu.memory_space<vmem>>, vector<1x2x48xf32>
    %389 = vector.shape_cast %388 : vector<1x2x48xf32> to vector<2x48xf32>
    %390 = vector.shape_cast %386 : vector<2x48xf32> to vector<1x2x48xf32>
    tpu.vector_store %arg8[%387, %c0_175, %c0_176], %390 {strides = array<i32>} : memref<8x2x48xf32, #tpu.memory_space<vmem>>, vector<1x2x48xf32>,
    %c3_i32 = arith.constant 3 : i32
    %391 = arith.index_cast %c3_i32 : i32 to index
    %c0_177 = arith.constant 0 : index
    %c0_178 = arith.constant 0 : index
    %392 = vector.load %arg0[%391, %c0_177, %c0_178] : memref<8x2x53xf32, #tpu.memory_space<vmem>>, vector<1x2x53xf32>
    %393 = vector.shape_cast %392 : vector<1x2x53xf32> to vector<2x53xf32>
    %394 = vector.extract_strided_slice %393 {offsets = [0, 32], sizes = [2, 16], strides = [1, 1]} : vector<2x53xf32> to vector<2x16xf32>
    %395 = vector.extract_strided_slice %393 {offsets = [0, 52], sizes = [2, 1], strides = [1, 1]} : vector<2x53xf32> to vector<2x1xf32>
    %396 = vector.broadcast %395 : vector<2x1xf32> to vector<2x16xf32>
    %397 = arith.mulf %381, %396 : vector<2x16xf32>
    %cst_179 = arith.constant dense<0.000000e+00> : vector<2x32xf32>
    %398 = tpu.matmul %397, %0, %cst_179 {dimension_numbers = #tpu.dot_dimension_numbers<[1], [0], [0], [1], [0, 0, 1, 1], [], []>} : vector<2x16xf32>, vector<16x32xf32>, vector<2x32xf32> -> vector<2x32xf32>
    %399 = arith.index_cast %c3_i32 : i32 to index
    %c0_180 = arith.constant 0 : index
    %c0_181 = arith.constant 0 : index
    %400 = vector.load %arg5[%399, %c0_180, %c0_181] : memref<8x2x32xf32, #tpu.memory_space<vmem>>, vector<1x2x32xf32>
    %401 = vector.shape_cast %400 : vector<1x2x32xf32> to vector<2x32xf32>
    %402 = arith.addf %398, %401 : vector<2x32xf32>
    %cst_182 = arith.constant 0.000000e+00 : f32
    %403 = vector.broadcast %cst_182 : f32 to vector<2x32xf32>
    %404 = arith.maximumf %402, %403 : vector<2x32xf32>
    %cst_183 = arith.constant dense<0.000000e+00> : vector<2x96xf32>
    %405 = tpu.matmul %404, %1, %cst_183 {dimension_numbers = #tpu.dot_dimension_numbers<[1], [0], [0], [1], [0, 0, 1, 1], [], []>} : vector<2x32xf32>, vector<32x96xf32>, vector<2x96xf32> -> vector<2x96xf32>
    %406 = vector.broadcast %5 : vector<1x96xf32> to vector<2x96xf32>
    %407 = arith.addf %405, %406 : vector<2x96xf32>
    %cst_184 = arith.constant dense<0.000000e+00> : vector<2x96xf32>
    %408 = tpu.matmul %357, %2, %cst_184 {dimension_numbers = #tpu.dot_dimension_numbers<[1], [0], [0], [1], [0, 0, 1, 1], [], []>} : vector<2x32xf32>, vector<32x96xf32>, vector<2x96xf32> -> vector<2x96xf32>
    %409 = vector.extract_strided_slice %407 {offsets = [0, 0], sizes = [2, 32], strides = [1, 1]} : vector<2x96xf32> to vector<2x32xf32>
    %410 = vector.extract_strided_slice %408 {offsets = [0, 0], sizes = [2, 32], strides = [1, 1]} : vector<2x96xf32> to vector<2x32xf32>
    %411 = arith.addf %409, %410 : vector<2x32xf32>
    %cst_185 = arith.constant 5.000000e-01 : f32
    %412 = vector.broadcast %cst_185 : f32 to vector<2x32xf32>
    %413 = arith.mulf %412, %411 : vector<2x32xf32>
    %414 = math.tanh %413 : vector<2x32xf32>
    %cst_186 = arith.constant 5.000000e-01 : f32
    %415 = vector.broadcast %cst_186 : f32 to vector<2x32xf32>
    %416 = arith.mulf %415, %414 : vector<2x32xf32>
    %cst_187 = arith.constant 5.000000e-01 : f32
    %417 = vector.broadcast %cst_187 : f32 to vector<2x32xf32>
    %418 = arith.addf %416, %417 : vector<2x32xf32>
    %419 = vector.extract_strided_slice %407 {offsets = [0, 32], sizes = [2, 32], strides = [1, 1]} : vector<2x96xf32> to vector<2x32xf32>
    %420 = vector.extract_strided_slice %408 {offsets = [0, 32], sizes = [2, 32], strides = [1, 1]} : vector<2x96xf32> to vector<2x32xf32>
    %421 = arith.addf %419, %420 : vector<2x32xf32>
    %cst_188 = arith.constant 5.000000e-01 : f32
    %422 = vector.broadcast %cst_188 : f32 to vector<2x32xf32>
    %423 = arith.mulf %422, %421 : vector<2x32xf32>
    %424 = math.tanh %423 : vector<2x32xf32>
    %cst_189 = arith.constant 5.000000e-01 : f32
    %425 = vector.broadcast %cst_189 : f32 to vector<2x32xf32>
    %426 = arith.mulf %425, %424 : vector<2x32xf32>
    %cst_190 = arith.constant 5.000000e-01 : f32
    %427 = vector.broadcast %cst_190 : f32 to vector<2x32xf32>
    %428 = arith.addf %426, %427 : vector<2x32xf32>
    %429 = vector.extract_strided_slice %407 {offsets = [0, 64], sizes = [2, 32], strides = [1, 1]} : vector<2x96xf32> to vector<2x32xf32>
    %430 = vector.extract_strided_slice %408 {offsets = [0, 64], sizes = [2, 32], strides = [1, 1]} : vector<2x96xf32> to vector<2x32xf32>
    %431 = vector.broadcast %6 : vector<1x32xf32> to vector<2x32xf32>
    %432 = arith.addf %430, %431 : vector<2x32xf32>
    %433 = arith.mulf %418, %432 : vector<2x32xf32>
    %434 = arith.addf %429, %433 : vector<2x32xf32>
    %435 = math.tanh %434 : vector<2x32xf32>
    %cst_191 = arith.constant 1.000000e+00 : f32
    %436 = vector.broadcast %cst_191 : f32 to vector<2x32xf32>
    %437 = arith.subf %436, %428 : vector<2x32xf32>
    %438 = arith.mulf %437, %435 : vector<2x32xf32>
    %439 = arith.mulf %428, %357 : vector<2x32xf32>
    %440 = arith.addf %438, %439 : vector<2x32xf32>
    %cst_192 = arith.constant dense<0.000000e+00> : vector<2x32xf32>
    %441 = tpu.matmul %440, %3, %cst_192 {dimension_numbers = #tpu.dot_dimension_numbers<[1], [0], [0], [1], [0, 0, 1, 1], [], []>} : vector<2x32xf32>, vector<32x32xf32>, vector<2x32xf32> -> vector<2x32xf32>
    %442 = arith.index_cast %c3_i32 : i32 to index
    %c0_193 = arith.constant 0 : index
    %c0_194 = arith.constant 0 : index
    %443 = vector.load %arg6[%442, %c0_193, %c0_194] : memref<8x2x32xf32, #tpu.memory_space<vmem>>, vector<1x2x32xf32>
    %444 = vector.shape_cast %443 : vector<1x2x32xf32> to vector<2x32xf32>
    %445 = arith.addf %441, %444 : vector<2x32xf32>
    %cst_195 = arith.constant 0.000000e+00 : f32
    %446 = vector.broadcast %cst_195 : f32 to vector<2x32xf32>
    %447 = arith.maximumf %445, %446 : vector<2x32xf32>
    %cst_196 = arith.constant dense<0.000000e+00> : vector<2x32xf32>
    %448 = tpu.matmul %447, %4, %cst_196 {dimension_numbers = #tpu.dot_dimension_numbers<[1], [0], [0], [1], [0, 0, 1, 1], [], []>} : vector<2x32xf32>, vector<32x32xf32>, vector<2x32xf32> -> vector<2x32xf32>
    %449 = vector.broadcast %7 : vector<1x32xf32> to vector<2x32xf32>
    %450 = arith.addf %448, %449 : vector<2x32xf32>
    %451 = vector.extract_strided_slice %450 {offsets = [0, 0], sizes = [2, 16], strides = [1, 1]} : vector<2x32xf32> to vector<2x16xf32>
    %452 = vector.extract_strided_slice %450 {offsets = [0, 16], sizes = [2, 16], strides = [1, 1]} : vector<2x32xf32> to vector<2x16xf32>
    %cst_197 = arith.constant 0.000000e+00 : f32
    %453 = vector.broadcast %cst_197 : f32 to vector<2x16xf32>
    %454 = arith.maximumf %452, %453 : vector<2x16xf32>
    %455 = math.absf %452 : vector<2x16xf32>
    %cst_198 = arith.constant 0.000000e+00 : f32
    %456 = vector.broadcast %cst_198 : f32 to vector<2x16xf32>
    %457 = arith.subf %456, %455 : vector<2x16xf32>
    %458 = math.exp %457 : vector<2x16xf32>
    %459 = math.log1p %458 : vector<2x16xf32>
    %460 = arith.addf %454, %459 : vector<2x16xf32>
    %cst_199 = arith.constant 1.000000e-01 : f32
    %461 = vector.broadcast %cst_199 : f32 to vector<2x16xf32>
    %462 = arith.addf %460, %461 : vector<2x16xf32>
    %463 = arith.mulf %462, %394 : vector<2x16xf32>
    %464 = arith.addf %451, %463 : vector<2x16xf32>
    %465 = arith.index_cast %c3_i32 : i32 to index
    %c0_200 = arith.constant 0 : index
    %c0_201 = arith.constant 0 : index
    %466 = vector.load %arg7[%465, %c0_200, %c0_201] : memref<8x2x32xf32, #tpu.memory_space<vmem>>, vector<1x2x32xf32>
    %467 = vector.shape_cast %466 : vector<1x2x32xf32> to vector<2x32xf32>
    %468 = vector.shape_cast %440 : vector<2x32xf32> to vector<1x2x32xf32>
    tpu.vector_store %arg7[%465, %c0_200, %c0_201], %468 {strides = array<i32>} : memref<8x2x32xf32, #tpu.memory_space<vmem>>, vector<1x2x32xf32>,
    %469 = tpu.concatenate %464, %451, %462 in 1 : vector<2x16xf32>, vector<2x16xf32>, vector<2x16xf32> -> vector<2x48xf32>
    %470 = arith.index_cast %c3_i32 : i32 to index
    %c0_202 = arith.constant 0 : index
    %c0_203 = arith.constant 0 : index
    %471 = vector.load %arg8[%470, %c0_202, %c0_203] : memref<8x2x48xf32, #tpu.memory_space<vmem>>, vector<1x2x48xf32>
    %472 = vector.shape_cast %471 : vector<1x2x48xf32> to vector<2x48xf32>
    %473 = vector.shape_cast %469 : vector<2x48xf32> to vector<1x2x48xf32>
    tpu.vector_store %arg8[%470, %c0_202, %c0_203], %473 {strides = array<i32>} : memref<8x2x48xf32, #tpu.memory_space<vmem>>, vector<1x2x48xf32>,
    %c4_i32 = arith.constant 4 : i32
    %474 = arith.index_cast %c4_i32 : i32 to index
    %c0_204 = arith.constant 0 : index
    %c0_205 = arith.constant 0 : index
    %475 = vector.load %arg0[%474, %c0_204, %c0_205] : memref<8x2x53xf32, #tpu.memory_space<vmem>>, vector<1x2x53xf32>
    %476 = vector.shape_cast %475 : vector<1x2x53xf32> to vector<2x53xf32>
    %477 = vector.extract_strided_slice %476 {offsets = [0, 32], sizes = [2, 16], strides = [1, 1]} : vector<2x53xf32> to vector<2x16xf32>
    %478 = vector.extract_strided_slice %476 {offsets = [0, 52], sizes = [2, 1], strides = [1, 1]} : vector<2x53xf32> to vector<2x1xf32>
    %479 = vector.broadcast %478 : vector<2x1xf32> to vector<2x16xf32>
    %480 = arith.mulf %464, %479 : vector<2x16xf32>
    %cst_206 = arith.constant dense<0.000000e+00> : vector<2x32xf32>
    %481 = tpu.matmul %480, %0, %cst_206 {dimension_numbers = #tpu.dot_dimension_numbers<[1], [0], [0], [1], [0, 0, 1, 1], [], []>} : vector<2x16xf32>, vector<16x32xf32>, vector<2x32xf32> -> vector<2x32xf32>
    %482 = arith.index_cast %c4_i32 : i32 to index
    %c0_207 = arith.constant 0 : index
    %c0_208 = arith.constant 0 : index
    %483 = vector.load %arg5[%482, %c0_207, %c0_208] : memref<8x2x32xf32, #tpu.memory_space<vmem>>, vector<1x2x32xf32>
    %484 = vector.shape_cast %483 : vector<1x2x32xf32> to vector<2x32xf32>
    %485 = arith.addf %481, %484 : vector<2x32xf32>
    %cst_209 = arith.constant 0.000000e+00 : f32
    %486 = vector.broadcast %cst_209 : f32 to vector<2x32xf32>
    %487 = arith.maximumf %485, %486 : vector<2x32xf32>
    %cst_210 = arith.constant dense<0.000000e+00> : vector<2x96xf32>
    %488 = tpu.matmul %487, %1, %cst_210 {dimension_numbers = #tpu.dot_dimension_numbers<[1], [0], [0], [1], [0, 0, 1, 1], [], []>} : vector<2x32xf32>, vector<32x96xf32>, vector<2x96xf32> -> vector<2x96xf32>
    %489 = vector.broadcast %5 : vector<1x96xf32> to vector<2x96xf32>
    %490 = arith.addf %488, %489 : vector<2x96xf32>
    %cst_211 = arith.constant dense<0.000000e+00> : vector<2x96xf32>
    %491 = tpu.matmul %440, %2, %cst_211 {dimension_numbers = #tpu.dot_dimension_numbers<[1], [0], [0], [1], [0, 0, 1, 1], [], []>} : vector<2x32xf32>, vector<32x96xf32>, vector<2x96xf32> -> vector<2x96xf32>
    %492 = vector.extract_strided_slice %490 {offsets = [0, 0], sizes = [2, 32], strides = [1, 1]} : vector<2x96xf32> to vector<2x32xf32>
    %493 = vector.extract_strided_slice %491 {offsets = [0, 0], sizes = [2, 32], strides = [1, 1]} : vector<2x96xf32> to vector<2x32xf32>
    %494 = arith.addf %492, %493 : vector<2x32xf32>
    %cst_212 = arith.constant 5.000000e-01 : f32
    %495 = vector.broadcast %cst_212 : f32 to vector<2x32xf32>
    %496 = arith.mulf %495, %494 : vector<2x32xf32>
    %497 = math.tanh %496 : vector<2x32xf32>
    %cst_213 = arith.constant 5.000000e-01 : f32
    %498 = vector.broadcast %cst_213 : f32 to vector<2x32xf32>
    %499 = arith.mulf %498, %497 : vector<2x32xf32>
    %cst_214 = arith.constant 5.000000e-01 : f32
    %500 = vector.broadcast %cst_214 : f32 to vector<2x32xf32>
    %501 = arith.addf %499, %500 : vector<2x32xf32>
    %502 = vector.extract_strided_slice %490 {offsets = [0, 32], sizes = [2, 32], strides = [1, 1]} : vector<2x96xf32> to vector<2x32xf32>
    %503 = vector.extract_strided_slice %491 {offsets = [0, 32], sizes = [2, 32], strides = [1, 1]} : vector<2x96xf32> to vector<2x32xf32>
    %504 = arith.addf %502, %503 : vector<2x32xf32>
    %cst_215 = arith.constant 5.000000e-01 : f32
    %505 = vector.broadcast %cst_215 : f32 to vector<2x32xf32>
    %506 = arith.mulf %505, %504 : vector<2x32xf32>
    %507 = math.tanh %506 : vector<2x32xf32>
    %cst_216 = arith.constant 5.000000e-01 : f32
    %508 = vector.broadcast %cst_216 : f32 to vector<2x32xf32>
    %509 = arith.mulf %508, %507 : vector<2x32xf32>
    %cst_217 = arith.constant 5.000000e-01 : f32
    %510 = vector.broadcast %cst_217 : f32 to vector<2x32xf32>
    %511 = arith.addf %509, %510 : vector<2x32xf32>
    %512 = vector.extract_strided_slice %490 {offsets = [0, 64], sizes = [2, 32], strides = [1, 1]} : vector<2x96xf32> to vector<2x32xf32>
    %513 = vector.extract_strided_slice %491 {offsets = [0, 64], sizes = [2, 32], strides = [1, 1]} : vector<2x96xf32> to vector<2x32xf32>
    %514 = vector.broadcast %6 : vector<1x32xf32> to vector<2x32xf32>
    %515 = arith.addf %513, %514 : vector<2x32xf32>
    %516 = arith.mulf %501, %515 : vector<2x32xf32>
    %517 = arith.addf %512, %516 : vector<2x32xf32>
    %518 = math.tanh %517 : vector<2x32xf32>
    %cst_218 = arith.constant 1.000000e+00 : f32
    %519 = vector.broadcast %cst_218 : f32 to vector<2x32xf32>
    %520 = arith.subf %519, %511 : vector<2x32xf32>
    %521 = arith.mulf %520, %518 : vector<2x32xf32>
    %522 = arith.mulf %511, %440 : vector<2x32xf32>
    %523 = arith.addf %521, %522 : vector<2x32xf32>
    %cst_219 = arith.constant dense<0.000000e+00> : vector<2x32xf32>
    %524 = tpu.matmul %523, %3, %cst_219 {dimension_numbers = #tpu.dot_dimension_numbers<[1], [0], [0], [1], [0, 0, 1, 1], [], []>} : vector<2x32xf32>, vector<32x32xf32>, vector<2x32xf32> -> vector<2x32xf32>
    %525 = arith.index_cast %c4_i32 : i32 to index
    %c0_220 = arith.constant 0 : index
    %c0_221 = arith.constant 0 : index
    %526 = vector.load %arg6[%525, %c0_220, %c0_221] : memref<8x2x32xf32, #tpu.memory_space<vmem>>, vector<1x2x32xf32>
    %527 = vector.shape_cast %526 : vector<1x2x32xf32> to vector<2x32xf32>
    %528 = arith.addf %524, %527 : vector<2x32xf32>
    %cst_222 = arith.constant 0.000000e+00 : f32
    %529 = vector.broadcast %cst_222 : f32 to vector<2x32xf32>
    %530 = arith.maximumf %528, %529 : vector<2x32xf32>
    %cst_223 = arith.constant dense<0.000000e+00> : vector<2x32xf32>
    %531 = tpu.matmul %530, %4, %cst_223 {dimension_numbers = #tpu.dot_dimension_numbers<[1], [0], [0], [1], [0, 0, 1, 1], [], []>} : vector<2x32xf32>, vector<32x32xf32>, vector<2x32xf32> -> vector<2x32xf32>
    %532 = vector.broadcast %7 : vector<1x32xf32> to vector<2x32xf32>
    %533 = arith.addf %531, %532 : vector<2x32xf32>
    %534 = vector.extract_strided_slice %533 {offsets = [0, 0], sizes = [2, 16], strides = [1, 1]} : vector<2x32xf32> to vector<2x16xf32>
    %535 = vector.extract_strided_slice %533 {offsets = [0, 16], sizes = [2, 16], strides = [1, 1]} : vector<2x32xf32> to vector<2x16xf32>
    %cst_224 = arith.constant 0.000000e+00 : f32
    %536 = vector.broadcast %cst_224 : f32 to vector<2x16xf32>
    %537 = arith.maximumf %535, %536 : vector<2x16xf32>
    %538 = math.absf %535 : vector<2x16xf32>
    %cst_225 = arith.constant 0.000000e+00 : f32
    %539 = vector.broadcast %cst_225 : f32 to vector<2x16xf32>
    %540 = arith.subf %539, %538 : vector<2x16xf32>
    %541 = math.exp %540 : vector<2x16xf32>
    %542 = math.log1p %541 : vector<2x16xf32>
    %543 = arith.addf %537, %542 : vector<2x16xf32>
    %cst_226 = arith.constant 1.000000e-01 : f32
    %544 = vector.broadcast %cst_226 : f32 to vector<2x16xf32>
    %545 = arith.addf %543, %544 : vector<2x16xf32>
    %546 = arith.mulf %545, %477 : vector<2x16xf32>
    %547 = arith.addf %534, %546 : vector<2x16xf32>
    %548 = arith.index_cast %c4_i32 : i32 to index
    %c0_227 = arith.constant 0 : index
    %c0_228 = arith.constant 0 : index
    %549 = vector.load %arg7[%548, %c0_227, %c0_228] : memref<8x2x32xf32, #tpu.memory_space<vmem>>, vector<1x2x32xf32>
    %550 = vector.shape_cast %549 : vector<1x2x32xf32> to vector<2x32xf32>
    %551 = vector.shape_cast %523 : vector<2x32xf32> to vector<1x2x32xf32>
    tpu.vector_store %arg7[%548, %c0_227, %c0_228], %551 {strides = array<i32>} : memref<8x2x32xf32, #tpu.memory_space<vmem>>, vector<1x2x32xf32>,
    %552 = tpu.concatenate %547, %534, %545 in 1 : vector<2x16xf32>, vector<2x16xf32>, vector<2x16xf32> -> vector<2x48xf32>
    %553 = arith.index_cast %c4_i32 : i32 to index
    %c0_229 = arith.constant 0 : index
    %c0_230 = arith.constant 0 : index
    %554 = vector.load %arg8[%553, %c0_229, %c0_230] : memref<8x2x48xf32, #tpu.memory_space<vmem>>, vector<1x2x48xf32>
    %555 = vector.shape_cast %554 : vector<1x2x48xf32> to vector<2x48xf32>
    %556 = vector.shape_cast %552 : vector<2x48xf32> to vector<1x2x48xf32>
    tpu.vector_store %arg8[%553, %c0_229, %c0_230], %556 {strides = array<i32>} : memref<8x2x48xf32, #tpu.memory_space<vmem>>, vector<1x2x48xf32>,
    %c5_i32 = arith.constant 5 : i32
    %557 = arith.index_cast %c5_i32 : i32 to index
    %c0_231 = arith.constant 0 : index
    %c0_232 = arith.constant 0 : index
    %558 = vector.load %arg0[%557, %c0_231, %c0_232] : memref<8x2x53xf32, #tpu.memory_space<vmem>>, vector<1x2x53xf32>
    %559 = vector.shape_cast %558 : vector<1x2x53xf32> to vector<2x53xf32>
    %560 = vector.extract_strided_slice %559 {offsets = [0, 32], sizes = [2, 16], strides = [1, 1]} : vector<2x53xf32> to vector<2x16xf32>
    %561 = vector.extract_strided_slice %559 {offsets = [0, 52], sizes = [2, 1], strides = [1, 1]} : vector<2x53xf32> to vector<2x1xf32>
    %562 = vector.broadcast %561 : vector<2x1xf32> to vector<2x16xf32>
    %563 = arith.mulf %547, %562 : vector<2x16xf32>
    %cst_233 = arith.constant dense<0.000000e+00> : vector<2x32xf32>
    %564 = tpu.matmul %563, %0, %cst_233 {dimension_numbers = #tpu.dot_dimension_numbers<[1], [0], [0], [1], [0, 0, 1, 1], [], []>} : vector<2x16xf32>, vector<16x32xf32>, vector<2x32xf32> -> vector<2x32xf32>
    %565 = arith.index_cast %c5_i32 : i32 to index
    %c0_234 = arith.constant 0 : index
    %c0_235 = arith.constant 0 : index
    %566 = vector.load %arg5[%565, %c0_234, %c0_235] : memref<8x2x32xf32, #tpu.memory_space<vmem>>, vector<1x2x32xf32>
    %567 = vector.shape_cast %566 : vector<1x2x32xf32> to vector<2x32xf32>
    %568 = arith.addf %564, %567 : vector<2x32xf32>
    %cst_236 = arith.constant 0.000000e+00 : f32
    %569 = vector.broadcast %cst_236 : f32 to vector<2x32xf32>
    %570 = arith.maximumf %568, %569 : vector<2x32xf32>
    %cst_237 = arith.constant dense<0.000000e+00> : vector<2x96xf32>
    %571 = tpu.matmul %570, %1, %cst_237 {dimension_numbers = #tpu.dot_dimension_numbers<[1], [0], [0], [1], [0, 0, 1, 1], [], []>} : vector<2x32xf32>, vector<32x96xf32>, vector<2x96xf32> -> vector<2x96xf32>
    %572 = vector.broadcast %5 : vector<1x96xf32> to vector<2x96xf32>
    %573 = arith.addf %571, %572 : vector<2x96xf32>
    %cst_238 = arith.constant dense<0.000000e+00> : vector<2x96xf32>
    %574 = tpu.matmul %523, %2, %cst_238 {dimension_numbers = #tpu.dot_dimension_numbers<[1], [0], [0], [1], [0, 0, 1, 1], [], []>} : vector<2x32xf32>, vector<32x96xf32>, vector<2x96xf32> -> vector<2x96xf32>
    %575 = vector.extract_strided_slice %573 {offsets = [0, 0], sizes = [2, 32], strides = [1, 1]} : vector<2x96xf32> to vector<2x32xf32>
    %576 = vector.extract_strided_slice %574 {offsets = [0, 0], sizes = [2, 32], strides = [1, 1]} : vector<2x96xf32> to vector<2x32xf32>
    %577 = arith.addf %575, %576 : vector<2x32xf32>
    %cst_239 = arith.constant 5.000000e-01 : f32
    %578 = vector.broadcast %cst_239 : f32 to vector<2x32xf32>
    %579 = arith.mulf %578, %577 : vector<2x32xf32>
    %580 = math.tanh %579 : vector<2x32xf32>
    %cst_240 = arith.constant 5.000000e-01 : f32
    %581 = vector.broadcast %cst_240 : f32 to vector<2x32xf32>
    %582 = arith.mulf %581, %580 : vector<2x32xf32>
    %cst_241 = arith.constant 5.000000e-01 : f32
    %583 = vector.broadcast %cst_241 : f32 to vector<2x32xf32>
    %584 = arith.addf %582, %583 : vector<2x32xf32>
    %585 = vector.extract_strided_slice %573 {offsets = [0, 32], sizes = [2, 32], strides = [1, 1]} : vector<2x96xf32> to vector<2x32xf32>
    %586 = vector.extract_strided_slice %574 {offsets = [0, 32], sizes = [2, 32], strides = [1, 1]} : vector<2x96xf32> to vector<2x32xf32>
    %587 = arith.addf %585, %586 : vector<2x32xf32>
    %cst_242 = arith.constant 5.000000e-01 : f32
    %588 = vector.broadcast %cst_242 : f32 to vector<2x32xf32>
    %589 = arith.mulf %588, %587 : vector<2x32xf32>
    %590 = math.tanh %589 : vector<2x32xf32>
    %cst_243 = arith.constant 5.000000e-01 : f32
    %591 = vector.broadcast %cst_243 : f32 to vector<2x32xf32>
    %592 = arith.mulf %591, %590 : vector<2x32xf32>
    %cst_244 = arith.constant 5.000000e-01 : f32
    %593 = vector.broadcast %cst_244 : f32 to vector<2x32xf32>
    %594 = arith.addf %592, %593 : vector<2x32xf32>
    %595 = vector.extract_strided_slice %573 {offsets = [0, 64], sizes = [2, 32], strides = [1, 1]} : vector<2x96xf32> to vector<2x32xf32>
    %596 = vector.extract_strided_slice %574 {offsets = [0, 64], sizes = [2, 32], strides = [1, 1]} : vector<2x96xf32> to vector<2x32xf32>
    %597 = vector.broadcast %6 : vector<1x32xf32> to vector<2x32xf32>
    %598 = arith.addf %596, %597 : vector<2x32xf32>
    %599 = arith.mulf %584, %598 : vector<2x32xf32>
    %600 = arith.addf %595, %599 : vector<2x32xf32>
    %601 = math.tanh %600 : vector<2x32xf32>
    %cst_245 = arith.constant 1.000000e+00 : f32
    %602 = vector.broadcast %cst_245 : f32 to vector<2x32xf32>
    %603 = arith.subf %602, %594 : vector<2x32xf32>
    %604 = arith.mulf %603, %601 : vector<2x32xf32>
    %605 = arith.mulf %594, %523 : vector<2x32xf32>
    %606 = arith.addf %604, %605 : vector<2x32xf32>
    %cst_246 = arith.constant dense<0.000000e+00> : vector<2x32xf32>
    %607 = tpu.matmul %606, %3, %cst_246 {dimension_numbers = #tpu.dot_dimension_numbers<[1], [0], [0], [1], [0, 0, 1, 1], [], []>} : vector<2x32xf32>, vector<32x32xf32>, vector<2x32xf32> -> vector<2x32xf32>
    %608 = arith.index_cast %c5_i32 : i32 to index
    %c0_247 = arith.constant 0 : index
    %c0_248 = arith.constant 0 : index
    %609 = vector.load %arg6[%608, %c0_247, %c0_248] : memref<8x2x32xf32, #tpu.memory_space<vmem>>, vector<1x2x32xf32>
    %610 = vector.shape_cast %609 : vector<1x2x32xf32> to vector<2x32xf32>
    %611 = arith.addf %607, %610 : vector<2x32xf32>
    %cst_249 = arith.constant 0.000000e+00 : f32
    %612 = vector.broadcast %cst_249 : f32 to vector<2x32xf32>
    %613 = arith.maximumf %611, %612 : vector<2x32xf32>
    %cst_250 = arith.constant dense<0.000000e+00> : vector<2x32xf32>
    %614 = tpu.matmul %613, %4, %cst_250 {dimension_numbers = #tpu.dot_dimension_numbers<[1], [0], [0], [1], [0, 0, 1, 1], [], []>} : vector<2x32xf32>, vector<32x32xf32>, vector<2x32xf32> -> vector<2x32xf32>
    %615 = vector.broadcast %7 : vector<1x32xf32> to vector<2x32xf32>
    %616 = arith.addf %614, %615 : vector<2x32xf32>
    %617 = vector.extract_strided_slice %616 {offsets = [0, 0], sizes = [2, 16], strides = [1, 1]} : vector<2x32xf32> to vector<2x16xf32>
    %618 = vector.extract_strided_slice %616 {offsets = [0, 16], sizes = [2, 16], strides = [1, 1]} : vector<2x32xf32> to vector<2x16xf32>
    %cst_251 = arith.constant 0.000000e+00 : f32
    %619 = vector.broadcast %cst_251 : f32 to vector<2x16xf32>
    %620 = arith.maximumf %618, %619 : vector<2x16xf32>
    %621 = math.absf %618 : vector<2x16xf32>
    %cst_252 = arith.constant 0.000000e+00 : f32
    %622 = vector.broadcast %cst_252 : f32 to vector<2x16xf32>
    %623 = arith.subf %622, %621 : vector<2x16xf32>
    %624 = math.exp %623 : vector<2x16xf32>
    %625 = math.log1p %624 : vector<2x16xf32>
    %626 = arith.addf %620, %625 : vector<2x16xf32>
    %cst_253 = arith.constant 1.000000e-01 : f32
    %627 = vector.broadcast %cst_253 : f32 to vector<2x16xf32>
    %628 = arith.addf %626, %627 : vector<2x16xf32>
    %629 = arith.mulf %628, %560 : vector<2x16xf32>
    %630 = arith.addf %617, %629 : vector<2x16xf32>
    %631 = arith.index_cast %c5_i32 : i32 to index
    %c0_254 = arith.constant 0 : index
    %c0_255 = arith.constant 0 : index
    %632 = vector.load %arg7[%631, %c0_254, %c0_255] : memref<8x2x32xf32, #tpu.memory_space<vmem>>, vector<1x2x32xf32>
    %633 = vector.shape_cast %632 : vector<1x2x32xf32> to vector<2x32xf32>
    %634 = vector.shape_cast %606 : vector<2x32xf32> to vector<1x2x32xf32>
    tpu.vector_store %arg7[%631, %c0_254, %c0_255], %634 {strides = array<i32>} : memref<8x2x32xf32, #tpu.memory_space<vmem>>, vector<1x2x32xf32>,
    %635 = tpu.concatenate %630, %617, %628 in 1 : vector<2x16xf32>, vector<2x16xf32>, vector<2x16xf32> -> vector<2x48xf32>
    %636 = arith.index_cast %c5_i32 : i32 to index
    %c0_256 = arith.constant 0 : index
    %c0_257 = arith.constant 0 : index
    %637 = vector.load %arg8[%636, %c0_256, %c0_257] : memref<8x2x48xf32, #tpu.memory_space<vmem>>, vector<1x2x48xf32>
    %638 = vector.shape_cast %637 : vector<1x2x48xf32> to vector<2x48xf32>
    %639 = vector.shape_cast %635 : vector<2x48xf32> to vector<1x2x48xf32>
    tpu.vector_store %arg8[%636, %c0_256, %c0_257], %639 {strides = array<i32>} : memref<8x2x48xf32, #tpu.memory_space<vmem>>, vector<1x2x48xf32>,
    %c6_i32 = arith.constant 6 : i32
    %640 = arith.index_cast %c6_i32 : i32 to index
    %c0_258 = arith.constant 0 : index
    %c0_259 = arith.constant 0 : index
    %641 = vector.load %arg0[%640, %c0_258, %c0_259] : memref<8x2x53xf32, #tpu.memory_space<vmem>>, vector<1x2x53xf32>
    %642 = vector.shape_cast %641 : vector<1x2x53xf32> to vector<2x53xf32>
    %643 = vector.extract_strided_slice %642 {offsets = [0, 32], sizes = [2, 16], strides = [1, 1]} : vector<2x53xf32> to vector<2x16xf32>
    %644 = vector.extract_strided_slice %642 {offsets = [0, 52], sizes = [2, 1], strides = [1, 1]} : vector<2x53xf32> to vector<2x1xf32>
    %645 = vector.broadcast %644 : vector<2x1xf32> to vector<2x16xf32>
    %646 = arith.mulf %630, %645 : vector<2x16xf32>
    %cst_260 = arith.constant dense<0.000000e+00> : vector<2x32xf32>
    %647 = tpu.matmul %646, %0, %cst_260 {dimension_numbers = #tpu.dot_dimension_numbers<[1], [0], [0], [1], [0, 0, 1, 1], [], []>} : vector<2x16xf32>, vector<16x32xf32>, vector<2x32xf32> -> vector<2x32xf32>
    %648 = arith.index_cast %c6_i32 : i32 to index
    %c0_261 = arith.constant 0 : index
    %c0_262 = arith.constant 0 : index
    %649 = vector.load %arg5[%648, %c0_261, %c0_262] : memref<8x2x32xf32, #tpu.memory_space<vmem>>, vector<1x2x32xf32>
    %650 = vector.shape_cast %649 : vector<1x2x32xf32> to vector<2x32xf32>
    %651 = arith.addf %647, %650 : vector<2x32xf32>
    %cst_263 = arith.constant 0.000000e+00 : f32
    %652 = vector.broadcast %cst_263 : f32 to vector<2x32xf32>
    %653 = arith.maximumf %651, %652 : vector<2x32xf32>
    %cst_264 = arith.constant dense<0.000000e+00> : vector<2x96xf32>
    %654 = tpu.matmul %653, %1, %cst_264 {dimension_numbers = #tpu.dot_dimension_numbers<[1], [0], [0], [1], [0, 0, 1, 1], [], []>} : vector<2x32xf32>, vector<32x96xf32>, vector<2x96xf32> -> vector<2x96xf32>
    %655 = vector.broadcast %5 : vector<1x96xf32> to vector<2x96xf32>
    %656 = arith.addf %654, %655 : vector<2x96xf32>
    %cst_265 = arith.constant dense<0.000000e+00> : vector<2x96xf32>
    %657 = tpu.matmul %606, %2, %cst_265 {dimension_numbers = #tpu.dot_dimension_numbers<[1], [0], [0], [1], [0, 0, 1, 1], [], []>} : vector<2x32xf32>, vector<32x96xf32>, vector<2x96xf32> -> vector<2x96xf32>
    %658 = vector.extract_strided_slice %656 {offsets = [0, 0], sizes = [2, 32], strides = [1, 1]} : vector<2x96xf32> to vector<2x32xf32>
    %659 = vector.extract_strided_slice %657 {offsets = [0, 0], sizes = [2, 32], strides = [1, 1]} : vector<2x96xf32> to vector<2x32xf32>
    %660 = arith.addf %658, %659 : vector<2x32xf32>
    %cst_266 = arith.constant 5.000000e-01 : f32
    %661 = vector.broadcast %cst_266 : f32 to vector<2x32xf32>
    %662 = arith.mulf %661, %660 : vector<2x32xf32>
    %663 = math.tanh %662 : vector<2x32xf32>
    %cst_267 = arith.constant 5.000000e-01 : f32
    %664 = vector.broadcast %cst_267 : f32 to vector<2x32xf32>
    %665 = arith.mulf %664, %663 : vector<2x32xf32>
    %cst_268 = arith.constant 5.000000e-01 : f32
    %666 = vector.broadcast %cst_268 : f32 to vector<2x32xf32>
    %667 = arith.addf %665, %666 : vector<2x32xf32>
    %668 = vector.extract_strided_slice %656 {offsets = [0, 32], sizes = [2, 32], strides = [1, 1]} : vector<2x96xf32> to vector<2x32xf32>
    %669 = vector.extract_strided_slice %657 {offsets = [0, 32], sizes = [2, 32], strides = [1, 1]} : vector<2x96xf32> to vector<2x32xf32>
    %670 = arith.addf %668, %669 : vector<2x32xf32>
    %cst_269 = arith.constant 5.000000e-01 : f32
    %671 = vector.broadcast %cst_269 : f32 to vector<2x32xf32>
    %672 = arith.mulf %671, %670 : vector<2x32xf32>
    %673 = math.tanh %672 : vector<2x32xf32>
    %cst_270 = arith.constant 5.000000e-01 : f32
    %674 = vector.broadcast %cst_270 : f32 to vector<2x32xf32>
    %675 = arith.mulf %674, %673 : vector<2x32xf32>
    %cst_271 = arith.constant 5.000000e-01 : f32
    %676 = vector.broadcast %cst_271 : f32 to vector<2x32xf32>
    %677 = arith.addf %675, %676 : vector<2x32xf32>
    %678 = vector.extract_strided_slice %656 {offsets = [0, 64], sizes = [2, 32], strides = [1, 1]} : vector<2x96xf32> to vector<2x32xf32>
    %679 = vector.extract_strided_slice %657 {offsets = [0, 64], sizes = [2, 32], strides = [1, 1]} : vector<2x96xf32> to vector<2x32xf32>
    %680 = vector.broadcast %6 : vector<1x32xf32> to vector<2x32xf32>
    %681 = arith.addf %679, %680 : vector<2x32xf32>
    %682 = arith.mulf %667, %681 : vector<2x32xf32>
    %683 = arith.addf %678, %682 : vector<2x32xf32>
    %684 = math.tanh %683 : vector<2x32xf32>
    %cst_272 = arith.constant 1.000000e+00 : f32
    %685 = vector.broadcast %cst_272 : f32 to vector<2x32xf32>
    %686 = arith.subf %685, %677 : vector<2x32xf32>
    %687 = arith.mulf %686, %684 : vector<2x32xf32>
    %688 = arith.mulf %677, %606 : vector<2x32xf32>
    %689 = arith.addf %687, %688 : vector<2x32xf32>
    %cst_273 = arith.constant dense<0.000000e+00> : vector<2x32xf32>
    %690 = tpu.matmul %689, %3, %cst_273 {dimension_numbers = #tpu.dot_dimension_numbers<[1], [0], [0], [1], [0, 0, 1, 1], [], []>} : vector<2x32xf32>, vector<32x32xf32>, vector<2x32xf32> -> vector<2x32xf32>
    %691 = arith.index_cast %c6_i32 : i32 to index
    %c0_274 = arith.constant 0 : index
    %c0_275 = arith.constant 0 : index
    %692 = vector.load %arg6[%691, %c0_274, %c0_275] : memref<8x2x32xf32, #tpu.memory_space<vmem>>, vector<1x2x32xf32>
    %693 = vector.shape_cast %692 : vector<1x2x32xf32> to vector<2x32xf32>
    %694 = arith.addf %690, %693 : vector<2x32xf32>
    %cst_276 = arith.constant 0.000000e+00 : f32
    %695 = vector.broadcast %cst_276 : f32 to vector<2x32xf32>
    %696 = arith.maximumf %694, %695 : vector<2x32xf32>
    %cst_277 = arith.constant dense<0.000000e+00> : vector<2x32xf32>
    %697 = tpu.matmul %696, %4, %cst_277 {dimension_numbers = #tpu.dot_dimension_numbers<[1], [0], [0], [1], [0, 0, 1, 1], [], []>} : vector<2x32xf32>, vector<32x32xf32>, vector<2x32xf32> -> vector<2x32xf32>
    %698 = vector.broadcast %7 : vector<1x32xf32> to vector<2x32xf32>
    %699 = arith.addf %697, %698 : vector<2x32xf32>
    %700 = vector.extract_strided_slice %699 {offsets = [0, 0], sizes = [2, 16], strides = [1, 1]} : vector<2x32xf32> to vector<2x16xf32>
    %701 = vector.extract_strided_slice %699 {offsets = [0, 16], sizes = [2, 16], strides = [1, 1]} : vector<2x32xf32> to vector<2x16xf32>
    %cst_278 = arith.constant 0.000000e+00 : f32
    %702 = vector.broadcast %cst_278 : f32 to vector<2x16xf32>
    %703 = arith.maximumf %701, %702 : vector<2x16xf32>
    %704 = math.absf %701 : vector<2x16xf32>
    %cst_279 = arith.constant 0.000000e+00 : f32
    %705 = vector.broadcast %cst_279 : f32 to vector<2x16xf32>
    %706 = arith.subf %705, %704 : vector<2x16xf32>
    %707 = math.exp %706 : vector<2x16xf32>
    %708 = math.log1p %707 : vector<2x16xf32>
    %709 = arith.addf %703, %708 : vector<2x16xf32>
    %cst_280 = arith.constant 1.000000e-01 : f32
    %710 = vector.broadcast %cst_280 : f32 to vector<2x16xf32>
    %711 = arith.addf %709, %710 : vector<2x16xf32>
    %712 = arith.mulf %711, %643 : vector<2x16xf32>
    %713 = arith.addf %700, %712 : vector<2x16xf32>
    %714 = arith.index_cast %c6_i32 : i32 to index
    %c0_281 = arith.constant 0 : index
    %c0_282 = arith.constant 0 : index
    %715 = vector.load %arg7[%714, %c0_281, %c0_282] : memref<8x2x32xf32, #tpu.memory_space<vmem>>, vector<1x2x32xf32>
    %716 = vector.shape_cast %715 : vector<1x2x32xf32> to vector<2x32xf32>
    %717 = vector.shape_cast %689 : vector<2x32xf32> to vector<1x2x32xf32>
    tpu.vector_store %arg7[%714, %c0_281, %c0_282], %717 {strides = array<i32>} : memref<8x2x32xf32, #tpu.memory_space<vmem>>, vector<1x2x32xf32>,
    %718 = tpu.concatenate %713, %700, %711 in 1 : vector<2x16xf32>, vector<2x16xf32>, vector<2x16xf32> -> vector<2x48xf32>
    %719 = arith.index_cast %c6_i32 : i32 to index
    %c0_283 = arith.constant 0 : index
    %c0_284 = arith.constant 0 : index
    %720 = vector.load %arg8[%719, %c0_283, %c0_284] : memref<8x2x48xf32, #tpu.memory_space<vmem>>, vector<1x2x48xf32>
    %721 = vector.shape_cast %720 : vector<1x2x48xf32> to vector<2x48xf32>
    %722 = vector.shape_cast %718 : vector<2x48xf32> to vector<1x2x48xf32>
    tpu.vector_store %arg8[%719, %c0_283, %c0_284], %722 {strides = array<i32>} : memref<8x2x48xf32, #tpu.memory_space<vmem>>, vector<1x2x48xf32>,
    %c7_i32 = arith.constant 7 : i32
    %723 = arith.index_cast %c7_i32 : i32 to index
    %c0_285 = arith.constant 0 : index
    %c0_286 = arith.constant 0 : index
    %724 = vector.load %arg0[%723, %c0_285, %c0_286] : memref<8x2x53xf32, #tpu.memory_space<vmem>>, vector<1x2x53xf32>
    %725 = vector.shape_cast %724 : vector<1x2x53xf32> to vector<2x53xf32>
    %726 = vector.extract_strided_slice %725 {offsets = [0, 32], sizes = [2, 16], strides = [1, 1]} : vector<2x53xf32> to vector<2x16xf32>
    %727 = vector.extract_strided_slice %725 {offsets = [0, 52], sizes = [2, 1], strides = [1, 1]} : vector<2x53xf32> to vector<2x1xf32>
    %728 = vector.broadcast %727 : vector<2x1xf32> to vector<2x16xf32>
    %729 = arith.mulf %713, %728 : vector<2x16xf32>
    %cst_287 = arith.constant dense<0.000000e+00> : vector<2x32xf32>
    %730 = tpu.matmul %729, %0, %cst_287 {dimension_numbers = #tpu.dot_dimension_numbers<[1], [0], [0], [1], [0, 0, 1, 1], [], []>} : vector<2x16xf32>, vector<16x32xf32>, vector<2x32xf32> -> vector<2x32xf32>
    %731 = arith.index_cast %c7_i32 : i32 to index
    %c0_288 = arith.constant 0 : index
    %c0_289 = arith.constant 0 : index
    %732 = vector.load %arg5[%731, %c0_288, %c0_289] : memref<8x2x32xf32, #tpu.memory_space<vmem>>, vector<1x2x32xf32>
    %733 = vector.shape_cast %732 : vector<1x2x32xf32> to vector<2x32xf32>
    %734 = arith.addf %730, %733 : vector<2x32xf32>
    %cst_290 = arith.constant 0.000000e+00 : f32
    %735 = vector.broadcast %cst_290 : f32 to vector<2x32xf32>
    %736 = arith.maximumf %734, %735 : vector<2x32xf32>
    %cst_291 = arith.constant dense<0.000000e+00> : vector<2x96xf32>
    %737 = tpu.matmul %736, %1, %cst_291 {dimension_numbers = #tpu.dot_dimension_numbers<[1], [0], [0], [1], [0, 0, 1, 1], [], []>} : vector<2x32xf32>, vector<32x96xf32>, vector<2x96xf32> -> vector<2x96xf32>
    %738 = vector.broadcast %5 : vector<1x96xf32> to vector<2x96xf32>
    %739 = arith.addf %737, %738 : vector<2x96xf32>
    %cst_292 = arith.constant dense<0.000000e+00> : vector<2x96xf32>
    %740 = tpu.matmul %689, %2, %cst_292 {dimension_numbers = #tpu.dot_dimension_numbers<[1], [0], [0], [1], [0, 0, 1, 1], [], []>} : vector<2x32xf32>, vector<32x96xf32>, vector<2x96xf32> -> vector<2x96xf32>
    %741 = vector.extract_strided_slice %739 {offsets = [0, 0], sizes = [2, 32], strides = [1, 1]} : vector<2x96xf32> to vector<2x32xf32>
    %742 = vector.extract_strided_slice %740 {offsets = [0, 0], sizes = [2, 32], strides = [1, 1]} : vector<2x96xf32> to vector<2x32xf32>
    %743 = arith.addf %741, %742 : vector<2x32xf32>
    %cst_293 = arith.constant 5.000000e-01 : f32
    %744 = vector.broadcast %cst_293 : f32 to vector<2x32xf32>
    %745 = arith.mulf %744, %743 : vector<2x32xf32>
    %746 = math.tanh %745 : vector<2x32xf32>
    %cst_294 = arith.constant 5.000000e-01 : f32
    %747 = vector.broadcast %cst_294 : f32 to vector<2x32xf32>
    %748 = arith.mulf %747, %746 : vector<2x32xf32>
    %cst_295 = arith.constant 5.000000e-01 : f32
    %749 = vector.broadcast %cst_295 : f32 to vector<2x32xf32>
    %750 = arith.addf %748, %749 : vector<2x32xf32>
    %751 = vector.extract_strided_slice %739 {offsets = [0, 32], sizes = [2, 32], strides = [1, 1]} : vector<2x96xf32> to vector<2x32xf32>
    %752 = vector.extract_strided_slice %740 {offsets = [0, 32], sizes = [2, 32], strides = [1, 1]} : vector<2x96xf32> to vector<2x32xf32>
    %753 = arith.addf %751, %752 : vector<2x32xf32>
    %cst_296 = arith.constant 5.000000e-01 : f32
    %754 = vector.broadcast %cst_296 : f32 to vector<2x32xf32>
    %755 = arith.mulf %754, %753 : vector<2x32xf32>
    %756 = math.tanh %755 : vector<2x32xf32>
    %cst_297 = arith.constant 5.000000e-01 : f32
    %757 = vector.broadcast %cst_297 : f32 to vector<2x32xf32>
    %758 = arith.mulf %757, %756 : vector<2x32xf32>
    %cst_298 = arith.constant 5.000000e-01 : f32
    %759 = vector.broadcast %cst_298 : f32 to vector<2x32xf32>
    %760 = arith.addf %758, %759 : vector<2x32xf32>
    %761 = vector.extract_strided_slice %739 {offsets = [0, 64], sizes = [2, 32], strides = [1, 1]} : vector<2x96xf32> to vector<2x32xf32>
    %762 = vector.extract_strided_slice %740 {offsets = [0, 64], sizes = [2, 32], strides = [1, 1]} : vector<2x96xf32> to vector<2x32xf32>
    %763 = vector.broadcast %6 : vector<1x32xf32> to vector<2x32xf32>
    %764 = arith.addf %762, %763 : vector<2x32xf32>
    %765 = arith.mulf %750, %764 : vector<2x32xf32>
    %766 = arith.addf %761, %765 : vector<2x32xf32>
    %767 = math.tanh %766 : vector<2x32xf32>
    %cst_299 = arith.constant 1.000000e+00 : f32
    %768 = vector.broadcast %cst_299 : f32 to vector<2x32xf32>
    %769 = arith.subf %768, %760 : vector<2x32xf32>
    %770 = arith.mulf %769, %767 : vector<2x32xf32>
    %771 = arith.mulf %760, %689 : vector<2x32xf32>
    %772 = arith.addf %770, %771 : vector<2x32xf32>
    %cst_300 = arith.constant dense<0.000000e+00> : vector<2x32xf32>
    %773 = tpu.matmul %772, %3, %cst_300 {dimension_numbers = #tpu.dot_dimension_numbers<[1], [0], [0], [1], [0, 0, 1, 1], [], []>} : vector<2x32xf32>, vector<32x32xf32>, vector<2x32xf32> -> vector<2x32xf32>
    %774 = arith.index_cast %c7_i32 : i32 to index
    %c0_301 = arith.constant 0 : index
    %c0_302 = arith.constant 0 : index
    %775 = vector.load %arg6[%774, %c0_301, %c0_302] : memref<8x2x32xf32, #tpu.memory_space<vmem>>, vector<1x2x32xf32>
    %776 = vector.shape_cast %775 : vector<1x2x32xf32> to vector<2x32xf32>
    %777 = arith.addf %773, %776 : vector<2x32xf32>
    %cst_303 = arith.constant 0.000000e+00 : f32
    %778 = vector.broadcast %cst_303 : f32 to vector<2x32xf32>
    %779 = arith.maximumf %777, %778 : vector<2x32xf32>
    %cst_304 = arith.constant dense<0.000000e+00> : vector<2x32xf32>
    %780 = tpu.matmul %779, %4, %cst_304 {dimension_numbers = #tpu.dot_dimension_numbers<[1], [0], [0], [1], [0, 0, 1, 1], [], []>} : vector<2x32xf32>, vector<32x32xf32>, vector<2x32xf32> -> vector<2x32xf32>
    %781 = vector.broadcast %7 : vector<1x32xf32> to vector<2x32xf32>
    %782 = arith.addf %780, %781 : vector<2x32xf32>
    %783 = vector.extract_strided_slice %782 {offsets = [0, 0], sizes = [2, 16], strides = [1, 1]} : vector<2x32xf32> to vector<2x16xf32>
    %784 = vector.extract_strided_slice %782 {offsets = [0, 16], sizes = [2, 16], strides = [1, 1]} : vector<2x32xf32> to vector<2x16xf32>
    %cst_305 = arith.constant 0.000000e+00 : f32
    %785 = vector.broadcast %cst_305 : f32 to vector<2x16xf32>
    %786 = arith.maximumf %784, %785 : vector<2x16xf32>
    %787 = math.absf %784 : vector<2x16xf32>
    %cst_306 = arith.constant 0.000000e+00 : f32
    %788 = vector.broadcast %cst_306 : f32 to vector<2x16xf32>
    %789 = arith.subf %788, %787 : vector<2x16xf32>
    %790 = math.exp %789 : vector<2x16xf32>
    %791 = math.log1p %790 : vector<2x16xf32>
    %792 = arith.addf %786, %791 : vector<2x16xf32>
    %cst_307 = arith.constant 1.000000e-01 : f32
    %793 = vector.broadcast %cst_307 : f32 to vector<2x16xf32>
    %794 = arith.addf %792, %793 : vector<2x16xf32>
    %795 = arith.mulf %794, %726 : vector<2x16xf32>
    %796 = arith.addf %783, %795 : vector<2x16xf32>
    %797 = arith.index_cast %c7_i32 : i32 to index
    %c0_308 = arith.constant 0 : index
    %c0_309 = arith.constant 0 : index
    %798 = vector.load %arg7[%797, %c0_308, %c0_309] : memref<8x2x32xf32, #tpu.memory_space<vmem>>, vector<1x2x32xf32>
    %799 = vector.shape_cast %798 : vector<1x2x32xf32> to vector<2x32xf32>
    %800 = vector.shape_cast %772 : vector<2x32xf32> to vector<1x2x32xf32>
    tpu.vector_store %arg7[%797, %c0_308, %c0_309], %800 {strides = array<i32>} : memref<8x2x32xf32, #tpu.memory_space<vmem>>, vector<1x2x32xf32>,
    %801 = tpu.concatenate %796, %783, %794 in 1 : vector<2x16xf32>, vector<2x16xf32>, vector<2x16xf32> -> vector<2x48xf32>
    %802 = arith.index_cast %c7_i32 : i32 to index
    %c0_310 = arith.constant 0 : index
    %c0_311 = arith.constant 0 : index
    %803 = vector.load %arg8[%802, %c0_310, %c0_311] : memref<8x2x48xf32, #tpu.memory_space<vmem>>, vector<1x2x48xf32>
    %804 = vector.shape_cast %803 : vector<1x2x48xf32> to vector<2x48xf32>
    %805 = vector.shape_cast %801 : vector<2x48xf32> to vector<1x2x48xf32>
    tpu.vector_store %arg8[%802, %c0_310, %c0_311], %805 {strides = array<i32>} : memref<8x2x48xf32, #tpu.memory_space<vmem>>, vector<1x2x48xf32>,
    %c8_i32 = arith.constant 8 : i32
    %c64 = arith.constant 64 : index
    %c0_312 = arith.constant 0 : index
    %806 = vector.load %arg3[%c64, %c0_312] : memref<240x128xf32, #tpu.memory_space<vmem>>, vector<32x32xf32>
    %c235 = arith.constant 235 : index
    %c0_313 = arith.constant 0 : index
    %807 = vector.load %arg3[%c235, %c0_313] : memref<240x128xf32, #tpu.memory_space<vmem>>, vector<1x32xf32>
    %c128 = arith.constant 128 : index
    %c0_314 = arith.constant 0 : index
    %808 = vector.load %arg3[%c128, %c0_314] : memref<240x128xf32, #tpu.memory_space<vmem>>, vector<32x32xf32>
    %c237 = arith.constant 237 : index
    %c0_315 = arith.constant 0 : index
    %809 = vector.load %arg3[%c237, %c0_315] : memref<240x128xf32, #tpu.memory_space<vmem>>, vector<1x32xf32>
    %c0_316 = arith.constant 0 : index
    %c0_317 = arith.constant 0 : index
    %c0_318 = arith.constant 0 : index
    %810 = vector.load %arg7[%c0_316, %c0_317, %c0_318] : memref<8x2x32xf32, #tpu.memory_space<vmem>>, vector<1x2x32xf32>
    %811 = vector.shape_cast %810 : vector<1x2x32xf32> to vector<2x32xf32>
    %c0_319 = arith.constant 0 : index
    %c0_320 = arith.constant 0 : index
    %c0_321 = arith.constant 0 : index
    %812 = vector.load %arg0[%c0_319, %c0_320, %c0_321] : memref<8x2x53xf32, #tpu.memory_space<vmem>>, vector<1x2x53xf32>
    %813 = vector.shape_cast %812 : vector<1x2x53xf32> to vector<2x53xf32>
    %814 = vector.extract_strided_slice %813 {offsets = [0, 16], sizes = [2, 16], strides = [1, 1]} : vector<2x53xf32> to vector<2x16xf32>
    %cst_322 = arith.constant dense<0.000000e+00> : vector<2x32xf32>
    %815 = tpu.matmul %811, %806, %cst_322 {dimension_numbers = #tpu.dot_dimension_numbers<[1], [0], [0], [1], [0, 0, 1, 1], [], []>} : vector<2x32xf32>, vector<32x32xf32>, vector<2x32xf32> -> vector<2x32xf32>
    %816 = vector.broadcast %807 : vector<1x32xf32> to vector<2x32xf32>
    %817 = arith.addf %815, %816 : vector<2x32xf32>
    %cst_323 = arith.constant 0.000000e+00 : f32
    %818 = vector.broadcast %cst_323 : f32 to vector<2x32xf32>
    %819 = arith.maximumf %817, %818 : vector<2x32xf32>
    %cst_324 = arith.constant dense<0.000000e+00> : vector<2x32xf32>
    %820 = tpu.matmul %819, %808, %cst_324 {dimension_numbers = #tpu.dot_dimension_numbers<[1], [0], [0], [1], [0, 0, 1, 1], [], []>} : vector<2x32xf32>, vector<32x32xf32>, vector<2x32xf32> -> vector<2x32xf32>
    %821 = vector.broadcast %809 : vector<1x32xf32> to vector<2x32xf32>
    %822 = arith.addf %820, %821 : vector<2x32xf32>
    %823 = vector.extract_strided_slice %822 {offsets = [0, 0], sizes = [2, 16], strides = [1, 1]} : vector<2x32xf32> to vector<2x16xf32>
    %824 = vector.extract_strided_slice %822 {offsets = [0, 16], sizes = [2, 16], strides = [1, 1]} : vector<2x32xf32> to vector<2x16xf32>
    %cst_325 = arith.constant 0.000000e+00 : f32
    %825 = vector.broadcast %cst_325 : f32 to vector<2x16xf32>
    %826 = arith.maximumf %824, %825 : vector<2x16xf32>
    %827 = math.absf %824 : vector<2x16xf32>
    %cst_326 = arith.constant 0.000000e+00 : f32
    %828 = vector.broadcast %cst_326 : f32 to vector<2x16xf32>
    %829 = arith.subf %828, %827 : vector<2x16xf32>
    %830 = math.exp %829 : vector<2x16xf32>
    %831 = math.log1p %830 : vector<2x16xf32>
    %832 = arith.addf %826, %831 : vector<2x16xf32>
    %cst_327 = arith.constant 1.000000e-01 : f32
    %833 = vector.broadcast %cst_327 : f32 to vector<2x16xf32>
    %834 = arith.addf %832, %833 : vector<2x16xf32>
    %835 = arith.mulf %834, %814 : vector<2x16xf32>
    %836 = arith.addf %823, %835 : vector<2x16xf32>
    %c0_328 = arith.constant 0 : index
    %c0_329 = arith.constant 0 : index
    %c0_330 = arith.constant 0 : index
    %837 = vector.load %arg8[%c0_328, %c0_329, %c0_330] : memref<8x2x48xf32, #tpu.memory_space<vmem>>, vector<1x2x48xf32>
    %838 = vector.shape_cast %837 : vector<1x2x48xf32> to vector<2x48xf32>
    %839 = tpu.concatenate %811, %836, %823, %834, %838 in 1 : vector<2x32xf32>, vector<2x16xf32>, vector<2x16xf32>, vector<2x16xf32>, vector<2x48xf32> -> vector<2x128xf32>
    %c0_331 = arith.constant 0 : index
    %c0_332 = arith.constant 0 : index
    %c0_333 = arith.constant 0 : index
    %840 = vector.load %arg4[%c0_331, %c0_332, %c0_333] : memref<8x2x128xf32, #tpu.memory_space<vmem>>, vector<1x2x128xf32>
    %841 = vector.shape_cast %840 : vector<1x2x128xf32> to vector<2x128xf32>
    %842 = vector.shape_cast %839 : vector<2x128xf32> to vector<1x2x128xf32>
    tpu.vector_store %arg4[%c0_331, %c0_332, %c0_333], %842 {strides = array<i32>} : memref<8x2x128xf32, #tpu.memory_space<vmem>>, vector<1x2x128xf32>,
    %c1_334 = arith.constant 1 : index
    %c0_335 = arith.constant 0 : index
    %c0_336 = arith.constant 0 : index
    %843 = vector.load %arg7[%c1_334, %c0_335, %c0_336] : memref<8x2x32xf32, #tpu.memory_space<vmem>>, vector<1x2x32xf32>
    %844 = vector.shape_cast %843 : vector<1x2x32xf32> to vector<2x32xf32>
    %c1_337 = arith.constant 1 : index
    %c0_338 = arith.constant 0 : index
    %c0_339 = arith.constant 0 : index
    %845 = vector.load %arg0[%c1_337, %c0_338, %c0_339] : memref<8x2x53xf32, #tpu.memory_space<vmem>>, vector<1x2x53xf32>
    %846 = vector.shape_cast %845 : vector<1x2x53xf32> to vector<2x53xf32>
    %847 = vector.extract_strided_slice %846 {offsets = [0, 16], sizes = [2, 16], strides = [1, 1]} : vector<2x53xf32> to vector<2x16xf32>
    %cst_340 = arith.constant dense<0.000000e+00> : vector<2x32xf32>
    %848 = tpu.matmul %844, %806, %cst_340 {dimension_numbers = #tpu.dot_dimension_numbers<[1], [0], [0], [1], [0, 0, 1, 1], [], []>} : vector<2x32xf32>, vector<32x32xf32>, vector<2x32xf32> -> vector<2x32xf32>
    %849 = vector.broadcast %807 : vector<1x32xf32> to vector<2x32xf32>
    %850 = arith.addf %848, %849 : vector<2x32xf32>
    %cst_341 = arith.constant 0.000000e+00 : f32
    %851 = vector.broadcast %cst_341 : f32 to vector<2x32xf32>
    %852 = arith.maximumf %850, %851 : vector<2x32xf32>
    %cst_342 = arith.constant dense<0.000000e+00> : vector<2x32xf32>
    %853 = tpu.matmul %852, %808, %cst_342 {dimension_numbers = #tpu.dot_dimension_numbers<[1], [0], [0], [1], [0, 0, 1, 1], [], []>} : vector<2x32xf32>, vector<32x32xf32>, vector<2x32xf32> -> vector<2x32xf32>
    %854 = vector.broadcast %809 : vector<1x32xf32> to vector<2x32xf32>
    %855 = arith.addf %853, %854 : vector<2x32xf32>
    %856 = vector.extract_strided_slice %855 {offsets = [0, 0], sizes = [2, 16], strides = [1, 1]} : vector<2x32xf32> to vector<2x16xf32>
    %857 = vector.extract_strided_slice %855 {offsets = [0, 16], sizes = [2, 16], strides = [1, 1]} : vector<2x32xf32> to vector<2x16xf32>
    %cst_343 = arith.constant 0.000000e+00 : f32
    %858 = vector.broadcast %cst_343 : f32 to vector<2x16xf32>
    %859 = arith.maximumf %857, %858 : vector<2x16xf32>
    %860 = math.absf %857 : vector<2x16xf32>
    %cst_344 = arith.constant 0.000000e+00 : f32
    %861 = vector.broadcast %cst_344 : f32 to vector<2x16xf32>
    %862 = arith.subf %861, %860 : vector<2x16xf32>
    %863 = math.exp %862 : vector<2x16xf32>
    %864 = math.log1p %863 : vector<2x16xf32>
    %865 = arith.addf %859, %864 : vector<2x16xf32>
    %cst_345 = arith.constant 1.000000e-01 : f32
    %866 = vector.broadcast %cst_345 : f32 to vector<2x16xf32>
    %867 = arith.addf %865, %866 : vector<2x16xf32>
    %868 = arith.mulf %867, %847 : vector<2x16xf32>
    %869 = arith.addf %856, %868 : vector<2x16xf32>
    %c1_346 = arith.constant 1 : index
    %c0_347 = arith.constant 0 : index
    %c0_348 = arith.constant 0 : index
    %870 = vector.load %arg8[%c1_346, %c0_347, %c0_348] : memref<8x2x48xf32, #tpu.memory_space<vmem>>, vector<1x2x48xf32>
    %871 = vector.shape_cast %870 : vector<1x2x48xf32> to vector<2x48xf32>
    %872 = tpu.concatenate %844, %869, %856, %867, %871 in 1 : vector<2x32xf32>, vector<2x16xf32>, vector<2x16xf32>, vector<2x16xf32>, vector<2x48xf32> -> vector<2x128xf32>
    %c1_349 = arith.constant 1 : index
    %c0_350 = arith.constant 0 : index
    %c0_351 = arith.constant 0 : index
    %873 = vector.load %arg4[%c1_349, %c0_350, %c0_351] : memref<8x2x128xf32, #tpu.memory_space<vmem>>, vector<1x2x128xf32>
    %874 = vector.shape_cast %873 : vector<1x2x128xf32> to vector<2x128xf32>
    %875 = vector.shape_cast %872 : vector<2x128xf32> to vector<1x2x128xf32>
    tpu.vector_store %arg4[%c1_349, %c0_350, %c0_351], %875 {strides = array<i32>} : memref<8x2x128xf32, #tpu.memory_space<vmem>>, vector<1x2x128xf32>,
    %c2_352 = arith.constant 2 : index
    %c0_353 = arith.constant 0 : index
    %c0_354 = arith.constant 0 : index
    %876 = vector.load %arg7[%c2_352, %c0_353, %c0_354] : memref<8x2x32xf32, #tpu.memory_space<vmem>>, vector<1x2x32xf32>
    %877 = vector.shape_cast %876 : vector<1x2x32xf32> to vector<2x32xf32>
    %c2_355 = arith.constant 2 : index
    %c0_356 = arith.constant 0 : index
    %c0_357 = arith.constant 0 : index
    %878 = vector.load %arg0[%c2_355, %c0_356, %c0_357] : memref<8x2x53xf32, #tpu.memory_space<vmem>>, vector<1x2x53xf32>
    %879 = vector.shape_cast %878 : vector<1x2x53xf32> to vector<2x53xf32>
    %880 = vector.extract_strided_slice %879 {offsets = [0, 16], sizes = [2, 16], strides = [1, 1]} : vector<2x53xf32> to vector<2x16xf32>
    %cst_358 = arith.constant dense<0.000000e+00> : vector<2x32xf32>
    %881 = tpu.matmul %877, %806, %cst_358 {dimension_numbers = #tpu.dot_dimension_numbers<[1], [0], [0], [1], [0, 0, 1, 1], [], []>} : vector<2x32xf32>, vector<32x32xf32>, vector<2x32xf32> -> vector<2x32xf32>
    %882 = vector.broadcast %807 : vector<1x32xf32> to vector<2x32xf32>
    %883 = arith.addf %881, %882 : vector<2x32xf32>
    %cst_359 = arith.constant 0.000000e+00 : f32
    %884 = vector.broadcast %cst_359 : f32 to vector<2x32xf32>
    %885 = arith.maximumf %883, %884 : vector<2x32xf32>
    %cst_360 = arith.constant dense<0.000000e+00> : vector<2x32xf32>
    %886 = tpu.matmul %885, %808, %cst_360 {dimension_numbers = #tpu.dot_dimension_numbers<[1], [0], [0], [1], [0, 0, 1, 1], [], []>} : vector<2x32xf32>, vector<32x32xf32>, vector<2x32xf32> -> vector<2x32xf32>
    %887 = vector.broadcast %809 : vector<1x32xf32> to vector<2x32xf32>
    %888 = arith.addf %886, %887 : vector<2x32xf32>
    %889 = vector.extract_strided_slice %888 {offsets = [0, 0], sizes = [2, 16], strides = [1, 1]} : vector<2x32xf32> to vector<2x16xf32>
    %890 = vector.extract_strided_slice %888 {offsets = [0, 16], sizes = [2, 16], strides = [1, 1]} : vector<2x32xf32> to vector<2x16xf32>
    %cst_361 = arith.constant 0.000000e+00 : f32
    %891 = vector.broadcast %cst_361 : f32 to vector<2x16xf32>
    %892 = arith.maximumf %890, %891 : vector<2x16xf32>
    %893 = math.absf %890 : vector<2x16xf32>
    %cst_362 = arith.constant 0.000000e+00 : f32
    %894 = vector.broadcast %cst_362 : f32 to vector<2x16xf32>
    %895 = arith.subf %894, %893 : vector<2x16xf32>
    %896 = math.exp %895 : vector<2x16xf32>
    %897 = math.log1p %896 : vector<2x16xf32>
    %898 = arith.addf %892, %897 : vector<2x16xf32>
    %cst_363 = arith.constant 1.000000e-01 : f32
    %899 = vector.broadcast %cst_363 : f32 to vector<2x16xf32>
    %900 = arith.addf %898, %899 : vector<2x16xf32>
    %901 = arith.mulf %900, %880 : vector<2x16xf32>
    %902 = arith.addf %889, %901 : vector<2x16xf32>
    %c2_364 = arith.constant 2 : index
    %c0_365 = arith.constant 0 : index
    %c0_366 = arith.constant 0 : index
    %903 = vector.load %arg8[%c2_364, %c0_365, %c0_366] : memref<8x2x48xf32, #tpu.memory_space<vmem>>, vector<1x2x48xf32>
    %904 = vector.shape_cast %903 : vector<1x2x48xf32> to vector<2x48xf32>
    %905 = tpu.concatenate %877, %902, %889, %900, %904 in 1 : vector<2x32xf32>, vector<2x16xf32>, vector<2x16xf32>, vector<2x16xf32>, vector<2x48xf32> -> vector<2x128xf32>
    %c2_367 = arith.constant 2 : index
    %c0_368 = arith.constant 0 : index
    %c0_369 = arith.constant 0 : index
    %906 = vector.load %arg4[%c2_367, %c0_368, %c0_369] : memref<8x2x128xf32, #tpu.memory_space<vmem>>, vector<1x2x128xf32>
    %907 = vector.shape_cast %906 : vector<1x2x128xf32> to vector<2x128xf32>
    %908 = vector.shape_cast %905 : vector<2x128xf32> to vector<1x2x128xf32>
    tpu.vector_store %arg4[%c2_367, %c0_368, %c0_369], %908 {strides = array<i32>} : memref<8x2x128xf32, #tpu.memory_space<vmem>>, vector<1x2x128xf32>,
    %c3_370 = arith.constant 3 : index
    %c0_371 = arith.constant 0 : index
    %c0_372 = arith.constant 0 : index
    %909 = vector.load %arg7[%c3_370, %c0_371, %c0_372] : memref<8x2x32xf32, #tpu.memory_space<vmem>>, vector<1x2x32xf32>
    %910 = vector.shape_cast %909 : vector<1x2x32xf32> to vector<2x32xf32>
    %c3_373 = arith.constant 3 : index
    %c0_374 = arith.constant 0 : index
    %c0_375 = arith.constant 0 : index
    %911 = vector.load %arg0[%c3_373, %c0_374, %c0_375] : memref<8x2x53xf32, #tpu.memory_space<vmem>>, vector<1x2x53xf32>
    %912 = vector.shape_cast %911 : vector<1x2x53xf32> to vector<2x53xf32>
    %913 = vector.extract_strided_slice %912 {offsets = [0, 16], sizes = [2, 16], strides = [1, 1]} : vector<2x53xf32> to vector<2x16xf32>
    %cst_376 = arith.constant dense<0.000000e+00> : vector<2x32xf32>
    %914 = tpu.matmul %910, %806, %cst_376 {dimension_numbers = #tpu.dot_dimension_numbers<[1], [0], [0], [1], [0, 0, 1, 1], [], []>} : vector<2x32xf32>, vector<32x32xf32>, vector<2x32xf32> -> vector<2x32xf32>
    %915 = vector.broadcast %807 : vector<1x32xf32> to vector<2x32xf32>
    %916 = arith.addf %914, %915 : vector<2x32xf32>
    %cst_377 = arith.constant 0.000000e+00 : f32
    %917 = vector.broadcast %cst_377 : f32 to vector<2x32xf32>
    %918 = arith.maximumf %916, %917 : vector<2x32xf32>
    %cst_378 = arith.constant dense<0.000000e+00> : vector<2x32xf32>
    %919 = tpu.matmul %918, %808, %cst_378 {dimension_numbers = #tpu.dot_dimension_numbers<[1], [0], [0], [1], [0, 0, 1, 1], [], []>} : vector<2x32xf32>, vector<32x32xf32>, vector<2x32xf32> -> vector<2x32xf32>
    %920 = vector.broadcast %809 : vector<1x32xf32> to vector<2x32xf32>
    %921 = arith.addf %919, %920 : vector<2x32xf32>
    %922 = vector.extract_strided_slice %921 {offsets = [0, 0], sizes = [2, 16], strides = [1, 1]} : vector<2x32xf32> to vector<2x16xf32>
    %923 = vector.extract_strided_slice %921 {offsets = [0, 16], sizes = [2, 16], strides = [1, 1]} : vector<2x32xf32> to vector<2x16xf32>
    %cst_379 = arith.constant 0.000000e+00 : f32
    %924 = vector.broadcast %cst_379 : f32 to vector<2x16xf32>
    %925 = arith.maximumf %923, %924 : vector<2x16xf32>
    %926 = math.absf %923 : vector<2x16xf32>
    %cst_380 = arith.constant 0.000000e+00 : f32
    %927 = vector.broadcast %cst_380 : f32 to vector<2x16xf32>
    %928 = arith.subf %927, %926 : vector<2x16xf32>
    %929 = math.exp %928 : vector<2x16xf32>
    %930 = math.log1p %929 : vector<2x16xf32>
    %931 = arith.addf %925, %930 : vector<2x16xf32>
    %cst_381 = arith.constant 1.000000e-01 : f32
    %932 = vector.broadcast %cst_381 : f32 to vector<2x16xf32>
    %933 = arith.addf %931, %932 : vector<2x16xf32>
    %934 = arith.mulf %933, %913 : vector<2x16xf32>
    %935 = arith.addf %922, %934 : vector<2x16xf32>
    %c3_382 = arith.constant 3 : index
    %c0_383 = arith.constant 0 : index
    %c0_384 = arith.constant 0 : index
    %936 = vector.load %arg8[%c3_382, %c0_383, %c0_384] : memref<8x2x48xf32, #tpu.memory_space<vmem>>, vector<1x2x48xf32>
    %937 = vector.shape_cast %936 : vector<1x2x48xf32> to vector<2x48xf32>
    %938 = tpu.concatenate %910, %935, %922, %933, %937 in 1 : vector<2x32xf32>, vector<2x16xf32>, vector<2x16xf32>, vector<2x16xf32>, vector<2x48xf32> -> vector<2x128xf32>
    %c3_385 = arith.constant 3 : index
    %c0_386 = arith.constant 0 : index
    %c0_387 = arith.constant 0 : index
    %939 = vector.load %arg4[%c3_385, %c0_386, %c0_387] : memref<8x2x128xf32, #tpu.memory_space<vmem>>, vector<1x2x128xf32>
    %940 = vector.shape_cast %939 : vector<1x2x128xf32> to vector<2x128xf32>
    %941 = vector.shape_cast %938 : vector<2x128xf32> to vector<1x2x128xf32>
    tpu.vector_store %arg4[%c3_385, %c0_386, %c0_387], %941 {strides = array<i32>} : memref<8x2x128xf32, #tpu.memory_space<vmem>>, vector<1x2x128xf32>,
    %c4_388 = arith.constant 4 : index
    %c0_389 = arith.constant 0 : index
    %c0_390 = arith.constant 0 : index
    %942 = vector.load %arg7[%c4_388, %c0_389, %c0_390] : memref<8x2x32xf32, #tpu.memory_space<vmem>>, vector<1x2x32xf32>
    %943 = vector.shape_cast %942 : vector<1x2x32xf32> to vector<2x32xf32>
    %c4_391 = arith.constant 4 : index
    %c0_392 = arith.constant 0 : index
    %c0_393 = arith.constant 0 : index
    %944 = vector.load %arg0[%c4_391, %c0_392, %c0_393] : memref<8x2x53xf32, #tpu.memory_space<vmem>>, vector<1x2x53xf32>
    %945 = vector.shape_cast %944 : vector<1x2x53xf32> to vector<2x53xf32>
    %946 = vector.extract_strided_slice %945 {offsets = [0, 16], sizes = [2, 16], strides = [1, 1]} : vector<2x53xf32> to vector<2x16xf32>
    %cst_394 = arith.constant dense<0.000000e+00> : vector<2x32xf32>
    %947 = tpu.matmul %943, %806, %cst_394 {dimension_numbers = #tpu.dot_dimension_numbers<[1], [0], [0], [1], [0, 0, 1, 1], [], []>} : vector<2x32xf32>, vector<32x32xf32>, vector<2x32xf32> -> vector<2x32xf32>
    %948 = vector.broadcast %807 : vector<1x32xf32> to vector<2x32xf32>
    %949 = arith.addf %947, %948 : vector<2x32xf32>
    %cst_395 = arith.constant 0.000000e+00 : f32
    %950 = vector.broadcast %cst_395 : f32 to vector<2x32xf32>
    %951 = arith.maximumf %949, %950 : vector<2x32xf32>
    %cst_396 = arith.constant dense<0.000000e+00> : vector<2x32xf32>
    %952 = tpu.matmul %951, %808, %cst_396 {dimension_numbers = #tpu.dot_dimension_numbers<[1], [0], [0], [1], [0, 0, 1, 1], [], []>} : vector<2x32xf32>, vector<32x32xf32>, vector<2x32xf32> -> vector<2x32xf32>
    %953 = vector.broadcast %809 : vector<1x32xf32> to vector<2x32xf32>
    %954 = arith.addf %952, %953 : vector<2x32xf32>
    %955 = vector.extract_strided_slice %954 {offsets = [0, 0], sizes = [2, 16], strides = [1, 1]} : vector<2x32xf32> to vector<2x16xf32>
    %956 = vector.extract_strided_slice %954 {offsets = [0, 16], sizes = [2, 16], strides = [1, 1]} : vector<2x32xf32> to vector<2x16xf32>
    %cst_397 = arith.constant 0.000000e+00 : f32
    %957 = vector.broadcast %cst_397 : f32 to vector<2x16xf32>
    %958 = arith.maximumf %956, %957 : vector<2x16xf32>
    %959 = math.absf %956 : vector<2x16xf32>
    %cst_398 = arith.constant 0.000000e+00 : f32
    %960 = vector.broadcast %cst_398 : f32 to vector<2x16xf32>
    %961 = arith.subf %960, %959 : vector<2x16xf32>
    %962 = math.exp %961 : vector<2x16xf32>
    %963 = math.log1p %962 : vector<2x16xf32>
    %964 = arith.addf %958, %963 : vector<2x16xf32>
    %cst_399 = arith.constant 1.000000e-01 : f32
    %965 = vector.broadcast %cst_399 : f32 to vector<2x16xf32>
    %966 = arith.addf %964, %965 : vector<2x16xf32>
    %967 = arith.mulf %966, %946 : vector<2x16xf32>
    %968 = arith.addf %955, %967 : vector<2x16xf32>
    %c4_400 = arith.constant 4 : index
    %c0_401 = arith.constant 0 : index
    %c0_402 = arith.constant 0 : index
    %969 = vector.load %arg8[%c4_400, %c0_401, %c0_402] : memref<8x2x48xf32, #tpu.memory_space<vmem>>, vector<1x2x48xf32>
    %970 = vector.shape_cast %969 : vector<1x2x48xf32> to vector<2x48xf32>
    %971 = tpu.concatenate %943, %968, %955, %966, %970 in 1 : vector<2x32xf32>, vector<2x16xf32>, vector<2x16xf32>, vector<2x16xf32>, vector<2x48xf32> -> vector<2x128xf32>
    %c4_403 = arith.constant 4 : index
    %c0_404 = arith.constant 0 : index
    %c0_405 = arith.constant 0 : index
    %972 = vector.load %arg4[%c4_403, %c0_404, %c0_405] : memref<8x2x128xf32, #tpu.memory_space<vmem>>, vector<1x2x128xf32>
    %973 = vector.shape_cast %972 : vector<1x2x128xf32> to vector<2x128xf32>
    %974 = vector.shape_cast %971 : vector<2x128xf32> to vector<1x2x128xf32>
    tpu.vector_store %arg4[%c4_403, %c0_404, %c0_405], %974 {strides = array<i32>} : memref<8x2x128xf32, #tpu.memory_space<vmem>>, vector<1x2x128xf32>,
    %c5_406 = arith.constant 5 : index
    %c0_407 = arith.constant 0 : index
    %c0_408 = arith.constant 0 : index
    %975 = vector.load %arg7[%c5_406, %c0_407, %c0_408] : memref<8x2x32xf32, #tpu.memory_space<vmem>>, vector<1x2x32xf32>
    %976 = vector.shape_cast %975 : vector<1x2x32xf32> to vector<2x32xf32>
    %c5_409 = arith.constant 5 : index
    %c0_410 = arith.constant 0 : index
    %c0_411 = arith.constant 0 : index
    %977 = vector.load %arg0[%c5_409, %c0_410, %c0_411] : memref<8x2x53xf32, #tpu.memory_space<vmem>>, vector<1x2x53xf32>
    %978 = vector.shape_cast %977 : vector<1x2x53xf32> to vector<2x53xf32>
    %979 = vector.extract_strided_slice %978 {offsets = [0, 16], sizes = [2, 16], strides = [1, 1]} : vector<2x53xf32> to vector<2x16xf32>
    %cst_412 = arith.constant dense<0.000000e+00> : vector<2x32xf32>
    %980 = tpu.matmul %976, %806, %cst_412 {dimension_numbers = #tpu.dot_dimension_numbers<[1], [0], [0], [1], [0, 0, 1, 1], [], []>} : vector<2x32xf32>, vector<32x32xf32>, vector<2x32xf32> -> vector<2x32xf32>
    %981 = vector.broadcast %807 : vector<1x32xf32> to vector<2x32xf32>
    %982 = arith.addf %980, %981 : vector<2x32xf32>
    %cst_413 = arith.constant 0.000000e+00 : f32
    %983 = vector.broadcast %cst_413 : f32 to vector<2x32xf32>
    %984 = arith.maximumf %982, %983 : vector<2x32xf32>
    %cst_414 = arith.constant dense<0.000000e+00> : vector<2x32xf32>
    %985 = tpu.matmul %984, %808, %cst_414 {dimension_numbers = #tpu.dot_dimension_numbers<[1], [0], [0], [1], [0, 0, 1, 1], [], []>} : vector<2x32xf32>, vector<32x32xf32>, vector<2x32xf32> -> vector<2x32xf32>
    %986 = vector.broadcast %809 : vector<1x32xf32> to vector<2x32xf32>
    %987 = arith.addf %985, %986 : vector<2x32xf32>
    %988 = vector.extract_strided_slice %987 {offsets = [0, 0], sizes = [2, 16], strides = [1, 1]} : vector<2x32xf32> to vector<2x16xf32>
    %989 = vector.extract_strided_slice %987 {offsets = [0, 16], sizes = [2, 16], strides = [1, 1]} : vector<2x32xf32> to vector<2x16xf32>
    %cst_415 = arith.constant 0.000000e+00 : f32
    %990 = vector.broadcast %cst_415 : f32 to vector<2x16xf32>
    %991 = arith.maximumf %989, %990 : vector<2x16xf32>
    %992 = math.absf %989 : vector<2x16xf32>
    %cst_416 = arith.constant 0.000000e+00 : f32
    %993 = vector.broadcast %cst_416 : f32 to vector<2x16xf32>
    %994 = arith.subf %993, %992 : vector<2x16xf32>
    %995 = math.exp %994 : vector<2x16xf32>
    %996 = math.log1p %995 : vector<2x16xf32>
    %997 = arith.addf %991, %996 : vector<2x16xf32>
    %cst_417 = arith.constant 1.000000e-01 : f32
    %998 = vector.broadcast %cst_417 : f32 to vector<2x16xf32>
    %999 = arith.addf %997, %998 : vector<2x16xf32>
    %1000 = arith.mulf %999, %979 : vector<2x16xf32>
    %1001 = arith.addf %988, %1000 : vector<2x16xf32>
    %c5_418 = arith.constant 5 : index
    %c0_419 = arith.constant 0 : index
    %c0_420 = arith.constant 0 : index
    %1002 = vector.load %arg8[%c5_418, %c0_419, %c0_420] : memref<8x2x48xf32, #tpu.memory_space<vmem>>, vector<1x2x48xf32>
    %1003 = vector.shape_cast %1002 : vector<1x2x48xf32> to vector<2x48xf32>
    %1004 = tpu.concatenate %976, %1001, %988, %999, %1003 in 1 : vector<2x32xf32>, vector<2x16xf32>, vector<2x16xf32>, vector<2x16xf32>, vector<2x48xf32> -> vector<2x128xf32>
    %c5_421 = arith.constant 5 : index
    %c0_422 = arith.constant 0 : index
    %c0_423 = arith.constant 0 : index
    %1005 = vector.load %arg4[%c5_421, %c0_422, %c0_423] : memref<8x2x128xf32, #tpu.memory_space<vmem>>, vector<1x2x128xf32>
    %1006 = vector.shape_cast %1005 : vector<1x2x128xf32> to vector<2x128xf32>
    %1007 = vector.shape_cast %1004 : vector<2x128xf32> to vector<1x2x128xf32>
    tpu.vector_store %arg4[%c5_421, %c0_422, %c0_423], %1007 {strides = array<i32>} : memref<8x2x128xf32, #tpu.memory_space<vmem>>, vector<1x2x128xf32>,
    %c6_424 = arith.constant 6 : index
    %c0_425 = arith.constant 0 : index
    %c0_426 = arith.constant 0 : index
    %1008 = vector.load %arg7[%c6_424, %c0_425, %c0_426] : memref<8x2x32xf32, #tpu.memory_space<vmem>>, vector<1x2x32xf32>
    %1009 = vector.shape_cast %1008 : vector<1x2x32xf32> to vector<2x32xf32>
    %c6_427 = arith.constant 6 : index
    %c0_428 = arith.constant 0 : index
    %c0_429 = arith.constant 0 : index
    %1010 = vector.load %arg0[%c6_427, %c0_428, %c0_429] : memref<8x2x53xf32, #tpu.memory_space<vmem>>, vector<1x2x53xf32>
    %1011 = vector.shape_cast %1010 : vector<1x2x53xf32> to vector<2x53xf32>
    %1012 = vector.extract_strided_slice %1011 {offsets = [0, 16], sizes = [2, 16], strides = [1, 1]} : vector<2x53xf32> to vector<2x16xf32>
    %cst_430 = arith.constant dense<0.000000e+00> : vector<2x32xf32>
    %1013 = tpu.matmul %1009, %806, %cst_430 {dimension_numbers = #tpu.dot_dimension_numbers<[1], [0], [0], [1], [0, 0, 1, 1], [], []>} : vector<2x32xf32>, vector<32x32xf32>, vector<2x32xf32> -> vector<2x32xf32>
    %1014 = vector.broadcast %807 : vector<1x32xf32> to vector<2x32xf32>
    %1015 = arith.addf %1013, %1014 : vector<2x32xf32>
    %cst_431 = arith.constant 0.000000e+00 : f32
    %1016 = vector.broadcast %cst_431 : f32 to vector<2x32xf32>
    %1017 = arith.maximumf %1015, %1016 : vector<2x32xf32>
    %cst_432 = arith.constant dense<0.000000e+00> : vector<2x32xf32>
    %1018 = tpu.matmul %1017, %808, %cst_432 {dimension_numbers = #tpu.dot_dimension_numbers<[1], [0], [0], [1], [0, 0, 1, 1], [], []>} : vector<2x32xf32>, vector<32x32xf32>, vector<2x32xf32> -> vector<2x32xf32>
    %1019 = vector.broadcast %809 : vector<1x32xf32> to vector<2x32xf32>
    %1020 = arith.addf %1018, %1019 : vector<2x32xf32>
    %1021 = vector.extract_strided_slice %1020 {offsets = [0, 0], sizes = [2, 16], strides = [1, 1]} : vector<2x32xf32> to vector<2x16xf32>
    %1022 = vector.extract_strided_slice %1020 {offsets = [0, 16], sizes = [2, 16], strides = [1, 1]} : vector<2x32xf32> to vector<2x16xf32>
    %cst_433 = arith.constant 0.000000e+00 : f32
    %1023 = vector.broadcast %cst_433 : f32 to vector<2x16xf32>
    %1024 = arith.maximumf %1022, %1023 : vector<2x16xf32>
    %1025 = math.absf %1022 : vector<2x16xf32>
    %cst_434 = arith.constant 0.000000e+00 : f32
    %1026 = vector.broadcast %cst_434 : f32 to vector<2x16xf32>
    %1027 = arith.subf %1026, %1025 : vector<2x16xf32>
    %1028 = math.exp %1027 : vector<2x16xf32>
    %1029 = math.log1p %1028 : vector<2x16xf32>
    %1030 = arith.addf %1024, %1029 : vector<2x16xf32>
    %cst_435 = arith.constant 1.000000e-01 : f32
    %1031 = vector.broadcast %cst_435 : f32 to vector<2x16xf32>
    %1032 = arith.addf %1030, %1031 : vector<2x16xf32>
    %1033 = arith.mulf %1032, %1012 : vector<2x16xf32>
    %1034 = arith.addf %1021, %1033 : vector<2x16xf32>
    %c6_436 = arith.constant 6 : index
    %c0_437 = arith.constant 0 : index
    %c0_438 = arith.constant 0 : index
    %1035 = vector.load %arg8[%c6_436, %c0_437, %c0_438] : memref<8x2x48xf32, #tpu.memory_space<vmem>>, vector<1x2x48xf32>
    %1036 = vector.shape_cast %1035 : vector<1x2x48xf32> to vector<2x48xf32>
    %1037 = tpu.concatenate %1009, %1034, %1021, %1032, %1036 in 1 : vector<2x32xf32>, vector<2x16xf32>, vector<2x16xf32>, vector<2x16xf32>, vector<2x48xf32> -> vector<2x128xf32>
    %c6_439 = arith.constant 6 : index
    %c0_440 = arith.constant 0 : index
    %c0_441 = arith.constant 0 : index
    %1038 = vector.load %arg4[%c6_439, %c0_440, %c0_441] : memref<8x2x128xf32, #tpu.memory_space<vmem>>, vector<1x2x128xf32>
    %1039 = vector.shape_cast %1038 : vector<1x2x128xf32> to vector<2x128xf32>
    %1040 = vector.shape_cast %1037 : vector<2x128xf32> to vector<1x2x128xf32>
    tpu.vector_store %arg4[%c6_439, %c0_440, %c0_441], %1040 {strides = array<i32>} : memref<8x2x128xf32, #tpu.memory_space<vmem>>, vector<1x2x128xf32>,
    %c7_442 = arith.constant 7 : index
    %c0_443 = arith.constant 0 : index
    %c0_444 = arith.constant 0 : index
    %1041 = vector.load %arg7[%c7_442, %c0_443, %c0_444] : memref<8x2x32xf32, #tpu.memory_space<vmem>>, vector<1x2x32xf32>
    %1042 = vector.shape_cast %1041 : vector<1x2x32xf32> to vector<2x32xf32>
    %c7_445 = arith.constant 7 : index
    %c0_446 = arith.constant 0 : index
    %c0_447 = arith.constant 0 : index
    %1043 = vector.load %arg0[%c7_445, %c0_446, %c0_447] : memref<8x2x53xf32, #tpu.memory_space<vmem>>, vector<1x2x53xf32>
    %1044 = vector.shape_cast %1043 : vector<1x2x53xf32> to vector<2x53xf32>
    %1045 = vector.extract_strided_slice %1044 {offsets = [0, 16], sizes = [2, 16], strides = [1, 1]} : vector<2x53xf32> to vector<2x16xf32>
    %cst_448 = arith.constant dense<0.000000e+00> : vector<2x32xf32>
    %1046 = tpu.matmul %1042, %806, %cst_448 {dimension_numbers = #tpu.dot_dimension_numbers<[1], [0], [0], [1], [0, 0, 1, 1], [], []>} : vector<2x32xf32>, vector<32x32xf32>, vector<2x32xf32> -> vector<2x32xf32>
    %1047 = vector.broadcast %807 : vector<1x32xf32> to vector<2x32xf32>
    %1048 = arith.addf %1046, %1047 : vector<2x32xf32>
    %cst_449 = arith.constant 0.000000e+00 : f32
    %1049 = vector.broadcast %cst_449 : f32 to vector<2x32xf32>
    %1050 = arith.maximumf %1048, %1049 : vector<2x32xf32>
    %cst_450 = arith.constant dense<0.000000e+00> : vector<2x32xf32>
    %1051 = tpu.matmul %1050, %808, %cst_450 {dimension_numbers = #tpu.dot_dimension_numbers<[1], [0], [0], [1], [0, 0, 1, 1], [], []>} : vector<2x32xf32>, vector<32x32xf32>, vector<2x32xf32> -> vector<2x32xf32>
    %1052 = vector.broadcast %809 : vector<1x32xf32> to vector<2x32xf32>
    %1053 = arith.addf %1051, %1052 : vector<2x32xf32>
    %1054 = vector.extract_strided_slice %1053 {offsets = [0, 0], sizes = [2, 16], strides = [1, 1]} : vector<2x32xf32> to vector<2x16xf32>
    %1055 = vector.extract_strided_slice %1053 {offsets = [0, 16], sizes = [2, 16], strides = [1, 1]} : vector<2x32xf32> to vector<2x16xf32>
    %cst_451 = arith.constant 0.000000e+00 : f32
    %1056 = vector.broadcast %cst_451 : f32 to vector<2x16xf32>
    %1057 = arith.maximumf %1055, %1056 : vector<2x16xf32>
    %1058 = math.absf %1055 : vector<2x16xf32>
    %cst_452 = arith.constant 0.000000e+00 : f32
    %1059 = vector.broadcast %cst_452 : f32 to vector<2x16xf32>
    %1060 = arith.subf %1059, %1058 : vector<2x16xf32>
    %1061 = math.exp %1060 : vector<2x16xf32>
    %1062 = math.log1p %1061 : vector<2x16xf32>
    %1063 = arith.addf %1057, %1062 : vector<2x16xf32>
    %cst_453 = arith.constant 1.000000e-01 : f32
    %1064 = vector.broadcast %cst_453 : f32 to vector<2x16xf32>
    %1065 = arith.addf %1063, %1064 : vector<2x16xf32>
    %1066 = arith.mulf %1065, %1045 : vector<2x16xf32>
    %1067 = arith.addf %1054, %1066 : vector<2x16xf32>
    %c7_454 = arith.constant 7 : index
    %c0_455 = arith.constant 0 : index
    %c0_456 = arith.constant 0 : index
    %1068 = vector.load %arg8[%c7_454, %c0_455, %c0_456] : memref<8x2x48xf32, #tpu.memory_space<vmem>>, vector<1x2x48xf32>
    %1069 = vector.shape_cast %1068 : vector<1x2x48xf32> to vector<2x48xf32>
    %1070 = tpu.concatenate %1042, %1067, %1054, %1065, %1069 in 1 : vector<2x32xf32>, vector<2x16xf32>, vector<2x16xf32>, vector<2x16xf32>, vector<2x48xf32> -> vector<2x128xf32>
    %c7_457 = arith.constant 7 : index
    %c0_458 = arith.constant 0 : index
    %c0_459 = arith.constant 0 : index
    %1071 = vector.load %arg4[%c7_457, %c0_458, %c0_459] : memref<8x2x128xf32, #tpu.memory_space<vmem>>, vector<1x2x128xf32>
    %1072 = vector.shape_cast %1071 : vector<1x2x128xf32> to vector<2x128xf32>
    %1073 = vector.shape_cast %1070 : vector<2x128xf32> to vector<1x2x128xf32>
    tpu.vector_store %arg4[%c7_457, %c0_458, %c0_459], %1073 {strides = array<i32>} : memref<8x2x128xf32, #tpu.memory_space<vmem>>, vector<1x2x128xf32>,
    return
  }
}

</mosaic_0001>

<llo_original>
// kernel: tpu_custom_call.1
$region0: #{tpu_custom_call.1}
  #allocation0 [shape = 'u32[]', space=smem, size = 0x4, offset = 0x4, fixed_abs, tag = 'smem constant byte address 0x4 - core index']
  #allocation1 [shape = 'u32[144,128]{1,0:T(1,128)}', space=vmem, size = 0x12000, scoped, tag = 'internal scratch']
  #allocation2 [shape = 'f32[8,2,32]{2,1,0:T(2,128)}', space=vmem, size = 0x2000, scoped, tag = 'scratch operand']
  #allocation3 [shape = 'f32[8,2,32]{2,1,0:T(2,128)}', space=vmem, size = 0x2000, scoped, tag = 'scratch operand']
  #allocation4 [shape = 'f32[8,2,32]{2,1,0:T(2,128)}', space=vmem, size = 0x2000, scoped, tag = 'scratch operand']
  #allocation5 [shape = 'f32[8,2,48]{2,1,0:T(2,128)}', space=vmem, size = 0x2000, scoped, tag = 'scratch operand']
  %s0 = inlined_call_operand.hbm [shape: f32[8,2,53], index: 0, kind: input, shape index: {}]
  %s1 = inlined_call_operand.vmem [shape: f32[2,16], index: 1, kind: input, shape index: {}]
  %s2 = inlined_call_operand.vmem [shape: f32[2,32], index: 2, kind: input, shape index: {}]
  %s3 = inlined_call_operand.hbm [shape: f32[240,128], index: 3, kind: input, shape index: {}]
  %s4 = inlined_call_operand.hbm [shape: f32[8,2,128], index: 4, kind: output, shape index: {}]
  %s5 = sld [smem:[#allocation0]]
  $region34: #{tpu_custom_call.1} parent=0
    _
  %s7 = ssub.s32 1, %s5
  %s8 = scalar_select 0, %s7, %s5
  $region1: #{tpu_custom_call.1} parent=0
    #allocation6 [shape = 'u8[8192]{0}', space=vmem, size = 0x2000, scoped, tag = 'input window, operand 0, single buffered']
    #allocation7 [shape = 's32[1]{0}', space=sflag, size = 0x4, scoped, tag = 'scoped memory for tpu_custom_call.1']
    #allocation8 [shape = 's32[1]{0}', space=sflag, size = 0x4, scoped, tag = 'scoped memory for tpu_custom_call.1']
    #allocation9 [shape = 'u8[122880]{0}', space=vmem, size = 0x1e000, scoped, tag = 'input window, operand 3, single buffered']
    #allocation10 [shape = 's32[1]{0}', space=sflag, size = 0x4, scoped, tag = 'scoped memory for tpu_custom_call.1']
    #allocation11 [shape = 'u8[8192]{0}', space=vmem, size = 0x2000, scoped, tag = 'output window, operand 0, single buffered']
    %9 = vsyncpa [#allocation7], 0
    %10 = vsyncpa [#allocation10], 0
    %11 = vsyncpa [#allocation8], 0
    // Predicated region
    $region2: #{tpu_custom_call.1} parent=1 // pred_check
      _
    $region3: #{tpu_custom_call.1} parent=1 // pred_check_branch
      %13 = sbr.rel (0) target = $region5
    $region4: #{tpu_custom_call.1} parent=1 // pred_region
      %s15 = ssub.s32 256, 256
      %16 = vsyncadd [#allocation7], %s15
      %s17 = sshll.u32 [#allocation6], 4
      %s18 = int_to_ptr.vmem [resolvable:$true] %s17
      %23 = dma.hbm_to_vmem [thread:$0]  %s0, 256, %s18, [#allocation7], 32, 32, 2
    $region5: #{tpu_custom_call.1} parent=1 // pred_fallthru
      _
    // Predicated region
    $region6: #{tpu_custom_call.1} parent=1 // pred_check
      _
    $region7: #{tpu_custom_call.1} parent=1 // pred_check_branch
      %25 = sbr.rel (0) target = $region9
    $region8: #{tpu_custom_call.1} parent=1 // pred_region
      _
    $region9: #{tpu_custom_call.1} parent=1 // pred_fallthru
      _
    // Predicated region
    $region10: #{tpu_custom_call.1} parent=1 // pred_check
      _
    $region11: #{tpu_custom_call.1} parent=1 // pred_check_branch
      %27 = sbr.rel (0) target = $region13
    $region12: #{tpu_custom_call.1} parent=1 // pred_region
      _
    $region13: #{tpu_custom_call.1} parent=1 // pred_fallthru
      _
    // Predicated region
    $region14: #{tpu_custom_call.1} parent=1 // pred_check
      _
    $region15: #{tpu_custom_call.1} parent=1 // pred_check_branch
      %29 = sbr.rel (0) target = $region17
    $region16: #{tpu_custom_call.1} parent=1 // pred_region
      %s31 = ssub.s32 3840, 3840
      %32 = vsyncadd [#allocation10], %s31
      %s33 = sshll.u32 [#allocation9], 4
      %s34 = int_to_ptr.vmem [resolvable:$true] %s33
      %39 = dma.hbm_to_vmem [thread:$0]  %s3, 3840, %s34, [#allocation10], 128, 128, 8
    $region17: #{tpu_custom_call.1} parent=1 // pred_fallthru
      _
    // Predicated region
    $region18: #{tpu_custom_call.1} parent=1 // pred_check
      _
    $region19: #{tpu_custom_call.1} parent=1 // pred_check_branch
      %41 = sbr.rel (0) target = $region21
    $region20: #{tpu_custom_call.1} parent=1 // pred_region
      %42 = dma.done [#allocation7], 256
    $region21: #{tpu_custom_call.1} parent=1 // pred_fallthru
      _
    // Predicated region
    $region22: #{tpu_custom_call.1} parent=1 // pred_check
      _
    $region23: #{tpu_custom_call.1} parent=1 // pred_check_branch
      %44 = sbr.rel (0) target = $region25
    $region24: #{tpu_custom_call.1} parent=1 // pred_region
      %45 = dma.done [#allocation10], 3840
    $region25: #{tpu_custom_call.1} parent=1 // pred_fallthru
      _
    %v46 = vld [vmem:[#allocation9 + $0xc0] sm:$0xff]
    %v47 = vld [vmem:[#allocation9 + $0xc8] sm:$0xff]
    %v48 = vld [vmem:[#allocation9] sm:$0xff]
    %v49 = vld [vmem:[#allocation9 + $0x8] sm:$0xff]
    %v50 = vld [vmem:[#allocation9 + $0x10] sm:$0xff]
    %v51 = vld [vmem:[#allocation9 + $0x18] sm:$0xff]
    %v52 = vld [vmem:[#allocation9 + $0x20] sm:$0xff]
    %v53 = vld [vmem:[#allocation9 + $0x28] sm:$0xff]
    %v54 = vld [vmem:[#allocation9 + $0x30] sm:$0xff]
    %v55 = vld [vmem:[#allocation9 + $0x38] sm:$0xff]
    %v56 = vld [vmem:[#allocation9 + $0x60] sm:$0xff]
    %v57 = vld [vmem:[#allocation9 + $0x68] sm:$0xff]
    %v58 = vld [vmem:[#allocation9 + $0x70] sm:$0xff]
    %v59 = vld [vmem:[#allocation9 + $0x78] sm:$0xff]
    %v60 = vld [vmem:[#allocation9 + $0xa0] sm:$0xff]
    %v61 = vld [vmem:[#allocation9 + $0xa8] sm:$0xff]
    %v62 = vld [vmem:[#allocation9 + $0xb0] sm:$0xff]
    %v63 = vld [vmem:[#allocation9 + $0xb8] sm:$0xff]
    %v64 = vld [vmem:[#allocation9 + $0xe9] sm:$0x1]
    %v65 = vld [vmem:[#allocation9 + $0xea] sm:$0x1]
    %v66 = vld [vmem:[#allocation9 + $0xee] sm:$0x1]
    %v67 = vld [vmem:[#allocation9 + $0xe0] sm:$0xf]
    %v68 = vld [vmem:[#allocation9 + $0xe8] sm:$0x1]
    %v69 = vld [vmem:[#allocation9 + $0xd0] sm:$0xff]
    %v70 = vld [vmem:[#allocation9 + $0xd8] sm:$0xff]
    %v71 = vld [vmem:[#allocation9 + $0xec] sm:$0x1]
    %v72 = vld [vmem:[#allocation6] sm:$0x3]
    %v73 = vlaneseq
    %v74 = vshrl.u32 %v73, 7
    %v75 = vsub.s32 0, %v74
    %v76 = vrot.slane %v68, %v75
    %78 = vrot.lane.b32.xlu0 %v72, 80
    %v79 = vpop.permute.xlu0 %78
    %vm80 = vcmask 31744
    %v81 = vsel %vm80, %v79, 0
    %vm83 = vcmask 1043456
    %v85 = vsel %vm83, %v67, 0
    %87 = vmatprep.subr.mxu0 0.0
    %88 = vmatpush1.msra.mxu0 %v85
    %89 = vmatprep.subr.mxu0 0.0
    %90 = vmatpush1.msra.mxu0 0.0
    %91 = vmatprep.subr.mxu0 0.0
    %92 = vmatpush1.msra.mxu0 0.0
    %93 = vmatprep.subr.mxu0 0.0
    %94 = vmatpush1.msra.mxu0 0.0
    %95 = vmatprep.subr.mxu0 0.0
    %96 = vmatpush1.msra.mxu0 0.0
    %97 = vmatprep.subr.mxu0 0.0
    %98 = vmatpush1.msra.mxu0 0.0
    %99 = vmatprep.subr.mxu0 0.0
    %100 = vmatpush1.msra.mxu0 0.0
    %101 = vmatprep.subr.mxu0 0.0
    %102 = vmatpush1.msra.mxu0 0.0
    %103 = vmatprep.subr.mxu0 0.0
    %104 = vmatpush1.msra.mxu0 0.0
    %105 = vmatprep.subr.mxu0 0.0
    %106 = vmatpush1.msra.mxu0 0.0
    %107 = vmatprep.subr.mxu0 0.0
    %108 = vmatpush1.msra.mxu0 0.0
    %109 = vmatprep.subr.mxu0 0.0
    %110 = vmatpush1.msra.mxu0 0.0
    %111 = vmatprep.subr.mxu0 0.0
    %112 = vmatpush1.msra.mxu0 0.0
    %113 = vmatprep.subr.mxu0 0.0
    %114 = vmatpush1.msra.mxu0 0.0
    %115 = vmatprep.subr.mxu0 0.0
    %116 = vmatpush1.msra.mxu0 0.0
    %117 = vmatprep.subr.mxu0 0.0
    %118 = vmatpush1.msra.mxu0 0.0
    %119 = vmatprep.subr.mxu0 0.0
    %120 = vmatpush1.msra.mxu0 0.0
    %121 = vmatprep.subr.mxu0 0.0
    %122 = vmatpush1.msra.mxu0 0.0
    %123 = vmatprep.subr.mxu0 0.0
    %124 = vmatpush1.msra.mxu0 0.0
    %125 = vmatprep.subr.mxu0 0.0
    %126 = vmatpush1.msra.mxu0 0.0
    %127 = vmatprep.subr.mxu0 0.0
    %128 = vmatpush1.msra.mxu0 0.0
    %129 = vmatprep.subr.mxu0 0.0
    %130 = vmatpush1.msra.mxu0 0.0
    %131 = vmatprep.subr.mxu0 0.0
    %132 = vmatpush1.msra.mxu0 0.0
    %133 = vmatprep.subr.mxu0 0.0
    %134 = vmatpush1.msra.mxu0 0.0
    %135 = vmatprep.subr.mxu0 0.0
    %136 = vmatpush1.msra.mxu0 0.0
    %137 = vmatprep.subr.mxu0 0.0
    %138 = vmatpush1.msra.mxu0 0.0
    %139 = vmatprep.subr.mxu0 0.0
    %140 = vmatpush1.msra.mxu0 0.0
    %141 = vmatprep.subr.mxu0 0.0
    %142 = vmatpush1.msra.mxu0 0.0
    %143 = vmatprep.subr.mxu0 0.0
    %144 = vmatpush1.msra.mxu0 0.0
    %145 = vmatprep.subr.mxu0 0.0
    %146 = vmatpush1.msra.mxu0 0.0
    %147 = vmatprep.subr.mxu0 0.0
    %148 = vmatpush1.msra.mxu0 0.0
    %149 = vmatprep.subr.mxu0 0.0
    %150 = vmatpush1.msra.mxu0 0.0
    %151 = vmatprep.mubr.f32.mxu0 0.0
    %152 = vmatmul.mubr.f32.gmra.mrb[0].mxu0 %v81
    %v153 = vpop.f32.mrb[0].mxu0
    %v154 = vadd.f32 %v76, %v153
    %v155 = vpop.f32.mrb[0].mxu0
    %156 = vdwg.mxu0
    %vm157 = vcmask 254976
    %158 = vst.msk [vmem:[#allocation2] sm:$0x3] %vm157, %v154
    %v159 = vlaneseq
    %v160 = vshrl.u32 %v159, 7
    %v161 = vsub.s32 0, %v160
    %v162 = vrot.slane %v71, %v161
    %vm163 = vcmask 130048
    %v164 = vsel %vm163, %v72, 0
    %166 = vmatprep.subr.mxu0 0.0
    %167 = vmatpush1.msra.mxu0 %v69
    %168 = vmatprep.subr.mxu0 0.0
    %169 = vmatpush1.msra.mxu0 %v70
    %170 = vmatprep.subr.mxu0 0.0
    %171 = vmatpush1.msra.mxu0 0.0
    %172 = vmatprep.subr.mxu0 0.0
    %173 = vmatpush1.msra.mxu0 0.0
    %174 = vmatprep.subr.mxu0 0.0
    %175 = vmatpush1.msra.mxu0 0.0
    %176 = vmatprep.subr.mxu0 0.0
    %177 = vmatpush1.msra.mxu0 0.0
    %178 = vmatprep.subr.mxu0 0.0
    %179 = vmatpush1.msra.mxu0 0.0
    %180 = vmatprep.subr.mxu0 0.0
    %181 = vmatpush1.msra.mxu0 0.0
    %182 = vmatprep.subr.mxu0 0.0
    %183 = vmatpush1.msra.mxu0 0.0
    %184 = vmatprep.subr.mxu0 0.0
    %185 = vmatpush1.msra.mxu0 0.0
    %186 = vmatprep.subr.mxu0 0.0
    %187 = vmatpush1.msra.mxu0 0.0
    %188 = vmatprep.subr.mxu0 0.0
    %189 = vmatpush1.msra.mxu0 0.0
    %190 = vmatprep.subr.mxu0 0.0
    %191 = vmatpush1.msra.mxu0 0.0
    %192 = vmatprep.subr.mxu0 0.0
    %193 = vmatpush1.msra.mxu0 0.0
    %194 = vmatprep.subr.mxu0 0.0
    %195 = vmatpush1.msra.mxu0 0.0
    %196 = vmatprep.subr.mxu0 0.0
    %197 = vmatpush1.msra.mxu0 0.0
    %198 = vmatprep.subr.mxu0 0.0
    %199 = vmatpush1.msra.mxu0 0.0
    %200 = vmatprep.subr.mxu0 0.0
    %201 = vmatpush1.msra.mxu0 0.0
    %202 = vmatprep.subr.mxu0 0.0
    %203 = vmatpush1.msra.mxu0 0.0
    %204 = vmatprep.subr.mxu0 0.0
    %205 = vmatpush1.msra.mxu0 0.0
    %206 = vmatprep.subr.mxu0 0.0
    %207 = vmatpush1.msra.mxu0 0.0
    %208 = vmatprep.subr.mxu0 0.0
    %209 = vmatpush1.msra.mxu0 0.0
    %210 = vmatprep.subr.mxu0 0.0
    %211 = vmatpush1.msra.mxu0 0.0
    %212 = vmatprep.subr.mxu0 0.0
    %213 = vmatpush1.msra.mxu0 0.0
    %214 = vmatprep.subr.mxu0 0.0
    %215 = vmatpush1.msra.mxu0 0.0
    %216 = vmatprep.subr.mxu0 0.0
    %217 = vmatpush1.msra.mxu0 0.0
    %218 = vmatprep.subr.mxu0 0.0
    %219 = vmatpush1.msra.mxu0 0.0
    %220 = vmatprep.subr.mxu0 0.0
    %221 = vmatpush1.msra.mxu0 0.0
    %222 = vmatprep.subr.mxu0 0.0
    %223 = vmatpush1.msra.mxu0 0.0
    %224 = vmatprep.subr.mxu0 0.0
    %225 = vmatpush1.msra.mxu0 0.0
    %226 = vmatprep.subr.mxu0 0.0
    %227 = vmatpush1.msra.mxu0 0.0
    %228 = vmatprep.subr.mxu0 0.0
    %229 = vmatpush1.msra.mxu0 0.0
    %230 = vmatprep.mubr.f32.mxu0 0.0
    %231 = vmatmul.mubr.f32.gmra.mrb[0].mxu0 %v164
    %v232 = vpop.f32.mrb[0].mxu0
    %v233 = vadd.f32 %v162, %v232
    %v234 = vpop.f32.mrb[0].mxu0
    %235 = vdwg.mxu0
    %236 = vst.msk [vmem:[#allocation3] sm:$0x3] %vm157, %v233
    %s237 = scalar_lea.vmem [#allocation6], 2
    %v238 = vld [vmem:[%s237] sm:$0x3]
    %240 = vrot.lane.b32.xlu0 %v238, 80
    %v241 = vpop.permute.xlu0 %240
    %v242 = vsel %vm80, %v241, 0
    %244 = vmatprep.subr.mxu0 0.0
    %245 = vmatpush1.msra.mxu0 %v85
    %246 = vmatprep.subr.mxu0 0.0
    %247 = vmatpush1.msra.mxu0 0.0
    %248 = vmatprep.subr.mxu0 0.0
    %249 = vmatpush1.msra.mxu0 0.0
    %250 = vmatprep.subr.mxu0 0.0
    %251 = vmatpush1.msra.mxu0 0.0
    %252 = vmatprep.subr.mxu0 0.0
    %253 = vmatpush1.msra.mxu0 0.0
    %254 = vmatprep.subr.mxu0 0.0
    %255 = vmatpush1.msra.mxu0 0.0
    %256 = vmatprep.subr.mxu0 0.0
    %257 = vmatpush1.msra.mxu0 0.0
    %258 = vmatprep.subr.mxu0 0.0
    %259 = vmatpush1.msra.mxu0 0.0
    %260 = vmatprep.subr.mxu0 0.0
    %261 = vmatpush1.msra.mxu0 0.0
    %262 = vmatprep.subr.mxu0 0.0
    %263 = vmatpush1.msra.mxu0 0.0
    %264 = vmatprep.subr.mxu0 0.0
    %265 = vmatpush1.msra.mxu0 0.0
    %266 = vmatprep.subr.mxu0 0.0
    %267 = vmatpush1.msra.mxu0 0.0
    %268 = vmatprep.subr.mxu0 0.0
    %269 = vmatpush1.msra.mxu0 0.0
    %270 = vmatprep.subr.mxu0 0.0
    %271 = vmatpush1.msra.mxu0 0.0
    %272 = vmatprep.subr.mxu0 0.0
    %273 = vmatpush1.msra.mxu0 0.0
    %274 = vmatprep.subr.mxu0 0.0
    %275 = vmatpush1.msra.mxu0 0.0
    %276 = vmatprep.subr.mxu0 0.0
    %277 = vmatpush1.msra.mxu0 0.0
    %278 = vmatprep.subr.mxu0 0.0
    %279 = vmatpush1.msra.mxu0 0.0
    %280 = vmatprep.subr.mxu0 0.0
    %281 = vmatpush1.msra.mxu0 0.0
    %282 = vmatprep.subr.mxu0 0.0
    %283 = vmatpush1.msra.mxu0 0.0
    %284 = vmatprep.subr.mxu0 0.0
    %285 = vmatpush1.msra.mxu0 0.0
    %286 = vmatprep.subr.mxu0 0.0
    %287 = vmatpush1.msra.mxu0 0.0
    %288 = vmatprep.subr.mxu0 0.0
    %289 = vmatpush1.msra.mxu0 0.0
    %290 = vmatprep.subr.mxu0 0.0
    %291 = vmatpush1.msra.mxu0 0.0
    %292 = vmatprep.subr.mxu0 0.0
    %293 = vmatpush1.msra.mxu0 0.0
    %294 = vmatprep.subr.mxu0 0.0
    %295 = vmatpush1.msra.mxu0 0.0
    %296 = vmatprep.subr.mxu0 0.0
    %297 = vmatpush1.msra.mxu0 0.0
    %298 = vmatprep.subr.mxu0 0.0
    %299 = vmatpush1.msra.mxu0 0.0
    %300 = vmatprep.subr.mxu0 0.0
    %301 = vmatpush1.msra.mxu0 0.0
    %302 = vmatprep.subr.mxu0 0.0
    %303 = vmatpush1.msra.mxu0 0.0
    %304 = vmatprep.subr.mxu0 0.0
    %305 = vmatpush1.msra.mxu0 0.0
    %306 = vmatprep.subr.mxu0 0.0
    %307 = vmatpush1.msra.mxu0 0.0
    %308 = vmatprep.mubr.f32.mxu0 0.0
    %309 = vmatmul.mubr.f32.gmra.mrb[0].mxu0 %v242
    %v310 = vpop.f32.mrb[0].mxu0
    %v311 = vadd.f32 %v76, %v310
    %v312 = vpop.f32.mrb[0].mxu0
    %313 = vdwg.mxu0
    %s314 = scalar_lea.vmem [#allocation2], 2
    %315 = vst.msk [vmem:[%s314] sm:$0x3] %vm157, %v311
    %v316 = vsel %vm163, %v238, 0
    %318 = vmatprep.subr.mxu0 0.0
    %319 = vmatpush1.msra.mxu0 %v69
    %320 = vmatprep.subr.mxu0 0.0
    %321 = vmatpush1.msra.mxu0 %v70
    %322 = vmatprep.subr.mxu0 0.0
    %323 = vmatpush1.msra.mxu0 0.0
    %324 = vmatprep.subr.mxu0 0.0
    %325 = vmatpush1.msra.mxu0 0.0
    %326 = vmatprep.subr.mxu0 0.0
    %327 = vmatpush1.msra.mxu0 0.0
    %328 = vmatprep.subr.mxu0 0.0
    %329 = vmatpush1.msra.mxu0 0.0
    %330 = vmatprep.subr.mxu0 0.0
    %331 = vmatpush1.msra.mxu0 0.0
    %332 = vmatprep.subr.mxu0 0.0
    %333 = vmatpush1.msra.mxu0 0.0
    %334 = vmatprep.subr.mxu0 0.0
    %335 = vmatpush1.msra.mxu0 0.0
    %336 = vmatprep.subr.mxu0 0.0
    %337 = vmatpush1.msra.mxu0 0.0
    %338 = vmatprep.subr.mxu0 0.0
    %339 = vmatpush1.msra.mxu0 0.0
    %340 = vmatprep.subr.mxu0 0.0
    %341 = vmatpush1.msra.mxu0 0.0
    %342 = vmatprep.subr.mxu0 0.0
    %343 = vmatpush1.msra.mxu0 0.0
    %344 = vmatprep.subr.mxu0 0.0
    %345 = vmatpush1.msra.mxu0 0.0
    %346 = vmatprep.subr.mxu0 0.0
    %347 = vmatpush1.msra.mxu0 0.0
    %348 = vmatprep.subr.mxu0 0.0
    %349 = vmatpush1.msra.mxu0 0.0
    %350 = vmatprep.subr.mxu0 0.0
    %351 = vmatpush1.msra.mxu0 0.0
    %352 = vmatprep.subr.mxu0 0.0
    %353 = vmatpush1.msra.mxu0 0.0
    %354 = vmatprep.subr.mxu0 0.0
    %355 = vmatpush1.msra.mxu0 0.0
    %356 = vmatprep.subr.mxu0 0.0
    %357 = vmatpush1.msra.mxu0 0.0
    %358 = vmatprep.subr.mxu0 0.0
    %359 = vmatpush1.msra.mxu0 0.0
    %360 = vmatprep.subr.mxu0 0.0
    %361 = vmatpush1.msra.mxu0 0.0
    %362 = vmatprep.subr.mxu0 0.0
    %363 = vmatpush1.msra.mxu0 0.0
    %364 = vmatprep.subr.mxu0 0.0
    %365 = vmatpush1.msra.mxu0 0.0
    %366 = vmatprep.subr.mxu0 0.0
    %367 = vmatpush1.msra.mxu0 0.0
    %368 = vmatprep.subr.mxu0 0.0
    %369 = vmatpush1.msra.mxu0 0.0
    %370 = vmatprep.subr.mxu0 0.0
    %371 = vmatpush1.msra.mxu0 0.0
    %372 = vmatprep.subr.mxu0 0.0
    %373 = vmatpush1.msra.mxu0 0.0
    %374 = vmatprep.subr.mxu0 0.0
    %375 = vmatpush1.msra.mxu0 0.0
    %376 = vmatprep.subr.mxu0 0.0
    %377 = vmatpush1.msra.mxu0 0.0
    %378 = vmatprep.subr.mxu0 0.0
    %379 = vmatpush1.msra.mxu0 0.0
    %380 = vmatprep.subr.mxu0 0.0
    %381 = vmatpush1.msra.mxu0 0.0
    %382 = vmatprep.mubr.f32.mxu0 0.0
    %383 = vmatmul.mubr.f32.gmra.mrb[0].mxu0 %v316
    %v384 = vpop.f32.mrb[0].mxu0
    %v385 = vadd.f32 %v162, %v384
    %v386 = vpop.f32.mrb[0].mxu0
    %387 = vdwg.mxu0
    %s388 = scalar_lea.vmem [#allocation3], 2
    %389 = vst.msk [vmem:[%s388] sm:$0x3] %vm157, %v385
    %s390 = scalar_lea.vmem [#allocation6], 4
    %v391 = vld [vmem:[%s390] sm:$0x3]
    %393 = vrot.lane.b32.xlu0 %v391, 80
    %v394 = vpop.permute.xlu0 %393
    %v395 = vsel %vm80, %v394, 0
    %397 = vmatprep.subr.mxu0 0.0
    %398 = vmatpush1.msra.mxu0 %v85
    %399 = vmatprep.subr.mxu0 0.0
    %400 = vmatpush1.msra.mxu0 0.0
    %401 = vmatprep.subr.mxu0 0.0
    %402 = vmatpush1.msra.mxu0 0.0
    %403 = vmatprep.subr.mxu0 0.0
    %404 = vmatpush1.msra.mxu0 0.0
    %405 = vmatprep.subr.mxu0 0.0
    %406 = vmatpush1.msra.mxu0 0.0
    %407 = vmatprep.subr.mxu0 0.0
    %408 = vmatpush1.msra.mxu0 0.0
    %409 = vmatprep.subr.mxu0 0.0
    %410 = vmatpush1.msra.mxu0 0.0
    %411 = vmatprep.subr.mxu0 0.0
    %412 = vmatpush1.msra.mxu0 0.0
    %413 = vmatprep.subr.mxu0 0.0
    %414 = vmatpush1.msra.mxu0 0.0
    %415 = vmatprep.subr.mxu0 0.0
    %416 = vmatpush1.msra.mxu0 0.0
    %417 = vmatprep.subr.mxu0 0.0
    %418 = vmatpush1.msra.mxu0 0.0
    %419 = vmatprep.subr.mxu0 0.0
    %420 = vmatpush1.msra.mxu0 0.0
    %421 = vmatprep.subr.mxu0 0.0
    %422 = vmatpush1.msra.mxu0 0.0
    %423 = vmatprep.subr.mxu0 0.0
    %424 = vmatpush1.msra.mxu0 0.0
    %425 = vmatprep.subr.mxu0 0.0
    %426 = vmatpush1.msra.mxu0 0.0
    %427 = vmatprep.subr.mxu0 0.0
    %428 = vmatpush1.msra.mxu0 0.0
    %429 = vmatprep.subr.mxu0 0.0
    %430 = vmatpush1.msra.mxu0 0.0
    %431 = vmatprep.subr.mxu0 0.0
    %432 = vmatpush1.msra.mxu0 0.0
    %433 = vmatprep.subr.mxu0 0.0
    %434 = vmatpush1.msra.mxu0 0.0
    %435 = vmatprep.subr.mxu0 0.0
    %436 = vmatpush1.msra.mxu0 0.0
    %437 = vmatprep.subr.mxu0 0.0
    %438 = vmatpush1.msra.mxu0 0.0
    %439 = vmatprep.subr.mxu0 0.0
    %440 = vmatpush1.msra.mxu0 0.0
    %441 = vmatprep.subr.mxu0 0.0
    %442 = vmatpush1.msra.mxu0 0.0
    %443 = vmatprep.subr.mxu0 0.0
    %444 = vmatpush1.msra.mxu0 0.0
    %445 = vmatprep.subr.mxu0 0.0
    %446 = vmatpush1.msra.mxu0 0.0
    %447 = vmatprep.subr.mxu0 0.0
    %448 = vmatpush1.msra.mxu0 0.0
    %449 = vmatprep.subr.mxu0 0.0
    %450 = vmatpush1.msra.mxu0 0.0
    %451 = vmatprep.subr.mxu0 0.0
    %452 = vmatpush1.msra.mxu0 0.0
    %453 = vmatprep.subr.mxu0 0.0
    %454 = vmatpush1.msra.mxu0 0.0
    %455 = vmatprep.subr.mxu0 0.0
    %456 = vmatpush1.msra.mxu0 0.0
    %457 = vmatprep.subr.mxu0 0.0
    %458 = vmatpush1.msra.mxu0 0.0
    %459 = vmatprep.subr.mxu0 0.0
    %460 = vmatpush1.msra.mxu0 0.0
    %461 = vmatprep.mubr.f32.mxu0 0.0
    %462 = vmatmul.mubr.f32.gmra.mrb[0].mxu0 %v395
    %v463 = vpop.f32.mrb[0].mxu0
    %v464 = vadd.f32 %v76, %v463
    %v465 = vpop.f32.mrb[0].mxu0
    %466 = vdwg.mxu0
    %s467 = scalar_lea.vmem [#allocation2], 4
    %468 = vst.msk [vmem:[%s467] sm:$0x3] %vm157, %v464
    %v469 = vsel %vm163, %v391, 0
    %471 = vmatprep.subr.mxu0 0.0
    %472 = vmatpush1.msra.mxu0 %v69
    %473 = vmatprep.subr.mxu0 0.0
    %474 = vmatpush1.msra.mxu0 %v70
    %475 = vmatprep.subr.mxu0 0.0
    %476 = vmatpush1.msra.mxu0 0.0
    %477 = vmatprep.subr.mxu0 0.0
    %478 = vmatpush1.msra.mxu0 0.0
    %479 = vmatprep.subr.mxu0 0.0
    %480 = vmatpush1.msra.mxu0 0.0
    %481 = vmatprep.subr.mxu0 0.0
    %482 = vmatpush1.msra.mxu0 0.0
    %483 = vmatprep.subr.mxu0 0.0
    %484 = vmatpush1.msra.mxu0 0.0
    %485 = vmatprep.subr.mxu0 0.0
    %486 = vmatpush1.msra.mxu0 0.0
    %487 = vmatprep.subr.mxu0 0.0
    %488 = vmatpush1.msra.mxu0 0.0
    %489 = vmatprep.subr.mxu0 0.0
    %490 = vmatpush1.msra.mxu0 0.0
    %491 = vmatprep.subr.mxu0 0.0
    %492 = vmatpush1.msra.mxu0 0.0
    %493 = vmatprep.subr.mxu0 0.0
    %494 = vmatpush1.msra.mxu0 0.0
    %495 = vmatprep.subr.mxu0 0.0
    %496 = vmatpush1.msra.mxu0 0.0
    %497 = vmatprep.subr.mxu0 0.0
    %498 = vmatpush1.msra.mxu0 0.0
    %499 = vmatprep.subr.mxu0 0.0
    %500 = vmatpush1.msra.mxu0 0.0
    %501 = vmatprep.subr.mxu0 0.0
    %502 = vmatpush1.msra.mxu0 0.0
    %503 = vmatprep.subr.mxu0 0.0
    %504 = vmatpush1.msra.mxu0 0.0
    %505 = vmatprep.subr.mxu0 0.0
    %506 = vmatpush1.msra.mxu0 0.0
    %507 = vmatprep.subr.mxu0 0.0
    %508 = vmatpush1.msra.mxu0 0.0
    %509 = vmatprep.subr.mxu0 0.0
    %510 = vmatpush1.msra.mxu0 0.0
    %511 = vmatprep.subr.mxu0 0.0
    %512 = vmatpush1.msra.mxu0 0.0
    %513 = vmatprep.subr.mxu0 0.0
    %514 = vmatpush1.msra.mxu0 0.0
    %515 = vmatprep.subr.mxu0 0.0
    %516 = vmatpush1.msra.mxu0 0.0
    %517 = vmatprep.subr.mxu0 0.0
    %518 = vmatpush1.msra.mxu0 0.0
    %519 = vmatprep.subr.mxu0 0.0
    %520 = vmatpush1.msra.mxu0 0.0
    %521 = vmatprep.subr.mxu0 0.0
    %522 = vmatpush1.msra.mxu0 0.0
    %523 = vmatprep.subr.mxu0 0.0
    %524 = vmatpush1.msra.mxu0 0.0
    %525 = vmatprep.subr.mxu0 0.0
    %526 = vmatpush1.msra.mxu0 0.0
    %527 = vmatprep.subr.mxu0 0.0
    %528 = vmatpush1.msra.mxu0 0.0
    %529 = vmatprep.subr.mxu0 0.0
    %530 = vmatpush1.msra.mxu0 0.0
    %531 = vmatprep.subr.mxu0 0.0
    %532 = vmatpush1.msra.mxu0 0.0
    %533 = vmatprep.subr.mxu0 0.0
    %534 = vmatpush1.msra.mxu0 0.0
    %535 = vmatprep.mubr.f32.mxu0 0.0
    %536 = vmatmul.mubr.f32.gmra.mrb[0].mxu0 %v469
    %v537 = vpop.f32.mrb[0].mxu0
    %v538 = vadd.f32 %v162, %v537
    %v539 = vpop.f32.mrb[0].mxu0
    %540 = vdwg.mxu0
    %s541 = scalar_lea.vmem [#allocation3], 4
    %542 = vst.msk [vmem:[%s541] sm:$0x3] %vm157, %v538
    %s543 = scalar_lea.vmem [#allocation6], 6
    %v544 = vld [vmem:[%s543] sm:$0x3]
    %546 = vrot.lane.b32.xlu0 %v544, 80
    %v547 = vpop.permute.xlu0 %546
    %v548 = vsel %vm80, %v547, 0
    %550 = vmatprep.subr.mxu0 0.0
    %551 = vmatpush1.msra.mxu0 %v85
    %552 = vmatprep.subr.mxu0 0.0
    %553 = vmatpush1.msra.mxu0 0.0
    %554 = vmatprep.subr.mxu0 0.0
    %555 = vmatpush1.msra.mxu0 0.0
    %556 = vmatprep.subr.mxu0 0.0
    %557 = vmatpush1.msra.mxu0 0.0
    %558 = vmatprep.subr.mxu0 0.0
    %559 = vmatpush1.msra.mxu0 0.0
    %560 = vmatprep.subr.mxu0 0.0
    %561 = vmatpush1.msra.mxu0 0.0
    %562 = vmatprep.subr.mxu0 0.0
    %563 = vmatpush1.msra.mxu0 0.0
    %564 = vmatprep.subr.mxu0 0.0
    %565 = vmatpush1.msra.mxu0 0.0
    %566 = vmatprep.subr.mxu0 0.0
    %567 = vmatpush1.msra.mxu0 0.0
    %568 = vmatprep.subr.mxu0 0.0
    %569 = vmatpush1.msra.mxu0 0.0
    %570 = vmatprep.subr.mxu0 0.0
    %571 = vmatpush1.msra.mxu0 0.0
    %572 = vmatprep.subr.mxu0 0.0
    %573 = vmatpush1.msra.mxu0 0.0
    %574 = vmatprep.subr.mxu0 0.0
    %575 = vmatpush1.msra.mxu0 0.0
    %576 = vmatprep.subr.mxu0 0.0
    %577 = vmatpush1.msra.mxu0 0.0
    %578 = vmatprep.subr.mxu0 0.0
    %579 = vmatpush1.msra.mxu0 0.0
    %580 = vmatprep.subr.mxu0 0.0
    %581 = vmatpush1.msra.mxu0 0.0
    %582 = vmatprep.subr.mxu0 0.0
    %583 = vmatpush1.msra.mxu0 0.0
    %584 = vmatprep.subr.mxu0 0.0
    %585 = vmatpush1.msra.mxu0 0.0
    %586 = vmatprep.subr.mxu0 0.0
    %587 = vmatpush1.msra.mxu0 0.0
    %588 = vmatprep.subr.mxu0 0.0
    %589 = vmatpush1.msra.mxu0 0.0
    %590 = vmatprep.subr.mxu0 0.0
    %591 = vmatpush1.msra.mxu0 0.0
    %592 = vmatprep.subr.mxu0 0.0
    %593 = vmatpush1.msra.mxu0 0.0
    %594 = vmatprep.subr.mxu0 0.0
    %595 = vmatpush1.msra.mxu0 0.0
    %596 = vmatprep.subr.mxu0 0.0
    %597 = vmatpush1.msra.mxu0 0.0
    %598 = vmatprep.subr.mxu0 0.0
    %599 = vmatpush1.msra.mxu0 0.0
    %600 = vmatprep.subr.mxu0 0.0
    %601 = vmatpush1.msra.mxu0 0.0
    %602 = vmatprep.subr.mxu0 0.0
    %603 = vmatpush1.msra.mxu0 0.0
    %604 = vmatprep.subr.mxu0 0.0
    %605 = vmatpush1.msra.mxu0 0.0
    %606 = vmatprep.subr.mxu0 0.0
    %607 = vmatpush1.msra.mxu0 0.0
    %608 = vmatprep.subr.mxu0 0.0
    %609 = vmatpush1.msra.mxu0 0.0
    %610 = vmatprep.subr.mxu0 0.0
    %611 = vmatpush1.msra.mxu0 0.0
    %612 = vmatprep.subr.mxu0 0.0
    %613 = vmatpush1.msra.mxu0 0.0
    %614 = vmatprep.mubr.f32.mxu0 0.0
    %615 = vmatmul.mubr.f32.gmra.mrb[0].mxu0 %v548
    %v616 = vpop.f32.mrb[0].mxu0
    %v617 = vadd.f32 %v76, %v616
    %v618 = vpop.f32.mrb[0].mxu0
    %619 = vdwg.mxu0
    %s620 = scalar_lea.vmem [#allocation2], 6
    %621 = vst.msk [vmem:[%s620] sm:$0x3] %vm157, %v617
    %v622 = vsel %vm163, %v544, 0
    %624 = vmatprep.subr.mxu0 0.0
    %625 = vmatpush1.msra.mxu0 %v69
    %626 = vmatprep.subr.mxu0 0.0
    %627 = vmatpush1.msra.mxu0 %v70
    %628 = vmatprep.subr.mxu0 0.0
    %629 = vmatpush1.msra.mxu0 0.0
    %630 = vmatprep.subr.mxu0 0.0
    %631 = vmatpush1.msra.mxu0 0.0
    %632 = vmatprep.subr.mxu0 0.0
    %633 = vmatpush1.msra.mxu0 0.0
    %634 = vmatprep.subr.mxu0 0.0
    %635 = vmatpush1.msra.mxu0 0.0
    %636 = vmatprep.subr.mxu0 0.0
    %637 = vmatpush1.msra.mxu0 0.0
    %638 = vmatprep.subr.mxu0 0.0
    %639 = vmatpush1.msra.mxu0 0.0
    %640 = vmatprep.subr.mxu0 0.0
    %641 = vmatpush1.msra.mxu0 0.0
    %642 = vmatprep.subr.mxu0 0.0
    %643 = vmatpush1.msra.mxu0 0.0
    %644 = vmatprep.subr.mxu0 0.0
    %645 = vmatpush1.msra.mxu0 0.0
    %646 = vmatprep.subr.mxu0 0.0
    %647 = vmatpush1.msra.mxu0 0.0
    %648 = vmatprep.subr.mxu0 0.0
    %649 = vmatpush1.msra.mxu0 0.0
    %650 = vmatprep.subr.mxu0 0.0
    %651 = vmatpush1.msra.mxu0 0.0
    %652 = vmatprep.subr.mxu0 0.0
    %653 = vmatpush1.msra.mxu0 0.0
    %654 = vmatprep.subr.mxu0 0.0
    %655 = vmatpush1.msra.mxu0 0.0
    %656 = vmatprep.subr.mxu0 0.0
    %657 = vmatpush1.msra.mxu0 0.0
    %658 = vmatprep.subr.mxu0 0.0
    %659 = vmatpush1.msra.mxu0 0.0
    %660 = vmatprep.subr.mxu0 0.0
    %661 = vmatpush1.msra.mxu0 0.0
    %662 = vmatprep.subr.mxu0 0.0
    %663 = vmatpush1.msra.mxu0 0.0
    %664 = vmatprep.subr.mxu0 0.0
    %665 = vmatpush1.msra.mxu0 0.0
    %666 = vmatprep.subr.mxu0 0.0
    %667 = vmatpush1.msra.mxu0 0.0
    %668 = vmatprep.subr.mxu0 0.0
    %669 = vmatpush1.msra.mxu0 0.0
    %670 = vmatprep.subr.mxu0 0.0
    %671 = vmatpush1.msra.mxu0 0.0
    %672 = vmatprep.subr.mxu0 0.0
    %673 = vmatpush1.msra.mxu0 0.0
    %674 = vmatprep.subr.mxu0 0.0
    %675 = vmatpush1.msra.mxu0 0.0
    %676 = vmatprep.subr.mxu0 0.0
    %677 = vmatpush1.msra.mxu0 0.0
    %678 = vmatprep.subr.mxu0 0.0
    %679 = vmatpush1.msra.mxu0 0.0
    %680 = vmatprep.subr.mxu0 0.0
    %681 = vmatpush1.msra.mxu0 0.0
    %682 = vmatprep.subr.mxu0 0.0
    %683 = vmatpush1.msra.mxu0 0.0
    %684 = vmatprep.subr.mxu0 0.0
    %685 = vmatpush1.msra.mxu0 0.0
    %686 = vmatprep.subr.mxu0 0.0
    %687 = vmatpush1.msra.mxu0 0.0
    %688 = vmatprep.mubr.f32.mxu0 0.0
    %689 = vmatmul.mubr.f32.gmra.mrb[0].mxu0 %v622
    %v690 = vpop.f32.mrb[0].mxu0
    %v691 = vadd.f32 %v162, %v690
    %v692 = vpop.f32.mrb[0].mxu0
    %693 = vdwg.mxu0
    %s694 = scalar_lea.vmem [#allocation3], 6
    %695 = vst.msk [vmem:[%s694] sm:$0x3] %vm157, %v691
    %s696 = scalar_lea.vmem [#allocation6], 8
    %v697 = vld [vmem:[%s696] sm:$0x3]
    %699 = vrot.lane.b32.xlu0 %v697, 80
    %v700 = vpop.permute.xlu0 %699
    %v701 = vsel %vm80, %v700, 0
    %703 = vmatprep.subr.mxu0 0.0
    %704 = vmatpush1.msra.mxu0 %v85
    %705 = vmatprep.subr.mxu0 0.0
    %706 = vmatpush1.msra.mxu0 0.0
    %707 = vmatprep.subr.mxu0 0.0
    %708 = vmatpush1.msra.mxu0 0.0
    %709 = vmatprep.subr.mxu0 0.0
    %710 = vmatpush1.msra.mxu0 0.0
    %711 = vmatprep.subr.mxu0 0.0
    %712 = vmatpush1.msra.mxu0 0.0
    %713 = vmatprep.subr.mxu0 0.0
    %714 = vmatpush1.msra.mxu0 0.0
    %715 = vmatprep.subr.mxu0 0.0
    %716 = vmatpush1.msra.mxu0 0.0
    %717 = vmatprep.subr.mxu0 0.0
    %718 = vmatpush1.msra.mxu0 0.0
    %719 = vmatprep.subr.mxu0 0.0
    %720 = vmatpush1.msra.mxu0 0.0
    %721 = vmatprep.subr.mxu0 0.0
    %722 = vmatpush1.msra.mxu0 0.0
    %723 = vmatprep.subr.mxu0 0.0
    %724 = vmatpush1.msra.mxu0 0.0
    %725 = vmatprep.subr.mxu0 0.0
    %726 = vmatpush1.msra.mxu0 0.0
    %727 = vmatprep.subr.mxu0 0.0
    %728 = vmatpush1.msra.mxu0 0.0
    %729 = vmatprep.subr.mxu0 0.0
    %730 = vmatpush1.msra.mxu0 0.0
    %731 = vmatprep.subr.mxu0 0.0
    %732 = vmatpush1.msra.mxu0 0.0
    %733 = vmatprep.subr.mxu0 0.0
    %734 = vmatpush1.msra.mxu0 0.0
    %735 = vmatprep.subr.mxu0 0.0
    %736 = vmatpush1.msra.mxu0 0.0
    %737 = vmatprep.subr.mxu0 0.0
    %738 = vmatpush1.msra.mxu0 0.0
    %739 = vmatprep.subr.mxu0 0.0
    %740 = vmatpush1.msra.mxu0 0.0
    %741 = vmatprep.subr.mxu0 0.0
    %742 = vmatpush1.msra.mxu0 0.0
    %743 = vmatprep.subr.mxu0 0.0
    %744 = vmatpush1.msra.mxu0 0.0
    %745 = vmatprep.subr.mxu0 0.0
    %746 = vmatpush1.msra.mxu0 0.0
    %747 = vmatprep.subr.mxu0 0.0
    %748 = vmatpush1.msra.mxu0 0.0
    %749 = vmatprep.subr.mxu0 0.0
    %750 = vmatpush1.msra.mxu0 0.0
    %751 = vmatprep.subr.mxu0 0.0
    %752 = vmatpush1.msra.mxu0 0.0
    %753 = vmatprep.subr.mxu0 0.0
    %754 = vmatpush1.msra.mxu0 0.0
    %755 = vmatprep.subr.mxu0 0.0
    %756 = vmatpush1.msra.mxu0 0.0
    %757 = vmatprep.subr.mxu0 0.0
    %758 = vmatpush1.msra.mxu0 0.0
    %759 = vmatprep.subr.mxu0 0.0
    %760 = vmatpush1.msra.mxu0 0.0
    %761 = vmatprep.subr.mxu0 0.0
    %762 = vmatpush1.msra.mxu0 0.0
    %763 = vmatprep.subr.mxu0 0.0
    %764 = vmatpush1.msra.mxu0 0.0
    %765 = vmatprep.subr.mxu0 0.0
    %766 = vmatpush1.msra.mxu0 0.0
    %767 = vmatprep.mubr.f32.mxu0 0.0
    %768 = vmatmul.mubr.f32.gmra.mrb[0].mxu0 %v701
    %v769 = vpop.f32.mrb[0].mxu0
    %v770 = vadd.f32 %v76, %v769
    %v771 = vpop.f32.mrb[0].mxu0
    %772 = vdwg.mxu0
    %s773 = scalar_lea.vmem [#allocation2], 8
    %774 = vst.msk [vmem:[%s773] sm:$0x3] %vm157, %v770
    %v775 = vsel %vm163, %v697, 0
    %777 = vmatprep.subr.mxu0 0.0
    %778 = vmatpush1.msra.mxu0 %v69
    %779 = vmatprep.subr.mxu0 0.0
    %780 = vmatpush1.msra.mxu0 %v70
    %781 = vmatprep.subr.mxu0 0.0
    %782 = vmatpush1.msra.mxu0 0.0
    %783 = vmatprep.subr.mxu0 0.0
    %784 = vmatpush1.msra.mxu0 0.0
    %785 = vmatprep.subr.mxu0 0.0
    %786 = vmatpush1.msra.mxu0 0.0
    %787 = vmatprep.subr.mxu0 0.0
    %788 = vmatpush1.msra.mxu0 0.0
    %789 = vmatprep.subr.mxu0 0.0
    %790 = vmatpush1.msra.mxu0 0.0
    %791 = vmatprep.subr.mxu0 0.0
    %792 = vmatpush1.msra.mxu0 0.0
    %793 = vmatprep.subr.mxu0 0.0
    %794 = vmatpush1.msra.mxu0 0.0
    %795 = vmatprep.subr.mxu0 0.0
    %796 = vmatpush1.msra.mxu0 0.0
    %797 = vmatprep.subr.mxu0 0.0
    %798 = vmatpush1.msra.mxu0 0.0
    %799 = vmatprep.subr.mxu0 0.0
    %800 = vmatpush1.msra.mxu0 0.0
    %801 = vmatprep.subr.mxu0 0.0
    %802 = vmatpush1.msra.mxu0 0.0
    %803 = vmatprep.subr.mxu0 0.0
    %804 = vmatpush1.msra.mxu0 0.0
    %805 = vmatprep.subr.mxu0 0.0
    %806 = vmatpush1.msra.mxu0 0.0
    %807 = vmatprep.subr.mxu0 0.0
    %808 = vmatpush1.msra.mxu0 0.0
    %809 = vmatprep.subr.mxu0 0.0
    %810 = vmatpush1.msra.mxu0 0.0
    %811 = vmatprep.subr.mxu0 0.0
    %812 = vmatpush1.msra.mxu0 0.0
    %813 = vmatprep.subr.mxu0 0.0
    %814 = vmatpush1.msra.mxu0 0.0
    %815 = vmatprep.subr.mxu0 0.0
    %816 = vmatpush1.msra.mxu0 0.0
    %817 = vmatprep.subr.mxu0 0.0
    %818 = vmatpush1.msra.mxu0 0.0
    %819 = vmatprep.subr.mxu0 0.0
    %820 = vmatpush1.msra.mxu0 0.0
    %821 = vmatprep.subr.mxu0 0.0
    %822 = vmatpush1.msra.mxu0 0.0
    %823 = vmatprep.subr.mxu0 0.0
    %824 = vmatpush1.msra.mxu0 0.0
    %825 = vmatprep.subr.mxu0 0.0
    %826 = vmatpush1.msra.mxu0 0.0
    %827 = vmatprep.subr.mxu0 0.0
    %828 = vmatpush1.msra.mxu0 0.0
    %829 = vmatprep.subr.mxu0 0.0
    %830 = vmatpush1.msra.mxu0 0.0
    %831 = vmatprep.subr.mxu0 0.0
    %832 = vmatpush1.msra.mxu0 0.0
    %833 = vmatprep.subr.mxu0 0.0
    %834 = vmatpush1.msra.mxu0 0.0
    %835 = vmatprep.subr.mxu0 0.0
    %836 = vmatpush1.msra.mxu0 0.0
    %837 = vmatprep.subr.mxu0 0.0
    %838 = vmatpush1.msra.mxu0 0.0
    %839 = vmatprep.subr.mxu0 0.0
    %840 = vmatpush1.msra.mxu0 0.0
    %841 = vmatprep.mubr.f32.mxu0 0.0
    %842 = vmatmul.mubr.f32.gmra.mrb[0].mxu0 %v775
    %v843 = vpop.f32.mrb[0].mxu0
    %v844 = vadd.f32 %v162, %v843
    %v845 = vpop.f32.mrb[0].mxu0
    %846 = vdwg.mxu0
    %s847 = scalar_lea.vmem [#allocation3], 8
    %848 = vst.msk [vmem:[%s847] sm:$0x3] %vm157, %v844
    %s849 = scalar_lea.vmem [#allocation6], 10
    %v850 = vld [vmem:[%s849] sm:$0x3]
    %852 = vrot.lane.b32.xlu0 %v850, 80
    %v853 = vpop.permute.xlu0 %852
    %v854 = vsel %vm80, %v853, 0
    %856 = vmatprep.subr.mxu0 0.0
    %857 = vmatpush1.msra.mxu0 %v85
    %858 = vmatprep.subr.mxu0 0.0
    %859 = vmatpush1.msra.mxu0 0.0
    %860 = vmatprep.subr.mxu0 0.0
    %861 = vmatpush1.msra.mxu0 0.0
    %862 = vmatprep.subr.mxu0 0.0
    %863 = vmatpush1.msra.mxu0 0.0
    %864 = vmatprep.subr.mxu0 0.0
    %865 = vmatpush1.msra.mxu0 0.0
    %866 = vmatprep.subr.mxu0 0.0
    %867 = vmatpush1.msra.mxu0 0.0
    %868 = vmatprep.subr.mxu0 0.0
    %869 = vmatpush1.msra.mxu0 0.0
    %870 = vmatprep.subr.mxu0 0.0
    %871 = vmatpush1.msra.mxu0 0.0
    %872 = vmatprep.subr.mxu0 0.0
    %873 = vmatpush1.msra.mxu0 0.0
    %874 = vmatprep.subr.mxu0 0.0
    %875 = vmatpush1.msra.mxu0 0.0
    %876 = vmatprep.subr.mxu0 0.0
    %877 = vmatpush1.msra.mxu0 0.0
    %878 = vmatprep.subr.mxu0 0.0
    %879 = vmatpush1.msra.mxu0 0.0
    %880 = vmatprep.subr.mxu0 0.0
    %881 = vmatpush1.msra.mxu0 0.0
    %882 = vmatprep.subr.mxu0 0.0
    %883 = vmatpush1.msra.mxu0 0.0
    %884 = vmatprep.subr.mxu0 0.0
    %885 = vmatpush1.msra.mxu0 0.0
    %886 = vmatprep.subr.mxu0 0.0
    %887 = vmatpush1.msra.mxu0 0.0
    %888 = vmatprep.subr.mxu0 0.0
    %889 = vmatpush1.msra.mxu0 0.0
    %890 = vmatprep.subr.mxu0 0.0
    %891 = vmatpush1.msra.mxu0 0.0
    %892 = vmatprep.subr.mxu0 0.0
    %893 = vmatpush1.msra.mxu0 0.0
    %894 = vmatprep.subr.mxu0 0.0
    %895 = vmatpush1.msra.mxu0 0.0
    %896 = vmatprep.subr.mxu0 0.0
    %897 = vmatpush1.msra.mxu0 0.0
    %898 = vmatprep.subr.mxu0 0.0
    %899 = vmatpush1.msra.mxu0 0.0
    %900 = vmatprep.subr.mxu0 0.0
    %901 = vmatpush1.msra.mxu0 0.0
    %902 = vmatprep.subr.mxu0 0.0
    %903 = vmatpush1.msra.mxu0 0.0
    %904 = vmatprep.subr.mxu0 0.0
    %905 = vmatpush1.msra.mxu0 0.0
    %906 = vmatprep.subr.mxu0 0.0
    %907 = vmatpush1.msra.mxu0 0.0
    %908 = vmatprep.subr.mxu0 0.0
    %909 = vmatpush1.msra.mxu0 0.0
    %910 = vmatprep.subr.mxu0 0.0
    %911 = vmatpush1.msra.mxu0 0.0
    %912 = vmatprep.subr.mxu0 0.0
    %913 = vmatpush1.msra.mxu0 0.0
    %914 = vmatprep.subr.mxu0 0.0
    %915 = vmatpush1.msra.mxu0 0.0
    %916 = vmatprep.subr.mxu0 0.0
    %917 = vmatpush1.msra.mxu0 0.0
    %918 = vmatprep.subr.mxu0 0.0
    %919 = vmatpush1.msra.mxu0 0.0
    %920 = vmatprep.mubr.f32.mxu0 0.0
    %921 = vmatmul.mubr.f32.gmra.mrb[0].mxu0 %v854
    %v922 = vpop.f32.mrb[0].mxu0
    %v923 = vadd.f32 %v76, %v922
    %v924 = vpop.f32.mrb[0].mxu0
    %925 = vdwg.mxu0
    %s926 = scalar_lea.vmem [#allocation2], 10
    %927 = vst.msk [vmem:[%s926] sm:$0x3] %vm157, %v923
    %v928 = vsel %vm163, %v850, 0
    %930 = vmatprep.subr.mxu0 0.0
    %931 = vmatpush1.msra.mxu0 %v69
    %932 = vmatprep.subr.mxu0 0.0
    %933 = vmatpush1.msra.mxu0 %v70
    %934 = vmatprep.subr.mxu0 0.0
    %935 = vmatpush1.msra.mxu0 0.0
    %936 = vmatprep.subr.mxu0 0.0
    %937 = vmatpush1.msra.mxu0 0.0
    %938 = vmatprep.subr.mxu0 0.0
    %939 = vmatpush1.msra.mxu0 0.0
    %940 = vmatprep.subr.mxu0 0.0
    %941 = vmatpush1.msra.mxu0 0.0
    %942 = vmatprep.subr.mxu0 0.0
    %943 = vmatpush1.msra.mxu0 0.0
    %944 = vmatprep.subr.mxu0 0.0
    %945 = vmatpush1.msra.mxu0 0.0
    %946 = vmatprep.subr.mxu0 0.0
    %947 = vmatpush1.msra.mxu0 0.0
    %948 = vmatprep.subr.mxu0 0.0
    %949 = vmatpush1.msra.mxu0 0.0
    %950 = vmatprep.subr.mxu0 0.0
    %951 = vmatpush1.msra.mxu0 0.0
    %952 = vmatprep.subr.mxu0 0.0
    %953 = vmatpush1.msra.mxu0 0.0
    %954 = vmatprep.subr.mxu0 0.0
    %955 = vmatpush1.msra.mxu0 0.0
    %956 = vmatprep.subr.mxu0 0.0
    %957 = vmatpush1.msra.mxu0 0.0
    %958 = vmatprep.subr.mxu0 0.0
    %959 = vmatpush1.msra.mxu0 0.0
    %960 = vmatprep.subr.mxu0 0.0
    %961 = vmatpush1.msra.mxu0 0.0
    %962 = vmatprep.subr.mxu0 0.0
    %963 = vmatpush1.msra.mxu0 0.0
    %964 = vmatprep.subr.mxu0 0.0
    %965 = vmatpush1.msra.mxu0 0.0
    %966 = vmatprep.subr.mxu0 0.0
    %967 = vmatpush1.msra.mxu0 0.0
    %968 = vmatprep.subr.mxu0 0.0
    %969 = vmatpush1.msra.mxu0 0.0
    %970 = vmatprep.subr.mxu0 0.0
    %971 = vmatpush1.msra.mxu0 0.0
    %972 = vmatprep.subr.mxu0 0.0
    %973 = vmatpush1.msra.mxu0 0.0
    %974 = vmatprep.subr.mxu0 0.0
    %975 = vmatpush1.msra.mxu0 0.0
    %976 = vmatprep.subr.mxu0 0.0
    %977 = vmatpush1.msra.mxu0 0.0
    %978 = vmatprep.subr.mxu0 0.0
    %979 = vmatpush1.msra.mxu0 0.0
    %980 = vmatprep.subr.mxu0 0.0
    %981 = vmatpush1.msra.mxu0 0.0
    %982 = vmatprep.subr.mxu0 0.0
    %983 = vmatpush1.msra.mxu0 0.0
    %984 = vmatprep.subr.mxu0 0.0
    %985 = vmatpush1.msra.mxu0 0.0
    %986 = vmatprep.subr.mxu0 0.0
    %987 = vmatpush1.msra.mxu0 0.0
    %988 = vmatprep.subr.mxu0 0.0
    %989 = vmatpush1.msra.mxu0 0.0
    %990 = vmatprep.subr.mxu0 0.0
    %991 = vmatpush1.msra.mxu0 0.0
    %992 = vmatprep.subr.mxu0 0.0
    %993 = vmatpush1.msra.mxu0 0.0
    %994 = vmatprep.mubr.f32.mxu0 0.0
    %995 = vmatmul.mubr.f32.gmra.mrb[0].mxu0 %v928
    %v996 = vpop.f32.mrb[0].mxu0
    %v997 = vadd.f32 %v162, %v996
    %v998 = vpop.f32.mrb[0].mxu0
    %999 = vdwg.mxu0
    %s1000 = scalar_lea.vmem [#allocation3], 10
    %1001 = vst.msk [vmem:[%s1000] sm:$0x3] %vm157, %v997
    %s1002 = scalar_lea.vmem [#allocation6], 12
    %v1003 = vld [vmem:[%s1002] sm:$0x3]
    %1005 = vrot.lane.b32.xlu0 %v1003, 80
    %v1006 = vpop.permute.xlu0 %1005
    %v1007 = vsel %vm80, %v1006, 0
    %1009 = vmatprep.subr.mxu0 0.0
    %1010 = vmatpush1.msra.mxu0 %v85
    %1011 = vmatprep.subr.mxu0 0.0
    %1012 = vmatpush1.msra.mxu0 0.0
    %1013 = vmatprep.subr.mxu0 0.0
    %1014 = vmatpush1.msra.mxu0 0.0
    %1015 = vmatprep.subr.mxu0 0.0
    %1016 = vmatpush1.msra.mxu0 0.0
    %1017 = vmatprep.subr.mxu0 0.0
    %1018 = vmatpush1.msra.mxu0 0.0
    %1019 = vmatprep.subr.mxu0 0.0
    %1020 = vmatpush1.msra.mxu0 0.0
    %1021 = vmatprep.subr.mxu0 0.0
    %1022 = vmatpush1.msra.mxu0 0.0
    %1023 = vmatprep.subr.mxu0 0.0
    %1024 = vmatpush1.msra.mxu0 0.0
    %1025 = vmatprep.subr.mxu0 0.0
    %1026 = vmatpush1.msra.mxu0 0.0
    %1027 = vmatprep.subr.mxu0 0.0
    %1028 = vmatpush1.msra.mxu0 0.0
    %1029 = vmatprep.subr.mxu0 0.0
    %1030 = vmatpush1.msra.mxu0 0.0
    %1031 = vmatprep.subr.mxu0 0.0
    %1032 = vmatpush1.msra.mxu0 0.0
    %1033 = vmatprep.subr.mxu0 0.0
    %1034 = vmatpush1.msra.mxu0 0.0
    %1035 = vmatprep.subr.mxu0 0.0
    %1036 = vmatpush1.msra.mxu0 0.0
    %1037 = vmatprep.subr.mxu0 0.0
    %1038 = vmatpush1.msra.mxu0 0.0
    %1039 = vmatprep.subr.mxu0 0.0
    %1040 = vmatpush1.msra.mxu0 0.0
    %1041 = vmatprep.subr.mxu0 0.0
    %1042 = vmatpush1.msra.mxu0 0.0
    %1043 = vmatprep.subr.mxu0 0.0
    %1044 = vmatpush1.msra.mxu0 0.0
    %1045 = vmatprep.subr.mxu0 0.0
    %1046 = vmatpush1.msra.mxu0 0.0
    %1047 = vmatprep.subr.mxu0 0.0
    %1048 = vmatpush1.msra.mxu0 0.0
    %1049 = vmatprep.subr.mxu0 0.0
    %1050 = vmatpush1.msra.mxu0 0.0
    %1051 = vmatprep.subr.mxu0 0.0
    %1052 = vmatpush1.msra.mxu0 0.0
    %1053 = vmatprep.subr.mxu0 0.0
    %1054 = vmatpush1.msra.mxu0 0.0
    %1055 = vmatprep.subr.mxu0 0.0
    %1056 = vmatpush1.msra.mxu0 0.0
    %1057 = vmatprep.subr.mxu0 0.0
    %1058 = vmatpush1.msra.mxu0 0.0
    %1059 = vmatprep.subr.mxu0 0.0
    %1060 = vmatpush1.msra.mxu0 0.0
    %1061 = vmatprep.subr.mxu0 0.0
    %1062 = vmatpush1.msra.mxu0 0.0
    %1063 = vmatprep.subr.mxu0 0.0
    %1064 = vmatpush1.msra.mxu0 0.0
    %1065 = vmatprep.subr.mxu0 0.0
    %1066 = vmatpush1.msra.mxu0 0.0
    %1067 = vmatprep.subr.mxu0 0.0
    %1068 = vmatpush1.msra.mxu0 0.0
    %1069 = vmatprep.subr.mxu0 0.0
    %1070 = vmatpush1.msra.mxu0 0.0
    %1071 = vmatprep.subr.mxu0 0.0
    %1072 = vmatpush1.msra.mxu0 0.0
    %1073 = vmatprep.mubr.f32.mxu0 0.0
    %1074 = vmatmul.mubr.f32.gmra.mrb[0].mxu0 %v1007
    %v1075 = vpop.f32.mrb[0].mxu0
    %v1076 = vadd.f32 %v76, %v1075
    %v1077 = vpop.f32.mrb[0].mxu0
    %1078 = vdwg.mxu0
    %s1079 = scalar_lea.vmem [#allocation2], 12
    %1080 = vst.msk [vmem:[%s1079] sm:$0x3] %vm157, %v1076
    %v1081 = vsel %vm163, %v1003, 0
    %1083 = vmatprep.subr.mxu0 0.0
    %1084 = vmatpush1.msra.mxu0 %v69
    %1085 = vmatprep.subr.mxu0 0.0
    %1086 = vmatpush1.msra.mxu0 %v70
    %1087 = vmatprep.subr.mxu0 0.0
    %1088 = vmatpush1.msra.mxu0 0.0
    %1089 = vmatprep.subr.mxu0 0.0
    %1090 = vmatpush1.msra.mxu0 0.0
    %1091 = vmatprep.subr.mxu0 0.0
    %1092 = vmatpush1.msra.mxu0 0.0
    %1093 = vmatprep.subr.mxu0 0.0
    %1094 = vmatpush1.msra.mxu0 0.0
    %1095 = vmatprep.subr.mxu0 0.0
    %1096 = vmatpush1.msra.mxu0 0.0
    %1097 = vmatprep.subr.mxu0 0.0
    %1098 = vmatpush1.msra.mxu0 0.0
    %1099 = vmatprep.subr.mxu0 0.0
    %1100 = vmatpush1.msra.mxu0 0.0
    %1101 = vmatprep.subr.mxu0 0.0
    %1102 = vmatpush1.msra.mxu0 0.0
    %1103 = vmatprep.subr.mxu0 0.0
    %1104 = vmatpush1.msra.mxu0 0.0
    %1105 = vmatprep.subr.mxu0 0.0
    %1106 = vmatpush1.msra.mxu0 0.0
    %1107 = vmatprep.subr.mxu0 0.0
    %1108 = vmatpush1.msra.mxu0 0.0
    %1109 = vmatprep.subr.mxu0 0.0
    %1110 = vmatpush1.msra.mxu0 0.0
    %1111 = vmatprep.subr.mxu0 0.0
    %1112 = vmatpush1.msra.mxu0 0.0
    %1113 = vmatprep.subr.mxu0 0.0
    %1114 = vmatpush1.msra.mxu0 0.0
    %1115 = vmatprep.subr.mxu0 0.0
    %1116 = vmatpush1.msra.mxu0 0.0
    %1117 = vmatprep.subr.mxu0 0.0
    %1118 = vmatpush1.msra.mxu0 0.0
    %1119 = vmatprep.subr.mxu0 0.0
    %1120 = vmatpush1.msra.mxu0 0.0
    %1121 = vmatprep.subr.mxu0 0.0
    %1122 = vmatpush1.msra.mxu0 0.0
    %1123 = vmatprep.subr.mxu0 0.0
    %1124 = vmatpush1.msra.mxu0 0.0
    %1125 = vmatprep.subr.mxu0 0.0
    %1126 = vmatpush1.msra.mxu0 0.0
    %1127 = vmatprep.subr.mxu0 0.0
    %1128 = vmatpush1.msra.mxu0 0.0
    %1129 = vmatprep.subr.mxu0 0.0
    %1130 = vmatpush1.msra.mxu0 0.0
    %1131 = vmatprep.subr.mxu0 0.0
    %1132 = vmatpush1.msra.mxu0 0.0
    %1133 = vmatprep.subr.mxu0 0.0
    %1134 = vmatpush1.msra.mxu0 0.0
    %1135 = vmatprep.subr.mxu0 0.0
    %1136 = vmatpush1.msra.mxu0 0.0
    %1137 = vmatprep.subr.mxu0 0.0
    %1138 = vmatpush1.msra.mxu0 0.0
    %1139 = vmatprep.subr.mxu0 0.0
    %1140 = vmatpush1.msra.mxu0 0.0
    %1141 = vmatprep.subr.mxu0 0.0
    %1142 = vmatpush1.msra.mxu0 0.0
    %1143 = vmatprep.subr.mxu0 0.0
    %1144 = vmatpush1.msra.mxu0 0.0
    %1145 = vmatprep.subr.mxu0 0.0
    %1146 = vmatpush1.msra.mxu0 0.0
    %1147 = vmatprep.mubr.f32.mxu0 0.0
    %1148 = vmatmul.mubr.f32.gmra.mrb[0].mxu0 %v1081
    %v1149 = vpop.f32.mrb[0].mxu0
    %v1150 = vadd.f32 %v162, %v1149
    %v1151 = vpop.f32.mrb[0].mxu0
    %1152 = vdwg.mxu0
    %s1153 = scalar_lea.vmem [#allocation3], 12
    %1154 = vst.msk [vmem:[%s1153] sm:$0x3] %vm157, %v1150
    %s1155 = scalar_lea.vmem [#allocation6], 14
    %v1156 = vld [vmem:[%s1155] sm:$0x3]
    %1158 = vrot.lane.b32.xlu0 %v1156, 80
    %v1159 = vpop.permute.xlu0 %1158
    %v1160 = vsel %vm80, %v1159, 0
    %1162 = vmatprep.subr.mxu0 0.0
    %1163 = vmatpush1.msra.mxu0 %v85
    %1164 = vmatprep.subr.mxu0 0.0
    %1165 = vmatpush1.msra.mxu0 0.0
    %1166 = vmatprep.subr.mxu0 0.0
    %1167 = vmatpush1.msra.mxu0 0.0
    %1168 = vmatprep.subr.mxu0 0.0
    %1169 = vmatpush1.msra.mxu0 0.0
    %1170 = vmatprep.subr.mxu0 0.0
    %1171 = vmatpush1.msra.mxu0 0.0
    %1172 = vmatprep.subr.mxu0 0.0
    %1173 = vmatpush1.msra.mxu0 0.0
    %1174 = vmatprep.subr.mxu0 0.0
    %1175 = vmatpush1.msra.mxu0 0.0
    %1176 = vmatprep.subr.mxu0 0.0
    %1177 = vmatpush1.msra.mxu0 0.0
    %1178 = vmatprep.subr.mxu0 0.0
    %1179 = vmatpush1.msra.mxu0 0.0
    %1180 = vmatprep.subr.mxu0 0.0
    %1181 = vmatpush1.msra.mxu0 0.0
    %1182 = vmatprep.subr.mxu0 0.0
    %1183 = vmatpush1.msra.mxu0 0.0
    %1184 = vmatprep.subr.mxu0 0.0
    %1185 = vmatpush1.msra.mxu0 0.0
    %1186 = vmatprep.subr.mxu0 0.0
    %1187 = vmatpush1.msra.mxu0 0.0
    %1188 = vmatprep.subr.mxu0 0.0
    %1189 = vmatpush1.msra.mxu0 0.0
    %1190 = vmatprep.subr.mxu0 0.0
    %1191 = vmatpush1.msra.mxu0 0.0
    %1192 = vmatprep.subr.mxu0 0.0
    %1193 = vmatpush1.msra.mxu0 0.0
    %1194 = vmatprep.subr.mxu0 0.0
    %1195 = vmatpush1.msra.mxu0 0.0
    %1196 = vmatprep.subr.mxu0 0.0
    %1197 = vmatpush1.msra.mxu0 0.0
    %1198 = vmatprep.subr.mxu0 0.0
    %1199 = vmatpush1.msra.mxu0 0.0
    %1200 = vmatprep.subr.mxu0 0.0
    %1201 = vmatpush1.msra.mxu0 0.0
    %1202 = vmatprep.subr.mxu0 0.0
    %1203 = vmatpush1.msra.mxu0 0.0
    %1204 = vmatprep.subr.mxu0 0.0
    %1205 = vmatpush1.msra.mxu0 0.0
    %1206 = vmatprep.subr.mxu0 0.0
    %1207 = vmatpush1.msra.mxu0 0.0
    %1208 = vmatprep.subr.mxu0 0.0
    %1209 = vmatpush1.msra.mxu0 0.0
    %1210 = vmatprep.subr.mxu0 0.0
    %1211 = vmatpush1.msra.mxu0 0.0
    %1212 = vmatprep.subr.mxu0 0.0
    %1213 = vmatpush1.msra.mxu0 0.0
    %1214 = vmatprep.subr.mxu0 0.0
    %1215 = vmatpush1.msra.mxu0 0.0
    %1216 = vmatprep.subr.mxu0 0.0
    %1217 = vmatpush1.msra.mxu0 0.0
    %1218 = vmatprep.subr.mxu0 0.0
    %1219 = vmatpush1.msra.mxu0 0.0
    %1220 = vmatprep.subr.mxu0 0.0
    %1221 = vmatpush1.msra.mxu0 0.0
    %1222 = vmatprep.subr.mxu0 0.0
    %1223 = vmatpush1.msra.mxu0 0.0
    %1224 = vmatprep.subr.mxu0 0.0
    %1225 = vmatpush1.msra.mxu0 0.0
    %1226 = vmatprep.mubr.f32.mxu0 0.0
    %1227 = vmatmul.mubr.f32.gmra.mrb[0].mxu0 %v1160
    %v1228 = vpop.f32.mrb[0].mxu0
    %v1229 = vadd.f32 %v76, %v1228
    %v1230 = vpop.f32.mrb[0].mxu0
    %1231 = vdwg.mxu0
    %s1232 = scalar_lea.vmem [#allocation2], 14
    %1233 = vst.msk [vmem:[%s1232] sm:$0x3] %vm157, %v1229
    %v1234 = vsel %vm163, %v1156, 0
    %1236 = vmatprep.subr.mxu0 0.0
    %1237 = vmatpush1.msra.mxu0 %v69
    %1238 = vmatprep.subr.mxu0 0.0
    %1239 = vmatpush1.msra.mxu0 %v70
    %1240 = vmatprep.subr.mxu0 0.0
    %1241 = vmatpush1.msra.mxu0 0.0
    %1242 = vmatprep.subr.mxu0 0.0
    %1243 = vmatpush1.msra.mxu0 0.0
    %1244 = vmatprep.subr.mxu0 0.0
    %1245 = vmatpush1.msra.mxu0 0.0
    %1246 = vmatprep.subr.mxu0 0.0
    %1247 = vmatpush1.msra.mxu0 0.0
    %1248 = vmatprep.subr.mxu0 0.0
    %1249 = vmatpush1.msra.mxu0 0.0
    %1250 = vmatprep.subr.mxu0 0.0
    %1251 = vmatpush1.msra.mxu0 0.0
    %1252 = vmatprep.subr.mxu0 0.0
    %1253 = vmatpush1.msra.mxu0 0.0
    %1254 = vmatprep.subr.mxu0 0.0
    %1255 = vmatpush1.msra.mxu0 0.0
    %1256 = vmatprep.subr.mxu0 0.0
    %1257 = vmatpush1.msra.mxu0 0.0
    %1258 = vmatprep.subr.mxu0 0.0
    %1259 = vmatpush1.msra.mxu0 0.0
    %1260 = vmatprep.subr.mxu0 0.0
    %1261 = vmatpush1.msra.mxu0 0.0
    %1262 = vmatprep.subr.mxu0 0.0
    %1263 = vmatpush1.msra.mxu0 0.0
    %1264 = vmatprep.subr.mxu0 0.0
    %1265 = vmatpush1.msra.mxu0 0.0
    %1266 = vmatprep.subr.mxu0 0.0
    %1267 = vmatpush1.msra.mxu0 0.0
    %1268 = vmatprep.subr.mxu0 0.0
    %1269 = vmatpush1.msra.mxu0 0.0
    %1270 = vmatprep.subr.mxu0 0.0
    %1271 = vmatpush1.msra.mxu0 0.0
    %1272 = vmatprep.subr.mxu0 0.0
    %1273 = vmatpush1.msra.mxu0 0.0
    %1274 = vmatprep.subr.mxu0 0.0
    %1275 = vmatpush1.msra.mxu0 0.0
    %1276 = vmatprep.subr.mxu0 0.0
    %1277 = vmatpush1.msra.mxu0 0.0
    %1278 = vmatprep.subr.mxu0 0.0
    %1279 = vmatpush1.msra.mxu0 0.0
    %1280 = vmatprep.subr.mxu0 0.0
    %1281 = vmatpush1.msra.mxu0 0.0
    %1282 = vmatprep.subr.mxu0 0.0
    %1283 = vmatpush1.msra.mxu0 0.0
    %1284 = vmatprep.subr.mxu0 0.0
    %1285 = vmatpush1.msra.mxu0 0.0
    %1286 = vmatprep.subr.mxu0 0.0
    %1287 = vmatpush1.msra.mxu0 0.0
    %1288 = vmatprep.subr.mxu0 0.0
    %1289 = vmatpush1.msra.mxu0 0.0
    %1290 = vmatprep.subr.mxu0 0.0
    %1291 = vmatpush1.msra.mxu0 0.0
    %1292 = vmatprep.subr.mxu0 0.0
    %1293 = vmatpush1.msra.mxu0 0.0
    %1294 = vmatprep.subr.mxu0 0.0
    %1295 = vmatpush1.msra.mxu0 0.0
    %1296 = vmatprep.subr.mxu0 0.0
    %1297 = vmatpush1.msra.mxu0 0.0
    %1298 = vmatprep.subr.mxu0 0.0
    %1299 = vmatpush1.msra.mxu0 0.0
    %1300 = vmatprep.mubr.f32.mxu0 0.0
    %1301 = vmatmul.mubr.f32.gmra.mrb[0].mxu0 %v1234
    %v1302 = vpop.f32.mrb[0].mxu0
    %v1303 = vadd.f32 %v162, %v1302
    %v1304 = vpop.f32.mrb[0].mxu0
    %1305 = vdwg.mxu0
    %s1306 = scalar_lea.vmem [#allocation3], 14
    %1307 = vst.msk [vmem:[%s1306] sm:$0x3] %vm157, %v1303
    %v1308 = vld [vmem:[%s2] sm:$0x3]
    %v1309 = vld [vmem:[%s1] sm:$0x3]
    %v1310 = vld [vmem:[#allocation6] sm:$0x3]
    %1312 = vset.pattern.permute.xlu0 52
    %1313 = vperm.xlu0 %1312, %v1310
    %v1314 = vpop.permute.xlu0 %1313
    %v1316 = vmul.f32 %v1309, %v1314
    %v1317 = vld [vmem:[#allocation2] sm:$0x3]
    %v1319 = vsel %vm163, %v1316, 0
    %1321 = vmatprep.subr.mxu0 0.0
    %1322 = vmatpush1.msra.mxu0 %v46
    %1323 = vmatprep.subr.mxu0 0.0
    %1324 = vmatpush1.msra.mxu0 %v47
    %1325 = vmatprep.subr.mxu0 0.0
    %1326 = vmatpush1.msra.mxu0 0.0
    %1327 = vmatprep.subr.mxu0 0.0
    %1328 = vmatpush1.msra.mxu0 0.0
    %1329 = vmatprep.subr.mxu0 0.0
    %1330 = vmatpush1.msra.mxu0 0.0
    %1331 = vmatprep.subr.mxu0 0.0
    %1332 = vmatpush1.msra.mxu0 0.0
    %1333 = vmatprep.subr.mxu0 0.0
    %1334 = vmatpush1.msra.mxu0 0.0
    %1335 = vmatprep.subr.mxu0 0.0
    %1336 = vmatpush1.msra.mxu0 0.0
    %1337 = vmatprep.subr.mxu0 0.0
    %1338 = vmatpush1.msra.mxu0 0.0
    %1339 = vmatprep.subr.mxu0 0.0
    %1340 = vmatpush1.msra.mxu0 0.0
    %1341 = vmatprep.subr.mxu0 0.0
    %1342 = vmatpush1.msra.mxu0 0.0
    %1343 = vmatprep.subr.mxu0 0.0
    %1344 = vmatpush1.msra.mxu0 0.0
    %1345 = vmatprep.subr.mxu0 0.0
    %1346 = vmatpush1.msra.mxu0 0.0
    %1347 = vmatprep.subr.mxu0 0.0
    %1348 = vmatpush1.msra.mxu0 0.0
    %1349 = vmatprep.subr.mxu0 0.0
    %1350 = vmatpush1.msra.mxu0 0.0
    %1351 = vmatprep.subr.mxu0 0.0
    %1352 = vmatpush1.msra.mxu0 0.0
    %1353 = vmatprep.subr.mxu0 0.0
    %1354 = vmatpush1.msra.mxu0 0.0
    %1355 = vmatprep.subr.mxu0 0.0
    %1356 = vmatpush1.msra.mxu0 0.0
    %1357 = vmatprep.subr.mxu0 0.0
    %1358 = vmatpush1.msra.mxu0 0.0
    %1359 = vmatprep.subr.mxu0 0.0
    %1360 = vmatpush1.msra.mxu0 0.0
    %1361 = vmatprep.subr.mxu0 0.0
    %1362 = vmatpush1.msra.mxu0 0.0
    %1363 = vmatprep.subr.mxu0 0.0
    %1364 = vmatpush1.msra.mxu0 0.0
    %1365 = vmatprep.subr.mxu0 0.0
    %1366 = vmatpush1.msra.mxu0 0.0
    %1367 = vmatprep.subr.mxu0 0.0
    %1368 = vmatpush1.msra.mxu0 0.0
    %1369 = vmatprep.subr.mxu0 0.0
    %1370 = vmatpush1.msra.mxu0 0.0
    %1371 = vmatprep.subr.mxu0 0.0
    %1372 = vmatpush1.msra.mxu0 0.0
    %1373 = vmatprep.subr.mxu0 0.0
    %1374 = vmatpush1.msra.mxu0 0.0
    %1375 = vmatprep.subr.mxu0 0.0
    %1376 = vmatpush1.msra.mxu0 0.0
    %1377 = vmatprep.subr.mxu0 0.0
    %1378 = vmatpush1.msra.mxu0 0.0
    %1379 = vmatprep.subr.mxu0 0.0
    %1380 = vmatpush1.msra.mxu0 0.0
    %1381 = vmatprep.subr.mxu0 0.0
    %1382 = vmatpush1.msra.mxu0 0.0
    %1383 = vmatprep.subr.mxu0 0.0
    %1384 = vmatpush1.msra.mxu0 0.0
    %1385 = vmatprep.mubr.f32.mxu0 0.0
    %1386 = vmatmul.mubr.f32.gmra.mrb[0].mxu0 %v1319
    %v1387 = vpop.f32.mrb[0].mxu0
    %v1388 = vadd.f32 %v1317, %v1387
    %v1389 = vpop.f32.mrb[0].mxu0
    %1390 = vdwg.mxu0
    %v1391 = vmax.f32 %v1388, 0.0
    %v1392 = vlaneseq
    %v1393 = vshrl.u32 %v1392, 7
    %v1394 = vsub.s32 0, %v1393
    %v1395 = vrot.slane %v64, %v1394
    %vm1396 = vcmask 261120
    %v1398 = vsel %vm1396, %v1391, 0
    %1400 = vmatprep.subr.mxu0 0.0
    %1401 = vmatpush1.msra.mxu0 %v48
    %1402 = vmatprep.subr.mxu0 0.0
    %1403 = vmatpush1.msra.mxu0 %v49
    %1404 = vmatprep.subr.mxu0 0.0
    %1405 = vmatpush1.msra.mxu0 %v50
    %1406 = vmatprep.subr.mxu0 0.0
    %1407 = vmatpush1.msra.mxu0 %v51
    %1408 = vmatprep.subr.mxu0 0.0
    %1409 = vmatpush1.msra.mxu0 0.0
    %1410 = vmatprep.subr.mxu0 0.0
    %1411 = vmatpush1.msra.mxu0 0.0
    %1412 = vmatprep.subr.mxu0 0.0
    %1413 = vmatpush1.msra.mxu0 0.0
    %1414 = vmatprep.subr.mxu0 0.0
    %1415 = vmatpush1.msra.mxu0 0.0
    %1416 = vmatprep.subr.mxu0 0.0
    %1417 = vmatpush1.msra.mxu0 0.0
    %1418 = vmatprep.subr.mxu0 0.0
    %1419 = vmatpush1.msra.mxu0 0.0
    %1420 = vmatprep.subr.mxu0 0.0
    %1421 = vmatpush1.msra.mxu0 0.0
    %1422 = vmatprep.subr.mxu0 0.0
    %1423 = vmatpush1.msra.mxu0 0.0
    %1424 = vmatprep.subr.mxu0 0.0
    %1425 = vmatpush1.msra.mxu0 0.0
    %1426 = vmatprep.subr.mxu0 0.0
    %1427 = vmatpush1.msra.mxu0 0.0
    %1428 = vmatprep.subr.mxu0 0.0
    %1429 = vmatpush1.msra.mxu0 0.0
    %1430 = vmatprep.subr.mxu0 0.0
    %1431 = vmatpush1.msra.mxu0 0.0
    %1432 = vmatprep.subr.mxu0 0.0
    %1433 = vmatpush1.msra.mxu0 0.0
    %1434 = vmatprep.subr.mxu0 0.0
    %1435 = vmatpush1.msra.mxu0 0.0
    %1436 = vmatprep.subr.mxu0 0.0
    %1437 = vmatpush1.msra.mxu0 0.0
    %1438 = vmatprep.subr.mxu0 0.0
    %1439 = vmatpush1.msra.mxu0 0.0
    %1440 = vmatprep.subr.mxu0 0.0
    %1441 = vmatpush1.msra.mxu0 0.0
    %1442 = vmatprep.subr.mxu0 0.0
    %1443 = vmatpush1.msra.mxu0 0.0
    %1444 = vmatprep.subr.mxu0 0.0
    %1445 = vmatpush1.msra.mxu0 0.0
    %1446 = vmatprep.subr.mxu0 0.0
    %1447 = vmatpush1.msra.mxu0 0.0
    %1448 = vmatprep.subr.mxu0 0.0
    %1449 = vmatpush1.msra.mxu0 0.0
    %1450 = vmatprep.subr.mxu0 0.0
    %1451 = vmatpush1.msra.mxu0 0.0
    %1452 = vmatprep.subr.mxu0 0.0
    %1453 = vmatpush1.msra.mxu0 0.0
    %1454 = vmatprep.subr.mxu0 0.0
    %1455 = vmatpush1.msra.mxu0 0.0
    %1456 = vmatprep.subr.mxu0 0.0
    %1457 = vmatpush1.msra.mxu0 0.0
    %1458 = vmatprep.subr.mxu0 0.0
    %1459 = vmatpush1.msra.mxu0 0.0
    %1460 = vmatprep.subr.mxu0 0.0
    %1461 = vmatpush1.msra.mxu0 0.0
    %1462 = vmatprep.subr.mxu0 0.0
    %1463 = vmatpush1.msra.mxu0 0.0
    %1464 = vmatprep.mubr.f32.mxu0 0.0
    %1465 = vmatmul.mubr.f32.gmra.mrb[0].mxu0 %v1398
    %v1466 = vpop.f32.mrb[0].mxu0
    %v1467 = vadd.f32 %v1395, %v1466
    %v1468 = vpop.f32.mrb[0].mxu0
    %1469 = vdwg.mxu0
    %v1471 = vsel %vm1396, %v1308, 0
    %1473 = vmatprep.subr.mxu0 0.0
    %1474 = vmatpush1.msra.mxu0 %v52
    %1475 = vmatprep.subr.mxu0 0.0
    %1476 = vmatpush1.msra.mxu0 %v53
    %1477 = vmatprep.subr.mxu0 0.0
    %1478 = vmatpush1.msra.mxu0 %v54
    %1479 = vmatprep.subr.mxu0 0.0
    %1480 = vmatpush1.msra.mxu0 %v55
    %1481 = vmatprep.subr.mxu0 0.0
    %1482 = vmatpush1.msra.mxu0 0.0
    %1483 = vmatprep.subr.mxu0 0.0
    %1484 = vmatpush1.msra.mxu0 0.0
    %1485 = vmatprep.subr.mxu0 0.0
    %1486 = vmatpush1.msra.mxu0 0.0
    %1487 = vmatprep.subr.mxu0 0.0
    %1488 = vmatpush1.msra.mxu0 0.0
    %1489 = vmatprep.subr.mxu0 0.0
    %1490 = vmatpush1.msra.mxu0 0.0
    %1491 = vmatprep.subr.mxu0 0.0
    %1492 = vmatpush1.msra.mxu0 0.0
    %1493 = vmatprep.subr.mxu0 0.0
    %1494 = vmatpush1.msra.mxu0 0.0
    %1495 = vmatprep.subr.mxu0 0.0
    %1496 = vmatpush1.msra.mxu0 0.0
    %1497 = vmatprep.subr.mxu0 0.0
    %1498 = vmatpush1.msra.mxu0 0.0
    %1499 = vmatprep.subr.mxu0 0.0
    %1500 = vmatpush1.msra.mxu0 0.0
    %1501 = vmatprep.subr.mxu0 0.0
    %1502 = vmatpush1.msra.mxu0 0.0
    %1503 = vmatprep.subr.mxu0 0.0
    %1504 = vmatpush1.msra.mxu0 0.0
    %1505 = vmatprep.subr.mxu0 0.0
    %1506 = vmatpush1.msra.mxu0 0.0
    %1507 = vmatprep.subr.mxu0 0.0
    %1508 = vmatpush1.msra.mxu0 0.0
    %1509 = vmatprep.subr.mxu0 0.0
    %1510 = vmatpush1.msra.mxu0 0.0
    %1511 = vmatprep.subr.mxu0 0.0
    %1512 = vmatpush1.msra.mxu0 0.0
    %1513 = vmatprep.subr.mxu0 0.0
    %1514 = vmatpush1.msra.mxu0 0.0
    %1515 = vmatprep.subr.mxu0 0.0
    %1516 = vmatpush1.msra.mxu0 0.0
    %1517 = vmatprep.subr.mxu0 0.0
    %1518 = vmatpush1.msra.mxu0 0.0
    %1519 = vmatprep.subr.mxu0 0.0
    %1520 = vmatpush1.msra.mxu0 0.0
    %1521 = vmatprep.subr.mxu0 0.0
    %1522 = vmatpush1.msra.mxu0 0.0
    %1523 = vmatprep.subr.mxu0 0.0
    %1524 = vmatpush1.msra.mxu0 0.0
    %1525 = vmatprep.subr.mxu0 0.0
    %1526 = vmatpush1.msra.mxu0 0.0
    %1527 = vmatprep.subr.mxu0 0.0
    %1528 = vmatpush1.msra.mxu0 0.0
    %1529 = vmatprep.subr.mxu0 0.0
    %1530 = vmatpush1.msra.mxu0 0.0
    %1531 = vmatprep.subr.mxu0 0.0
    %1532 = vmatpush1.msra.mxu0 0.0
    %1533 = vmatprep.subr.mxu0 0.0
    %1534 = vmatpush1.msra.mxu0 0.0
    %1535 = vmatprep.subr.mxu0 0.0
    %1536 = vmatpush1.msra.mxu0 0.0
    %1537 = vmatprep.mubr.f32.mxu0 0.0
    %1538 = vmatmul.mubr.f32.gmra.mrb[0].mxu0 %v1471
    %v1539 = vpop.f32.mrb[0].mxu0
    %v1540 = vadd.f32 0.0, %v1539
    %v1541 = vpop.f32.mrb[0].mxu0
    %1542 = vdwg.mxu0
    %v1543 = vadd.f32 %v1467, %v1540
    %v1544 = vmul.f32 %v1543, 0.5
    %v1545 = vtanh.pop %v1544
    %v1546 = vmul.f32 %v1545, 0.5
    %v1547 = vadd.f32 %v1546, 0.5
    %v1548 = vlaneseq
    %v1549 = vshrl.u32 %v1548, 7
    %v1550 = vsub.s32 0, %v1549
    %v1551 = vrot.slane %v65, %v1550
    %1553 = vrot.lane.b32.xlu0 %v1551, 64
    %v1554 = vpop.permute.xlu0 %1553
    %v1556 = vadd.f32 %v1540, %v1554
    %1558 = vrot.lane.b32.xlu0 %v1556, 64
    %v1559 = vpop.permute.xlu0 %1558
    %v1561 = vmul.f32 %v1547, %v1559
    %1563 = vrot.lane.b32.xlu0 %v1561, 64
    %v1564 = vpop.permute.xlu0 %1563
    %v1566 = vadd.f32 %v1467, %v1564
    %v1567 = vtanh.pop %v1566
    %v1568 = vsub.f32 1.0, %v1547
    %1570 = vrot.lane.b32.xlu0 %v1567, 96
    %v1571 = vpop.permute.xlu0 %1570
    %v1573 = vmul.f32 %v1568, %v1571
    %1574 = vrot.lane.b32.xlu0 %v1308, 32
    %v1575 = vpop.permute.xlu0 %1574
    %v1577 = vmul.f32 %v1547, %v1575
    %v1578 = vadd.f32 %v1573, %v1577
    %v1579 = vld [vmem:[#allocation3] sm:$0x3]
    %1581 = vrot.lane.b32.xlu0 %v1578, 96
    %v1582 = vpop.permute.xlu0 %1581
    %v1583 = vsel %vm1396, %v1582, 0
    %1585 = vmatprep.subr.mxu0 0.0
    %1586 = vmatpush1.msra.mxu0 %v56
    %1587 = vmatprep.subr.mxu0 0.0
    %1588 = vmatpush1.msra.mxu0 %v57
    %1589 = vmatprep.subr.mxu0 0.0
    %1590 = vmatpush1.msra.mxu0 %v58
    %1591 = vmatprep.subr.mxu0 0.0
    %1592 = vmatpush1.msra.mxu0 %v59
    %1593 = vmatprep.subr.mxu0 0.0
    %1594 = vmatpush1.msra.mxu0 0.0
    %1595 = vmatprep.subr.mxu0 0.0
    %1596 = vmatpush1.msra.mxu0 0.0
    %1597 = vmatprep.subr.mxu0 0.0
    %1598 = vmatpush1.msra.mxu0 0.0
    %1599 = vmatprep.subr.mxu0 0.0
    %1600 = vmatpush1.msra.mxu0 0.0
    %1601 = vmatprep.subr.mxu0 0.0
    %1602 = vmatpush1.msra.mxu0 0.0
    %1603 = vmatprep.subr.mxu0 0.0
    %1604 = vmatpush1.msra.mxu0 0.0
    %1605 = vmatprep.subr.mxu0 0.0
    %1606 = vmatpush1.msra.mxu0 0.0
    %1607 = vmatprep.subr.mxu0 0.0
    %1608 = vmatpush1.msra.mxu0 0.0
    %1609 = vmatprep.subr.mxu0 0.0
    %1610 = vmatpush1.msra.mxu0 0.0
    %1611 = vmatprep.subr.mxu0 0.0
    %1612 = vmatpush1.msra.mxu0 0.0
    %1613 = vmatprep.subr.mxu0 0.0
    %1614 = vmatpush1.msra.mxu0 0.0
    %1615 = vmatprep.subr.mxu0 0.0
    %1616 = vmatpush1.msra.mxu0 0.0
    %1617 = vmatprep.subr.mxu0 0.0
    %1618 = vmatpush1.msra.mxu0 0.0
    %1619 = vmatprep.subr.mxu0 0.0
    %1620 = vmatpush1.msra.mxu0 0.0
    %1621 = vmatprep.subr.mxu0 0.0
    %1622 = vmatpush1.msra.mxu0 0.0
    %1623 = vmatprep.subr.mxu0 0.0
    %1624 = vmatpush1.msra.mxu0 0.0
    %1625 = vmatprep.subr.mxu0 0.0
    %1626 = vmatpush1.msra.mxu0 0.0
    %1627 = vmatprep.subr.mxu0 0.0
    %1628 = vmatpush1.msra.mxu0 0.0
    %1629 = vmatprep.subr.mxu0 0.0
    %1630 = vmatpush1.msra.mxu0 0.0
    %1631 = vmatprep.subr.mxu0 0.0
    %1632 = vmatpush1.msra.mxu0 0.0
    %1633 = vmatprep.subr.mxu0 0.0
    %1634 = vmatpush1.msra.mxu0 0.0
    %1635 = vmatprep.subr.mxu0 0.0
    %1636 = vmatpush1.msra.mxu0 0.0
    %1637 = vmatprep.subr.mxu0 0.0
    %1638 = vmatpush1.msra.mxu0 0.0
    %1639 = vmatprep.subr.mxu0 0.0
    %1640 = vmatpush1.msra.mxu0 0.0
    %1641 = vmatprep.subr.mxu0 0.0
    %1642 = vmatpush1.msra.mxu0 0.0
    %1643 = vmatprep.subr.mxu0 0.0
    %1644 = vmatpush1.msra.mxu0 0.0
    %1645 = vmatprep.subr.mxu0 0.0
    %1646 = vmatpush1.msra.mxu0 0.0
    %1647 = vmatprep.subr.mxu0 0.0
    %1648 = vmatpush1.msra.mxu0 0.0
    %1649 = vmatprep.mubr.f32.mxu0 0.0
    %1650 = vmatmul.mubr.f32.gmra.mrb[0].mxu0 %v1583
    %v1651 = vpop.f32.mrb[0].mxu0
    %v1652 = vadd.f32 %v1579, %v1651
    %v1653 = vpop.f32.mrb[0].mxu0
    %1654 = vdwg.mxu0
    %v1655 = vmax.f32 %v1652, 0.0
    %v1656 = vlaneseq
    %v1657 = vshrl.u32 %v1656, 7
    %v1658 = vsub.s32 0, %v1657
    %v1659 = vrot.slane %v66, %v1658
    %v1661 = vsel %vm1396, %v1655, 0
    %1663 = vmatprep.subr.mxu0 0.0
    %1664 = vmatpush1.msra.mxu0 %v60
    %1665 = vmatprep.subr.mxu0 0.0
    %1666 = vmatpush1.msra.mxu0 %v61
    %1667 = vmatprep.subr.mxu0 0.0
    %1668 = vmatpush1.msra.mxu0 %v62
    %1669 = vmatprep.subr.mxu0 0.0
    %1670 = vmatpush1.msra.mxu0 %v63
    %1671 = vmatprep.subr.mxu0 0.0
    %1672 = vmatpush1.msra.mxu0 0.0
    %1673 = vmatprep.subr.mxu0 0.0
    %1674 = vmatpush1.msra.mxu0 0.0
    %1675 = vmatprep.subr.mxu0 0.0
    %1676 = vmatpush1.msra.mxu0 0.0
    %1677 = vmatprep.subr.mxu0 0.0
    %1678 = vmatpush1.msra.mxu0 0.0
    %1679 = vmatprep.subr.mxu0 0.0
    %1680 = vmatpush1.msra.mxu0 0.0
    %1681 = vmatprep.subr.mxu0 0.0
    %1682 = vmatpush1.msra.mxu0 0.0
    %1683 = vmatprep.subr.mxu0 0.0
    %1684 = vmatpush1.msra.mxu0 0.0
    %1685 = vmatprep.subr.mxu0 0.0
    %1686 = vmatpush1.msra.mxu0 0.0
    %1687 = vmatprep.subr.mxu0 0.0
    %1688 = vmatpush1.msra.mxu0 0.0
    %1689 = vmatprep.subr.mxu0 0.0
    %1690 = vmatpush1.msra.mxu0 0.0
    %1691 = vmatprep.subr.mxu0 0.0
    %1692 = vmatpush1.msra.mxu0 0.0
    %1693 = vmatprep.subr.mxu0 0.0
    %1694 = vmatpush1.msra.mxu0 0.0
    %1695 = vmatprep.subr.mxu0 0.0
    %1696 = vmatpush1.msra.mxu0 0.0
    %1697 = vmatprep.subr.mxu0 0.0
    %1698 = vmatpush1.msra.mxu0 0.0
    %1699 = vmatprep.subr.mxu0 0.0
    %1700 = vmatpush1.msra.mxu0 0.0
    %1701 = vmatprep.subr.mxu0 0.0
    %1702 = vmatpush1.msra.mxu0 0.0
    %1703 = vmatprep.subr.mxu0 0.0
    %1704 = vmatpush1.msra.mxu0 0.0
    %1705 = vmatprep.subr.mxu0 0.0
    %1706 = vmatpush1.msra.mxu0 0.0
    %1707 = vmatprep.subr.mxu0 0.0
    %1708 = vmatpush1.msra.mxu0 0.0
    %1709 = vmatprep.subr.mxu0 0.0
    %1710 = vmatpush1.msra.mxu0 0.0
    %1711 = vmatprep.subr.mxu0 0.0
    %1712 = vmatpush1.msra.mxu0 0.0
    %1713 = vmatprep.subr.mxu0 0.0
    %1714 = vmatpush1.msra.mxu0 0.0
    %1715 = vmatprep.subr.mxu0 0.0
    %1716 = vmatpush1.msra.mxu0 0.0
    %1717 = vmatprep.subr.mxu0 0.0
    %1718 = vmatpush1.msra.mxu0 0.0
    %1719 = vmatprep.subr.mxu0 0.0
    %1720 = vmatpush1.msra.mxu0 0.0
    %1721 = vmatprep.subr.mxu0 0.0
    %1722 = vmatpush1.msra.mxu0 0.0
    %1723 = vmatprep.subr.mxu0 0.0
    %1724 = vmatpush1.msra.mxu0 0.0
    %1725 = vmatprep.subr.mxu0 0.0
    %1726 = vmatpush1.msra.mxu0 0.0
    %1727 = vmatprep.mubr.f32.mxu0 0.0
    %1728 = vmatmul.mubr.f32.gmra.mrb[0].mxu0 %v1661
    %v1729 = vpop.f32.mrb[0].mxu0
    %v1730 = vadd.f32 %v1659, %v1729
    %v1731 = vpop.f32.mrb[0].mxu0
    %1732 = vdwg.mxu0
    %v1733 = vmax.f32 %v1730, 0.0
    %v1734 = vand.u32 2147483647, %v1730
    %v1735 = vsub.f32 0.0, %v1734
    %v1736 = vmul.f32 %v1735, 1.442695
    %v1737 = vpow.pop %v1736
    %v1738 = vadd.f32 %v1737, 1.0
    %v1739 = vlog2.pop %v1738
    %v1740 = vmul.f32 %v1739, 0.6931472
    %v1741 = vmul.f32 -0.5, %v1737
    %v1742 = vadd.f32 %v1741, 1.0
    %v1743 = vmul.f32 %v1742, %v1737
    %v1744 = vand.u32 2147483647, %v1737
    %vm1745 = vcmp.lt.f32.partialorder %v1744, 0.0004427343
    %v1746 = vsel %vm1745, %v1743, %v1740
    %v1747 = vadd.f32 %v1733, %v1746
    %v1748 = vadd.f32 %v1747, 0.1
    %1749 = vrot.lane.b32.xlu0 %v1310, 112
    %v1750 = vpop.permute.xlu0 %1749
    %v1752 = vmul.f32 %v1748, %v1750
    %1754 = vrot.lane.b32.xlu0 %v1752, 112
    %v1755 = vpop.permute.xlu0 %1754
    %v1757 = vadd.f32 %v1730, %v1755
    %1759 = vst.msk [vmem:[#allocation4] sm:$0x3] %vm157, %v1582
    %1761 = vrot.lane.b32.xlu0 %v1730, 16
    %v1762 = vpop.permute.xlu0 %1761
    %1765 = vrot.lane.b32.xlu0 %v1748, 16
    %v1766 = vpop.permute.xlu0 %1765
    %v1768 = vsel %vm163, %v1757, %v1762
    %v1769 = vsel %vm1396, %v1768, %v1766
    %vm1770 = vcmask 386048
    %1771 = vst.msk [vmem:[#allocation5] sm:$0x3] %vm1770, %v1769
    %v1772 = vld [vmem:[%s237] sm:$0x3]
    %1774 = vset.pattern.permute.xlu0 52
    %1775 = vperm.xlu0 %1774, %v1772
    %v1776 = vpop.permute.xlu0 %1775
    %v1778 = vmul.f32 %v1757, %v1776
    %v1779 = vld [vmem:[%s314] sm:$0x3]
    %v1781 = vsel %vm163, %v1778, 0
    %1783 = vmatprep.subr.mxu0 0.0
    %1784 = vmatpush1.msra.mxu0 %v46
    %1785 = vmatprep.subr.mxu0 0.0
    %1786 = vmatpush1.msra.mxu0 %v47
    %1787 = vmatprep.subr.mxu0 0.0
    %1788 = vmatpush1.msra.mxu0 0.0
    %1789 = vmatprep.subr.mxu0 0.0
    %1790 = vmatpush1.msra.mxu0 0.0
    %1791 = vmatprep.subr.mxu0 0.0
    %1792 = vmatpush1.msra.mxu0 0.0
    %1793 = vmatprep.subr.mxu0 0.0
    %1794 = vmatpush1.msra.mxu0 0.0
    %1795 = vmatprep.subr.mxu0 0.0
    %1796 = vmatpush1.msra.mxu0 0.0
    %1797 = vmatprep.subr.mxu0 0.0
    %1798 = vmatpush1.msra.mxu0 0.0
    %1799 = vmatprep.subr.mxu0 0.0
    %1800 = vmatpush1.msra.mxu0 0.0
    %1801 = vmatprep.subr.mxu0 0.0
    %1802 = vmatpush1.msra.mxu0 0.0
    %1803 = vmatprep.subr.mxu0 0.0
    %1804 = vmatpush1.msra.mxu0 0.0
    %1805 = vmatprep.subr.mxu0 0.0
    %1806 = vmatpush1.msra.mxu0 0.0
    %1807 = vmatprep.subr.mxu0 0.0
    %1808 = vmatpush1.msra.mxu0 0.0
    %1809 = vmatprep.subr.mxu0 0.0
    %1810 = vmatpush1.msra.mxu0 0.0
    %1811 = vmatprep.subr.mxu0 0.0
    %1812 = vmatpush1.msra.mxu0 0.0
    %1813 = vmatprep.subr.mxu0 0.0
    %1814 = vmatpush1.msra.mxu0 0.0
    %1815 = vmatprep.subr.mxu0 0.0
    %1816 = vmatpush1.msra.mxu0 0.0
    %1817 = vmatprep.subr.mxu0 0.0
    %1818 = vmatpush1.msra.mxu0 0.0
    %1819 = vmatprep.subr.mxu0 0.0
    %1820 = vmatpush1.msra.mxu0 0.0
    %1821 = vmatprep.subr.mxu0 0.0
    %1822 = vmatpush1.msra.mxu0 0.0
    %1823 = vmatprep.subr.mxu0 0.0
    %1824 = vmatpush1.msra.mxu0 0.0
    %1825 = vmatprep.subr.mxu0 0.0
    %1826 = vmatpush1.msra.mxu0 0.0
    %1827 = vmatprep.subr.mxu0 0.0
    %1828 = vmatpush1.msra.mxu0 0.0
    %1829 = vmatprep.subr.mxu0 0.0
    %1830 = vmatpush1.msra.mxu0 0.0
    %1831 = vmatprep.subr.mxu0 0.0
    %1832 = vmatpush1.msra.mxu0 0.0
    %1833 = vmatprep.subr.mxu0 0.0
    %1834 = vmatpush1.msra.mxu0 0.0
    %1835 = vmatprep.subr.mxu0 0.0
    %1836 = vmatpush1.msra.mxu0 0.0
    %1837 = vmatprep.subr.mxu0 0.0
    %1838 = vmatpush1.msra.mxu0 0.0
    %1839 = vmatprep.subr.mxu0 0.0
    %1840 = vmatpush1.msra.mxu0 0.0
    %1841 = vmatprep.subr.mxu0 0.0
    %1842 = vmatpush1.msra.mxu0 0.0
    %1843 = vmatprep.subr.mxu0 0.0
    %1844 = vmatpush1.msra.mxu0 0.0
    %1845 = vmatprep.subr.mxu0 0.0
    %1846 = vmatpush1.msra.mxu0 0.0
    %1847 = vmatprep.mubr.f32.mxu0 0.0
    %1848 = vmatmul.mubr.f32.gmra.mrb[0].mxu0 %v1781
    %v1849 = vpop.f32.mrb[0].mxu0
    %v1850 = vadd.f32 %v1779, %v1849
    %v1851 = vpop.f32.mrb[0].mxu0
    %1852 = vdwg.mxu0
    %v1853 = vmax.f32 %v1850, 0.0
    %v1855 = vsel %vm1396, %v1853, 0
    %1857 = vmatprep.subr.mxu0 0.0
    %1858 = vmatpush1.msra.mxu0 %v48
    %1859 = vmatprep.subr.mxu0 0.0
    %1860 = vmatpush1.msra.mxu0 %v49
    %1861 = vmatprep.subr.mxu0 0.0
    %1862 = vmatpush1.msra.mxu0 %v50
    %1863 = vmatprep.subr.mxu0 0.0
    %1864 = vmatpush1.msra.mxu0 %v51
    %1865 = vmatprep.subr.mxu0 0.0
    %1866 = vmatpush1.msra.mxu0 0.0
    %1867 = vmatprep.subr.mxu0 0.0
    %1868 = vmatpush1.msra.mxu0 0.0
    %1869 = vmatprep.subr.mxu0 0.0
    %1870 = vmatpush1.msra.mxu0 0.0
    %1871 = vmatprep.subr.mxu0 0.0
    %1872 = vmatpush1.msra.mxu0 0.0
    %1873 = vmatprep.subr.mxu0 0.0
    %1874 = vmatpush1.msra.mxu0 0.0
    %1875 = vmatprep.subr.mxu0 0.0
    %1876 = vmatpush1.msra.mxu0 0.0
    %1877 = vmatprep.subr.mxu0 0.0
    %1878 = vmatpush1.msra.mxu0 0.0
    %1879 = vmatprep.subr.mxu0 0.0
    %1880 = vmatpush1.msra.mxu0 0.0
    %1881 = vmatprep.subr.mxu0 0.0
    %1882 = vmatpush1.msra.mxu0 0.0
    %1883 = vmatprep.subr.mxu0 0.0
    %1884 = vmatpush1.msra.mxu0 0.0
    %1885 = vmatprep.subr.mxu0 0.0
    %1886 = vmatpush1.msra.mxu0 0.0
    %1887 = vmatprep.subr.mxu0 0.0
    %1888 = vmatpush1.msra.mxu0 0.0
    %1889 = vmatprep.subr.mxu0 0.0
    %1890 = vmatpush1.msra.mxu0 0.0
    %1891 = vmatprep.subr.mxu0 0.0
    %1892 = vmatpush1.msra.mxu0 0.0
    %1893 = vmatprep.subr.mxu0 0.0
    %1894 = vmatpush1.msra.mxu0 0.0
    %1895 = vmatprep.subr.mxu0 0.0
    %1896 = vmatpush1.msra.mxu0 0.0
    %1897 = vmatprep.subr.mxu0 0.0
    %1898 = vmatpush1.msra.mxu0 0.0
    %1899 = vmatprep.subr.mxu0 0.0
    %1900 = vmatpush1.msra.mxu0 0.0
    %1901 = vmatprep.subr.mxu0 0.0
    %1902 = vmatpush1.msra.mxu0 0.0
    %1903 = vmatprep.subr.mxu0 0.0
    %1904 = vmatpush1.msra.mxu0 0.0
    %1905 = vmatprep.subr.mxu0 0.0
    %1906 = vmatpush1.msra.mxu0 0.0
    %1907 = vmatprep.subr.mxu0 0.0
    %1908 = vmatpush1.msra.mxu0 0.0
    %1909 = vmatprep.subr.mxu0 0.0
    %1910 = vmatpush1.msra.mxu0 0.0
    %1911 = vmatprep.subr.mxu0 0.0
    %1912 = vmatpush1.msra.mxu0 0.0
    %1913 = vmatprep.subr.mxu0 0.0
    %1914 = vmatpush1.msra.mxu0 0.0
    %1915 = vmatprep.subr.mxu0 0.0
    %1916 = vmatpush1.msra.mxu0 0.0
    %1917 = vmatprep.subr.mxu0 0.0
    %1918 = vmatpush1.msra.mxu0 0.0
    %1919 = vmatprep.subr.mxu0 0.0
    %1920 = vmatpush1.msra.mxu0 0.0
    %1921 = vmatprep.mubr.f32.mxu0 0.0
    %1922 = vmatmul.mubr.f32.gmra.mrb[0].mxu0 %v1855
    %v1923 = vpop.f32.mrb[0].mxu0
    %v1924 = vadd.f32 %v1395, %v1923
    %v1925 = vpop.f32.mrb[0].mxu0
    %1926 = vdwg.mxu0
    %1927 = vmatprep.subr.mxu0 0.0
    %1928 = vmatpush1.msra.mxu0 %v52
    %1929 = vmatprep.subr.mxu0 0.0
    %1930 = vmatpush1.msra.mxu0 %v53
    %1931 = vmatprep.subr.mxu0 0.0
    %1932 = vmatpush1.msra.mxu0 %v54
    %1933 = vmatprep.subr.mxu0 0.0
    %1934 = vmatpush1.msra.mxu0 %v55
    %1935 = vmatprep.subr.mxu0 0.0
    %1936 = vmatpush1.msra.mxu0 0.0
    %1937 = vmatprep.subr.mxu0 0.0
    %1938 = vmatpush1.msra.mxu0 0.0
    %1939 = vmatprep.subr.mxu0 0.0
    %1940 = vmatpush1.msra.mxu0 0.0
    %1941 = vmatprep.subr.mxu0 0.0
    %1942 = vmatpush1.msra.mxu0 0.0
    %1943 = vmatprep.subr.mxu0 0.0
    %1944 = vmatpush1.msra.mxu0 0.0
    %1945 = vmatprep.subr.mxu0 0.0
    %1946 = vmatpush1.msra.mxu0 0.0
    %1947 = vmatprep.subr.mxu0 0.0
    %1948 = vmatpush1.msra.mxu0 0.0
    %1949 = vmatprep.subr.mxu0 0.0
    %1950 = vmatpush1.msra.mxu0 0.0
    %1951 = vmatprep.subr.mxu0 0.0
    %1952 = vmatpush1.msra.mxu0 0.0
    %1953 = vmatprep.subr.mxu0 0.0
    %1954 = vmatpush1.msra.mxu0 0.0
    %1955 = vmatprep.subr.mxu0 0.0
    %1956 = vmatpush1.msra.mxu0 0.0
    %1957 = vmatprep.subr.mxu0 0.0
    %1958 = vmatpush1.msra.mxu0 0.0
    %1959 = vmatprep.subr.mxu0 0.0
    %1960 = vmatpush1.msra.mxu0 0.0
    %1961 = vmatprep.subr.mxu0 0.0
    %1962 = vmatpush1.msra.mxu0 0.0
    %1963 = vmatprep.subr.mxu0 0.0
    %1964 = vmatpush1.msra.mxu0 0.0
    %1965 = vmatprep.subr.mxu0 0.0
    %1966 = vmatpush1.msra.mxu0 0.0
    %1967 = vmatprep.subr.mxu0 0.0
    %1968 = vmatpush1.msra.mxu0 0.0
    %1969 = vmatprep.subr.mxu0 0.0
    %1970 = vmatpush1.msra.mxu0 0.0
    %1971 = vmatprep.subr.mxu0 0.0
    %1972 = vmatpush1.msra.mxu0 0.0
    %1973 = vmatprep.subr.mxu0 0.0
    %1974 = vmatpush1.msra.mxu0 0.0
    %1975 = vmatprep.subr.mxu0 0.0
    %1976 = vmatpush1.msra.mxu0 0.0
    %1977 = vmatprep.subr.mxu0 0.0
    %1978 = vmatpush1.msra.mxu0 0.0
    %1979 = vmatprep.subr.mxu0 0.0
    %1980 = vmatpush1.msra.mxu0 0.0
    %1981 = vmatprep.subr.mxu0 0.0
    %1982 = vmatpush1.msra.mxu0 0.0
    %1983 = vmatprep.subr.mxu0 0.0
    %1984 = vmatpush1.msra.mxu0 0.0
    %1985 = vmatprep.subr.mxu0 0.0
    %1986 = vmatpush1.msra.mxu0 0.0
    %1987 = vmatprep.subr.mxu0 0.0
    %1988 = vmatpush1.msra.mxu0 0.0
    %1989 = vmatprep.subr.mxu0 0.0
    %1990 = vmatpush1.msra.mxu0 0.0
    %1991 = vmatprep.mubr.f32.mxu0 0.0
    %1992 = vmatmul.mubr.f32.gmra.mrb[0].mxu0 %v1583
    %v1993 = vpop.f32.mrb[0].mxu0
    %v1994 = vadd.f32 0.0, %v1993
    %v1995 = vpop.f32.mrb[0].mxu0
    %1996 = vdwg.mxu0
    %v1997 = vadd.f32 %v1924, %v1994
    %v1998 = vmul.f32 %v1997, 0.5
    %v1999 = vtanh.pop %v1998
    %v2000 = vmul.f32 %v1999, 0.5
    %v2001 = vadd.f32 %v2000, 0.5
    %v2002 = vadd.f32 %v1994, %v1554
    %2004 = vrot.lane.b32.xlu0 %v2002, 64
    %v2005 = vpop.permute.xlu0 %2004
    %v2007 = vmul.f32 %v2001, %v2005
    %2009 = vrot.lane.b32.xlu0 %v2007, 64
    %v2010 = vpop.permute.xlu0 %2009
    %v2012 = vadd.f32 %v1924, %v2010
    %v2013 = vtanh.pop %v2012
    %v2014 = vsub.f32 1.0, %v2001
    %2016 = vrot.lane.b32.xlu0 %v2013, 96
    %v2017 = vpop.permute.xlu0 %2016
    %v2019 = vmul.f32 %v2014, %v2017
    %v2020 = vmul.f32 %v2001, %v1578
    %v2021 = vadd.f32 %v2019, %v2020
    %v2022 = vld [vmem:[%s388] sm:$0x3]
    %2024 = vrot.lane.b32.xlu0 %v2021, 96
    %v2025 = vpop.permute.xlu0 %2024
    %v2026 = vsel %vm1396, %v2025, 0
    %2028 = vmatprep.subr.mxu0 0.0
    %2029 = vmatpush1.msra.mxu0 %v56
    %2030 = vmatprep.subr.mxu0 0.0
    %2031 = vmatpush1.msra.mxu0 %v57
    %2032 = vmatprep.subr.mxu0 0.0
    %2033 = vmatpush1.msra.mxu0 %v58
    %2034 = vmatprep.subr.mxu0 0.0
    %2035 = vmatpush1.msra.mxu0 %v59
    %2036 = vmatprep.subr.mxu0 0.0
    %2037 = vmatpush1.msra.mxu0 0.0
    %2038 = vmatprep.subr.mxu0 0.0
    %2039 = vmatpush1.msra.mxu0 0.0
    %2040 = vmatprep.subr.mxu0 0.0
    %2041 = vmatpush1.msra.mxu0 0.0
    %2042 = vmatprep.subr.mxu0 0.0
    %2043 = vmatpush1.msra.mxu0 0.0
    %2044 = vmatprep.subr.mxu0 0.0
    %2045 = vmatpush1.msra.mxu0 0.0
    %2046 = vmatprep.subr.mxu0 0.0
    %2047 = vmatpush1.msra.mxu0 0.0
    %2048 = vmatprep.subr.mxu0 0.0
    %2049 = vmatpush1.msra.mxu0 0.0
    %2050 = vmatprep.subr.mxu0 0.0
    %2051 = vmatpush1.msra.mxu0 0.0
    %2052 = vmatprep.subr.mxu0 0.0
    %2053 = vmatpush1.msra.mxu0 0.0
    %2054 = vmatprep.subr.mxu0 0.0
    %2055 = vmatpush1.msra.mxu0 0.0
    %2056 = vmatprep.subr.mxu0 0.0
    %2057 = vmatpush1.msra.mxu0 0.0
    %2058 = vmatprep.subr.mxu0 0.0
    %2059 = vmatpush1.msra.mxu0 0.0
    %2060 = vmatprep.subr.mxu0 0.0
    %2061 = vmatpush1.msra.mxu0 0.0
    %2062 = vmatprep.subr.mxu0 0.0
    %2063 = vmatpush1.msra.mxu0 0.0
    %2064 = vmatprep.subr.mxu0 0.0
    %2065 = vmatpush1.msra.mxu0 0.0
    %2066 = vmatprep.subr.mxu0 0.0
    %2067 = vmatpush1.msra.mxu0 0.0
    %2068 = vmatprep.subr.mxu0 0.0
    %2069 = vmatpush1.msra.mxu0 0.0
    %2070 = vmatprep.subr.mxu0 0.0
    %2071 = vmatpush1.msra.mxu0 0.0
    %2072 = vmatprep.subr.mxu0 0.0
    %2073 = vmatpush1.msra.mxu0 0.0
    %2074 = vmatprep.subr.mxu0 0.0
    %2075 = vmatpush1.msra.mxu0 0.0
    %2076 = vmatprep.subr.mxu0 0.0
    %2077 = vmatpush1.msra.mxu0 0.0
    %2078 = vmatprep.subr.mxu0 0.0
    %2079 = vmatpush1.msra.mxu0 0.0
    %2080 = vmatprep.subr.mxu0 0.0
    %2081 = vmatpush1.msra.mxu0 0.0
    %2082 = vmatprep.subr.mxu0 0.0
    %2083 = vmatpush1.msra.mxu0 0.0
    %2084 = vmatprep.subr.mxu0 0.0
    %2085 = vmatpush1.msra.mxu0 0.0
    %2086 = vmatprep.subr.mxu0 0.0
    %2087 = vmatpush1.msra.mxu0 0.0
    %2088 = vmatprep.subr.mxu0 0.0
    %2089 = vmatpush1.msra.mxu0 0.0
    %2090 = vmatprep.subr.mxu0 0.0
    %2091 = vmatpush1.msra.mxu0 0.0
    %2092 = vmatprep.mubr.f32.mxu0 0.0
    %2093 = vmatmul.mubr.f32.gmra.mrb[0].mxu0 %v2026
    %v2094 = vpop.f32.mrb[0].mxu0
    %v2095 = vadd.f32 %v2022, %v2094
    %v2096 = vpop.f32.mrb[0].mxu0
    %2097 = vdwg.mxu0
    %v2098 = vmax.f32 %v2095, 0.0
    %v2100 = vsel %vm1396, %v2098, 0
    %2102 = vmatprep.subr.mxu0 0.0
    %2103 = vmatpush1.msra.mxu0 %v60
    %2104 = vmatprep.subr.mxu0 0.0
    %2105 = vmatpush1.msra.mxu0 %v61
    %2106 = vmatprep.subr.mxu0 0.0
    %2107 = vmatpush1.msra.mxu0 %v62
    %2108 = vmatprep.subr.mxu0 0.0
    %2109 = vmatpush1.msra.mxu0 %v63
    %2110 = vmatprep.subr.mxu0 0.0
    %2111 = vmatpush1.msra.mxu0 0.0
    %2112 = vmatprep.subr.mxu0 0.0
    %2113 = vmatpush1.msra.mxu0 0.0
    %2114 = vmatprep.subr.mxu0 0.0
    %2115 = vmatpush1.msra.mxu0 0.0
    %2116 = vmatprep.subr.mxu0 0.0
    %2117 = vmatpush1.msra.mxu0 0.0
    %2118 = vmatprep.subr.mxu0 0.0
    %2119 = vmatpush1.msra.mxu0 0.0
    %2120 = vmatprep.subr.mxu0 0.0
    %2121 = vmatpush1.msra.mxu0 0.0
    %2122 = vmatprep.subr.mxu0 0.0
    %2123 = vmatpush1.msra.mxu0 0.0
    %2124 = vmatprep.subr.mxu0 0.0
    %2125 = vmatpush1.msra.mxu0 0.0
    %2126 = vmatprep.subr.mxu0 0.0
    %2127 = vmatpush1.msra.mxu0 0.0
    %2128 = vmatprep.subr.mxu0 0.0
    %2129 = vmatpush1.msra.mxu0 0.0
    %2130 = vmatprep.subr.mxu0 0.0
    %2131 = vmatpush1.msra.mxu0 0.0
    %2132 = vmatprep.subr.mxu0 0.0
    %2133 = vmatpush1.msra.mxu0 0.0
    %2134 = vmatprep.subr.mxu0 0.0
    %2135 = vmatpush1.msra.mxu0 0.0
    %2136 = vmatprep.subr.mxu0 0.0
    %2137 = vmatpush1.msra.mxu0 0.0
    %2138 = vmatprep.subr.mxu0 0.0
    %2139 = vmatpush1.msra.mxu0 0.0
    %2140 = vmatprep.subr.mxu0 0.0
    %2141 = vmatpush1.msra.mxu0 0.0
    %2142 = vmatprep.subr.mxu0 0.0
    %2143 = vmatpush1.msra.mxu0 0.0
    %2144 = vmatprep.subr.mxu0 0.0
    %2145 = vmatpush1.msra.mxu0 0.0
    %2146 = vmatprep.subr.mxu0 0.0
    %2147 = vmatpush1.msra.mxu0 0.0
    %2148 = vmatprep.subr.mxu0 0.0
    %2149 = vmatpush1.msra.mxu0 0.0
    %2150 = vmatprep.subr.mxu0 0.0
    %2151 = vmatpush1.msra.mxu0 0.0
    %2152 = vmatprep.subr.mxu0 0.0
    %2153 = vmatpush1.msra.mxu0 0.0
    %2154 = vmatprep.subr.mxu0 0.0
    %2155 = vmatpush1.msra.mxu0 0.0
    %2156 = vmatprep.subr.mxu0 0.0
    %2157 = vmatpush1.msra.mxu0 0.0
    %2158 = vmatprep.subr.mxu0 0.0
    %2159 = vmatpush1.msra.mxu0 0.0
    %2160 = vmatprep.subr.mxu0 0.0
    %2161 = vmatpush1.msra.mxu0 0.0
    %2162 = vmatprep.subr.mxu0 0.0
    %2163 = vmatpush1.msra.mxu0 0.0
    %2164 = vmatprep.subr.mxu0 0.0
    %2165 = vmatpush1.msra.mxu0 0.0
    %2166 = vmatprep.mubr.f32.mxu0 0.0
    %2167 = vmatmul.mubr.f32.gmra.mrb[0].mxu0 %v2100
    %v2168 = vpop.f32.mrb[0].mxu0
    %v2169 = vadd.f32 %v1659, %v2168
    %v2170 = vpop.f32.mrb[0].mxu0
    %2171 = vdwg.mxu0
    %v2172 = vmax.f32 %v2169, 0.0
    %v2173 = vand.u32 2147483647, %v2169
    %v2174 = vsub.f32 0.0, %v2173
    %v2175 = vmul.f32 %v2174, 1.442695
    %v2176 = vpow.pop %v2175
    %v2177 = vadd.f32 %v2176, 1.0
    %v2178 = vlog2.pop %v2177
    %v2179 = vmul.f32 %v2178, 0.6931472
    %v2180 = vmul.f32 -0.5, %v2176
    %v2181 = vadd.f32 %v2180, 1.0
    %v2182 = vmul.f32 %v2181, %v2176
    %v2183 = vand.u32 2147483647, %v2176
    %vm2184 = vcmp.lt.f32.partialorder %v2183, 0.0004427343
    %v2185 = vsel %vm2184, %v2182, %v2179
    %v2186 = vadd.f32 %v2172, %v2185
    %v2187 = vadd.f32 %v2186, 0.1
    %2188 = vrot.lane.b32.xlu0 %v1772, 112
    %v2189 = vpop.permute.xlu0 %2188
    %v2191 = vmul.f32 %v2187, %v2189
    %2193 = vrot.lane.b32.xlu0 %v2191, 112
    %v2194 = vpop.permute.xlu0 %2193
    %v2196 = vadd.f32 %v2169, %v2194
    %s2198 = scalar_lea.vmem [#allocation4], 2
    %2199 = vst.msk [vmem:[%s2198] sm:$0x3] %vm157, %v2025
    %2201 = vrot.lane.b32.xlu0 %v2169, 16
    %v2202 = vpop.permute.xlu0 %2201
    %2205 = vrot.lane.b32.xlu0 %v2187, 16
    %v2206 = vpop.permute.xlu0 %2205
    %v2208 = vsel %vm163, %v2196, %v2202
    %v2209 = vsel %vm1396, %v2208, %v2206
    %s2210 = scalar_lea.vmem [#allocation5], 2
    %2211 = vst.msk [vmem:[%s2210] sm:$0x3] %vm1770, %v2209
    %v2212 = vld [vmem:[%s390] sm:$0x3]
    %2214 = vset.pattern.permute.xlu0 52
    %2215 = vperm.xlu0 %2214, %v2212
    %v2216 = vpop.permute.xlu0 %2215
    %v2218 = vmul.f32 %v2196, %v2216
    %v2219 = vld [vmem:[%s467] sm:$0x3]
    %v2221 = vsel %vm163, %v2218, 0
    %2223 = vmatprep.subr.mxu0 0.0
    %2224 = vmatpush1.msra.mxu0 %v46
    %2225 = vmatprep.subr.mxu0 0.0
    %2226 = vmatpush1.msra.mxu0 %v47
    %2227 = vmatprep.subr.mxu0 0.0
    %2228 = vmatpush1.msra.mxu0 0.0
    %2229 = vmatprep.subr.mxu0 0.0
    %2230 = vmatpush1.msra.mxu0 0.0
    %2231 = vmatprep.subr.mxu0 0.0
    %2232 = vmatpush1.msra.mxu0 0.0
    %2233 = vmatprep.subr.mxu0 0.0
    %2234 = vmatpush1.msra.mxu0 0.0
    %2235 = vmatprep.subr.mxu0 0.0
    %2236 = vmatpush1.msra.mxu0 0.0
    %2237 = vmatprep.subr.mxu0 0.0
    %2238 = vmatpush1.msra.mxu0 0.0
    %2239 = vmatprep.subr.mxu0 0.0
    %2240 = vmatpush1.msra.mxu0 0.0
    %2241 = vmatprep.subr.mxu0 0.0
    %2242 = vmatpush1.msra.mxu0 0.0
    %2243 = vmatprep.subr.mxu0 0.0
    %2244 = vmatpush1.msra.mxu0 0.0
    %2245 = vmatprep.subr.mxu0 0.0
    %2246 = vmatpush1.msra.mxu0 0.0
    %2247 = vmatprep.subr.mxu0 0.0
    %2248 = vmatpush1.msra.mxu0 0.0
    %2249 = vmatprep.subr.mxu0 0.0
    %2250 = vmatpush1.msra.mxu0 0.0
    %2251 = vmatprep.subr.mxu0 0.0
    %2252 = vmatpush1.msra.mxu0 0.0
    %2253 = vmatprep.subr.mxu0 0.0
    %2254 = vmatpush1.msra.mxu0 0.0
    %2255 = vmatprep.subr.mxu0 0.0
    %2256 = vmatpush1.msra.mxu0 0.0
    %2257 = vmatprep.subr.mxu0 0.0
    %2258 = vmatpush1.msra.mxu0 0.0
    %2259 = vmatprep.subr.mxu0 0.0
    %2260 = vmatpush1.msra.mxu0 0.0
    %2261 = vmatprep.subr.mxu0 0.0
    %2262 = vmatpush1.msra.mxu0 0.0
    %2263 = vmatprep.subr.mxu0 0.0
    %2264 = vmatpush1.msra.mxu0 0.0
    %2265 = vmatprep.subr.mxu0 0.0
    %2266 = vmatpush1.msra.mxu0 0.0
    %2267 = vmatprep.subr.mxu0 0.0
    %2268 = vmatpush1.msra.mxu0 0.0
    %2269 = vmatprep.subr.mxu0 0.0
    %2270 = vmatpush1.msra.mxu0 0.0
    %2271 = vmatprep.subr.mxu0 0.0
    %2272 = vmatpush1.msra.mxu0 0.0
    %2273 = vmatprep.subr.mxu0 0.0
    %2274 = vmatpush1.msra.mxu0 0.0
    %2275 = vmatprep.subr.mxu0 0.0
    %2276 = vmatpush1.msra.mxu0 0.0
    %2277 = vmatprep.subr.mxu0 0.0
    %2278 = vmatpush1.msra.mxu0 0.0
    %2279 = vmatprep.subr.mxu0 0.0
    %2280 = vmatpush1.msra.mxu0 0.0
    %2281 = vmatprep.subr.mxu0 0.0
    %2282 = vmatpush1.msra.mxu0 0.0
    %2283 = vmatprep.subr.mxu0 0.0
    %2284 = vmatpush1.msra.mxu0 0.0
    %2285 = vmatprep.subr.mxu0 0.0
    %2286 = vmatpush1.msra.mxu0 0.0
    %2287 = vmatprep.mubr.f32.mxu0 0.0
    %2288 = vmatmul.mubr.f32.gmra.mrb[0].mxu0 %v2221
    %v2289 = vpop.f32.mrb[0].mxu0
    %v2290 = vadd.f32 %v2219, %v2289
    %v2291 = vpop.f32.mrb[0].mxu0
    %2292 = vdwg.mxu0
    %v2293 = vmax.f32 %v2290, 0.0
    %v2295 = vsel %vm1396, %v2293, 0
    %2297 = vmatprep.subr.mxu0 0.0
    %2298 = vmatpush1.msra.mxu0 %v48
    %2299 = vmatprep.subr.mxu0 0.0
    %2300 = vmatpush1.msra.mxu0 %v49
    %2301 = vmatprep.subr.mxu0 0.0
    %2302 = vmatpush1.msra.mxu0 %v50
    %2303 = vmatprep.subr.mxu0 0.0
    %2304 = vmatpush1.msra.mxu0 %v51
    %2305 = vmatprep.subr.mxu0 0.0
    %2306 = vmatpush1.msra.mxu0 0.0
    %2307 = vmatprep.subr.mxu0 0.0
    %2308 = vmatpush1.msra.mxu0 0.0
    %2309 = vmatprep.subr.mxu0 0.0
    %2310 = vmatpush1.msra.mxu0 0.0
    %2311 = vmatprep.subr.mxu0 0.0
    %2312 = vmatpush1.msra.mxu0 0.0
    %2313 = vmatprep.subr.mxu0 0.0
    %2314 = vmatpush1.msra.mxu0 0.0
    %2315 = vmatprep.subr.mxu0 0.0
    %2316 = vmatpush1.msra.mxu0 0.0
    %2317 = vmatprep.subr.mxu0 0.0
    %2318 = vmatpush1.msra.mxu0 0.0
    %2319 = vmatprep.subr.mxu0 0.0
    %2320 = vmatpush1.msra.mxu0 0.0
    %2321 = vmatprep.subr.mxu0 0.0
    %2322 = vmatpush1.msra.mxu0 0.0
    %2323 = vmatprep.subr.mxu0 0.0
    %2324 = vmatpush1.msra.mxu0 0.0
    %2325 = vmatprep.subr.mxu0 0.0
    %2326 = vmatpush1.msra.mxu0 0.0
    %2327 = vmatprep.subr.mxu0 0.0
    %2328 = vmatpush1.msra.mxu0 0.0
    %2329 = vmatprep.subr.mxu0 0.0
    %2330 = vmatpush1.msra.mxu0 0.0
    %2331 = vmatprep.subr.mxu0 0.0
    %2332 = vmatpush1.msra.mxu0 0.0
    %2333 = vmatprep.subr.mxu0 0.0
    %2334 = vmatpush1.msra.mxu0 0.0
    %2335 = vmatprep.subr.mxu0 0.0
    %2336 = vmatpush1.msra.mxu0 0.0
    %2337 = vmatprep.subr.mxu0 0.0
    %2338 = vmatpush1.msra.mxu0 0.0
    %2339 = vmatprep.subr.mxu0 0.0
    %2340 = vmatpush1.msra.mxu0 0.0
    %2341 = vmatprep.subr.mxu0 0.0
    %2342 = vmatpush1.msra.mxu0 0.0
    %2343 = vmatprep.subr.mxu0 0.0
    %2344 = vmatpush1.msra.mxu0 0.0
    %2345 = vmatprep.subr.mxu0 0.0
    %2346 = vmatpush1.msra.mxu0 0.0
    %2347 = vmatprep.subr.mxu0 0.0
    %2348 = vmatpush1.msra.mxu0 0.0
    %2349 = vmatprep.subr.mxu0 0.0
    %2350 = vmatpush1.msra.mxu0 0.0
    %2351 = vmatprep.subr.mxu0 0.0
    %2352 = vmatpush1.msra.mxu0 0.0
    %2353 = vmatprep.subr.mxu0 0.0
    %2354 = vmatpush1.msra.mxu0 0.0
    %2355 = vmatprep.subr.mxu0 0.0
    %2356 = vmatpush1.msra.mxu0 0.0
    %2357 = vmatprep.subr.mxu0 0.0
    %2358 = vmatpush1.msra.mxu0 0.0
    %2359 = vmatprep.subr.mxu0 0.0
    %2360 = vmatpush1.msra.mxu0 0.0
    %2361 = vmatprep.mubr.f32.mxu0 0.0
    %2362 = vmatmul.mubr.f32.gmra.mrb[0].mxu0 %v2295
    %v2363 = vpop.f32.mrb[0].mxu0
    %v2364 = vadd.f32 %v1395, %v2363
    %v2365 = vpop.f32.mrb[0].mxu0
    %2366 = vdwg.mxu0
    %2367 = vmatprep.subr.mxu0 0.0
    %2368 = vmatpush1.msra.mxu0 %v52
    %2369 = vmatprep.subr.mxu0 0.0
    %2370 = vmatpush1.msra.mxu0 %v53
    %2371 = vmatprep.subr.mxu0 0.0
    %2372 = vmatpush1.msra.mxu0 %v54
    %2373 = vmatprep.subr.mxu0 0.0
    %2374 = vmatpush1.msra.mxu0 %v55
    %2375 = vmatprep.subr.mxu0 0.0
    %2376 = vmatpush1.msra.mxu0 0.0
    %2377 = vmatprep.subr.mxu0 0.0
    %2378 = vmatpush1.msra.mxu0 0.0
    %2379 = vmatprep.subr.mxu0 0.0
    %2380 = vmatpush1.msra.mxu0 0.0
    %2381 = vmatprep.subr.mxu0 0.0
    %2382 = vmatpush1.msra.mxu0 0.0
    %2383 = vmatprep.subr.mxu0 0.0
    %2384 = vmatpush1.msra.mxu0 0.0
    %2385 = vmatprep.subr.mxu0 0.0
    %2386 = vmatpush1.msra.mxu0 0.0
    %2387 = vmatprep.subr.mxu0 0.0
    %2388 = vmatpush1.msra.mxu0 0.0
    %2389 = vmatprep.subr.mxu0 0.0
    %2390 = vmatpush1.msra.mxu0 0.0
    %2391 = vmatprep.subr.mxu0 0.0
    %2392 = vmatpush1.msra.mxu0 0.0
    %2393 = vmatprep.subr.mxu0 0.0
    %2394 = vmatpush1.msra.mxu0 0.0
    %2395 = vmatprep.subr.mxu0 0.0
    %2396 = vmatpush1.msra.mxu0 0.0
    %2397 = vmatprep.subr.mxu0 0.0
    %2398 = vmatpush1.msra.mxu0 0.0
    %2399 = vmatprep.subr.mxu0 0.0
    %2400 = vmatpush1.msra.mxu0 0.0
    %2401 = vmatprep.subr.mxu0 0.0
    %2402 = vmatpush1.msra.mxu0 0.0
    %2403 = vmatprep.subr.mxu0 0.0
    %2404 = vmatpush1.msra.mxu0 0.0
    %2405 = vmatprep.subr.mxu0 0.0
    %2406 = vmatpush1.msra.mxu0 0.0
    %2407 = vmatprep.subr.mxu0 0.0
    %2408 = vmatpush1.msra.mxu0 0.0
    %2409 = vmatprep.subr.mxu0 0.0
    %2410 = vmatpush1.msra.mxu0 0.0
    %2411 = vmatprep.subr.mxu0 0.0
    %2412 = vmatpush1.msra.mxu0 0.0
    %2413 = vmatprep.subr.mxu0 0.0
    %2414 = vmatpush1.msra.mxu0 0.0
    %2415 = vmatprep.subr.mxu0 0.0
    %2416 = vmatpush1.msra.mxu0 0.0
    %2417 = vmatprep.subr.mxu0 0.0
    %2418 = vmatpush1.msra.mxu0 0.0
    %2419 = vmatprep.subr.mxu0 0.0
    %2420 = vmatpush1.msra.mxu0 0.0
    %2421 = vmatprep.subr.mxu0 0.0
    %2422 = vmatpush1.msra.mxu0 0.0
    %2423 = vmatprep.subr.mxu0 0.0
    %2424 = vmatpush1.msra.mxu0 0.0
    %2425 = vmatprep.subr.mxu0 0.0
    %2426 = vmatpush1.msra.mxu0 0.0
    %2427 = vmatprep.subr.mxu0 0.0
    %2428 = vmatpush1.msra.mxu0 0.0
    %2429 = vmatprep.subr.mxu0 0.0
    %2430 = vmatpush1.msra.mxu0 0.0
    %2431 = vmatprep.mubr.f32.mxu0 0.0
    %2432 = vmatmul.mubr.f32.gmra.mrb[0].mxu0 %v2026
    %v2433 = vpop.f32.mrb[0].mxu0
    %v2434 = vadd.f32 0.0, %v2433
    %v2435 = vpop.f32.mrb[0].mxu0
    %2436 = vdwg.mxu0
    %v2437 = vadd.f32 %v2364, %v2434
    %v2438 = vmul.f32 %v2437, 0.5
    %v2439 = vtanh.pop %v2438
    %v2440 = vmul.f32 %v2439, 0.5
    %v2441 = vadd.f32 %v2440, 0.5
    %v2442 = vadd.f32 %v2434, %v1554
    %2444 = vrot.lane.b32.xlu0 %v2442, 64
    %v2445 = vpop.permute.xlu0 %2444
    %v2447 = vmul.f32 %v2441, %v2445
    %2449 = vrot.lane.b32.xlu0 %v2447, 64
    %v2450 = vpop.permute.xlu0 %2449
    %v2452 = vadd.f32 %v2364, %v2450
    %v2453 = vtanh.pop %v2452
    %v2454 = vsub.f32 1.0, %v2441
    %2456 = vrot.lane.b32.xlu0 %v2453, 96
    %v2457 = vpop.permute.xlu0 %2456
    %v2459 = vmul.f32 %v2454, %v2457
    %v2460 = vmul.f32 %v2441, %v2021
    %v2461 = vadd.f32 %v2459, %v2460
    %v2462 = vld [vmem:[%s541] sm:$0x3]
    %2464 = vrot.lane.b32.xlu0 %v2461, 96
    %v2465 = vpop.permute.xlu0 %2464
    %v2466 = vsel %vm1396, %v2465, 0
    %2468 = vmatprep.subr.mxu0 0.0
    %2469 = vmatpush1.msra.mxu0 %v56
    %2470 = vmatprep.subr.mxu0 0.0
    %2471 = vmatpush1.msra.mxu0 %v57
    %2472 = vmatprep.subr.mxu0 0.0
    %2473 = vmatpush1.msra.mxu0 %v58
    %2474 = vmatprep.subr.mxu0 0.0
    %2475 = vmatpush1.msra.mxu0 %v59
    %2476 = vmatprep.subr.mxu0 0.0
    %2477 = vmatpush1.msra.mxu0 0.0
    %2478 = vmatprep.subr.mxu0 0.0
    %2479 = vmatpush1.msra.mxu0 0.0
    %2480 = vmatprep.subr.mxu0 0.0
    %2481 = vmatpush1.msra.mxu0 0.0
    %2482 = vmatprep.subr.mxu0 0.0
    %2483 = vmatpush1.msra.mxu0 0.0
    %2484 = vmatprep.subr.mxu0 0.0
    %2485 = vmatpush1.msra.mxu0 0.0
    %2486 = vmatprep.subr.mxu0 0.0
    %2487 = vmatpush1.msra.mxu0 0.0
    %2488 = vmatprep.subr.mxu0 0.0
    %2489 = vmatpush1.msra.mxu0 0.0
    %2490 = vmatprep.subr.mxu0 0.0
    %2491 = vmatpush1.msra.mxu0 0.0
    %2492 = vmatprep.subr.mxu0 0.0
    %2493 = vmatpush1.msra.mxu0 0.0
    %2494 = vmatprep.subr.mxu0 0.0
    %2495 = vmatpush1.msra.mxu0 0.0
    %2496 = vmatprep.subr.mxu0 0.0
    %2497 = vmatpush1.msra.mxu0 0.0
    %2498 = vmatprep.subr.mxu0 0.0
    %2499 = vmatpush1.msra.mxu0 0.0
    %2500 = vmatprep.subr.mxu0 0.0
    %2501 = vmatpush1.msra.mxu0 0.0
    %2502 = vmatprep.subr.mxu0 0.0
    %2503 = vmatpush1.msra.mxu0 0.0
    %2504 = vmatprep.subr.mxu0 0.0
    %2505 = vmatpush1.msra.mxu0 0.0
    %2506 = vmatprep.subr.mxu0 0.0
    %2507 = vmatpush1.msra.mxu0 0.0
    %2508 = vmatprep.subr.mxu0 0.0
    %2509 = vmatpush1.msra.mxu0 0.0
    %2510 = vmatprep.subr.mxu0 0.0
    %2511 = vmatpush1.msra.mxu0 0.0
    %2512 = vmatprep.subr.mxu0 0.0
    %2513 = vmatpush1.msra.mxu0 0.0
    %2514 = vmatprep.subr.mxu0 0.0
    %2515 = vmatpush1.msra.mxu0 0.0
    %2516 = vmatprep.subr.mxu0 0.0
    %2517 = vmatpush1.msra.mxu0 0.0
    %2518 = vmatprep.subr.mxu0 0.0
    %2519 = vmatpush1.msra.mxu0 0.0
    %2520 = vmatprep.subr.mxu0 0.0
    %2521 = vmatpush1.msra.mxu0 0.0
    %2522 = vmatprep.subr.mxu0 0.0
    %2523 = vmatpush1.msra.mxu0 0.0
    %2524 = vmatprep.subr.mxu0 0.0
    %2525 = vmatpush1.msra.mxu0 0.0
    %2526 = vmatprep.subr.mxu0 0.0
    %2527 = vmatpush1.msra.mxu0 0.0
    %2528 = vmatprep.subr.mxu0 0.0
    %2529 = vmatpush1.msra.mxu0 0.0
    %2530 = vmatprep.subr.mxu0 0.0
    %2531 = vmatpush1.msra.mxu0 0.0
    %2532 = vmatprep.mubr.f32.mxu0 0.0
    %2533 = vmatmul.mubr.f32.gmra.mrb[0].mxu0 %v2466
    %v2534 = vpop.f32.mrb[0].mxu0
    %v2535 = vadd.f32 %v2462, %v2534
    %v2536 = vpop.f32.mrb[0].mxu0
    %2537 = vdwg.mxu0
    %v2538 = vmax.f32 %v2535, 0.0
    %v2540 = vsel %vm1396, %v2538, 0
    %2542 = vmatprep.subr.mxu0 0.0
    %2543 = vmatpush1.msra.mxu0 %v60
    %2544 = vmatprep.subr.mxu0 0.0
    %2545 = vmatpush1.msra.mxu0 %v61
    %2546 = vmatprep.subr.mxu0 0.0
    %2547 = vmatpush1.msra.mxu0 %v62
    %2548 = vmatprep.subr.mxu0 0.0
    %2549 = vmatpush1.msra.mxu0 %v63
    %2550 = vmatprep.subr.mxu0 0.0
    %2551 = vmatpush1.msra.mxu0 0.0
    %2552 = vmatprep.subr.mxu0 0.0
    %2553 = vmatpush1.msra.mxu0 0.0
    %2554 = vmatprep.subr.mxu0 0.0
    %2555 = vmatpush1.msra.mxu0 0.0
    %2556 = vmatprep.subr.mxu0 0.0
    %2557 = vmatpush1.msra.mxu0 0.0
    %2558 = vmatprep.subr.mxu0 0.0
    %2559 = vmatpush1.msra.mxu0 0.0
    %2560 = vmatprep.subr.mxu0 0.0
    %2561 = vmatpush1.msra.mxu0 0.0
    %2562 = vmatprep.subr.mxu0 0.0
    %2563 = vmatpush1.msra.mxu0 0.0
    %2564 = vmatprep.subr.mxu0 0.0
    %2565 = vmatpush1.msra.mxu0 0.0
    %2566 = vmatprep.subr.mxu0 0.0
    %2567 = vmatpush1.msra.mxu0 0.0
    %2568 = vmatprep.subr.mxu0 0.0
    %2569 = vmatpush1.msra.mxu0 0.0
    %2570 = vmatprep.subr.mxu0 0.0
    %2571 = vmatpush1.msra.mxu0 0.0
    %2572 = vmatprep.subr.mxu0 0.0
    %2573 = vmatpush1.msra.mxu0 0.0
    %2574 = vmatprep.subr.mxu0 0.0
    %2575 = vmatpush1.msra.mxu0 0.0
    %2576 = vmatprep.subr.mxu0 0.0
    %2577 = vmatpush1.msra.mxu0 0.0
    %2578 = vmatprep.subr.mxu0 0.0
    %2579 = vmatpush1.msra.mxu0 0.0
    %2580 = vmatprep.subr.mxu0 0.0
    %2581 = vmatpush1.msra.mxu0 0.0
    %2582 = vmatprep.subr.mxu0 0.0
    %2583 = vmatpush1.msra.mxu0 0.0
    %2584 = vmatprep.subr.mxu0 0.0
    %2585 = vmatpush1.msra.mxu0 0.0
    %2586 = vmatprep.subr.mxu0 0.0
    %2587 = vmatpush1.msra.mxu0 0.0
    %2588 = vmatprep.subr.mxu0 0.0
    %2589 = vmatpush1.msra.mxu0 0.0
    %2590 = vmatprep.subr.mxu0 0.0
    %2591 = vmatpush1.msra.mxu0 0.0
    %2592 = vmatprep.subr.mxu0 0.0
    %2593 = vmatpush1.msra.mxu0 0.0
    %2594 = vmatprep.subr.mxu0 0.0
    %2595 = vmatpush1.msra.mxu0 0.0
    %2596 = vmatprep.subr.mxu0 0.0
    %2597 = vmatpush1.msra.mxu0 0.0
    %2598 = vmatprep.subr.mxu0 0.0
    %2599 = vmatpush1.msra.mxu0 0.0
    %2600 = vmatprep.subr.mxu0 0.0
    %2601 = vmatpush1.msra.mxu0 0.0
    %2602 = vmatprep.subr.mxu0 0.0
    %2603 = vmatpush1.msra.mxu0 0.0
    %2604 = vmatprep.subr.mxu0 0.0
    %2605 = vmatpush1.msra.mxu0 0.0
    %2606 = vmatprep.mubr.f32.mxu0 0.0
    %2607 = vmatmul.mubr.f32.gmra.mrb[0].mxu0 %v2540
    %v2608 = vpop.f32.mrb[0].mxu0
    %v2609 = vadd.f32 %v1659, %v2608
    %v2610 = vpop.f32.mrb[0].mxu0
    %2611 = vdwg.mxu0
    %v2612 = vmax.f32 %v2609, 0.0
    %v2613 = vand.u32 2147483647, %v2609
    %v2614 = vsub.f32 0.0, %v2613
    %v2615 = vmul.f32 %v2614, 1.442695
    %v2616 = vpow.pop %v2615
    %v2617 = vadd.f32 %v2616, 1.0
    %v2618 = vlog2.pop %v2617
    %v2619 = vmul.f32 %v2618, 0.6931472
    %v2620 = vmul.f32 -0.5, %v2616
    %v2621 = vadd.f32 %v2620, 1.0
    %v2622 = vmul.f32 %v2621, %v2616
    %v2623 = vand.u32 2147483647, %v2616
    %vm2624 = vcmp.lt.f32.partialorder %v2623, 0.0004427343
    %v2625 = vsel %vm2624, %v2622, %v2619
    %v2626 = vadd.f32 %v2612, %v2625
    %v2627 = vadd.f32 %v2626, 0.1
    %2628 = vrot.lane.b32.xlu0 %v2212, 112
    %v2629 = vpop.permute.xlu0 %2628
    %v2631 = vmul.f32 %v2627, %v2629
    %2633 = vrot.lane.b32.xlu0 %v2631, 112
    %v2634 = vpop.permute.xlu0 %2633
    %v2636 = vadd.f32 %v2609, %v2634
    %s2638 = scalar_lea.vmem [#allocation4], 4
    %2639 = vst.msk [vmem:[%s2638] sm:$0x3] %vm157, %v2465
    %2641 = vrot.lane.b32.xlu0 %v2609, 16
    %v2642 = vpop.permute.xlu0 %2641
    %2645 = vrot.lane.b32.xlu0 %v2627, 16
    %v2646 = vpop.permute.xlu0 %2645
    %v2648 = vsel %vm163, %v2636, %v2642
    %v2649 = vsel %vm1396, %v2648, %v2646
    %s2650 = scalar_lea.vmem [#allocation5], 4
    %2651 = vst.msk [vmem:[%s2650] sm:$0x3] %vm1770, %v2649
    %v2652 = vld [vmem:[%s543] sm:$0x3]
    %2654 = vset.pattern.permute.xlu0 52
    %2655 = vperm.xlu0 %2654, %v2652
    %v2656 = vpop.permute.xlu0 %2655
    %v2658 = vmul.f32 %v2636, %v2656
    %v2659 = vld [vmem:[%s620] sm:$0x3]
    %v2661 = vsel %vm163, %v2658, 0
    %2663 = vmatprep.subr.mxu0 0.0
    %2664 = vmatpush1.msra.mxu0 %v46
    %2665 = vmatprep.subr.mxu0 0.0
    %2666 = vmatpush1.msra.mxu0 %v47
    %2667 = vmatprep.subr.mxu0 0.0
    %2668 = vmatpush1.msra.mxu0 0.0
    %2669 = vmatprep.subr.mxu0 0.0
    %2670 = vmatpush1.msra.mxu0 0.0
    %2671 = vmatprep.subr.mxu0 0.0
    %2672 = vmatpush1.msra.mxu0 0.0
    %2673 = vmatprep.subr.mxu0 0.0
    %2674 = vmatpush1.msra.mxu0 0.0
    %2675 = vmatprep.subr.mxu0 0.0
    %2676 = vmatpush1.msra.mxu0 0.0
    %2677 = vmatprep.subr.mxu0 0.0
    %2678 = vmatpush1.msra.mxu0 0.0
    %2679 = vmatprep.subr.mxu0 0.0
    %2680 = vmatpush1.msra.mxu0 0.0
    %2681 = vmatprep.subr.mxu0 0.0
    %2682 = vmatpush1.msra.mxu0 0.0
    %2683 = vmatprep.subr.mxu0 0.0
    %2684 = vmatpush1.msra.mxu0 0.0
    %2685 = vmatprep.subr.mxu0 0.0
    %2686 = vmatpush1.msra.mxu0 0.0
    %2687 = vmatprep.subr.mxu0 0.0
    %2688 = vmatpush1.msra.mxu0 0.0
    %2689 = vmatprep.subr.mxu0 0.0
    %2690 = vmatpush1.msra.mxu0 0.0
    %2691 = vmatprep.subr.mxu0 0.0
    %2692 = vmatpush1.msra.mxu0 0.0
    %2693 = vmatprep.subr.mxu0 0.0
    %2694 = vmatpush1.msra.mxu0 0.0
    %2695 = vmatprep.subr.mxu0 0.0
    %2696 = vmatpush1.msra.mxu0 0.0
    %2697 = vmatprep.subr.mxu0 0.0
    %2698 = vmatpush1.msra.mxu0 0.0
    %2699 = vmatprep.subr.mxu0 0.0
    %2700 = vmatpush1.msra.mxu0 0.0
    %2701 = vmatprep.subr.mxu0 0.0
    %2702 = vmatpush1.msra.mxu0 0.0
    %2703 = vmatprep.subr.mxu0 0.0
    %2704 = vmatpush1.msra.mxu0 0.0
    %2705 = vmatprep.subr.mxu0 0.0
    %2706 = vmatpush1.msra.mxu0 0.0
    %2707 = vmatprep.subr.mxu0 0.0
    %2708 = vmatpush1.msra.mxu0 0.0
    %2709 = vmatprep.subr.mxu0 0.0
    %2710 = vmatpush1.msra.mxu0 0.0
    %2711 = vmatprep.subr.mxu0 0.0
    %2712 = vmatpush1.msra.mxu0 0.0
    %2713 = vmatprep.subr.mxu0 0.0
    %2714 = vmatpush1.msra.mxu0 0.0
    %2715 = vmatprep.subr.mxu0 0.0
    %2716 = vmatpush1.msra.mxu0 0.0
    %2717 = vmatprep.subr.mxu0 0.0
    %2718 = vmatpush1.msra.mxu0 0.0
    %2719 = vmatprep.subr.mxu0 0.0
    %2720 = vmatpush1.msra.mxu0 0.0
    %2721 = vmatprep.subr.mxu0 0.0
    %2722 = vmatpush1.msra.mxu0 0.0
    %2723 = vmatprep.subr.mxu0 0.0
    %2724 = vmatpush1.msra.mxu0 0.0
    %2725 = vmatprep.subr.mxu0 0.0
    %2726 = vmatpush1.msra.mxu0 0.0
    %2727 = vmatprep.mubr.f32.mxu0 0.0
    %2728 = vmatmul.mubr.f32.gmra.mrb[0].mxu0 %v2661
    %v2729 = vpop.f32.mrb[0].mxu0
    %v2730 = vadd.f32 %v2659, %v2729
    %v2731 = vpop.f32.mrb[0].mxu0
    %2732 = vdwg.mxu0
    %v2733 = vmax.f32 %v2730, 0.0
    %v2735 = vsel %vm1396, %v2733, 0
    %2737 = vmatprep.subr.mxu0 0.0
    %2738 = vmatpush1.msra.mxu0 %v48
    %2739 = vmatprep.subr.mxu0 0.0
    %2740 = vmatpush1.msra.mxu0 %v49
    %2741 = vmatprep.subr.mxu0 0.0
    %2742 = vmatpush1.msra.mxu0 %v50
    %2743 = vmatprep.subr.mxu0 0.0
    %2744 = vmatpush1.msra.mxu0 %v51
    %2745 = vmatprep.subr.mxu0 0.0
    %2746 = vmatpush1.msra.mxu0 0.0
    %2747 = vmatprep.subr.mxu0 0.0
    %2748 = vmatpush1.msra.mxu0 0.0
    %2749 = vmatprep.subr.mxu0 0.0
    %2750 = vmatpush1.msra.mxu0 0.0
    %2751 = vmatprep.subr.mxu0 0.0
    %2752 = vmatpush1.msra.mxu0 0.0
    %2753 = vmatprep.subr.mxu0 0.0
    %2754 = vmatpush1.msra.mxu0 0.0
    %2755 = vmatprep.subr.mxu0 0.0
    %2756 = vmatpush1.msra.mxu0 0.0
    %2757 = vmatprep.subr.mxu0 0.0
    %2758 = vmatpush1.msra.mxu0 0.0
    %2759 = vmatprep.subr.mxu0 0.0
    %2760 = vmatpush1.msra.mxu0 0.0
    %2761 = vmatprep.subr.mxu0 0.0
    %2762 = vmatpush1.msra.mxu0 0.0
    %2763 = vmatprep.subr.mxu0 0.0
    %2764 = vmatpush1.msra.mxu0 0.0
    %2765 = vmatprep.subr.mxu0 0.0
    %2766 = vmatpush1.msra.mxu0 0.0
    %2767 = vmatprep.subr.mxu0 0.0
    %2768 = vmatpush1.msra.mxu0 0.0
    %2769 = vmatprep.subr.mxu0 0.0
    %2770 = vmatpush1.msra.mxu0 0.0
    %2771 = vmatprep.subr.mxu0 0.0
    %2772 = vmatpush1.msra.mxu0 0.0
    %2773 = vmatprep.subr.mxu0 0.0
    %2774 = vmatpush1.msra.mxu0 0.0
    %2775 = vmatprep.subr.mxu0 0.0
    %2776 = vmatpush1.msra.mxu0 0.0
    %2777 = vmatprep.subr.mxu0 0.0
    %2778 = vmatpush1.msra.mxu0 0.0
    %2779 = vmatprep.subr.mxu0 0.0
    %2780 = vmatpush1.msra.mxu0 0.0
    %2781 = vmatprep.subr.mxu0 0.0
    %2782 = vmatpush1.msra.mxu0 0.0
    %2783 = vmatprep.subr.mxu0 0.0
    %2784 = vmatpush1.msra.mxu0 0.0
    %2785 = vmatprep.subr.mxu0 0.0
    %2786 = vmatpush1.msra.mxu0 0.0
    %2787 = vmatprep.subr.mxu0 0.0
    %2788 = vmatpush1.msra.mxu0 0.0
    %2789 = vmatprep.subr.mxu0 0.0
    %2790 = vmatpush1.msra.mxu0 0.0
    %2791 = vmatprep.subr.mxu0 0.0
    %2792 = vmatpush1.msra.mxu0 0.0
    %2793 = vmatprep.subr.mxu0 0.0
    %2794 = vmatpush1.msra.mxu0 0.0
    %2795 = vmatprep.subr.mxu0 0.0
    %2796 = vmatpush1.msra.mxu0 0.0
    %2797 = vmatprep.subr.mxu0 0.0
    %2798 = vmatpush1.msra.mxu0 0.0
    %2799 = vmatprep.subr.mxu0 0.0
    %2800 = vmatpush1.msra.mxu0 0.0
    %2801 = vmatprep.mubr.f32.mxu0 0.0
    %2802 = vmatmul.mubr.f32.gmra.mrb[0].mxu0 %v2735
    %v2803 = vpop.f32.mrb[0].mxu0
    %v2804 = vadd.f32 %v1395, %v2803
    %v2805 = vpop.f32.mrb[0].mxu0
    %2806 = vdwg.mxu0
    %2807 = vmatprep.subr.mxu0 0.0
    %2808 = vmatpush1.msra.mxu0 %v52
    %2809 = vmatprep.subr.mxu0 0.0
    %2810 = vmatpush1.msra.mxu0 %v53
    %2811 = vmatprep.subr.mxu0 0.0
    %2812 = vmatpush1.msra.mxu0 %v54
    %2813 = vmatprep.subr.mxu0 0.0
    %2814 = vmatpush1.msra.mxu0 %v55
    %2815 = vmatprep.subr.mxu0 0.0
    %2816 = vmatpush1.msra.mxu0 0.0
    %2817 = vmatprep.subr.mxu0 0.0
    %2818 = vmatpush1.msra.mxu0 0.0
    %2819 = vmatprep.subr.mxu0 0.0
    %2820 = vmatpush1.msra.mxu0 0.0
    %2821 = vmatprep.subr.mxu0 0.0
    %2822 = vmatpush1.msra.mxu0 0.0
    %2823 = vmatprep.subr.mxu0 0.0
    %2824 = vmatpush1.msra.mxu0 0.0
    %2825 = vmatprep.subr.mxu0 0.0
    %2826 = vmatpush1.msra.mxu0 0.0
    %2827 = vmatprep.subr.mxu0 0.0
    %2828 = vmatpush1.msra.mxu0 0.0
    %2829 = vmatprep.subr.mxu0 0.0
    %2830 = vmatpush1.msra.mxu0 0.0
    %2831 = vmatprep.subr.mxu0 0.0
    %2832 = vmatpush1.msra.mxu0 0.0
    %2833 = vmatprep.subr.mxu0 0.0
    %2834 = vmatpush1.msra.mxu0 0.0
    %2835 = vmatprep.subr.mxu0 0.0
    %2836 = vmatpush1.msra.mxu0 0.0
    %2837 = vmatprep.subr.mxu0 0.0
    %2838 = vmatpush1.msra.mxu0 0.0
    %2839 = vmatprep.subr.mxu0 0.0
    %2840 = vmatpush1.msra.mxu0 0.0
    %2841 = vmatprep.subr.mxu0 0.0
    %2842 = vmatpush1.msra.mxu0 0.0
    %2843 = vmatprep.subr.mxu0 0.0
    %2844 = vmatpush1.msra.mxu0 0.0
    %2845 = vmatprep.subr.mxu0 0.0
    %2846 = vmatpush1.msra.mxu0 0.0
    %2847 = vmatprep.subr.mxu0 0.0
    %2848 = vmatpush1.msra.mxu0 0.0
    %2849 = vmatprep.subr.mxu0 0.0
    %2850 = vmatpush1.msra.mxu0 0.0
    %2851 = vmatprep.subr.mxu0 0.0
    %2852 = vmatpush1.msra.mxu0 0.0
    %2853 = vmatprep.subr.mxu0 0.0
    %2854 = vmatpush1.msra.mxu0 0.0
    %2855 = vmatprep.subr.mxu0 0.0
    %2856 = vmatpush1.msra.mxu0 0.0
    %2857 = vmatprep.subr.mxu0 0.0
    %2858 = vmatpush1.msra.mxu0 0.0
    %2859 = vmatprep.subr.mxu0 0.0
    %2860 = vmatpush1.msra.mxu0 0.0
    %2861 = vmatprep.subr.mxu0 0.0
    %2862 = vmatpush1.msra.mxu0 0.0
    %2863 = vmatprep.subr.mxu0 0.0
    %2864 = vmatpush1.msra.mxu0 0.0
    %2865 = vmatprep.subr.mxu0 0.0
    %2866 = vmatpush1.msra.mxu0 0.0
    %2867 = vmatprep.subr.mxu0 0.0
    %2868 = vmatpush1.msra.mxu0 0.0
    %2869 = vmatprep.subr.mxu0 0.0
    %2870 = vmatpush1.msra.mxu0 0.0
    %2871 = vmatprep.mubr.f32.mxu0 0.0
    %2872 = vmatmul.mubr.f32.gmra.mrb[0].mxu0 %v2466
    %v2873 = vpop.f32.mrb[0].mxu0
    %v2874 = vadd.f32 0.0, %v2873
    %v2875 = vpop.f32.mrb[0].mxu0
    %2876 = vdwg.mxu0
    %v2877 = vadd.f32 %v2804, %v2874
    %v2878 = vmul.f32 %v2877, 0.5
    %v2879 = vtanh.pop %v2878
    %v2880 = vmul.f32 %v2879, 0.5
    %v2881 = vadd.f32 %v2880, 0.5
    %v2882 = vadd.f32 %v2874, %v1554
    %2884 = vrot.lane.b32.xlu0 %v2882, 64
    %v2885 = vpop.permute.xlu0 %2884
    %v2887 = vmul.f32 %v2881, %v2885
    %2889 = vrot.lane.b32.xlu0 %v2887, 64
    %v2890 = vpop.permute.xlu0 %2889
    %v2892 = vadd.f32 %v2804, %v2890
    %v2893 = vtanh.pop %v2892
    %v2894 = vsub.f32 1.0, %v2881
    %2896 = vrot.lane.b32.xlu0 %v2893, 96
    %v2897 = vpop.permute.xlu0 %2896
    %v2899 = vmul.f32 %v2894, %v2897
    %v2900 = vmul.f32 %v2881, %v2461
    %v2901 = vadd.f32 %v2899, %v2900
    %v2902 = vld [vmem:[%s694] sm:$0x3]
    %2904 = vrot.lane.b32.xlu0 %v2901, 96
    %v2905 = vpop.permute.xlu0 %2904
    %v2906 = vsel %vm1396, %v2905, 0
    %2908 = vmatprep.subr.mxu0 0.0
    %2909 = vmatpush1.msra.mxu0 %v56
    %2910 = vmatprep.subr.mxu0 0.0
    %2911 = vmatpush1.msra.mxu0 %v57
    %2912 = vmatprep.subr.mxu0 0.0
    %2913 = vmatpush1.msra.mxu0 %v58
    %2914 = vmatprep.subr.mxu0 0.0
    %2915 = vmatpush1.msra.mxu0 %v59
    %2916 = vmatprep.subr.mxu0 0.0
    %2917 = vmatpush1.msra.mxu0 0.0
    %2918 = vmatprep.subr.mxu0 0.0
    %2919 = vmatpush1.msra.mxu0 0.0
    %2920 = vmatprep.subr.mxu0 0.0
    %2921 = vmatpush1.msra.mxu0 0.0
    %2922 = vmatprep.subr.mxu0 0.0
    %2923 = vmatpush1.msra.mxu0 0.0
    %2924 = vmatprep.subr.mxu0 0.0
    %2925 = vmatpush1.msra.mxu0 0.0
    %2926 = vmatprep.subr.mxu0 0.0
    %2927 = vmatpush1.msra.mxu0 0.0
    %2928 = vmatprep.subr.mxu0 0.0
    %2929 = vmatpush1.msra.mxu0 0.0
    %2930 = vmatprep.subr.mxu0 0.0
    %2931 = vmatpush1.msra.mxu0 0.0
    %2932 = vmatprep.subr.mxu0 0.0
    %2933 = vmatpush1.msra.mxu0 0.0
    %2934 = vmatprep.subr.mxu0 0.0
    %2935 = vmatpush1.msra.mxu0 0.0
    %2936 = vmatprep.subr.mxu0 0.0
    %2937 = vmatpush1.msra.mxu0 0.0
    %2938 = vmatprep.subr.mxu0 0.0
    %2939 = vmatpush1.msra.mxu0 0.0
    %2940 = vmatprep.subr.mxu0 0.0
    %2941 = vmatpush1.msra.mxu0 0.0
    %2942 = vmatprep.subr.mxu0 0.0
    %2943 = vmatpush1.msra.mxu0 0.0
    %2944 = vmatprep.subr.mxu0 0.0
    %2945 = vmatpush1.msra.mxu0 0.0
    %2946 = vmatprep.subr.mxu0 0.0
    %2947 = vmatpush1.msra.mxu0 0.0
    %2948 = vmatprep.subr.mxu0 0.0
    %2949 = vmatpush1.msra.mxu0 0.0
    %2950 = vmatprep.subr.mxu0 0.0
    %2951 = vmatpush1.msra.mxu0 0.0
    %2952 = vmatprep.subr.mxu0 0.0
    %2953 = vmatpush1.msra.mxu0 0.0
    %2954 = vmatprep.subr.mxu0 0.0
    %2955 = vmatpush1.msra.mxu0 0.0
    %2956 = vmatprep.subr.mxu0 0.0
    %2957 = vmatpush1.msra.mxu0 0.0
    %2958 = vmatprep.subr.mxu0 0.0
    %2959 = vmatpush1.msra.mxu0 0.0
    %2960 = vmatprep.subr.mxu0 0.0
    %2961 = vmatpush1.msra.mxu0 0.0
    %2962 = vmatprep.subr.mxu0 0.0
    %2963 = vmatpush1.msra.mxu0 0.0
    %2964 = vmatprep.subr.mxu0 0.0
    %2965 = vmatpush1.msra.mxu0 0.0
    %2966 = vmatprep.subr.mxu0 0.0
    %2967 = vmatpush1.msra.mxu0 0.0
    %2968 = vmatprep.subr.mxu0 0.0
    %2969 = vmatpush1.msra.mxu0 0.0
    %2970 = vmatprep.subr.mxu0 0.0
    %2971 = vmatpush1.msra.mxu0 0.0
    %2972 = vmatprep.mubr.f32.mxu0 0.0
    %2973 = vmatmul.mubr.f32.gmra.mrb[0].mxu0 %v2906
    %v2974 = vpop.f32.mrb[0].mxu0
    %v2975 = vadd.f32 %v2902, %v2974
    %v2976 = vpop.f32.mrb[0].mxu0
    %2977 = vdwg.mxu0
    %v2978 = vmax.f32 %v2975, 0.0
    %v2980 = vsel %vm1396, %v2978, 0
    %2982 = vmatprep.subr.mxu0 0.0
    %2983 = vmatpush1.msra.mxu0 %v60
    %2984 = vmatprep.subr.mxu0 0.0
    %2985 = vmatpush1.msra.mxu0 %v61
    %2986 = vmatprep.subr.mxu0 0.0
    %2987 = vmatpush1.msra.mxu0 %v62
    %2988 = vmatprep.subr.mxu0 0.0
    %2989 = vmatpush1.msra.mxu0 %v63
    %2990 = vmatprep.subr.mxu0 0.0
    %2991 = vmatpush1.msra.mxu0 0.0
    %2992 = vmatprep.subr.mxu0 0.0
    %2993 = vmatpush1.msra.mxu0 0.0
    %2994 = vmatprep.subr.mxu0 0.0
    %2995 = vmatpush1.msra.mxu0 0.0
    %2996 = vmatprep.subr.mxu0 0.0
    %2997 = vmatpush1.msra.mxu0 0.0
    %2998 = vmatprep.subr.mxu0 0.0
    %2999 = vmatpush1.msra.mxu0 0.0
    %3000 = vmatprep.subr.mxu0 0.0
    %3001 = vmatpush1.msra.mxu0 0.0
    %3002 = vmatprep.subr.mxu0 0.0
    %3003 = vmatpush1.msra.mxu0 0.0
    %3004 = vmatprep.subr.mxu0 0.0
    %3005 = vmatpush1.msra.mxu0 0.0
    %3006 = vmatprep.subr.mxu0 0.0
    %3007 = vmatpush1.msra.mxu0 0.0
    %3008 = vmatprep.subr.mxu0 0.0
    %3009 = vmatpush1.msra.mxu0 0.0
    %3010 = vmatprep.subr.mxu0 0.0
    %3011 = vmatpush1.msra.mxu0 0.0
    %3012 = vmatprep.subr.mxu0 0.0
    %3013 = vmatpush1.msra.mxu0 0.0
    %3014 = vmatprep.subr.mxu0 0.0
    %3015 = vmatpush1.msra.mxu0 0.0
    %3016 = vmatprep.subr.mxu0 0.0
    %3017 = vmatpush1.msra.mxu0 0.0
    %3018 = vmatprep.subr.mxu0 0.0
    %3019 = vmatpush1.msra.mxu0 0.0
    %3020 = vmatprep.subr.mxu0 0.0
    %3021 = vmatpush1.msra.mxu0 0.0
    %3022 = vmatprep.subr.mxu0 0.0
    %3023 = vmatpush1.msra.mxu0 0.0
    %3024 = vmatprep.subr.mxu0 0.0
    %3025 = vmatpush1.msra.mxu0 0.0
    %3026 = vmatprep.subr.mxu0 0.0
    %3027 = vmatpush1.msra.mxu0 0.0
    %3028 = vmatprep.subr.mxu0 0.0
    %3029 = vmatpush1.msra.mxu0 0.0
    %3030 = vmatprep.subr.mxu0 0.0
    %3031 = vmatpush1.msra.mxu0 0.0
    %3032 = vmatprep.subr.mxu0 0.0
    %3033 = vmatpush1.msra.mxu0 0.0
    %3034 = vmatprep.subr.mxu0 0.0
    %3035 = vmatpush1.msra.mxu0 0.0
    %3036 = vmatprep.subr.mxu0 0.0
    %3037 = vmatpush1.msra.mxu0 0.0
    %3038 = vmatprep.subr.mxu0 0.0
    %3039 = vmatpush1.msra.mxu0 0.0
    %3040 = vmatprep.subr.mxu0 0.0
    %3041 = vmatpush1.msra.mxu0 0.0
    %3042 = vmatprep.subr.mxu0 0.0
    %3043 = vmatpush1.msra.mxu0 0.0
    %3044 = vmatprep.subr.mxu0 0.0
    %3045 = vmatpush1.msra.mxu0 0.0
    %3046 = vmatprep.mubr.f32.mxu0 0.0
    %3047 = vmatmul.mubr.f32.gmra.mrb[0].mxu0 %v2980
    %v3048 = vpop.f32.mrb[0].mxu0
    %v3049 = vadd.f32 %v1659, %v3048
    %v3050 = vpop.f32.mrb[0].mxu0
    %3051 = vdwg.mxu0
    %v3052 = vmax.f32 %v3049, 0.0
    %v3053 = vand.u32 2147483647, %v3049
    %v3054 = vsub.f32 0.0, %v3053
    %v3055 = vmul.f32 %v3054, 1.442695
    %v3056 = vpow.pop %v3055
    %v3057 = vadd.f32 %v3056, 1.0
    %v3058 = vlog2.pop %v3057
    %v3059 = vmul.f32 %v3058, 0.6931472
    %v3060 = vmul.f32 -0.5, %v3056
    %v3061 = vadd.f32 %v3060, 1.0
    %v3062 = vmul.f32 %v3061, %v3056
    %v3063 = vand.u32 2147483647, %v3056
    %vm3064 = vcmp.lt.f32.partialorder %v3063, 0.0004427343
    %v3065 = vsel %vm3064, %v3062, %v3059
    %v3066 = vadd.f32 %v3052, %v3065
    %v3067 = vadd.f32 %v3066, 0.1
    %3068 = vrot.lane.b32.xlu0 %v2652, 112
    %v3069 = vpop.permute.xlu0 %3068
    %v3071 = vmul.f32 %v3067, %v3069
    %3073 = vrot.lane.b32.xlu0 %v3071, 112
    %v3074 = vpop.permute.xlu0 %3073
    %v3076 = vadd.f32 %v3049, %v3074
    %s3078 = scalar_lea.vmem [#allocation4], 6
    %3079 = vst.msk [vmem:[%s3078] sm:$0x3] %vm157, %v2905
    %3081 = vrot.lane.b32.xlu0 %v3049, 16
    %v3082 = vpop.permute.xlu0 %3081
    %3085 = vrot.lane.b32.xlu0 %v3067, 16
    %v3086 = vpop.permute.xlu0 %3085
    %v3088 = vsel %vm163, %v3076, %v3082
    %v3089 = vsel %vm1396, %v3088, %v3086
    %s3090 = scalar_lea.vmem [#allocation5], 6
    %3091 = vst.msk [vmem:[%s3090] sm:$0x3] %vm1770, %v3089
    %v3092 = vld [vmem:[%s696] sm:$0x3]
    %3094 = vset.pattern.permute.xlu0 52
    %3095 = vperm.xlu0 %3094, %v3092
    %v3096 = vpop.permute.xlu0 %3095
    %v3098 = vmul.f32 %v3076, %v3096
    %v3099 = vld [vmem:[%s773] sm:$0x3]
    %v3101 = vsel %vm163, %v3098, 0
    %3103 = vmatprep.subr.mxu0 0.0
    %3104 = vmatpush1.msra.mxu0 %v46
    %3105 = vmatprep.subr.mxu0 0.0
    %3106 = vmatpush1.msra.mxu0 %v47
    %3107 = vmatprep.subr.mxu0 0.0
    %3108 = vmatpush1.msra.mxu0 0.0
    %3109 = vmatprep.subr.mxu0 0.0
    %3110 = vmatpush1.msra.mxu0 0.0
    %3111 = vmatprep.subr.mxu0 0.0
    %3112 = vmatpush1.msra.mxu0 0.0
    %3113 = vmatprep.subr.mxu0 0.0
    %3114 = vmatpush1.msra.mxu0 0.0
    %3115 = vmatprep.subr.mxu0 0.0
    %3116 = vmatpush1.msra.mxu0 0.0
    %3117 = vmatprep.subr.mxu0 0.0
    %3118 = vmatpush1.msra.mxu0 0.0
    %3119 = vmatprep.subr.mxu0 0.0
    %3120 = vmatpush1.msra.mxu0 0.0
    %3121 = vmatprep.subr.mxu0 0.0
    %3122 = vmatpush1.msra.mxu0 0.0
    %3123 = vmatprep.subr.mxu0 0.0
    %3124 = vmatpush1.msra.mxu0 0.0
    %3125 = vmatprep.subr.mxu0 0.0
    %3126 = vmatpush1.msra.mxu0 0.0
    %3127 = vmatprep.subr.mxu0 0.0
    %3128 = vmatpush1.msra.mxu0 0.0
    %3129 = vmatprep.subr.mxu0 0.0
    %3130 = vmatpush1.msra.mxu0 0.0
    %3131 = vmatprep.subr.mxu0 0.0
    %3132 = vmatpush1.msra.mxu0 0.0
    %3133 = vmatprep.subr.mxu0 0.0
    %3134 = vmatpush1.msra.mxu0 0.0
    %3135 = vmatprep.subr.mxu0 0.0
    %3136 = vmatpush1.msra.mxu0 0.0
    %3137 = vmatprep.subr.mxu0 0.0
    %3138 = vmatpush1.msra.mxu0 0.0
    %3139 = vmatprep.subr.mxu0 0.0
    %3140 = vmatpush1.msra.mxu0 0.0
    %3141 = vmatprep.subr.mxu0 0.0
    %3142 = vmatpush1.msra.mxu0 0.0
    %3143 = vmatprep.subr.mxu0 0.0
    %3144 = vmatpush1.msra.mxu0 0.0
    %3145 = vmatprep.subr.mxu0 0.0
    %3146 = vmatpush1.msra.mxu0 0.0
    %3147 = vmatprep.subr.mxu0 0.0
    %3148 = vmatpush1.msra.mxu0 0.0
    %3149 = vmatprep.subr.mxu0 0.0
    %3150 = vmatpush1.msra.mxu0 0.0
    %3151 = vmatprep.subr.mxu0 0.0
    %3152 = vmatpush1.msra.mxu0 0.0
    %3153 = vmatprep.subr.mxu0 0.0
    %3154 = vmatpush1.msra.mxu0 0.0
    %3155 = vmatprep.subr.mxu0 0.0
    %3156 = vmatpush1.msra.mxu0 0.0
    %3157 = vmatprep.subr.mxu0 0.0
    %3158 = vmatpush1.msra.mxu0 0.0
    %3159 = vmatprep.subr.mxu0 0.0
    %3160 = vmatpush1.msra.mxu0 0.0
    %3161 = vmatprep.subr.mxu0 0.0
    %3162 = vmatpush1.msra.mxu0 0.0
    %3163 = vmatprep.subr.mxu0 0.0
    %3164 = vmatpush1.msra.mxu0 0.0
    %3165 = vmatprep.subr.mxu0 0.0
    %3166 = vmatpush1.msra.mxu0 0.0
    %3167 = vmatprep.mubr.f32.mxu0 0.0
    %3168 = vmatmul.mubr.f32.gmra.mrb[0].mxu0 %v3101
    %v3169 = vpop.f32.mrb[0].mxu0
    %v3170 = vadd.f32 %v3099, %v3169
    %v3171 = vpop.f32.mrb[0].mxu0
    %3172 = vdwg.mxu0
    %v3173 = vmax.f32 %v3170, 0.0
    %v3175 = vsel %vm1396, %v3173, 0
    %3177 = vmatprep.subr.mxu0 0.0
    %3178 = vmatpush1.msra.mxu0 %v48
    %3179 = vmatprep.subr.mxu0 0.0
    %3180 = vmatpush1.msra.mxu0 %v49
    %3181 = vmatprep.subr.mxu0 0.0
    %3182 = vmatpush1.msra.mxu0 %v50
    %3183 = vmatprep.subr.mxu0 0.0
    %3184 = vmatpush1.msra.mxu0 %v51
    %3185 = vmatprep.subr.mxu0 0.0
    %3186 = vmatpush1.msra.mxu0 0.0
    %3187 = vmatprep.subr.mxu0 0.0
    %3188 = vmatpush1.msra.mxu0 0.0
    %3189 = vmatprep.subr.mxu0 0.0
    %3190 = vmatpush1.msra.mxu0 0.0
    %3191 = vmatprep.subr.mxu0 0.0
    %3192 = vmatpush1.msra.mxu0 0.0
    %3193 = vmatprep.subr.mxu0 0.0
    %3194 = vmatpush1.msra.mxu0 0.0
    %3195 = vmatprep.subr.mxu0 0.0
    %3196 = vmatpush1.msra.mxu0 0.0
    %3197 = vmatprep.subr.mxu0 0.0
    %3198 = vmatpush1.msra.mxu0 0.0
    %3199 = vmatprep.subr.mxu0 0.0
    %3200 = vmatpush1.msra.mxu0 0.0
    %3201 = vmatprep.subr.mxu0 0.0
    %3202 = vmatpush1.msra.mxu0 0.0
    %3203 = vmatprep.subr.mxu0 0.0
    %3204 = vmatpush1.msra.mxu0 0.0
    %3205 = vmatprep.subr.mxu0 0.0
    %3206 = vmatpush1.msra.mxu0 0.0
    %3207 = vmatprep.subr.mxu0 0.0
    %3208 = vmatpush1.msra.mxu0 0.0
    %3209 = vmatprep.subr.mxu0 0.0
    %3210 = vmatpush1.msra.mxu0 0.0
    %3211 = vmatprep.subr.mxu0 0.0
    %3212 = vmatpush1.msra.mxu0 0.0
    %3213 = vmatprep.subr.mxu0 0.0
    %3214 = vmatpush1.msra.mxu0 0.0
    %3215 = vmatprep.subr.mxu0 0.0
    %3216 = vmatpush1.msra.mxu0 0.0
    %3217 = vmatprep.subr.mxu0 0.0
    %3218 = vmatpush1.msra.mxu0 0.0
    %3219 = vmatprep.subr.mxu0 0.0
    %3220 = vmatpush1.msra.mxu0 0.0
    %3221 = vmatprep.subr.mxu0 0.0
    %3222 = vmatpush1.msra.mxu0 0.0
    %3223 = vmatprep.subr.mxu0 0.0
    %3224 = vmatpush1.msra.mxu0 0.0
    %3225 = vmatprep.subr.mxu0 0.0
    %3226 = vmatpush1.msra.mxu0 0.0
    %3227 = vmatprep.subr.mxu0 0.0
    %3228 = vmatpush1.msra.mxu0 0.0
    %3229 = vmatprep.subr.mxu0 0.0
    %3230 = vmatpush1.msra.mxu0 0.0
    %3231 = vmatprep.subr.mxu0 0.0
    %3232 = vmatpush1.msra.mxu0 0.0
    %3233 = vmatprep.subr.mxu0 0.0
    %3234 = vmatpush1.msra.mxu0 0.0
    %3235 = vmatprep.subr.mxu0 0.0
    %3236 = vmatpush1.msra.mxu0 0.0
    %3237 = vmatprep.subr.mxu0 0.0
    %3238 = vmatpush1.msra.mxu0 0.0
    %3239 = vmatprep.subr.mxu0 0.0
    %3240 = vmatpush1.msra.mxu0 0.0
    %3241 = vmatprep.mubr.f32.mxu0 0.0
    %3242 = vmatmul.mubr.f32.gmra.mrb[0].mxu0 %v3175
    %v3243 = vpop.f32.mrb[0].mxu0
    %v3244 = vadd.f32 %v1395, %v3243
    %v3245 = vpop.f32.mrb[0].mxu0
    %3246 = vdwg.mxu0
    %3247 = vmatprep.subr.mxu0 0.0
    %3248 = vmatpush1.msra.mxu0 %v52
    %3249 = vmatprep.subr.mxu0 0.0
    %3250 = vmatpush1.msra.mxu0 %v53
    %3251 = vmatprep.subr.mxu0 0.0
    %3252 = vmatpush1.msra.mxu0 %v54
    %3253 = vmatprep.subr.mxu0 0.0
    %3254 = vmatpush1.msra.mxu0 %v55
    %3255 = vmatprep.subr.mxu0 0.0
    %3256 = vmatpush1.msra.mxu0 0.0
    %3257 = vmatprep.subr.mxu0 0.0
    %3258 = vmatpush1.msra.mxu0 0.0
    %3259 = vmatprep.subr.mxu0 0.0
    %3260 = vmatpush1.msra.mxu0 0.0
    %3261 = vmatprep.subr.mxu0 0.0
    %3262 = vmatpush1.msra.mxu0 0.0
    %3263 = vmatprep.subr.mxu0 0.0
    %3264 = vmatpush1.msra.mxu0 0.0
    %3265 = vmatprep.subr.mxu0 0.0
    %3266 = vmatpush1.msra.mxu0 0.0
    %3267 = vmatprep.subr.mxu0 0.0
    %3268 = vmatpush1.msra.mxu0 0.0
    %3269 = vmatprep.subr.mxu0 0.0
    %3270 = vmatpush1.msra.mxu0 0.0
    %3271 = vmatprep.subr.mxu0 0.0
    %3272 = vmatpush1.msra.mxu0 0.0
    %3273 = vmatprep.subr.mxu0 0.0
    %3274 = vmatpush1.msra.mxu0 0.0
    %3275 = vmatprep.subr.mxu0 0.0
    %3276 = vmatpush1.msra.mxu0 0.0
    %3277 = vmatprep.subr.mxu0 0.0
    %3278 = vmatpush1.msra.mxu0 0.0
    %3279 = vmatprep.subr.mxu0 0.0
    %3280 = vmatpush1.msra.mxu0 0.0
    %3281 = vmatprep.subr.mxu0 0.0
    %3282 = vmatpush1.msra.mxu0 0.0
    %3283 = vmatprep.subr.mxu0 0.0
    %3284 = vmatpush1.msra.mxu0 0.0
    %3285 = vmatprep.subr.mxu0 0.0
    %3286 = vmatpush1.msra.mxu0 0.0
    %3287 = vmatprep.subr.mxu0 0.0
    %3288 = vmatpush1.msra.mxu0 0.0
    %3289 = vmatprep.subr.mxu0 0.0
    %3290 = vmatpush1.msra.mxu0 0.0
    %3291 = vmatprep.subr.mxu0 0.0
    %3292 = vmatpush1.msra.mxu0 0.0
    %3293 = vmatprep.subr.mxu0 0.0
    %3294 = vmatpush1.msra.mxu0 0.0
    %3295 = vmatprep.subr.mxu0 0.0
    %3296 = vmatpush1.msra.mxu0 0.0
    %3297 = vmatprep.subr.mxu0 0.0
    %3298 = vmatpush1.msra.mxu0 0.0
    %3299 = vmatprep.subr.mxu0 0.0
    %3300 = vmatpush1.msra.mxu0 0.0
    %3301 = vmatprep.subr.mxu0 0.0
    %3302 = vmatpush1.msra.mxu0 0.0
    %3303 = vmatprep.subr.mxu0 0.0
    %3304 = vmatpush1.msra.mxu0 0.0
    %3305 = vmatprep.subr.mxu0 0.0
    %3306 = vmatpush1.msra.mxu0 0.0
    %3307 = vmatprep.subr.mxu0 0.0
    %3308 = vmatpush1.msra.mxu0 0.0
    %3309 = vmatprep.subr.mxu0 0.0
    %3310 = vmatpush1.msra.mxu0 0.0
    %3311 = vmatprep.mubr.f32.mxu0 0.0
    %3312 = vmatmul.mubr.f32.gmra.mrb[0].mxu0 %v2906
    %v3313 = vpop.f32.mrb[0].mxu0
    %v3314 = vadd.f32 0.0, %v3313
    %v3315 = vpop.f32.mrb[0].mxu0
    %3316 = vdwg.mxu0
    %v3317 = vadd.f32 %v3244, %v3314
    %v3318 = vmul.f32 %v3317, 0.5
    %v3319 = vtanh.pop %v3318
    %v3320 = vmul.f32 %v3319, 0.5
    %v3321 = vadd.f32 %v3320, 0.5
    %v3322 = vadd.f32 %v3314, %v1554
    %3324 = vrot.lane.b32.xlu0 %v3322, 64
    %v3325 = vpop.permute.xlu0 %3324
    %v3327 = vmul.f32 %v3321, %v3325
    %3329 = vrot.lane.b32.xlu0 %v3327, 64
    %v3330 = vpop.permute.xlu0 %3329
    %v3332 = vadd.f32 %v3244, %v3330
    %v3333 = vtanh.pop %v3332
    %v3334 = vsub.f32 1.0, %v3321
    %3336 = vrot.lane.b32.xlu0 %v3333, 96
    %v3337 = vpop.permute.xlu0 %3336
    %v3339 = vmul.f32 %v3334, %v3337
    %v3340 = vmul.f32 %v3321, %v2901
    %v3341 = vadd.f32 %v3339, %v3340
    %v3342 = vld [vmem:[%s847] sm:$0x3]
    %3344 = vrot.lane.b32.xlu0 %v3341, 96
    %v3345 = vpop.permute.xlu0 %3344
    %v3346 = vsel %vm1396, %v3345, 0
    %3348 = vmatprep.subr.mxu0 0.0
    %3349 = vmatpush1.msra.mxu0 %v56
    %3350 = vmatprep.subr.mxu0 0.0
    %3351 = vmatpush1.msra.mxu0 %v57
    %3352 = vmatprep.subr.mxu0 0.0
    %3353 = vmatpush1.msra.mxu0 %v58
    %3354 = vmatprep.subr.mxu0 0.0
    %3355 = vmatpush1.msra.mxu0 %v59
    %3356 = vmatprep.subr.mxu0 0.0
    %3357 = vmatpush1.msra.mxu0 0.0
    %3358 = vmatprep.subr.mxu0 0.0
    %3359 = vmatpush1.msra.mxu0 0.0
    %3360 = vmatprep.subr.mxu0 0.0
    %3361 = vmatpush1.msra.mxu0 0.0
    %3362 = vmatprep.subr.mxu0 0.0
    %3363 = vmatpush1.msra.mxu0 0.0
    %3364 = vmatprep.subr.mxu0 0.0
    %3365 = vmatpush1.msra.mxu0 0.0
    %3366 = vmatprep.subr.mxu0 0.0
    %3367 = vmatpush1.msra.mxu0 0.0
    %3368 = vmatprep.subr.mxu0 0.0
    %3369 = vmatpush1.msra.mxu0 0.0
    %3370 = vmatprep.subr.mxu0 0.0
    %3371 = vmatpush1.msra.mxu0 0.0
    %3372 = vmatprep.subr.mxu0 0.0
    %3373 = vmatpush1.msra.mxu0 0.0
    %3374 = vmatprep.subr.mxu0 0.0
    %3375 = vmatpush1.msra.mxu0 0.0
    %3376 = vmatprep.subr.mxu0 0.0
    %3377 = vmatpush1.msra.mxu0 0.0
    %3378 = vmatprep.subr.mxu0 0.0
    %3379 = vmatpush1.msra.mxu0 0.0
    %3380 = vmatprep.subr.mxu0 0.0
    %3381 = vmatpush1.msra.mxu0 0.0
    %3382 = vmatprep.subr.mxu0 0.0
    %3383 = vmatpush1.msra.mxu0 0.0
    %3384 = vmatprep.subr.mxu0 0.0
    %3385 = vmatpush1.msra.mxu0 0.0
    %3386 = vmatprep.subr.mxu0 0.0
    %3387 = vmatpush1.msra.mxu0 0.0
    %3388 = vmatprep.subr.mxu0 0.0
    %3389 = vmatpush1.msra.mxu0 0.0
    %3390 = vmatprep.subr.mxu0 0.0
    %3391 = vmatpush1.msra.mxu0 0.0
    %3392 = vmatprep.subr.mxu0 0.0
    %3393 = vmatpush1.msra.mxu0 0.0
    %3394 = vmatprep.subr.mxu0 0.0
    %3395 = vmatpush1.msra.mxu0 0.0
    %3396 = vmatprep.subr.mxu0 0.0
    %3397 = vmatpush1.msra.mxu0 0.0
    %3398 = vmatprep.subr.mxu0 0.0
    %3399 = vmatpush1.msra.mxu0 0.0
    %3400 = vmatprep.subr.mxu0 0.0
    %3401 = vmatpush1.msra.mxu0 0.0
    %3402 = vmatprep.subr.mxu0 0.0
    %3403 = vmatpush1.msra.mxu0 0.0
    %3404 = vmatprep.subr.mxu0 0.0
    %3405 = vmatpush1.msra.mxu0 0.0
    %3406 = vmatprep.subr.mxu0 0.0
    %3407 = vmatpush1.msra.mxu0 0.0
    %3408 = vmatprep.subr.mxu0 0.0
    %3409 = vmatpush1.msra.mxu0 0.0
    %3410 = vmatprep.subr.mxu0 0.0
    %3411 = vmatpush1.msra.mxu0 0.0
    %3412 = vmatprep.mubr.f32.mxu0 0.0
    %3413 = vmatmul.mubr.f32.gmra.mrb[0].mxu0 %v3346
    %v3414 = vpop.f32.mrb[0].mxu0
    %v3415 = vadd.f32 %v3342, %v3414
    %v3416 = vpop.f32.mrb[0].mxu0
    %3417 = vdwg.mxu0
    %v3418 = vmax.f32 %v3415, 0.0
    %v3420 = vsel %vm1396, %v3418, 0
    %3422 = vmatprep.subr.mxu0 0.0
    %3423 = vmatpush1.msra.mxu0 %v60
    %3424 = vmatprep.subr.mxu0 0.0
    %3425 = vmatpush1.msra.mxu0 %v61
    %3426 = vmatprep.subr.mxu0 0.0
    %3427 = vmatpush1.msra.mxu0 %v62
    %3428 = vmatprep.subr.mxu0 0.0
    %3429 = vmatpush1.msra.mxu0 %v63
    %3430 = vmatprep.subr.mxu0 0.0
    %3431 = vmatpush1.msra.mxu0 0.0
    %3432 = vmatprep.subr.mxu0 0.0
    %3433 = vmatpush1.msra.mxu0 0.0
    %3434 = vmatprep.subr.mxu0 0.0
    %3435 = vmatpush1.msra.mxu0 0.0
    %3436 = vmatprep.subr.mxu0 0.0
    %3437 = vmatpush1.msra.mxu0 0.0
    %3438 = vmatprep.subr.mxu0 0.0
    %3439 = vmatpush1.msra.mxu0 0.0
    %3440 = vmatprep.subr.mxu0 0.0
    %3441 = vmatpush1.msra.mxu0 0.0
    %3442 = vmatprep.subr.mxu0 0.0
    %3443 = vmatpush1.msra.mxu0 0.0
    %3444 = vmatprep.subr.mxu0 0.0
    %3445 = vmatpush1.msra.mxu0 0.0
    %3446 = vmatprep.subr.mxu0 0.0
    %3447 = vmatpush1.msra.mxu0 0.0
    %3448 = vmatprep.subr.mxu0 0.0
    %3449 = vmatpush1.msra.mxu0 0.0
    %3450 = vmatprep.subr.mxu0 0.0
    %3451 = vmatpush1.msra.mxu0 0.0
    %3452 = vmatprep.subr.mxu0 0.0
    %3453 = vmatpush1.msra.mxu0 0.0
    %3454 = vmatprep.subr.mxu0 0.0
    %3455 = vmatpush1.msra.mxu0 0.0
    %3456 = vmatprep.subr.mxu0 0.0
    %3457 = vmatpush1.msra.mxu0 0.0
    %3458 = vmatprep.subr.mxu0 0.0
    %3459 = vmatpush1.msra.mxu0 0.0
    %3460 = vmatprep.subr.mxu0 0.0
    %3461 = vmatpush1.msra.mxu0 0.0
    %3462 = vmatprep.subr.mxu0 0.0
    %3463 = vmatpush1.msra.mxu0 0.0
    %3464 = vmatprep.subr.mxu0 0.0
    %3465 = vmatpush1.msra.mxu0 0.0
    %3466 = vmatprep.subr.mxu0 0.0
    %3467 = vmatpush1.msra.mxu0 0.0
    %3468 = vmatprep.subr.mxu0 0.0
    %3469 = vmatpush1.msra.mxu0 0.0
    %3470 = vmatprep.subr.mxu0 0.0
    %3471 = vmatpush1.msra.mxu0 0.0
    %3472 = vmatprep.subr.mxu0 0.0
    %3473 = vmatpush1.msra.mxu0 0.0
    %3474 = vmatprep.subr.mxu0 0.0
    %3475 = vmatpush1.msra.mxu0 0.0
    %3476 = vmatprep.subr.mxu0 0.0
    %3477 = vmatpush1.msra.mxu0 0.0
    %3478 = vmatprep.subr.mxu0 0.0
    %3479 = vmatpush1.msra.mxu0 0.0
    %3480 = vmatprep.subr.mxu0 0.0
    %3481 = vmatpush1.msra.mxu0 0.0
    %3482 = vmatprep.subr.mxu0 0.0
    %3483 = vmatpush1.msra.mxu0 0.0
    %3484 = vmatprep.subr.mxu0 0.0
    %3485 = vmatpush1.msra.mxu0 0.0
    %3486 = vmatprep.mubr.f32.mxu0 0.0
    %3487 = vmatmul.mubr.f32.gmra.mrb[0].mxu0 %v3420
    %v3488 = vpop.f32.mrb[0].mxu0
    %v3489 = vadd.f32 %v1659, %v3488
    %v3490 = vpop.f32.mrb[0].mxu0
    %3491 = vdwg.mxu0
    %v3492 = vmax.f32 %v3489, 0.0
    %v3493 = vand.u32 2147483647, %v3489
    %v3494 = vsub.f32 0.0, %v3493
    %v3495 = vmul.f32 %v3494, 1.442695
    %v3496 = vpow.pop %v3495
    %v3497 = vadd.f32 %v3496, 1.0
    %v3498 = vlog2.pop %v3497
    %v3499 = vmul.f32 %v3498, 0.6931472
    %v3500 = vmul.f32 -0.5, %v3496
    %v3501 = vadd.f32 %v3500, 1.0
    %v3502 = vmul.f32 %v3501, %v3496
    %v3503 = vand.u32 2147483647, %v3496
    %vm3504 = vcmp.lt.f32.partialorder %v3503, 0.0004427343
    %v3505 = vsel %vm3504, %v3502, %v3499
    %v3506 = vadd.f32 %v3492, %v3505
    %v3507 = vadd.f32 %v3506, 0.1
    %3508 = vrot.lane.b32.xlu0 %v3092, 112
    %v3509 = vpop.permute.xlu0 %3508
    %v3511 = vmul.f32 %v3507, %v3509
    %3513 = vrot.lane.b32.xlu0 %v3511, 112
    %v3514 = vpop.permute.xlu0 %3513
    %v3516 = vadd.f32 %v3489, %v3514
    %s3518 = scalar_lea.vmem [#allocation4], 8
    %3519 = vst.msk [vmem:[%s3518] sm:$0x3] %vm157, %v3345
    %3521 = vrot.lane.b32.xlu0 %v3489, 16
    %v3522 = vpop.permute.xlu0 %3521
    %3525 = vrot.lane.b32.xlu0 %v3507, 16
    %v3526 = vpop.permute.xlu0 %3525
    %v3528 = vsel %vm163, %v3516, %v3522
    %v3529 = vsel %vm1396, %v3528, %v3526
    %s3530 = scalar_lea.vmem [#allocation5], 8
    %3531 = vst.msk [vmem:[%s3530] sm:$0x3] %vm1770, %v3529
    %v3532 = vld [vmem:[%s849] sm:$0x3]
    %3534 = vset.pattern.permute.xlu0 52
    %3535 = vperm.xlu0 %3534, %v3532
    %v3536 = vpop.permute.xlu0 %3535
    %v3538 = vmul.f32 %v3516, %v3536
    %v3539 = vld [vmem:[%s926] sm:$0x3]
    %v3541 = vsel %vm163, %v3538, 0
    %3543 = vmatprep.subr.mxu0 0.0
    %3544 = vmatpush1.msra.mxu0 %v46
    %3545 = vmatprep.subr.mxu0 0.0
    %3546 = vmatpush1.msra.mxu0 %v47
    %3547 = vmatprep.subr.mxu0 0.0
    %3548 = vmatpush1.msra.mxu0 0.0
    %3549 = vmatprep.subr.mxu0 0.0
    %3550 = vmatpush1.msra.mxu0 0.0
    %3551 = vmatprep.subr.mxu0 0.0
    %3552 = vmatpush1.msra.mxu0 0.0
    %3553 = vmatprep.subr.mxu0 0.0
    %3554 = vmatpush1.msra.mxu0 0.0
    %3555 = vmatprep.subr.mxu0 0.0
    %3556 = vmatpush1.msra.mxu0 0.0
    %3557 = vmatprep.subr.mxu0 0.0
    %3558 = vmatpush1.msra.mxu0 0.0
    %3559 = vmatprep.subr.mxu0 0.0
    %3560 = vmatpush1.msra.mxu0 0.0
    %3561 = vmatprep.subr.mxu0 0.0
    %3562 = vmatpush1.msra.mxu0 0.0
    %3563 = vmatprep.subr.mxu0 0.0
    %3564 = vmatpush1.msra.mxu0 0.0
    %3565 = vmatprep.subr.mxu0 0.0
    %3566 = vmatpush1.msra.mxu0 0.0
    %3567 = vmatprep.subr.mxu0 0.0
    %3568 = vmatpush1.msra.mxu0 0.0
    %3569 = vmatprep.subr.mxu0 0.0
    %3570 = vmatpush1.msra.mxu0 0.0
    %3571 = vmatprep.subr.mxu0 0.0
    %3572 = vmatpush1.msra.mxu0 0.0
    %3573 = vmatprep.subr.mxu0 0.0
    %3574 = vmatpush1.msra.mxu0 0.0
    %3575 = vmatprep.subr.mxu0 0.0
    %3576 = vmatpush1.msra.mxu0 0.0
    %3577 = vmatprep.subr.mxu0 0.0
    %3578 = vmatpush1.msra.mxu0 0.0
    %3579 = vmatprep.subr.mxu0 0.0
    %3580 = vmatpush1.msra.mxu0 0.0
    %3581 = vmatprep.subr.mxu0 0.0
    %3582 = vmatpush1.msra.mxu0 0.0
    %3583 = vmatprep.subr.mxu0 0.0
    %3584 = vmatpush1.msra.mxu0 0.0
    %3585 = vmatprep.subr.mxu0 0.0
    %3586 = vmatpush1.msra.mxu0 0.0
    %3587 = vmatprep.subr.mxu0 0.0
    %3588 = vmatpush1.msra.mxu0 0.0
    %3589 = vmatprep.subr.mxu0 0.0
    %3590 = vmatpush1.msra.mxu0 0.0
    %3591 = vmatprep.subr.mxu0 0.0
    %3592 = vmatpush1.msra.mxu0 0.0
    %3593 = vmatprep.subr.mxu0 0.0
    %3594 = vmatpush1.msra.mxu0 0.0
    %3595 = vmatprep.subr.mxu0 0.0
    %3596 = vmatpush1.msra.mxu0 0.0
    %3597 = vmatprep.subr.mxu0 0.0
    %3598 = vmatpush1.msra.mxu0 0.0
    %3599 = vmatprep.subr.mxu0 0.0
    %3600 = vmatpush1.msra.mxu0 0.0
    %3601 = vmatprep.subr.mxu0 0.0
    %3602 = vmatpush1.msra.mxu0 0.0
    %3603 = vmatprep.subr.mxu0 0.0
    %3604 = vmatpush1.msra.mxu0 0.0
    %3605 = vmatprep.subr.mxu0 0.0
    %3606 = vmatpush1.msra.mxu0 0.0
    %3607 = vmatprep.mubr.f32.mxu0 0.0
    %3608 = vmatmul.mubr.f32.gmra.mrb[0].mxu0 %v3541
    %v3609 = vpop.f32.mrb[0].mxu0
    %v3610 = vadd.f32 %v3539, %v3609
    %v3611 = vpop.f32.mrb[0].mxu0
    %3612 = vdwg.mxu0
    %v3613 = vmax.f32 %v3610, 0.0
    %v3615 = vsel %vm1396, %v3613, 0
    %3617 = vmatprep.subr.mxu0 0.0
    %3618 = vmatpush1.msra.mxu0 %v48
    %3619 = vmatprep.subr.mxu0 0.0
    %3620 = vmatpush1.msra.mxu0 %v49
    %3621 = vmatprep.subr.mxu0 0.0
    %3622 = vmatpush1.msra.mxu0 %v50
    %3623 = vmatprep.subr.mxu0 0.0
    %3624 = vmatpush1.msra.mxu0 %v51
    %3625 = vmatprep.subr.mxu0 0.0
    %3626 = vmatpush1.msra.mxu0 0.0
    %3627 = vmatprep.subr.mxu0 0.0
    %3628 = vmatpush1.msra.mxu0 0.0
    %3629 = vmatprep.subr.mxu0 0.0
    %3630 = vmatpush1.msra.mxu0 0.0
    %3631 = vmatprep.subr.mxu0 0.0
    %3632 = vmatpush1.msra.mxu0 0.0
    %3633 = vmatprep.subr.mxu0 0.0
    %3634 = vmatpush1.msra.mxu0 0.0
    %3635 = vmatprep.subr.mxu0 0.0
    %3636 = vmatpush1.msra.mxu0 0.0
    %3637 = vmatprep.subr.mxu0 0.0
    %3638 = vmatpush1.msra.mxu0 0.0
    %3639 = vmatprep.subr.mxu0 0.0
    %3640 = vmatpush1.msra.mxu0 0.0
    %3641 = vmatprep.subr.mxu0 0.0
    %3642 = vmatpush1.msra.mxu0 0.0
    %3643 = vmatprep.subr.mxu0 0.0
    %3644 = vmatpush1.msra.mxu0 0.0
    %3645 = vmatprep.subr.mxu0 0.0
    %3646 = vmatpush1.msra.mxu0 0.0
    %3647 = vmatprep.subr.mxu0 0.0
    %3648 = vmatpush1.msra.mxu0 0.0
    %3649 = vmatprep.subr.mxu0 0.0
    %3650 = vmatpush1.msra.mxu0 0.0
    %3651 = vmatprep.subr.mxu0 0.0
    %3652 = vmatpush1.msra.mxu0 0.0
    %3653 = vmatprep.subr.mxu0 0.0
    %3654 = vmatpush1.msra.mxu0 0.0
    %3655 = vmatprep.subr.mxu0 0.0
    %3656 = vmatpush1.msra.mxu0 0.0
    %3657 = vmatprep.subr.mxu0 0.0
    %3658 = vmatpush1.msra.mxu0 0.0
    %3659 = vmatprep.subr.mxu0 0.0
    %3660 = vmatpush1.msra.mxu0 0.0
    %3661 = vmatprep.subr.mxu0 0.0
    %3662 = vmatpush1.msra.mxu0 0.0
    %3663 = vmatprep.subr.mxu0 0.0
    %3664 = vmatpush1.msra.mxu0 0.0
    %3665 = vmatprep.subr.mxu0 0.0
    %3666 = vmatpush1.msra.mxu0 0.0
    %3667 = vmatprep.subr.mxu0 0.0
    %3668 = vmatpush1.msra.mxu0 0.0
    %3669 = vmatprep.subr.mxu0 0.0
    %3670 = vmatpush1.msra.mxu0 0.0
    %3671 = vmatprep.subr.mxu0 0.0
    %3672 = vmatpush1.msra.mxu0 0.0
    %3673 = vmatprep.subr.mxu0 0.0
    %3674 = vmatpush1.msra.mxu0 0.0
    %3675 = vmatprep.subr.mxu0 0.0
    %3676 = vmatpush1.msra.mxu0 0.0
    %3677 = vmatprep.subr.mxu0 0.0
    %3678 = vmatpush1.msra.mxu0 0.0
    %3679 = vmatprep.subr.mxu0 0.0
    %3680 = vmatpush1.msra.mxu0 0.0
    %3681 = vmatprep.mubr.f32.mxu0 0.0
    %3682 = vmatmul.mubr.f32.gmra.mrb[0].mxu0 %v3615
    %v3683 = vpop.f32.mrb[0].mxu0
    %v3684 = vadd.f32 %v1395, %v3683
    %v3685 = vpop.f32.mrb[0].mxu0
    %3686 = vdwg.mxu0
    %3687 = vmatprep.subr.mxu0 0.0
    %3688 = vmatpush1.msra.mxu0 %v52
    %3689 = vmatprep.subr.mxu0 0.0
    %3690 = vmatpush1.msra.mxu0 %v53
    %3691 = vmatprep.subr.mxu0 0.0
    %3692 = vmatpush1.msra.mxu0 %v54
    %3693 = vmatprep.subr.mxu0 0.0
    %3694 = vmatpush1.msra.mxu0 %v55
    %3695 = vmatprep.subr.mxu0 0.0
    %3696 = vmatpush1.msra.mxu0 0.0
    %3697 = vmatprep.subr.mxu0 0.0
    %3698 = vmatpush1.msra.mxu0 0.0
    %3699 = vmatprep.subr.mxu0 0.0
    %3700 = vmatpush1.msra.mxu0 0.0
    %3701 = vmatprep.subr.mxu0 0.0
    %3702 = vmatpush1.msra.mxu0 0.0
    %3703 = vmatprep.subr.mxu0 0.0
    %3704 = vmatpush1.msra.mxu0 0.0
    %3705 = vmatprep.subr.mxu0 0.0
    %3706 = vmatpush1.msra.mxu0 0.0
    %3707 = vmatprep.subr.mxu0 0.0
    %3708 = vmatpush1.msra.mxu0 0.0
    %3709 = vmatprep.subr.mxu0 0.0
    %3710 = vmatpush1.msra.mxu0 0.0
    %3711 = vmatprep.subr.mxu0 0.0
    %3712 = vmatpush1.msra.mxu0 0.0
    %3713 = vmatprep.subr.mxu0 0.0
    %3714 = vmatpush1.msra.mxu0 0.0
    %3715 = vmatprep.subr.mxu0 0.0
    %3716 = vmatpush1.msra.mxu0 0.0
    %3717 = vmatprep.subr.mxu0 0.0
    %3718 = vmatpush1.msra.mxu0 0.0
    %3719 = vmatprep.subr.mxu0 0.0
    %3720 = vmatpush1.msra.mxu0 0.0
    %3721 = vmatprep.subr.mxu0 0.0
    %3722 = vmatpush1.msra.mxu0 0.0
    %3723 = vmatprep.subr.mxu0 0.0
    %3724 = vmatpush1.msra.mxu0 0.0
    %3725 = vmatprep.subr.mxu0 0.0
    %3726 = vmatpush1.msra.mxu0 0.0
    %3727 = vmatprep.subr.mxu0 0.0
    %3728 = vmatpush1.msra.mxu0 0.0
    %3729 = vmatprep.subr.mxu0 0.0
    %3730 = vmatpush1.msra.mxu0 0.0
    %3731 = vmatprep.subr.mxu0 0.0
    %3732 = vmatpush1.msra.mxu0 0.0
    %3733 = vmatprep.subr.mxu0 0.0
    %3734 = vmatpush1.msra.mxu0 0.0
    %3735 = vmatprep.subr.mxu0 0.0
    %3736 = vmatpush1.msra.mxu0 0.0
    %3737 = vmatprep.subr.mxu0 0.0
    %3738 = vmatpush1.msra.mxu0 0.0
    %3739 = vmatprep.subr.mxu0 0.0
    %3740 = vmatpush1.msra.mxu0 0.0
    %3741 = vmatprep.subr.mxu0 0.0
    %3742 = vmatpush1.msra.mxu0 0.0
    %3743 = vmatprep.subr.mxu0 0.0
    %3744 = vmatpush1.msra.mxu0 0.0
    %3745 = vmatprep.subr.mxu0 0.0
    %3746 = vmatpush1.msra.mxu0 0.0
    %3747 = vmatprep.subr.mxu0 0.0
    %3748 = vmatpush1.msra.mxu0 0.0
    %3749 = vmatprep.subr.mxu0 0.0
    %3750 = vmatpush1.msra.mxu0 0.0
    %3751 = vmatprep.mubr.f32.mxu0 0.0
    %3752 = vmatmul.mubr.f32.gmra.mrb[0].mxu0 %v3346
    %v3753 = vpop.f32.mrb[0].mxu0
    %v3754 = vadd.f32 0.0, %v3753
    %v3755 = vpop.f32.mrb[0].mxu0
    %3756 = vdwg.mxu0
    %v3757 = vadd.f32 %v3684, %v3754
    %v3758 = vmul.f32 %v3757, 0.5
    %v3759 = vtanh.pop %v3758
    %v3760 = vmul.f32 %v3759, 0.5
    %v3761 = vadd.f32 %v3760, 0.5
    %v3762 = vadd.f32 %v3754, %v1554
    %3764 = vrot.lane.b32.xlu0 %v3762, 64
    %v3765 = vpop.permute.xlu0 %3764
    %v3767 = vmul.f32 %v3761, %v3765
    %3769 = vrot.lane.b32.xlu0 %v3767, 64
    %v3770 = vpop.permute.xlu0 %3769
    %v3772 = vadd.f32 %v3684, %v3770
    %v3773 = vtanh.pop %v3772
    %v3774 = vsub.f32 1.0, %v3761
    %3776 = vrot.lane.b32.xlu0 %v3773, 96
    %v3777 = vpop.permute.xlu0 %3776
    %v3779 = vmul.f32 %v3774, %v3777
    %v3780 = vmul.f32 %v3761, %v3341
    %v3781 = vadd.f32 %v3779, %v3780
    %v3782 = vld [vmem:[%s1000] sm:$0x3]
    %3784 = vrot.lane.b32.xlu0 %v3781, 96
    %v3785 = vpop.permute.xlu0 %3784
    %v3786 = vsel %vm1396, %v3785, 0
    %3788 = vmatprep.subr.mxu0 0.0
    %3789 = vmatpush1.msra.mxu0 %v56
    %3790 = vmatprep.subr.mxu0 0.0
    %3791 = vmatpush1.msra.mxu0 %v57
    %3792 = vmatprep.subr.mxu0 0.0
    %3793 = vmatpush1.msra.mxu0 %v58
    %3794 = vmatprep.subr.mxu0 0.0
    %3795 = vmatpush1.msra.mxu0 %v59
    %3796 = vmatprep.subr.mxu0 0.0
    %3797 = vmatpush1.msra.mxu0 0.0
    %3798 = vmatprep.subr.mxu0 0.0
    %3799 = vmatpush1.msra.mxu0 0.0
    %3800 = vmatprep.subr.mxu0 0.0
    %3801 = vmatpush1.msra.mxu0 0.0
    %3802 = vmatprep.subr.mxu0 0.0
    %3803 = vmatpush1.msra.mxu0 0.0
    %3804 = vmatprep.subr.mxu0 0.0
    %3805 = vmatpush1.msra.mxu0 0.0
    %3806 = vmatprep.subr.mxu0 0.0
    %3807 = vmatpush1.msra.mxu0 0.0
    %3808 = vmatprep.subr.mxu0 0.0
    %3809 = vmatpush1.msra.mxu0 0.0
    %3810 = vmatprep.subr.mxu0 0.0
    %3811 = vmatpush1.msra.mxu0 0.0
    %3812 = vmatprep.subr.mxu0 0.0
    %3813 = vmatpush1.msra.mxu0 0.0
    %3814 = vmatprep.subr.mxu0 0.0
    %3815 = vmatpush1.msra.mxu0 0.0
    %3816 = vmatprep.subr.mxu0 0.0
    %3817 = vmatpush1.msra.mxu0 0.0
    %3818 = vmatprep.subr.mxu0 0.0
    %3819 = vmatpush1.msra.mxu0 0.0
    %3820 = vmatprep.subr.mxu0 0.0
    %3821 = vmatpush1.msra.mxu0 0.0
    %3822 = vmatprep.subr.mxu0 0.0
    %3823 = vmatpush1.msra.mxu0 0.0
    %3824 = vmatprep.subr.mxu0 0.0
    %3825 = vmatpush1.msra.mxu0 0.0
    %3826 = vmatprep.subr.mxu0 0.0
    %3827 = vmatpush1.msra.mxu0 0.0
    %3828 = vmatprep.subr.mxu0 0.0
    %3829 = vmatpush1.msra.mxu0 0.0
    %3830 = vmatprep.subr.mxu0 0.0
    %3831 = vmatpush1.msra.mxu0 0.0
    %3832 = vmatprep.subr.mxu0 0.0
    %3833 = vmatpush1.msra.mxu0 0.0
    %3834 = vmatprep.subr.mxu0 0.0
    %3835 = vmatpush1.msra.mxu0 0.0
    %3836 = vmatprep.subr.mxu0 0.0
    %3837 = vmatpush1.msra.mxu0 0.0
    %3838 = vmatprep.subr.mxu0 0.0
    %3839 = vmatpush1.msra.mxu0 0.0
    %3840 = vmatprep.subr.mxu0 0.0
    %3841 = vmatpush1.msra.mxu0 0.0
    %3842 = vmatprep.subr.mxu0 0.0
    %3843 = vmatpush1.msra.mxu0 0.0
    %3844 = vmatprep.subr.mxu0 0.0
    %3845 = vmatpush1.msra.mxu0 0.0
    %3846 = vmatprep.subr.mxu0 0.0
    %3847 = vmatpush1.msra.mxu0 0.0
    %3848 = vmatprep.subr.mxu0 0.0
    %3849 = vmatpush1.msra.mxu0 0.0
    %3850 = vmatprep.subr.mxu0 0.0
    %3851 = vmatpush1.msra.mxu0 0.0
    %3852 = vmatprep.mubr.f32.mxu0 0.0
    %3853 = vmatmul.mubr.f32.gmra.mrb[0].mxu0 %v3786
    %v3854 = vpop.f32.mrb[0].mxu0
    %v3855 = vadd.f32 %v3782, %v3854
    %v3856 = vpop.f32.mrb[0].mxu0
    %3857 = vdwg.mxu0
    %v3858 = vmax.f32 %v3855, 0.0
    %v3860 = vsel %vm1396, %v3858, 0
    %3862 = vmatprep.subr.mxu0 0.0
    %3863 = vmatpush1.msra.mxu0 %v60
    %3864 = vmatprep.subr.mxu0 0.0
    %3865 = vmatpush1.msra.mxu0 %v61
    %3866 = vmatprep.subr.mxu0 0.0
    %3867 = vmatpush1.msra.mxu0 %v62
    %3868 = vmatprep.subr.mxu0 0.0
    %3869 = vmatpush1.msra.mxu0 %v63
    %3870 = vmatprep.subr.mxu0 0.0
    %3871 = vmatpush1.msra.mxu0 0.0
    %3872 = vmatprep.subr.mxu0 0.0
    %3873 = vmatpush1.msra.mxu0 0.0
    %3874 = vmatprep.subr.mxu0 0.0
    %3875 = vmatpush1.msra.mxu0 0.0
    %3876 = vmatprep.subr.mxu0 0.0
    %3877 = vmatpush1.msra.mxu0 0.0
    %3878 = vmatprep.subr.mxu0 0.0
    %3879 = vmatpush1.msra.mxu0 0.0
    %3880 = vmatprep.subr.mxu0 0.0
    %3881 = vmatpush1.msra.mxu0 0.0
    %3882 = vmatprep.subr.mxu0 0.0
    %3883 = vmatpush1.msra.mxu0 0.0
    %3884 = vmatprep.subr.mxu0 0.0
    %3885 = vmatpush1.msra.mxu0 0.0
    %3886 = vmatprep.subr.mxu0 0.0
    %3887 = vmatpush1.msra.mxu0 0.0
    %3888 = vmatprep.subr.mxu0 0.0
    %3889 = vmatpush1.msra.mxu0 0.0
    %3890 = vmatprep.subr.mxu0 0.0
    %3891 = vmatpush1.msra.mxu0 0.0
    %3892 = vmatprep.subr.mxu0 0.0
    %3893 = vmatpush1.msra.mxu0 0.0
    %3894 = vmatprep.subr.mxu0 0.0
    %3895 = vmatpush1.msra.mxu0 0.0
    %3896 = vmatprep.subr.mxu0 0.0
    %3897 = vmatpush1.msra.mxu0 0.0
    %3898 = vmatprep.subr.mxu0 0.0
    %3899 = vmatpush1.msra.mxu0 0.0
    %3900 = vmatprep.subr.mxu0 0.0
    %3901 = vmatpush1.msra.mxu0 0.0
    %3902 = vmatprep.subr.mxu0 0.0
    %3903 = vmatpush1.msra.mxu0 0.0
    %3904 = vmatprep.subr.mxu0 0.0
    %3905 = vmatpush1.msra.mxu0 0.0
    %3906 = vmatprep.subr.mxu0 0.0
    %3907 = vmatpush1.msra.mxu0 0.0
    %3908 = vmatprep.subr.mxu0 0.0
    %3909 = vmatpush1.msra.mxu0 0.0
    %3910 = vmatprep.subr.mxu0 0.0
    %3911 = vmatpush1.msra.mxu0 0.0
    %3912 = vmatprep.subr.mxu0 0.0
    %3913 = vmatpush1.msra.mxu0 0.0
    %3914 = vmatprep.subr.mxu0 0.0
    %3915 = vmatpush1.msra.mxu0 0.0
    %3916 = vmatprep.subr.mxu0 0.0
    %3917 = vmatpush1.msra.mxu0 0.0
    %3918 = vmatprep.subr.mxu0 0.0
    %3919 = vmatpush1.msra.mxu0 0.0
    %3920 = vmatprep.subr.mxu0 0.0
    %3921 = vmatpush1.msra.mxu0 0.0
    %3922 = vmatprep.subr.mxu0 0.0
    %3923 = vmatpush1.msra.mxu0 0.0
    %3924 = vmatprep.subr.mxu0 0.0
    %3925 = vmatpush1.msra.mxu0 0.0
    %3926 = vmatprep.mubr.f32.mxu0 0.0
    %3927 = vmatmul.mubr.f32.gmra.mrb[0].mxu0 %v3860
    %v3928 = vpop.f32.mrb[0].mxu0
    %v3929 = vadd.f32 %v1659, %v3928
    %v3930 = vpop.f32.mrb[0].mxu0
    %3931 = vdwg.mxu0
    %v3932 = vmax.f32 %v3929, 0.0
    %v3933 = vand.u32 2147483647, %v3929
    %v3934 = vsub.f32 0.0, %v3933
    %v3935 = vmul.f32 %v3934, 1.442695
    %v3936 = vpow.pop %v3935
    %v3937 = vadd.f32 %v3936, 1.0
    %v3938 = vlog2.pop %v3937
    %v3939 = vmul.f32 %v3938, 0.6931472
    %v3940 = vmul.f32 -0.5, %v3936
    %v3941 = vadd.f32 %v3940, 1.0
    %v3942 = vmul.f32 %v3941, %v3936
    %v3943 = vand.u32 2147483647, %v3936
    %vm3944 = vcmp.lt.f32.partialorder %v3943, 0.0004427343
    %v3945 = vsel %vm3944, %v3942, %v3939
    %v3946 = vadd.f32 %v3932, %v3945
    %v3947 = vadd.f32 %v3946, 0.1
    %3948 = vrot.lane.b32.xlu0 %v3532, 112
    %v3949 = vpop.permute.xlu0 %3948
    %v3951 = vmul.f32 %v3947, %v3949
    %3953 = vrot.lane.b32.xlu0 %v3951, 112
    %v3954 = vpop.permute.xlu0 %3953
    %v3956 = vadd.f32 %v3929, %v3954
    %s3958 = scalar_lea.vmem [#allocation4], 10
    %3959 = vst.msk [vmem:[%s3958] sm:$0x3] %vm157, %v3785
    %3961 = vrot.lane.b32.xlu0 %v3929, 16
    %v3962 = vpop.permute.xlu0 %3961
    %3965 = vrot.lane.b32.xlu0 %v3947, 16
    %v3966 = vpop.permute.xlu0 %3965
    %v3968 = vsel %vm163, %v3956, %v3962
    %v3969 = vsel %vm1396, %v3968, %v3966
    %s3970 = scalar_lea.vmem [#allocation5], 10
    %3971 = vst.msk [vmem:[%s3970] sm:$0x3] %vm1770, %v3969
    %v3972 = vld [vmem:[%s1002] sm:$0x3]
    %3974 = vset.pattern.permute.xlu0 52
    %3975 = vperm.xlu0 %3974, %v3972
    %v3976 = vpop.permute.xlu0 %3975
    %v3978 = vmul.f32 %v3956, %v3976
    %v3979 = vld [vmem:[%s1079] sm:$0x3]
    %v3981 = vsel %vm163, %v3978, 0
    %3983 = vmatprep.subr.mxu0 0.0
    %3984 = vmatpush1.msra.mxu0 %v46
    %3985 = vmatprep.subr.mxu0 0.0
    %3986 = vmatpush1.msra.mxu0 %v47
    %3987 = vmatprep.subr.mxu0 0.0
    %3988 = vmatpush1.msra.mxu0 0.0
    %3989 = vmatprep.subr.mxu0 0.0
    %3990 = vmatpush1.msra.mxu0 0.0
    %3991 = vmatprep.subr.mxu0 0.0
    %3992 = vmatpush1.msra.mxu0 0.0
    %3993 = vmatprep.subr.mxu0 0.0
    %3994 = vmatpush1.msra.mxu0 0.0
    %3995 = vmatprep.subr.mxu0 0.0
    %3996 = vmatpush1.msra.mxu0 0.0
    %3997 = vmatprep.subr.mxu0 0.0
    %3998 = vmatpush1.msra.mxu0 0.0
    %3999 = vmatprep.subr.mxu0 0.0
    %4000 = vmatpush1.msra.mxu0 0.0
    %4001 = vmatprep.subr.mxu0 0.0
    %4002 = vmatpush1.msra.mxu0 0.0
    %4003 = vmatprep.subr.mxu0 0.0
    %4004 = vmatpush1.msra.mxu0 0.0
    %4005 = vmatprep.subr.mxu0 0.0
    %4006 = vmatpush1.msra.mxu0 0.0
    %4007 = vmatprep.subr.mxu0 0.0
    %4008 = vmatpush1.msra.mxu0 0.0
    %4009 = vmatprep.subr.mxu0 0.0
    %4010 = vmatpush1.msra.mxu0 0.0
    %4011 = vmatprep.subr.mxu0 0.0
    %4012 = vmatpush1.msra.mxu0 0.0
    %4013 = vmatprep.subr.mxu0 0.0
    %4014 = vmatpush1.msra.mxu0 0.0
    %4015 = vmatprep.subr.mxu0 0.0
    %4016 = vmatpush1.msra.mxu0 0.0
    %4017 = vmatprep.subr.mxu0 0.0
    %4018 = vmatpush1.msra.mxu0 0.0
    %4019 = vmatprep.subr.mxu0 0.0
    %4020 = vmatpush1.msra.mxu0 0.0
    %4021 = vmatprep.subr.mxu0 0.0
    %4022 = vmatpush1.msra.mxu0 0.0
    %4023 = vmatprep.subr.mxu0 0.0
    %4024 = vmatpush1.msra.mxu0 0.0
    %4025 = vmatprep.subr.mxu0 0.0
    %4026 = vmatpush1.msra.mxu0 0.0
    %4027 = vmatprep.subr.mxu0 0.0
    %4028 = vmatpush1.msra.mxu0 0.0
    %4029 = vmatprep.subr.mxu0 0.0
    %4030 = vmatpush1.msra.mxu0 0.0
    %4031 = vmatprep.subr.mxu0 0.0
    %4032 = vmatpush1.msra.mxu0 0.0
    %4033 = vmatprep.subr.mxu0 0.0
    %4034 = vmatpush1.msra.mxu0 0.0
    %4035 = vmatprep.subr.mxu0 0.0
    %4036 = vmatpush1.msra.mxu0 0.0
    %4037 = vmatprep.subr.mxu0 0.0
    %4038 = vmatpush1.msra.mxu0 0.0
    %4039 = vmatprep.subr.mxu0 0.0
    %4040 = vmatpush1.msra.mxu0 0.0
    %4041 = vmatprep.subr.mxu0 0.0
    %4042 = vmatpush1.msra.mxu0 0.0
    %4043 = vmatprep.subr.mxu0 0.0
    %4044 = vmatpush1.msra.mxu0 0.0
    %4045 = vmatprep.subr.mxu0 0.0
    %4046 = vmatpush1.msra.mxu0 0.0
    %4047 = vmatprep.mubr.f32.mxu0 0.0
    %4048 = vmatmul.mubr.f32.gmra.mrb[0].mxu0 %v3981
    %v4049 = vpop.f32.mrb[0].mxu0
    %v4050 = vadd.f32 %v3979, %v4049
    %v4051 = vpop.f32.mrb[0].mxu0
    %4052 = vdwg.mxu0
    %v4053 = vmax.f32 %v4050, 0.0
    %v4055 = vsel %vm1396, %v4053, 0
    %4057 = vmatprep.subr.mxu0 0.0
    %4058 = vmatpush1.msra.mxu0 %v48
    %4059 = vmatprep.subr.mxu0 0.0
    %4060 = vmatpush1.msra.mxu0 %v49
    %4061 = vmatprep.subr.mxu0 0.0
    %4062 = vmatpush1.msra.mxu0 %v50
    %4063 = vmatprep.subr.mxu0 0.0
    %4064 = vmatpush1.msra.mxu0 %v51
    %4065 = vmatprep.subr.mxu0 0.0
    %4066 = vmatpush1.msra.mxu0 0.0
    %4067 = vmatprep.subr.mxu0 0.0
    %4068 = vmatpush1.msra.mxu0 0.0
    %4069 = vmatprep.subr.mxu0 0.0
    %4070 = vmatpush1.msra.mxu0 0.0
    %4071 = vmatprep.subr.mxu0 0.0
    %4072 = vmatpush1.msra.mxu0 0.0
    %4073 = vmatprep.subr.mxu0 0.0
    %4074 = vmatpush1.msra.mxu0 0.0
    %4075 = vmatprep.subr.mxu0 0.0
    %4076 = vmatpush1.msra.mxu0 0.0
    %4077 = vmatprep.subr.mxu0 0.0
    %4078 = vmatpush1.msra.mxu0 0.0
    %4079 = vmatprep.subr.mxu0 0.0
    %4080 = vmatpush1.msra.mxu0 0.0
    %4081 = vmatprep.subr.mxu0 0.0
    %4082 = vmatpush1.msra.mxu0 0.0
    %4083 = vmatprep.subr.mxu0 0.0
    %4084 = vmatpush1.msra.mxu0 0.0
    %4085 = vmatprep.subr.mxu0 0.0
    %4086 = vmatpush1.msra.mxu0 0.0
    %4087 = vmatprep.subr.mxu0 0.0
    %4088 = vmatpush1.msra.mxu0 0.0
    %4089 = vmatprep.subr.mxu0 0.0
    %4090 = vmatpush1.msra.mxu0 0.0
    %4091 = vmatprep.subr.mxu0 0.0
    %4092 = vmatpush1.msra.mxu0 0.0
    %4093 = vmatprep.subr.mxu0 0.0
    %4094 = vmatpush1.msra.mxu0 0.0
    %4095 = vmatprep.subr.mxu0 0.0
    %4096 = vmatpush1.msra.mxu0 0.0
    %4097 = vmatprep.subr.mxu0 0.0
    %4098 = vmatpush1.msra.mxu0 0.0
    %4099 = vmatprep.subr.mxu0 0.0
    %4100 = vmatpush1.msra.mxu0 0.0
    %4101 = vmatprep.subr.mxu0 0.0
    %4102 = vmatpush1.msra.mxu0 0.0
    %4103 = vmatprep.subr.mxu0 0.0
    %4104 = vmatpush1.msra.mxu0 0.0
    %4105 = vmatprep.subr.mxu0 0.0
    %4106 = vmatpush1.msra.mxu0 0.0
    %4107 = vmatprep.subr.mxu0 0.0
    %4108 = vmatpush1.msra.mxu0 0.0
    %4109 = vmatprep.subr.mxu0 0.0
    %4110 = vmatpush1.msra.mxu0 0.0
    %4111 = vmatprep.subr.mxu0 0.0
    %4112 = vmatpush1.msra.mxu0 0.0
    %4113 = vmatprep.subr.mxu0 0.0
    %4114 = vmatpush1.msra.mxu0 0.0
    %4115 = vmatprep.subr.mxu0 0.0
    %4116 = vmatpush1.msra.mxu0 0.0
    %4117 = vmatprep.subr.mxu0 0.0
    %4118 = vmatpush1.msra.mxu0 0.0
    %4119 = vmatprep.subr.mxu0 0.0
    %4120 = vmatpush1.msra.mxu0 0.0
    %4121 = vmatprep.mubr.f32.mxu0 0.0
    %4122 = vmatmul.mubr.f32.gmra.mrb[0].mxu0 %v4055
    %v4123 = vpop.f32.mrb[0].mxu0
    %v4124 = vadd.f32 %v1395, %v4123
    %v4125 = vpop.f32.mrb[0].mxu0
    %4126 = vdwg.mxu0
    %4127 = vmatprep.subr.mxu0 0.0
    %4128 = vmatpush1.msra.mxu0 %v52
    %4129 = vmatprep.subr.mxu0 0.0
    %4130 = vmatpush1.msra.mxu0 %v53
    %4131 = vmatprep.subr.mxu0 0.0
    %4132 = vmatpush1.msra.mxu0 %v54
    %4133 = vmatprep.subr.mxu0 0.0
    %4134 = vmatpush1.msra.mxu0 %v55
    %4135 = vmatprep.subr.mxu0 0.0
    %4136 = vmatpush1.msra.mxu0 0.0
    %4137 = vmatprep.subr.mxu0 0.0
    %4138 = vmatpush1.msra.mxu0 0.0
    %4139 = vmatprep.subr.mxu0 0.0
    %4140 = vmatpush1.msra.mxu0 0.0
    %4141 = vmatprep.subr.mxu0 0.0
    %4142 = vmatpush1.msra.mxu0 0.0
    %4143 = vmatprep.subr.mxu0 0.0
    %4144 = vmatpush1.msra.mxu0 0.0
    %4145 = vmatprep.subr.mxu0 0.0
    %4146 = vmatpush1.msra.mxu0 0.0
    %4147 = vmatprep.subr.mxu0 0.0
    %4148 = vmatpush1.msra.mxu0 0.0
    %4149 = vmatprep.subr.mxu0 0.0
    %4150 = vmatpush1.msra.mxu0 0.0
    %4151 = vmatprep.subr.mxu0 0.0
    %4152 = vmatpush1.msra.mxu0 0.0
    %4153 = vmatprep.subr.mxu0 0.0
    %4154 = vmatpush1.msra.mxu0 0.0
    %4155 = vmatprep.subr.mxu0 0.0
    %4156 = vmatpush1.msra.mxu0 0.0
    %4157 = vmatprep.subr.mxu0 0.0
    %4158 = vmatpush1.msra.mxu0 0.0
    %4159 = vmatprep.subr.mxu0 0.0
    %4160 = vmatpush1.msra.mxu0 0.0
    %4161 = vmatprep.subr.mxu0 0.0
    %4162 = vmatpush1.msra.mxu0 0.0
    %4163 = vmatprep.subr.mxu0 0.0
    %4164 = vmatpush1.msra.mxu0 0.0
    %4165 = vmatprep.subr.mxu0 0.0
    %4166 = vmatpush1.msra.mxu0 0.0
    %4167 = vmatprep.subr.mxu0 0.0
    %4168 = vmatpush1.msra.mxu0 0.0
    %4169 = vmatprep.subr.mxu0 0.0
    %4170 = vmatpush1.msra.mxu0 0.0
    %4171 = vmatprep.subr.mxu0 0.0
    %4172 = vmatpush1.msra.mxu0 0.0
    %4173 = vmatprep.subr.mxu0 0.0
    %4174 = vmatpush1.msra.mxu0 0.0
    %4175 = vmatprep.subr.mxu0 0.0
    %4176 = vmatpush1.msra.mxu0 0.0
    %4177 = vmatprep.subr.mxu0 0.0
    %4178 = vmatpush1.msra.mxu0 0.0
    %4179 = vmatprep.subr.mxu0 0.0
    %4180 = vmatpush1.msra.mxu0 0.0
    %4181 = vmatprep.subr.mxu0 0.0
    %4182 = vmatpush1.msra.mxu0 0.0
    %4183 = vmatprep.subr.mxu0 0.0
    %4184 = vmatpush1.msra.mxu0 0.0
    %4185 = vmatprep.subr.mxu0 0.0
    %4186 = vmatpush1.msra.mxu0 0.0
    %4187 = vmatprep.subr.mxu0 0.0
    %4188 = vmatpush1.msra.mxu0 0.0
    %4189 = vmatprep.subr.mxu0 0.0
    %4190 = vmatpush1.msra.mxu0 0.0
    %4191 = vmatprep.mubr.f32.mxu0 0.0
    %4192 = vmatmul.mubr.f32.gmra.mrb[0].mxu0 %v3786
    %v4193 = vpop.f32.mrb[0].mxu0
    %v4194 = vadd.f32 0.0, %v4193
    %v4195 = vpop.f32.mrb[0].mxu0
    %4196 = vdwg.mxu0
    %v4197 = vadd.f32 %v4124, %v4194
    %v4198 = vmul.f32 %v4197, 0.5
    %v4199 = vtanh.pop %v4198
    %v4200 = vmul.f32 %v4199, 0.5
    %v4201 = vadd.f32 %v4200, 0.5
    %v4202 = vadd.f32 %v4194, %v1554
    %4204 = vrot.lane.b32.xlu0 %v4202, 64
    %v4205 = vpop.permute.xlu0 %4204
    %v4207 = vmul.f32 %v4201, %v4205
    %4209 = vrot.lane.b32.xlu0 %v4207, 64
    %v4210 = vpop.permute.xlu0 %4209
    %v4212 = vadd.f32 %v4124, %v4210
    %v4213 = vtanh.pop %v4212
    %v4214 = vsub.f32 1.0, %v4201
    %4216 = vrot.lane.b32.xlu0 %v4213, 96
    %v4217 = vpop.permute.xlu0 %4216
    %v4219 = vmul.f32 %v4214, %v4217
    %v4220 = vmul.f32 %v4201, %v3781
    %v4221 = vadd.f32 %v4219, %v4220
    %v4222 = vld [vmem:[%s1153] sm:$0x3]
    %4224 = vrot.lane.b32.xlu0 %v4221, 96
    %v4225 = vpop.permute.xlu0 %4224
    %v4226 = vsel %vm1396, %v4225, 0
    %4228 = vmatprep.subr.mxu0 0.0
    %4229 = vmatpush1.msra.mxu0 %v56
    %4230 = vmatprep.subr.mxu0 0.0
    %4231 = vmatpush1.msra.mxu0 %v57
    %4232 = vmatprep.subr.mxu0 0.0
    %4233 = vmatpush1.msra.mxu0 %v58
    %4234 = vmatprep.subr.mxu0 0.0
    %4235 = vmatpush1.msra.mxu0 %v59
    %4236 = vmatprep.subr.mxu0 0.0
    %4237 = vmatpush1.msra.mxu0 0.0
    %4238 = vmatprep.subr.mxu0 0.0
    %4239 = vmatpush1.msra.mxu0 0.0
    %4240 = vmatprep.subr.mxu0 0.0
    %4241 = vmatpush1.msra.mxu0 0.0
    %4242 = vmatprep.subr.mxu0 0.0
    %4243 = vmatpush1.msra.mxu0 0.0
    %4244 = vmatprep.subr.mxu0 0.0
    %4245 = vmatpush1.msra.mxu0 0.0
    %4246 = vmatprep.subr.mxu0 0.0
    %4247 = vmatpush1.msra.mxu0 0.0
    %4248 = vmatprep.subr.mxu0 0.0
    %4249 = vmatpush1.msra.mxu0 0.0
    %4250 = vmatprep.subr.mxu0 0.0
    %4251 = vmatpush1.msra.mxu0 0.0
    %4252 = vmatprep.subr.mxu0 0.0
    %4253 = vmatpush1.msra.mxu0 0.0
    %4254 = vmatprep.subr.mxu0 0.0
    %4255 = vmatpush1.msra.mxu0 0.0
    %4256 = vmatprep.subr.mxu0 0.0
    %4257 = vmatpush1.msra.mxu0 0.0
    %4258 = vmatprep.subr.mxu0 0.0
    %4259 = vmatpush1.msra.mxu0 0.0
    %4260 = vmatprep.subr.mxu0 0.0
    %4261 = vmatpush1.msra.mxu0 0.0
    %4262 = vmatprep.subr.mxu0 0.0
    %4263 = vmatpush1.msra.mxu0 0.0
    %4264 = vmatprep.subr.mxu0 0.0
    %4265 = vmatpush1.msra.mxu0 0.0
    %4266 = vmatprep.subr.mxu0 0.0
    %4267 = vmatpush1.msra.mxu0 0.0
    %4268 = vmatprep.subr.mxu0 0.0
    %4269 = vmatpush1.msra.mxu0 0.0
    %4270 = vmatprep.subr.mxu0 0.0
    %4271 = vmatpush1.msra.mxu0 0.0
    %4272 = vmatprep.subr.mxu0 0.0
    %4273 = vmatpush1.msra.mxu0 0.0
    %4274 = vmatprep.subr.mxu0 0.0
    %4275 = vmatpush1.msra.mxu0 0.0
    %4276 = vmatprep.subr.mxu0 0.0
    %4277 = vmatpush1.msra.mxu0 0.0
    %4278 = vmatprep.subr.mxu0 0.0
    %4279 = vmatpush1.msra.mxu0 0.0
    %4280 = vmatprep.subr.mxu0 0.0
    %4281 = vmatpush1.msra.mxu0 0.0
    %4282 = vmatprep.subr.mxu0 0.0
    %4283 = vmatpush1.msra.mxu0 0.0
    %4284 = vmatprep.subr.mxu0 0.0
    %4285 = vmatpush1.msra.mxu0 0.0
    %4286 = vmatprep.subr.mxu0 0.0
    %4287 = vmatpush1.msra.mxu0 0.0
    %4288 = vmatprep.subr.mxu0 0.0
    %4289 = vmatpush1.msra.mxu0 0.0
    %4290 = vmatprep.subr.mxu0 0.0
    %4291 = vmatpush1.msra.mxu0 0.0
    %4292 = vmatprep.mubr.f32.mxu0 0.0
    %4293 = vmatmul.mubr.f32.gmra.mrb[0].mxu0 %v4226
    %v4294 = vpop.f32.mrb[0].mxu0
    %v4295 = vadd.f32 %v4222, %v4294
    %v4296 = vpop.f32.mrb[0].mxu0
    %4297 = vdwg.mxu0
    %v4298 = vmax.f32 %v4295, 0.0
    %v4300 = vsel %vm1396, %v4298, 0
    %4302 = vmatprep.subr.mxu0 0.0
    %4303 = vmatpush1.msra.mxu0 %v60
    %4304 = vmatprep.subr.mxu0 0.0
    %4305 = vmatpush1.msra.mxu0 %v61
    %4306 = vmatprep.subr.mxu0 0.0
    %4307 = vmatpush1.msra.mxu0 %v62
    %4308 = vmatprep.subr.mxu0 0.0
    %4309 = vmatpush1.msra.mxu0 %v63
    %4310 = vmatprep.subr.mxu0 0.0
    %4311 = vmatpush1.msra.mxu0 0.0
    %4312 = vmatprep.subr.mxu0 0.0
    %4313 = vmatpush1.msra.mxu0 0.0
    %4314 = vmatprep.subr.mxu0 0.0
    %4315 = vmatpush1.msra.mxu0 0.0
    %4316 = vmatprep.subr.mxu0 0.0
    %4317 = vmatpush1.msra.mxu0 0.0
    %4318 = vmatprep.subr.mxu0 0.0
    %4319 = vmatpush1.msra.mxu0 0.0
    %4320 = vmatprep.subr.mxu0 0.0
    %4321 = vmatpush1.msra.mxu0 0.0
    %4322 = vmatprep.subr.mxu0 0.0
    %4323 = vmatpush1.msra.mxu0 0.0
    %4324 = vmatprep.subr.mxu0 0.0
    %4325 = vmatpush1.msra.mxu0 0.0
    %4326 = vmatprep.subr.mxu0 0.0
    %4327 = vmatpush1.msra.mxu0 0.0
    %4328 = vmatprep.subr.mxu0 0.0
    %4329 = vmatpush1.msra.mxu0 0.0
    %4330 = vmatprep.subr.mxu0 0.0
    %4331 = vmatpush1.msra.mxu0 0.0
    %4332 = vmatprep.subr.mxu0 0.0
    %4333 = vmatpush1.msra.mxu0 0.0
    %4334 = vmatprep.subr.mxu0 0.0
    %4335 = vmatpush1.msra.mxu0 0.0
    %4336 = vmatprep.subr.mxu0 0.0
    %4337 = vmatpush1.msra.mxu0 0.0
    %4338 = vmatprep.subr.mxu0 0.0
    %4339 = vmatpush1.msra.mxu0 0.0
    %4340 = vmatprep.subr.mxu0 0.0
    %4341 = vmatpush1.msra.mxu0 0.0
    %4342 = vmatprep.subr.mxu0 0.0
    %4343 = vmatpush1.msra.mxu0 0.0
    %4344 = vmatprep.subr.mxu0 0.0
    %4345 = vmatpush1.msra.mxu0 0.0
    %4346 = vmatprep.subr.mxu0 0.0
    %4347 = vmatpush1.msra.mxu0 0.0
    %4348 = vmatprep.subr.mxu0 0.0
    %4349 = vmatpush1.msra.mxu0 0.0
    %4350 = vmatprep.subr.mxu0 0.0
    %4351 = vmatpush1.msra.mxu0 0.0
    %4352 = vmatprep.subr.mxu0 0.0
    %4353 = vmatpush1.msra.mxu0 0.0
    %4354 = vmatprep.subr.mxu0 0.0
    %4355 = vmatpush1.msra.mxu0 0.0
    %4356 = vmatprep.subr.mxu0 0.0
    %4357 = vmatpush1.msra.mxu0 0.0
    %4358 = vmatprep.subr.mxu0 0.0
    %4359 = vmatpush1.msra.mxu0 0.0
    %4360 = vmatprep.subr.mxu0 0.0
    %4361 = vmatpush1.msra.mxu0 0.0
    %4362 = vmatprep.subr.mxu0 0.0
    %4363 = vmatpush1.msra.mxu0 0.0
    %4364 = vmatprep.subr.mxu0 0.0
    %4365 = vmatpush1.msra.mxu0 0.0
    %4366 = vmatprep.mubr.f32.mxu0 0.0
    %4367 = vmatmul.mubr.f32.gmra.mrb[0].mxu0 %v4300
    %v4368 = vpop.f32.mrb[0].mxu0
    %v4369 = vadd.f32 %v1659, %v4368
    %v4370 = vpop.f32.mrb[0].mxu0
    %4371 = vdwg.mxu0
    %v4372 = vmax.f32 %v4369, 0.0
    %v4373 = vand.u32 2147483647, %v4369
    %v4374 = vsub.f32 0.0, %v4373
    %v4375 = vmul.f32 %v4374, 1.442695
    %v4376 = vpow.pop %v4375
    %v4377 = vadd.f32 %v4376, 1.0
    %v4378 = vlog2.pop %v4377
    %v4379 = vmul.f32 %v4378, 0.6931472
    %v4380 = vmul.f32 -0.5, %v4376
    %v4381 = vadd.f32 %v4380, 1.0
    %v4382 = vmul.f32 %v4381, %v4376
    %v4383 = vand.u32 2147483647, %v4376
    %vm4384 = vcmp.lt.f32.partialorder %v4383, 0.0004427343
    %v4385 = vsel %vm4384, %v4382, %v4379
    %v4386 = vadd.f32 %v4372, %v4385
    %v4387 = vadd.f32 %v4386, 0.1
    %4388 = vrot.lane.b32.xlu0 %v3972, 112
    %v4389 = vpop.permute.xlu0 %4388
    %v4391 = vmul.f32 %v4387, %v4389
    %4393 = vrot.lane.b32.xlu0 %v4391, 112
    %v4394 = vpop.permute.xlu0 %4393
    %v4396 = vadd.f32 %v4369, %v4394
    %s4398 = scalar_lea.vmem [#allocation4], 12
    %4399 = vst.msk [vmem:[%s4398] sm:$0x3] %vm157, %v4225
    %4401 = vrot.lane.b32.xlu0 %v4369, 16
    %v4402 = vpop.permute.xlu0 %4401
    %4405 = vrot.lane.b32.xlu0 %v4387, 16
    %v4406 = vpop.permute.xlu0 %4405
    %v4408 = vsel %vm163, %v4396, %v4402
    %v4409 = vsel %vm1396, %v4408, %v4406
    %s4410 = scalar_lea.vmem [#allocation5], 12
    %4411 = vst.msk [vmem:[%s4410] sm:$0x3] %vm1770, %v4409
    %v4412 = vld [vmem:[%s1155] sm:$0x3]
    %4414 = vset.pattern.permute.xlu0 52
    %4415 = vperm.xlu0 %4414, %v4412
    %v4416 = vpop.permute.xlu0 %4415
    %v4418 = vmul.f32 %v4396, %v4416
    %v4419 = vld [vmem:[%s1232] sm:$0x3]
    %v4421 = vsel %vm163, %v4418, 0
    %4423 = vmatprep.subr.mxu0 0.0
    %4424 = vmatpush1.msra.mxu0 %v46
    %4425 = vmatprep.subr.mxu0 0.0
    %4426 = vmatpush1.msra.mxu0 %v47
    %4427 = vmatprep.subr.mxu0 0.0
    %4428 = vmatpush1.msra.mxu0 0.0
    %4429 = vmatprep.subr.mxu0 0.0
    %4430 = vmatpush1.msra.mxu0 0.0
    %4431 = vmatprep.subr.mxu0 0.0
    %4432 = vmatpush1.msra.mxu0 0.0
    %4433 = vmatprep.subr.mxu0 0.0
    %4434 = vmatpush1.msra.mxu0 0.0
    %4435 = vmatprep.subr.mxu0 0.0
    %4436 = vmatpush1.msra.mxu0 0.0
    %4437 = vmatprep.subr.mxu0 0.0
    %4438 = vmatpush1.msra.mxu0 0.0
    %4439 = vmatprep.subr.mxu0 0.0
    %4440 = vmatpush1.msra.mxu0 0.0
    %4441 = vmatprep.subr.mxu0 0.0
    %4442 = vmatpush1.msra.mxu0 0.0
    %4443 = vmatprep.subr.mxu0 0.0
    %4444 = vmatpush1.msra.mxu0 0.0
    %4445 = vmatprep.subr.mxu0 0.0
    %4446 = vmatpush1.msra.mxu0 0.0
    %4447 = vmatprep.subr.mxu0 0.0
    %4448 = vmatpush1.msra.mxu0 0.0
    %4449 = vmatprep.subr.mxu0 0.0
    %4450 = vmatpush1.msra.mxu0 0.0
    %4451 = vmatprep.subr.mxu0 0.0
    %4452 = vmatpush1.msra.mxu0 0.0
    %4453 = vmatprep.subr.mxu0 0.0
    %4454 = vmatpush1.msra.mxu0 0.0
    %4455 = vmatprep.subr.mxu0 0.0
    %4456 = vmatpush1.msra.mxu0 0.0
    %4457 = vmatprep.subr.mxu0 0.0
    %4458 = vmatpush1.msra.mxu0 0.0
    %4459 = vmatprep.subr.mxu0 0.0
    %4460 = vmatpush1.msra.mxu0 0.0
    %4461 = vmatprep.subr.mxu0 0.0
    %4462 = vmatpush1.msra.mxu0 0.0
    %4463 = vmatprep.subr.mxu0 0.0
    %4464 = vmatpush1.msra.mxu0 0.0
    %4465 = vmatprep.subr.mxu0 0.0
    %4466 = vmatpush1.msra.mxu0 0.0
    %4467 = vmatprep.subr.mxu0 0.0
    %4468 = vmatpush1.msra.mxu0 0.0
    %4469 = vmatprep.subr.mxu0 0.0
    %4470 = vmatpush1.msra.mxu0 0.0
    %4471 = vmatprep.subr.mxu0 0.0
    %4472 = vmatpush1.msra.mxu0 0.0
    %4473 = vmatprep.subr.mxu0 0.0
    %4474 = vmatpush1.msra.mxu0 0.0
    %4475 = vmatprep.subr.mxu0 0.0
    %4476 = vmatpush1.msra.mxu0 0.0
    %4477 = vmatprep.subr.mxu0 0.0
    %4478 = vmatpush1.msra.mxu0 0.0
    %4479 = vmatprep.subr.mxu0 0.0
    %4480 = vmatpush1.msra.mxu0 0.0
    %4481 = vmatprep.subr.mxu0 0.0
    %4482 = vmatpush1.msra.mxu0 0.0
    %4483 = vmatprep.subr.mxu0 0.0
    %4484 = vmatpush1.msra.mxu0 0.0
    %4485 = vmatprep.subr.mxu0 0.0
    %4486 = vmatpush1.msra.mxu0 0.0
    %4487 = vmatprep.mubr.f32.mxu0 0.0
    %4488 = vmatmul.mubr.f32.gmra.mrb[0].mxu0 %v4421
    %v4489 = vpop.f32.mrb[0].mxu0
    %v4490 = vadd.f32 %v4419, %v4489
    %v4491 = vpop.f32.mrb[0].mxu0
    %4492 = vdwg.mxu0
    %v4493 = vmax.f32 %v4490, 0.0
    %v4495 = vsel %vm1396, %v4493, 0
    %4497 = vmatprep.subr.mxu0 0.0
    %4498 = vmatpush1.msra.mxu0 %v48
    %4499 = vmatprep.subr.mxu0 0.0
    %4500 = vmatpush1.msra.mxu0 %v49
    %4501 = vmatprep.subr.mxu0 0.0
    %4502 = vmatpush1.msra.mxu0 %v50
    %4503 = vmatprep.subr.mxu0 0.0
    %4504 = vmatpush1.msra.mxu0 %v51
    %4505 = vmatprep.subr.mxu0 0.0
    %4506 = vmatpush1.msra.mxu0 0.0
    %4507 = vmatprep.subr.mxu0 0.0
    %4508 = vmatpush1.msra.mxu0 0.0
    %4509 = vmatprep.subr.mxu0 0.0
    %4510 = vmatpush1.msra.mxu0 0.0
    %4511 = vmatprep.subr.mxu0 0.0
    %4512 = vmatpush1.msra.mxu0 0.0
    %4513 = vmatprep.subr.mxu0 0.0
    %4514 = vmatpush1.msra.mxu0 0.0
    %4515 = vmatprep.subr.mxu0 0.0
    %4516 = vmatpush1.msra.mxu0 0.0
    %4517 = vmatprep.subr.mxu0 0.0
    %4518 = vmatpush1.msra.mxu0 0.0
    %4519 = vmatprep.subr.mxu0 0.0
    %4520 = vmatpush1.msra.mxu0 0.0
    %4521 = vmatprep.subr.mxu0 0.0
    %4522 = vmatpush1.msra.mxu0 0.0
    %4523 = vmatprep.subr.mxu0 0.0
    %4524 = vmatpush1.msra.mxu0 0.0
    %4525 = vmatprep.subr.mxu0 0.0
    %4526 = vmatpush1.msra.mxu0 0.0
    %4527 = vmatprep.subr.mxu0 0.0
    %4528 = vmatpush1.msra.mxu0 0.0
    %4529 = vmatprep.subr.mxu0 0.0
    %4530 = vmatpush1.msra.mxu0 0.0
    %4531 = vmatprep.subr.mxu0 0.0
    %4532 = vmatpush1.msra.mxu0 0.0
    %4533 = vmatprep.subr.mxu0 0.0
    %4534 = vmatpush1.msra.mxu0 0.0
    %4535 = vmatprep.subr.mxu0 0.0
    %4536 = vmatpush1.msra.mxu0 0.0
    %4537 = vmatprep.subr.mxu0 0.0
    %4538 = vmatpush1.msra.mxu0 0.0
    %4539 = vmatprep.subr.mxu0 0.0
    %4540 = vmatpush1.msra.mxu0 0.0
    %4541 = vmatprep.subr.mxu0 0.0
    %4542 = vmatpush1.msra.mxu0 0.0
    %4543 = vmatprep.subr.mxu0 0.0
    %4544 = vmatpush1.msra.mxu0 0.0
    %4545 = vmatprep.subr.mxu0 0.0
    %4546 = vmatpush1.msra.mxu0 0.0
    %4547 = vmatprep.subr.mxu0 0.0
    %4548 = vmatpush1.msra.mxu0 0.0
    %4549 = vmatprep.subr.mxu0 0.0
    %4550 = vmatpush1.msra.mxu0 0.0
    %4551 = vmatprep.subr.mxu0 0.0
    %4552 = vmatpush1.msra.mxu0 0.0
    %4553 = vmatprep.subr.mxu0 0.0
    %4554 = vmatpush1.msra.mxu0 0.0
    %4555 = vmatprep.subr.mxu0 0.0
    %4556 = vmatpush1.msra.mxu0 0.0
    %4557 = vmatprep.subr.mxu0 0.0
    %4558 = vmatpush1.msra.mxu0 0.0
    %4559 = vmatprep.subr.mxu0 0.0
    %4560 = vmatpush1.msra.mxu0 0.0
    %4561 = vmatprep.mubr.f32.mxu0 0.0
    %4562 = vmatmul.mubr.f32.gmra.mrb[0].mxu0 %v4495
    %v4563 = vpop.f32.mrb[0].mxu0
    %v4564 = vadd.f32 %v1395, %v4563
    %v4565 = vpop.f32.mrb[0].mxu0
    %4566 = vdwg.mxu0
    %4567 = vmatprep.subr.mxu0 0.0
    %4568 = vmatpush1.msra.mxu0 %v52
    %4569 = vmatprep.subr.mxu0 0.0
    %4570 = vmatpush1.msra.mxu0 %v53
    %4571 = vmatprep.subr.mxu0 0.0
    %4572 = vmatpush1.msra.mxu0 %v54
    %4573 = vmatprep.subr.mxu0 0.0
    %4574 = vmatpush1.msra.mxu0 %v55
    %4575 = vmatprep.subr.mxu0 0.0
    %4576 = vmatpush1.msra.mxu0 0.0
    %4577 = vmatprep.subr.mxu0 0.0
    %4578 = vmatpush1.msra.mxu0 0.0
    %4579 = vmatprep.subr.mxu0 0.0
    %4580 = vmatpush1.msra.mxu0 0.0
    %4581 = vmatprep.subr.mxu0 0.0
    %4582 = vmatpush1.msra.mxu0 0.0
    %4583 = vmatprep.subr.mxu0 0.0
    %4584 = vmatpush1.msra.mxu0 0.0
    %4585 = vmatprep.subr.mxu0 0.0
    %4586 = vmatpush1.msra.mxu0 0.0
    %4587 = vmatprep.subr.mxu0 0.0
    %4588 = vmatpush1.msra.mxu0 0.0
    %4589 = vmatprep.subr.mxu0 0.0
    %4590 = vmatpush1.msra.mxu0 0.0
    %4591 = vmatprep.subr.mxu0 0.0
    %4592 = vmatpush1.msra.mxu0 0.0
    %4593 = vmatprep.subr.mxu0 0.0
    %4594 = vmatpush1.msra.mxu0 0.0
    %4595 = vmatprep.subr.mxu0 0.0
    %4596 = vmatpush1.msra.mxu0 0.0
    %4597 = vmatprep.subr.mxu0 0.0
    %4598 = vmatpush1.msra.mxu0 0.0
    %4599 = vmatprep.subr.mxu0 0.0
    %4600 = vmatpush1.msra.mxu0 0.0
    %4601 = vmatprep.subr.mxu0 0.0
    %4602 = vmatpush1.msra.mxu0 0.0
    %4603 = vmatprep.subr.mxu0 0.0
    %4604 = vmatpush1.msra.mxu0 0.0
    %4605 = vmatprep.subr.mxu0 0.0
    %4606 = vmatpush1.msra.mxu0 0.0
    %4607 = vmatprep.subr.mxu0 0.0
    %4608 = vmatpush1.msra.mxu0 0.0
    %4609 = vmatprep.subr.mxu0 0.0
    %4610 = vmatpush1.msra.mxu0 0.0
    %4611 = vmatprep.subr.mxu0 0.0
    %4612 = vmatpush1.msra.mxu0 0.0
    %4613 = vmatprep.subr.mxu0 0.0
    %4614 = vmatpush1.msra.mxu0 0.0
    %4615 = vmatprep.subr.mxu0 0.0
    %4616 = vmatpush1.msra.mxu0 0.0
    %4617 = vmatprep.subr.mxu0 0.0
    %4618 = vmatpush1.msra.mxu0 0.0
    %4619 = vmatprep.subr.mxu0 0.0
    %4620 = vmatpush1.msra.mxu0 0.0
    %4621 = vmatprep.subr.mxu0 0.0
    %4622 = vmatpush1.msra.mxu0 0.0
    %4623 = vmatprep.subr.mxu0 0.0
    %4624 = vmatpush1.msra.mxu0 0.0
    %4625 = vmatprep.subr.mxu0 0.0
    %4626 = vmatpush1.msra.mxu0 0.0
    %4627 = vmatprep.subr.mxu0 0.0
    %4628 = vmatpush1.msra.mxu0 0.0
    %4629 = vmatprep.subr.mxu0 0.0
    %4630 = vmatpush1.msra.mxu0 0.0
    %4631 = vmatprep.mubr.f32.mxu0 0.0
    %4632 = vmatmul.mubr.f32.gmra.mrb[0].mxu0 %v4226
    %v4633 = vpop.f32.mrb[0].mxu0
    %v4634 = vadd.f32 0.0, %v4633
    %v4635 = vpop.f32.mrb[0].mxu0
    %4636 = vdwg.mxu0
    %v4637 = vadd.f32 %v4564, %v4634
    %v4638 = vmul.f32 %v4637, 0.5
    %v4639 = vtanh.pop %v4638
    %v4640 = vmul.f32 %v4639, 0.5
    %v4641 = vadd.f32 %v4640, 0.5
    %v4642 = vadd.f32 %v4634, %v1554
    %4644 = vrot.lane.b32.xlu0 %v4642, 64
    %v4645 = vpop.permute.xlu0 %4644
    %v4647 = vmul.f32 %v4641, %v4645
    %4649 = vrot.lane.b32.xlu0 %v4647, 64
    %v4650 = vpop.permute.xlu0 %4649
    %v4652 = vadd.f32 %v4564, %v4650
    %v4653 = vtanh.pop %v4652
    %v4654 = vsub.f32 1.0, %v4641
    %4656 = vrot.lane.b32.xlu0 %v4653, 96
    %v4657 = vpop.permute.xlu0 %4656
    %v4659 = vmul.f32 %v4654, %v4657
    %v4660 = vmul.f32 %v4641, %v4221
    %v4661 = vadd.f32 %v4659, %v4660
    %v4662 = vld [vmem:[%s1306] sm:$0x3]
    %4664 = vrot.lane.b32.xlu0 %v4661, 96
    %v4665 = vpop.permute.xlu0 %4664
    %v4666 = vsel %vm1396, %v4665, 0
    %4668 = vmatprep.subr.mxu0 0.0
    %4669 = vmatpush1.msra.mxu0 %v56
    %4670 = vmatprep.subr.mxu0 0.0
    %4671 = vmatpush1.msra.mxu0 %v57
    %4672 = vmatprep.subr.mxu0 0.0
    %4673 = vmatpush1.msra.mxu0 %v58
    %4674 = vmatprep.subr.mxu0 0.0
    %4675 = vmatpush1.msra.mxu0 %v59
    %4676 = vmatprep.subr.mxu0 0.0
    %4677 = vmatpush1.msra.mxu0 0.0
    %4678 = vmatprep.subr.mxu0 0.0
    %4679 = vmatpush1.msra.mxu0 0.0
    %4680 = vmatprep.subr.mxu0 0.0
    %4681 = vmatpush1.msra.mxu0 0.0
    %4682 = vmatprep.subr.mxu0 0.0
    %4683 = vmatpush1.msra.mxu0 0.0
    %4684 = vmatprep.subr.mxu0 0.0
    %4685 = vmatpush1.msra.mxu0 0.0
    %4686 = vmatprep.subr.mxu0 0.0
    %4687 = vmatpush1.msra.mxu0 0.0
    %4688 = vmatprep.subr.mxu0 0.0
    %4689 = vmatpush1.msra.mxu0 0.0
    %4690 = vmatprep.subr.mxu0 0.0
    %4691 = vmatpush1.msra.mxu0 0.0
    %4692 = vmatprep.subr.mxu0 0.0
    %4693 = vmatpush1.msra.mxu0 0.0
    %4694 = vmatprep.subr.mxu0 0.0
    %4695 = vmatpush1.msra.mxu0 0.0
    %4696 = vmatprep.subr.mxu0 0.0
    %4697 = vmatpush1.msra.mxu0 0.0
    %4698 = vmatprep.subr.mxu0 0.0
    %4699 = vmatpush1.msra.mxu0 0.0
    %4700 = vmatprep.subr.mxu0 0.0
    %4701 = vmatpush1.msra.mxu0 0.0
    %4702 = vmatprep.subr.mxu0 0.0
    %4703 = vmatpush1.msra.mxu0 0.0
    %4704 = vmatprep.subr.mxu0 0.0
    %4705 = vmatpush1.msra.mxu0 0.0
    %4706 = vmatprep.subr.mxu0 0.0
    %4707 = vmatpush1.msra.mxu0 0.0
    %4708 = vmatprep.subr.mxu0 0.0
    %4709 = vmatpush1.msra.mxu0 0.0
    %4710 = vmatprep.subr.mxu0 0.0
    %4711 = vmatpush1.msra.mxu0 0.0
    %4712 = vmatprep.subr.mxu0 0.0
    %4713 = vmatpush1.msra.mxu0 0.0
    %4714 = vmatprep.subr.mxu0 0.0
    %4715 = vmatpush1.msra.mxu0 0.0
    %4716 = vmatprep.subr.mxu0 0.0
    %4717 = vmatpush1.msra.mxu0 0.0
    %4718 = vmatprep.subr.mxu0 0.0
    %4719 = vmatpush1.msra.mxu0 0.0
    %4720 = vmatprep.subr.mxu0 0.0
    %4721 = vmatpush1.msra.mxu0 0.0
    %4722 = vmatprep.subr.mxu0 0.0
    %4723 = vmatpush1.msra.mxu0 0.0
    %4724 = vmatprep.subr.mxu0 0.0
    %4725 = vmatpush1.msra.mxu0 0.0
    %4726 = vmatprep.subr.mxu0 0.0
    %4727 = vmatpush1.msra.mxu0 0.0
    %4728 = vmatprep.subr.mxu0 0.0
    %4729 = vmatpush1.msra.mxu0 0.0
    %4730 = vmatprep.subr.mxu0 0.0
    %4731 = vmatpush1.msra.mxu0 0.0
    %4732 = vmatprep.mubr.f32.mxu0 0.0
    %4733 = vmatmul.mubr.f32.gmra.mrb[0].mxu0 %v4666
    %v4734 = vpop.f32.mrb[0].mxu0
    %v4735 = vadd.f32 %v4662, %v4734
    %v4736 = vpop.f32.mrb[0].mxu0
    %4737 = vdwg.mxu0
    %v4738 = vmax.f32 %v4735, 0.0
    %v4740 = vsel %vm1396, %v4738, 0
    %4742 = vmatprep.subr.mxu0 0.0
    %4743 = vmatpush1.msra.mxu0 %v60
    %4744 = vmatprep.subr.mxu0 0.0
    %4745 = vmatpush1.msra.mxu0 %v61
    %4746 = vmatprep.subr.mxu0 0.0
    %4747 = vmatpush1.msra.mxu0 %v62
    %4748 = vmatprep.subr.mxu0 0.0
    %4749 = vmatpush1.msra.mxu0 %v63
    %4750 = vmatprep.subr.mxu0 0.0
    %4751 = vmatpush1.msra.mxu0 0.0
    %4752 = vmatprep.subr.mxu0 0.0
    %4753 = vmatpush1.msra.mxu0 0.0
    %4754 = vmatprep.subr.mxu0 0.0
    %4755 = vmatpush1.msra.mxu0 0.0
    %4756 = vmatprep.subr.mxu0 0.0
    %4757 = vmatpush1.msra.mxu0 0.0
    %4758 = vmatprep.subr.mxu0 0.0
    %4759 = vmatpush1.msra.mxu0 0.0
    %4760 = vmatprep.subr.mxu0 0.0
    %4761 = vmatpush1.msra.mxu0 0.0
    %4762 = vmatprep.subr.mxu0 0.0
    %4763 = vmatpush1.msra.mxu0 0.0
    %4764 = vmatprep.subr.mxu0 0.0
    %4765 = vmatpush1.msra.mxu0 0.0
    %4766 = vmatprep.subr.mxu0 0.0
    %4767 = vmatpush1.msra.mxu0 0.0
    %4768 = vmatprep.subr.mxu0 0.0
    %4769 = vmatpush1.msra.mxu0 0.0
    %4770 = vmatprep.subr.mxu0 0.0
    %4771 = vmatpush1.msra.mxu0 0.0
    %4772 = vmatprep.subr.mxu0 0.0
    %4773 = vmatpush1.msra.mxu0 0.0
    %4774 = vmatprep.subr.mxu0 0.0
    %4775 = vmatpush1.msra.mxu0 0.0
    %4776 = vmatprep.subr.mxu0 0.0
    %4777 = vmatpush1.msra.mxu0 0.0
    %4778 = vmatprep.subr.mxu0 0.0
    %4779 = vmatpush1.msra.mxu0 0.0
    %4780 = vmatprep.subr.mxu0 0.0
    %4781 = vmatpush1.msra.mxu0 0.0
    %4782 = vmatprep.subr.mxu0 0.0
    %4783 = vmatpush1.msra.mxu0 0.0
    %4784 = vmatprep.subr.mxu0 0.0
    %4785 = vmatpush1.msra.mxu0 0.0
    %4786 = vmatprep.subr.mxu0 0.0
    %4787 = vmatpush1.msra.mxu0 0.0
    %4788 = vmatprep.subr.mxu0 0.0
    %4789 = vmatpush1.msra.mxu0 0.0
    %4790 = vmatprep.subr.mxu0 0.0
    %4791 = vmatpush1.msra.mxu0 0.0
    %4792 = vmatprep.subr.mxu0 0.0
    %4793 = vmatpush1.msra.mxu0 0.0
    %4794 = vmatprep.subr.mxu0 0.0
    %4795 = vmatpush1.msra.mxu0 0.0
    %4796 = vmatprep.subr.mxu0 0.0
    %4797 = vmatpush1.msra.mxu0 0.0
    %4798 = vmatprep.subr.mxu0 0.0
    %4799 = vmatpush1.msra.mxu0 0.0
    %4800 = vmatprep.subr.mxu0 0.0
    %4801 = vmatpush1.msra.mxu0 0.0
    %4802 = vmatprep.subr.mxu0 0.0
    %4803 = vmatpush1.msra.mxu0 0.0
    %4804 = vmatprep.subr.mxu0 0.0
    %4805 = vmatpush1.msra.mxu0 0.0
    %4806 = vmatprep.mubr.f32.mxu0 0.0
    %4807 = vmatmul.mubr.f32.gmra.mrb[0].mxu0 %v4740
    %v4808 = vpop.f32.mrb[0].mxu0
    %v4809 = vadd.f32 %v1659, %v4808
    %v4810 = vpop.f32.mrb[0].mxu0
    %4811 = vdwg.mxu0
    %v4812 = vmax.f32 %v4809, 0.0
    %v4813 = vand.u32 2147483647, %v4809
    %v4814 = vsub.f32 0.0, %v4813
    %v4815 = vmul.f32 %v4814, 1.442695
    %v4816 = vpow.pop %v4815
    %v4817 = vadd.f32 %v4816, 1.0
    %v4818 = vlog2.pop %v4817
    %v4819 = vmul.f32 %v4818, 0.6931472
    %v4820 = vmul.f32 -0.5, %v4816
    %v4821 = vadd.f32 %v4820, 1.0
    %v4822 = vmul.f32 %v4821, %v4816
    %v4823 = vand.u32 2147483647, %v4816
    %vm4824 = vcmp.lt.f32.partialorder %v4823, 0.0004427343
    %v4825 = vsel %vm4824, %v4822, %v4819
    %v4826 = vadd.f32 %v4812, %v4825
    %v4827 = vadd.f32 %v4826, 0.1
    %4828 = vrot.lane.b32.xlu0 %v4412, 112
    %v4829 = vpop.permute.xlu0 %4828
    %v4831 = vmul.f32 %v4827, %v4829
    %4833 = vrot.lane.b32.xlu0 %v4831, 112
    %v4834 = vpop.permute.xlu0 %4833
    %v4836 = vadd.f32 %v4809, %v4834
    %s4838 = scalar_lea.vmem [#allocation4], 14
    %4839 = vst.msk [vmem:[%s4838] sm:$0x3] %vm157, %v4665
    %4841 = vrot.lane.b32.xlu0 %v4809, 16
    %v4842 = vpop.permute.xlu0 %4841
    %4845 = vrot.lane.b32.xlu0 %v4827, 16
    %v4846 = vpop.permute.xlu0 %4845
    %v4848 = vsel %vm163, %v4836, %v4842
    %v4849 = vsel %vm1396, %v4848, %v4846
    %s4850 = scalar_lea.vmem [#allocation5], 14
    %4851 = vst.msk [vmem:[%s4850] sm:$0x3] %vm1770, %v4849
    %v4852 = vld [vmem:[#allocation9 + $0x40] sm:$0xff]
    %v4853 = vld [vmem:[#allocation9 + $0x48] sm:$0xff]
    %v4854 = vld [vmem:[#allocation9 + $0x50] sm:$0xff]
    %v4855 = vld [vmem:[#allocation9 + $0x58] sm:$0xff]
    %v4856 = vld [vmem:[#allocation9 + $0xeb] sm:$0x1]
    %v4857 = vld [vmem:[#allocation9 + $0x80] sm:$0xff]
    %v4858 = vld [vmem:[#allocation9 + $0x88] sm:$0xff]
    %v4859 = vld [vmem:[#allocation9 + $0x90] sm:$0xff]
    %v4860 = vld [vmem:[#allocation9 + $0x98] sm:$0xff]
    %v4861 = vld [vmem:[#allocation9 + $0xed] sm:$0x1]
    %v4862 = vld [vmem:[#allocation4] sm:$0x3]
    %v4863 = vld [vmem:[#allocation6] sm:$0x3]
    %v4864 = vlaneseq
    %v4865 = vshrl.u32 %v4864, 7
    %v4866 = vsub.s32 0, %v4865
    %v4867 = vrot.slane %v4856, %v4866
    %v4869 = vsel %vm1396, %v4862, 0
    %4871 = vmatprep.subr.mxu0 0.0
    %4872 = vmatpush1.msra.mxu0 %v4852
    %4873 = vmatprep.subr.mxu0 0.0
    %4874 = vmatpush1.msra.mxu0 %v4853
    %4875 = vmatprep.subr.mxu0 0.0
    %4876 = vmatpush1.msra.mxu0 %v4854
    %4877 = vmatprep.subr.mxu0 0.0
    %4878 = vmatpush1.msra.mxu0 %v4855
    %4879 = vmatprep.subr.mxu0 0.0
    %4880 = vmatpush1.msra.mxu0 0.0
    %4881 = vmatprep.subr.mxu0 0.0
    %4882 = vmatpush1.msra.mxu0 0.0
    %4883 = vmatprep.subr.mxu0 0.0
    %4884 = vmatpush1.msra.mxu0 0.0
    %4885 = vmatprep.subr.mxu0 0.0
    %4886 = vmatpush1.msra.mxu0 0.0
    %4887 = vmatprep.subr.mxu0 0.0
    %4888 = vmatpush1.msra.mxu0 0.0
    %4889 = vmatprep.subr.mxu0 0.0
    %4890 = vmatpush1.msra.mxu0 0.0
    %4891 = vmatprep.subr.mxu0 0.0
    %4892 = vmatpush1.msra.mxu0 0.0
    %4893 = vmatprep.subr.mxu0 0.0
    %4894 = vmatpush1.msra.mxu0 0.0
    %4895 = vmatprep.subr.mxu0 0.0
    %4896 = vmatpush1.msra.mxu0 0.0
    %4897 = vmatprep.subr.mxu0 0.0
    %4898 = vmatpush1.msra.mxu0 0.0
    %4899 = vmatprep.subr.mxu0 0.0
    %4900 = vmatpush1.msra.mxu0 0.0
    %4901 = vmatprep.subr.mxu0 0.0
    %4902 = vmatpush1.msra.mxu0 0.0
    %4903 = vmatprep.subr.mxu0 0.0
    %4904 = vmatpush1.msra.mxu0 0.0
    %4905 = vmatprep.subr.mxu0 0.0
    %4906 = vmatpush1.msra.mxu0 0.0
    %4907 = vmatprep.subr.mxu0 0.0
    %4908 = vmatpush1.msra.mxu0 0.0
    %4909 = vmatprep.subr.mxu0 0.0
    %4910 = vmatpush1.msra.mxu0 0.0
    %4911 = vmatprep.subr.mxu0 0.0
    %4912 = vmatpush1.msra.mxu0 0.0
    %4913 = vmatprep.subr.mxu0 0.0
    %4914 = vmatpush1.msra.mxu0 0.0
    %4915 = vmatprep.subr.mxu0 0.0
    %4916 = vmatpush1.msra.mxu0 0.0
    %4917 = vmatprep.subr.mxu0 0.0
    %4918 = vmatpush1.msra.mxu0 0.0
    %4919 = vmatprep.subr.mxu0 0.0
    %4920 = vmatpush1.msra.mxu0 0.0
    %4921 = vmatprep.subr.mxu0 0.0
    %4922 = vmatpush1.msra.mxu0 0.0
    %4923 = vmatprep.subr.mxu0 0.0
    %4924 = vmatpush1.msra.mxu0 0.0
    %4925 = vmatprep.subr.mxu0 0.0
    %4926 = vmatpush1.msra.mxu0 0.0
    %4927 = vmatprep.subr.mxu0 0.0
    %4928 = vmatpush1.msra.mxu0 0.0
    %4929 = vmatprep.subr.mxu0 0.0
    %4930 = vmatpush1.msra.mxu0 0.0
    %4931 = vmatprep.subr.mxu0 0.0
    %4932 = vmatpush1.msra.mxu0 0.0
    %4933 = vmatprep.subr.mxu0 0.0
    %4934 = vmatpush1.msra.mxu0 0.0
    %4935 = vmatprep.mubr.f32.mxu0 0.0
    %4936 = vmatmul.mubr.f32.gmra.mrb[0].mxu0 %v4869
    %v4937 = vpop.f32.mrb[0].mxu0
    %v4938 = vadd.f32 %v4867, %v4937
    %v4939 = vpop.f32.mrb[0].mxu0
    %4940 = vdwg.mxu0
    %v4941 = vmax.f32 %v4938, 0.0
    %v4942 = vlaneseq
    %v4943 = vshrl.u32 %v4942, 7
    %v4944 = vsub.s32 0, %v4943
    %v4945 = vrot.slane %v4861, %v4944
    %v4947 = vsel %vm1396, %v4941, 0
    %4949 = vmatprep.subr.mxu0 0.0
    %4950 = vmatpush1.msra.mxu0 %v4857
    %4951 = vmatprep.subr.mxu0 0.0
    %4952 = vmatpush1.msra.mxu0 %v4858
    %4953 = vmatprep.subr.mxu0 0.0
    %4954 = vmatpush1.msra.mxu0 %v4859
    %4955 = vmatprep.subr.mxu0 0.0
    %4956 = vmatpush1.msra.mxu0 %v4860
    %4957 = vmatprep.subr.mxu0 0.0
    %4958 = vmatpush1.msra.mxu0 0.0
    %4959 = vmatprep.subr.mxu0 0.0
    %4960 = vmatpush1.msra.mxu0 0.0
    %4961 = vmatprep.subr.mxu0 0.0
    %4962 = vmatpush1.msra.mxu0 0.0
    %4963 = vmatprep.subr.mxu0 0.0
    %4964 = vmatpush1.msra.mxu0 0.0
    %4965 = vmatprep.subr.mxu0 0.0
    %4966 = vmatpush1.msra.mxu0 0.0
    %4967 = vmatprep.subr.mxu0 0.0
    %4968 = vmatpush1.msra.mxu0 0.0
    %4969 = vmatprep.subr.mxu0 0.0
    %4970 = vmatpush1.msra.mxu0 0.0
    %4971 = vmatprep.subr.mxu0 0.0
    %4972 = vmatpush1.msra.mxu0 0.0
    %4973 = vmatprep.subr.mxu0 0.0
    %4974 = vmatpush1.msra.mxu0 0.0
    %4975 = vmatprep.subr.mxu0 0.0
    %4976 = vmatpush1.msra.mxu0 0.0
    %4977 = vmatprep.subr.mxu0 0.0
    %4978 = vmatpush1.msra.mxu0 0.0
    %4979 = vmatprep.subr.mxu0 0.0
    %4980 = vmatpush1.msra.mxu0 0.0
    %4981 = vmatprep.subr.mxu0 0.0
    %4982 = vmatpush1.msra.mxu0 0.0
    %4983 = vmatprep.subr.mxu0 0.0
    %4984 = vmatpush1.msra.mxu0 0.0
    %4985 = vmatprep.subr.mxu0 0.0
    %4986 = vmatpush1.msra.mxu0 0.0
    %4987 = vmatprep.subr.mxu0 0.0
    %4988 = vmatpush1.msra.mxu0 0.0
    %4989 = vmatprep.subr.mxu0 0.0
    %4990 = vmatpush1.msra.mxu0 0.0
    %4991 = vmatprep.subr.mxu0 0.0
    %4992 = vmatpush1.msra.mxu0 0.0
    %4993 = vmatprep.subr.mxu0 0.0
    %4994 = vmatpush1.msra.mxu0 0.0
    %4995 = vmatprep.subr.mxu0 0.0
    %4996 = vmatpush1.msra.mxu0 0.0
    %4997 = vmatprep.subr.mxu0 0.0
    %4998 = vmatpush1.msra.mxu0 0.0
    %4999 = vmatprep.subr.mxu0 0.0
    %5000 = vmatpush1.msra.mxu0 0.0
    %5001 = vmatprep.subr.mxu0 0.0
    %5002 = vmatpush1.msra.mxu0 0.0
    %5003 = vmatprep.subr.mxu0 0.0
    %5004 = vmatpush1.msra.mxu0 0.0
    %5005 = vmatprep.subr.mxu0 0.0
    %5006 = vmatpush1.msra.mxu0 0.0
    %5007 = vmatprep.subr.mxu0 0.0
    %5008 = vmatpush1.msra.mxu0 0.0
    %5009 = vmatprep.subr.mxu0 0.0
    %5010 = vmatpush1.msra.mxu0 0.0
    %5011 = vmatprep.subr.mxu0 0.0
    %5012 = vmatpush1.msra.mxu0 0.0
    %5013 = vmatprep.mubr.f32.mxu0 0.0
    %5014 = vmatmul.mubr.f32.gmra.mrb[0].mxu0 %v4947
    %v5015 = vpop.f32.mrb[0].mxu0
    %v5016 = vadd.f32 %v4945, %v5015
    %v5017 = vpop.f32.mrb[0].mxu0
    %5018 = vdwg.mxu0
    %v5019 = vmax.f32 %v5016, 0.0
    %v5020 = vand.u32 2147483647, %v5016
    %v5021 = vsub.f32 0.0, %v5020
    %v5022 = vmul.f32 %v5021, 1.442695
    %v5023 = vpow.pop %v5022
    %v5024 = vadd.f32 %v5023, 1.0
    %v5025 = vlog2.pop %v5024
    %v5026 = vmul.f32 %v5025, 0.6931472
    %v5027 = vmul.f32 -0.5, %v5023
    %v5028 = vadd.f32 %v5027, 1.0
    %v5029 = vmul.f32 %v5028, %v5023
    %v5030 = vand.u32 2147483647, %v5023
    %vm5031 = vcmp.lt.f32.partialorder %v5030, 0.0004427343
    %v5032 = vsel %vm5031, %v5029, %v5026
    %v5033 = vadd.f32 %v5019, %v5032
    %v5034 = vadd.f32 %v5033, 0.1
    %v5035 = vmul.f32 %v5034, %v4863
    %5037 = vrot.lane.b32.xlu0 %v5035, 112
    %v5038 = vpop.permute.xlu0 %5037
    %v5040 = vadd.f32 %v5016, %v5038
    %v5041 = vld [vmem:[#allocation5] sm:$0x3]
    %5043 = vrot.lane.b32.xlu0 %v5040, 32
    %v5044 = vpop.permute.xlu0 %5043
    %5047 = vrot.lane.b32.xlu0 %v5016, 48
    %v5048 = vpop.permute.xlu0 %5047
    %5051 = vrot.lane.b32.xlu0 %v5034, 48
    %v5052 = vpop.permute.xlu0 %5051
    %5055 = vrot.lane.b32.xlu0 %v5041, 80
    %v5056 = vpop.permute.xlu0 %5055
    %v5058 = vsel %vm1396, %v4862, %v5044
    %vm5059 = vcmask 392192
    %v5060 = vsel %vm5059, %v5058, %v5048
    %vm5061 = vcmask 523264
    %v5062 = vsel %vm5061, %v5060, %v5052
    %vm5063 = vcmask 654336
    %v5064 = vsel %vm5063, %v5062, %v5056
    %5065 = vst [vmem:[#allocation11] sm:$0x3] %v5064
    %v5066 = vld [vmem:[%s2198] sm:$0x3]
    %v5067 = vld [vmem:[%s237] sm:$0x3]
    %v5069 = vsel %vm1396, %v5066, 0
    %5071 = vmatprep.subr.mxu0 0.0
    %5072 = vmatpush1.msra.mxu0 %v4852
    %5073 = vmatprep.subr.mxu0 0.0
    %5074 = vmatpush1.msra.mxu0 %v4853
    %5075 = vmatprep.subr.mxu0 0.0
    %5076 = vmatpush1.msra.mxu0 %v4854
    %5077 = vmatprep.subr.mxu0 0.0
    %5078 = vmatpush1.msra.mxu0 %v4855
    %5079 = vmatprep.subr.mxu0 0.0
    %5080 = vmatpush1.msra.mxu0 0.0
    %5081 = vmatprep.subr.mxu0 0.0
    %5082 = vmatpush1.msra.mxu0 0.0
    %5083 = vmatprep.subr.mxu0 0.0
    %5084 = vmatpush1.msra.mxu0 0.0
    %5085 = vmatprep.subr.mxu0 0.0
    %5086 = vmatpush1.msra.mxu0 0.0
    %5087 = vmatprep.subr.mxu0 0.0
    %5088 = vmatpush1.msra.mxu0 0.0
    %5089 = vmatprep.subr.mxu0 0.0
    %5090 = vmatpush1.msra.mxu0 0.0
    %5091 = vmatprep.subr.mxu0 0.0
    %5092 = vmatpush1.msra.mxu0 0.0
    %5093 = vmatprep.subr.mxu0 0.0
    %5094 = vmatpush1.msra.mxu0 0.0
    %5095 = vmatprep.subr.mxu0 0.0
    %5096 = vmatpush1.msra.mxu0 0.0
    %5097 = vmatprep.subr.mxu0 0.0
    %5098 = vmatpush1.msra.mxu0 0.0
    %5099 = vmatprep.subr.mxu0 0.0
    %5100 = vmatpush1.msra.mxu0 0.0
    %5101 = vmatprep.subr.mxu0 0.0
    %5102 = vmatpush1.msra.mxu0 0.0
    %5103 = vmatprep.subr.mxu0 0.0
    %5104 = vmatpush1.msra.mxu0 0.0
    %5105 = vmatprep.subr.mxu0 0.0
    %5106 = vmatpush1.msra.mxu0 0.0
    %5107 = vmatprep.subr.mxu0 0.0
    %5108 = vmatpush1.msra.mxu0 0.0
    %5109 = vmatprep.subr.mxu0 0.0
    %5110 = vmatpush1.msra.mxu0 0.0
    %5111 = vmatprep.subr.mxu0 0.0
    %5112 = vmatpush1.msra.mxu0 0.0
    %5113 = vmatprep.subr.mxu0 0.0
    %5114 = vmatpush1.msra.mxu0 0.0
    %5115 = vmatprep.subr.mxu0 0.0
    %5116 = vmatpush1.msra.mxu0 0.0
    %5117 = vmatprep.subr.mxu0 0.0
    %5118 = vmatpush1.msra.mxu0 0.0
    %5119 = vmatprep.subr.mxu0 0.0
    %5120 = vmatpush1.msra.mxu0 0.0
    %5121 = vmatprep.subr.mxu0 0.0
    %5122 = vmatpush1.msra.mxu0 0.0
    %5123 = vmatprep.subr.mxu0 0.0
    %5124 = vmatpush1.msra.mxu0 0.0
    %5125 = vmatprep.subr.mxu0 0.0
    %5126 = vmatpush1.msra.mxu0 0.0
    %5127 = vmatprep.subr.mxu0 0.0
    %5128 = vmatpush1.msra.mxu0 0.0
    %5129 = vmatprep.subr.mxu0 0.0
    %5130 = vmatpush1.msra.mxu0 0.0
    %5131 = vmatprep.subr.mxu0 0.0
    %5132 = vmatpush1.msra.mxu0 0.0
    %5133 = vmatprep.subr.mxu0 0.0
    %5134 = vmatpush1.msra.mxu0 0.0
    %5135 = vmatprep.mubr.f32.mxu0 0.0
    %5136 = vmatmul.mubr.f32.gmra.mrb[0].mxu0 %v5069
    %v5137 = vpop.f32.mrb[0].mxu0
    %v5138 = vadd.f32 %v4867, %v5137
    %v5139 = vpop.f32.mrb[0].mxu0
    %5140 = vdwg.mxu0
    %v5141 = vmax.f32 %v5138, 0.0
    %v5143 = vsel %vm1396, %v5141, 0
    %5145 = vmatprep.subr.mxu0 0.0
    %5146 = vmatpush1.msra.mxu0 %v4857
    %5147 = vmatprep.subr.mxu0 0.0
    %5148 = vmatpush1.msra.mxu0 %v4858
    %5149 = vmatprep.subr.mxu0 0.0
    %5150 = vmatpush1.msra.mxu0 %v4859
    %5151 = vmatprep.subr.mxu0 0.0
    %5152 = vmatpush1.msra.mxu0 %v4860
    %5153 = vmatprep.subr.mxu0 0.0
    %5154 = vmatpush1.msra.mxu0 0.0
    %5155 = vmatprep.subr.mxu0 0.0
    %5156 = vmatpush1.msra.mxu0 0.0
    %5157 = vmatprep.subr.mxu0 0.0
    %5158 = vmatpush1.msra.mxu0 0.0
    %5159 = vmatprep.subr.mxu0 0.0
    %5160 = vmatpush1.msra.mxu0 0.0
    %5161 = vmatprep.subr.mxu0 0.0
    %5162 = vmatpush1.msra.mxu0 0.0
    %5163 = vmatprep.subr.mxu0 0.0
    %5164 = vmatpush1.msra.mxu0 0.0
    %5165 = vmatprep.subr.mxu0 0.0
    %5166 = vmatpush1.msra.mxu0 0.0
    %5167 = vmatprep.subr.mxu0 0.0
    %5168 = vmatpush1.msra.mxu0 0.0
    %5169 = vmatprep.subr.mxu0 0.0
    %5170 = vmatpush1.msra.mxu0 0.0
    %5171 = vmatprep.subr.mxu0 0.0
    %5172 = vmatpush1.msra.mxu0 0.0
    %5173 = vmatprep.subr.mxu0 0.0
    %5174 = vmatpush1.msra.mxu0 0.0
    %5175 = vmatprep.subr.mxu0 0.0
    %5176 = vmatpush1.msra.mxu0 0.0
    %5177 = vmatprep.subr.mxu0 0.0
    %5178 = vmatpush1.msra.mxu0 0.0
    %5179 = vmatprep.subr.mxu0 0.0
    %5180 = vmatpush1.msra.mxu0 0.0
    %5181 = vmatprep.subr.mxu0 0.0
    %5182 = vmatpush1.msra.mxu0 0.0
    %5183 = vmatprep.subr.mxu0 0.0
    %5184 = vmatpush1.msra.mxu0 0.0
    %5185 = vmatprep.subr.mxu0 0.0
    %5186 = vmatpush1.msra.mxu0 0.0
    %5187 = vmatprep.subr.mxu0 0.0
    %5188 = vmatpush1.msra.mxu0 0.0
    %5189 = vmatprep.subr.mxu0 0.0
    %5190 = vmatpush1.msra.mxu0 0.0
    %5191 = vmatprep.subr.mxu0 0.0
    %5192 = vmatpush1.msra.mxu0 0.0
    %5193 = vmatprep.subr.mxu0 0.0
    %5194 = vmatpush1.msra.mxu0 0.0
    %5195 = vmatprep.subr.mxu0 0.0
    %5196 = vmatpush1.msra.mxu0 0.0
    %5197 = vmatprep.subr.mxu0 0.0
    %5198 = vmatpush1.msra.mxu0 0.0
    %5199 = vmatprep.subr.mxu0 0.0
    %5200 = vmatpush1.msra.mxu0 0.0
    %5201 = vmatprep.subr.mxu0 0.0
    %5202 = vmatpush1.msra.mxu0 0.0
    %5203 = vmatprep.subr.mxu0 0.0
    %5204 = vmatpush1.msra.mxu0 0.0
    %5205 = vmatprep.subr.mxu0 0.0
    %5206 = vmatpush1.msra.mxu0 0.0
    %5207 = vmatprep.subr.mxu0 0.0
    %5208 = vmatpush1.msra.mxu0 0.0
    %5209 = vmatprep.mubr.f32.mxu0 0.0
    %5210 = vmatmul.mubr.f32.gmra.mrb[0].mxu0 %v5143
    %v5211 = vpop.f32.mrb[0].mxu0
    %v5212 = vadd.f32 %v4945, %v5211
    %v5213 = vpop.f32.mrb[0].mxu0
    %5214 = vdwg.mxu0
    %v5215 = vmax.f32 %v5212, 0.0
    %v5216 = vand.u32 2147483647, %v5212
    %v5217 = vsub.f32 0.0, %v5216
    %v5218 = vmul.f32 %v5217, 1.442695
    %v5219 = vpow.pop %v5218
    %v5220 = vadd.f32 %v5219, 1.0
    %v5221 = vlog2.pop %v5220
    %v5222 = vmul.f32 %v5221, 0.6931472
    %v5223 = vmul.f32 -0.5, %v5219
    %v5224 = vadd.f32 %v5223, 1.0
    %v5225 = vmul.f32 %v5224, %v5219
    %v5226 = vand.u32 2147483647, %v5219
    %vm5227 = vcmp.lt.f32.partialorder %v5226, 0.0004427343
    %v5228 = vsel %vm5227, %v5225, %v5222
    %v5229 = vadd.f32 %v5215, %v5228
    %v5230 = vadd.f32 %v5229, 0.1
    %v5231 = vmul.f32 %v5230, %v5067
    %5233 = vrot.lane.b32.xlu0 %v5231, 112
    %v5234 = vpop.permute.xlu0 %5233
    %v5236 = vadd.f32 %v5212, %v5234
    %v5237 = vld [vmem:[%s2210] sm:$0x3]
    %5239 = vrot.lane.b32.xlu0 %v5236, 32
    %v5240 = vpop.permute.xlu0 %5239
    %5243 = vrot.lane.b32.xlu0 %v5212, 48
    %v5244 = vpop.permute.xlu0 %5243
    %5247 = vrot.lane.b32.xlu0 %v5230, 48
    %v5248 = vpop.permute.xlu0 %5247
    %5251 = vrot.lane.b32.xlu0 %v5237, 80
    %v5252 = vpop.permute.xlu0 %5251
    %v5254 = vsel %vm1396, %v5066, %v5240
    %v5255 = vsel %vm5059, %v5254, %v5244
    %v5256 = vsel %vm5061, %v5255, %v5248
    %v5257 = vsel %vm5063, %v5256, %v5252
    %s5258 = scalar_lea.vmem [#allocation11], 2
    %5259 = vst [vmem:[%s5258] sm:$0x3] %v5257
    %v5260 = vld [vmem:[%s2638] sm:$0x3]
    %v5261 = vld [vmem:[%s390] sm:$0x3]
    %v5263 = vsel %vm1396, %v5260, 0
    %5265 = vmatprep.subr.mxu0 0.0
    %5266 = vmatpush1.msra.mxu0 %v4852
    %5267 = vmatprep.subr.mxu0 0.0
    %5268 = vmatpush1.msra.mxu0 %v4853
    %5269 = vmatprep.subr.mxu0 0.0
    %5270 = vmatpush1.msra.mxu0 %v4854
    %5271 = vmatprep.subr.mxu0 0.0
    %5272 = vmatpush1.msra.mxu0 %v4855
    %5273 = vmatprep.subr.mxu0 0.0
    %5274 = vmatpush1.msra.mxu0 0.0
    %5275 = vmatprep.subr.mxu0 0.0
    %5276 = vmatpush1.msra.mxu0 0.0
    %5277 = vmatprep.subr.mxu0 0.0
    %5278 = vmatpush1.msra.mxu0 0.0
    %5279 = vmatprep.subr.mxu0 0.0
    %5280 = vmatpush1.msra.mxu0 0.0
    %5281 = vmatprep.subr.mxu0 0.0
    %5282 = vmatpush1.msra.mxu0 0.0
    %5283 = vmatprep.subr.mxu0 0.0
    %5284 = vmatpush1.msra.mxu0 0.0
    %5285 = vmatprep.subr.mxu0 0.0
    %5286 = vmatpush1.msra.mxu0 0.0
    %5287 = vmatprep.subr.mxu0 0.0
    %5288 = vmatpush1.msra.mxu0 0.0
    %5289 = vmatprep.subr.mxu0 0.0
    %5290 = vmatpush1.msra.mxu0 0.0
    %5291 = vmatprep.subr.mxu0 0.0
    %5292 = vmatpush1.msra.mxu0 0.0
    %5293 = vmatprep.subr.mxu0 0.0
    %5294 = vmatpush1.msra.mxu0 0.0
    %5295 = vmatprep.subr.mxu0 0.0
    %5296 = vmatpush1.msra.mxu0 0.0
    %5297 = vmatprep.subr.mxu0 0.0
    %5298 = vmatpush1.msra.mxu0 0.0
    %5299 = vmatprep.subr.mxu0 0.0
    %5300 = vmatpush1.msra.mxu0 0.0
    %5301 = vmatprep.subr.mxu0 0.0
    %5302 = vmatpush1.msra.mxu0 0.0
    %5303 = vmatprep.subr.mxu0 0.0
    %5304 = vmatpush1.msra.mxu0 0.0
    %5305 = vmatprep.subr.mxu0 0.0
    %5306 = vmatpush1.msra.mxu0 0.0
    %5307 = vmatprep.subr.mxu0 0.0
    %5308 = vmatpush1.msra.mxu0 0.0
    %5309 = vmatprep.subr.mxu0 0.0
    %5310 = vmatpush1.msra.mxu0 0.0
    %5311 = vmatprep.subr.mxu0 0.0
    %5312 = vmatpush1.msra.mxu0 0.0
    %5313 = vmatprep.subr.mxu0 0.0
    %5314 = vmatpush1.msra.mxu0 0.0
    %5315 = vmatprep.subr.mxu0 0.0
    %5316 = vmatpush1.msra.mxu0 0.0
    %5317 = vmatprep.subr.mxu0 0.0
    %5318 = vmatpush1.msra.mxu0 0.0
    %5319 = vmatprep.subr.mxu0 0.0
    %5320 = vmatpush1.msra.mxu0 0.0
    %5321 = vmatprep.subr.mxu0 0.0
    %5322 = vmatpush1.msra.mxu0 0.0
    %5323 = vmatprep.subr.mxu0 0.0
    %5324 = vmatpush1.msra.mxu0 0.0
    %5325 = vmatprep.subr.mxu0 0.0
    %5326 = vmatpush1.msra.mxu0 0.0
    %5327 = vmatprep.subr.mxu0 0.0
    %5328 = vmatpush1.msra.mxu0 0.0
    %5329 = vmatprep.mubr.f32.mxu0 0.0
    %5330 = vmatmul.mubr.f32.gmra.mrb[0].mxu0 %v5263
    %v5331 = vpop.f32.mrb[0].mxu0
    %v5332 = vadd.f32 %v4867, %v5331
    %v5333 = vpop.f32.mrb[0].mxu0
    %5334 = vdwg.mxu0
    %v5335 = vmax.f32 %v5332, 0.0
    %v5337 = vsel %vm1396, %v5335, 0
    %5339 = vmatprep.subr.mxu0 0.0
    %5340 = vmatpush1.msra.mxu0 %v4857
    %5341 = vmatprep.subr.mxu0 0.0
    %5342 = vmatpush1.msra.mxu0 %v4858
    %5343 = vmatprep.subr.mxu0 0.0
    %5344 = vmatpush1.msra.mxu0 %v4859
    %5345 = vmatprep.subr.mxu0 0.0
    %5346 = vmatpush1.msra.mxu0 %v4860
    %5347 = vmatprep.subr.mxu0 0.0
    %5348 = vmatpush1.msra.mxu0 0.0
    %5349 = vmatprep.subr.mxu0 0.0
    %5350 = vmatpush1.msra.mxu0 0.0
    %5351 = vmatprep.subr.mxu0 0.0
    %5352 = vmatpush1.msra.mxu0 0.0
    %5353 = vmatprep.subr.mxu0 0.0
    %5354 = vmatpush1.msra.mxu0 0.0
    %5355 = vmatprep.subr.mxu0 0.0
    %5356 = vmatpush1.msra.mxu0 0.0
    %5357 = vmatprep.subr.mxu0 0.0
    %5358 = vmatpush1.msra.mxu0 0.0
    %5359 = vmatprep.subr.mxu0 0.0
    %5360 = vmatpush1.msra.mxu0 0.0
    %5361 = vmatprep.subr.mxu0 0.0
    %5362 = vmatpush1.msra.mxu0 0.0
    %5363 = vmatprep.subr.mxu0 0.0
    %5364 = vmatpush1.msra.mxu0 0.0
    %5365 = vmatprep.subr.mxu0 0.0
    %5366 = vmatpush1.msra.mxu0 0.0
    %5367 = vmatprep.subr.mxu0 0.0
    %5368 = vmatpush1.msra.mxu0 0.0
    %5369 = vmatprep.subr.mxu0 0.0
    %5370 = vmatpush1.msra.mxu0 0.0
    %5371 = vmatprep.subr.mxu0 0.0
    %5372 = vmatpush1.msra.mxu0 0.0
    %5373 = vmatprep.subr.mxu0 0.0
    %5374 = vmatpush1.msra.mxu0 0.0
    %5375 = vmatprep.subr.mxu0 0.0
    %5376 = vmatpush1.msra.mxu0 0.0
    %5377 = vmatprep.subr.mxu0 0.0
    %5378 = vmatpush1.msra.mxu0 0.0
    %5379 = vmatprep.subr.mxu0 0.0
    %5380 = vmatpush1.msra.mxu0 0.0
    %5381 = vmatprep.subr.mxu0 0.0
    %5382 = vmatpush1.msra.mxu0 0.0
    %5383 = vmatprep.subr.mxu0 0.0
    %5384 = vmatpush1.msra.mxu0 0.0
    %5385 = vmatprep.subr.mxu0 0.0
    %5386 = vmatpush1.msra.mxu0 0.0
    %5387 = vmatprep.subr.mxu0 0.0
    %5388 = vmatpush1.msra.mxu0 0.0
    %5389 = vmatprep.subr.mxu0 0.0
    %5390 = vmatpush1.msra.mxu0 0.0
    %5391 = vmatprep.subr.mxu0 0.0
    %5392 = vmatpush1.msra.mxu0 0.0
    %5393 = vmatprep.subr.mxu0 0.0
    %5394 = vmatpush1.msra.mxu0 0.0
    %5395 = vmatprep.subr.mxu0 0.0
    %5396 = vmatpush1.msra.mxu0 0.0
    %5397 = vmatprep.subr.mxu0 0.0
    %5398 = vmatpush1.msra.mxu0 0.0
    %5399 = vmatprep.subr.mxu0 0.0
    %5400 = vmatpush1.msra.mxu0 0.0
    %5401 = vmatprep.subr.mxu0 0.0
    %5402 = vmatpush1.msra.mxu0 0.0
    %5403 = vmatprep.mubr.f32.mxu0 0.0
    %5404 = vmatmul.mubr.f32.gmra.mrb[0].mxu0 %v5337
    %v5405 = vpop.f32.mrb[0].mxu0
    %v5406 = vadd.f32 %v4945, %v5405
    %v5407 = vpop.f32.mrb[0].mxu0
    %5408 = vdwg.mxu0
    %v5409 = vmax.f32 %v5406, 0.0
    %v5410 = vand.u32 2147483647, %v5406
    %v5411 = vsub.f32 0.0, %v5410
    %v5412 = vmul.f32 %v5411, 1.442695
    %v5413 = vpow.pop %v5412
    %v5414 = vadd.f32 %v5413, 1.0
    %v5415 = vlog2.pop %v5414
    %v5416 = vmul.f32 %v5415, 0.6931472
    %v5417 = vmul.f32 -0.5, %v5413
    %v5418 = vadd.f32 %v5417, 1.0
    %v5419 = vmul.f32 %v5418, %v5413
    %v5420 = vand.u32 2147483647, %v5413
    %vm5421 = vcmp.lt.f32.partialorder %v5420, 0.0004427343
    %v5422 = vsel %vm5421, %v5419, %v5416
    %v5423 = vadd.f32 %v5409, %v5422
    %v5424 = vadd.f32 %v5423, 0.1
    %v5425 = vmul.f32 %v5424, %v5261
    %5427 = vrot.lane.b32.xlu0 %v5425, 112
    %v5428 = vpop.permute.xlu0 %5427
    %v5430 = vadd.f32 %v5406, %v5428
    %v5431 = vld [vmem:[%s2650] sm:$0x3]
    %5433 = vrot.lane.b32.xlu0 %v5430, 32
    %v5434 = vpop.permute.xlu0 %5433
    %5437 = vrot.lane.b32.xlu0 %v5406, 48
    %v5438 = vpop.permute.xlu0 %5437
    %5441 = vrot.lane.b32.xlu0 %v5424, 48
    %v5442 = vpop.permute.xlu0 %5441
    %5445 = vrot.lane.b32.xlu0 %v5431, 80
    %v5446 = vpop.permute.xlu0 %5445
    %v5448 = vsel %vm1396, %v5260, %v5434
    %v5449 = vsel %vm5059, %v5448, %v5438
    %v5450 = vsel %vm5061, %v5449, %v5442
    %v5451 = vsel %vm5063, %v5450, %v5446
    %s5452 = scalar_lea.vmem [#allocation11], 4
    %5453 = vst [vmem:[%s5452] sm:$0x3] %v5451
    %v5454 = vld [vmem:[%s3078] sm:$0x3]
    %v5455 = vld [vmem:[%s543] sm:$0x3]
    %v5457 = vsel %vm1396, %v5454, 0
    %5459 = vmatprep.subr.mxu0 0.0
    %5460 = vmatpush1.msra.mxu0 %v4852
    %5461 = vmatprep.subr.mxu0 0.0
    %5462 = vmatpush1.msra.mxu0 %v4853
    %5463 = vmatprep.subr.mxu0 0.0
    %5464 = vmatpush1.msra.mxu0 %v4854
    %5465 = vmatprep.subr.mxu0 0.0
    %5466 = vmatpush1.msra.mxu0 %v4855
    %5467 = vmatprep.subr.mxu0 0.0
    %5468 = vmatpush1.msra.mxu0 0.0
    %5469 = vmatprep.subr.mxu0 0.0
    %5470 = vmatpush1.msra.mxu0 0.0
    %5471 = vmatprep.subr.mxu0 0.0
    %5472 = vmatpush1.msra.mxu0 0.0
    %5473 = vmatprep.subr.mxu0 0.0
    %5474 = vmatpush1.msra.mxu0 0.0
    %5475 = vmatprep.subr.mxu0 0.0
    %5476 = vmatpush1.msra.mxu0 0.0
    %5477 = vmatprep.subr.mxu0 0.0
    %5478 = vmatpush1.msra.mxu0 0.0
    %5479 = vmatprep.subr.mxu0 0.0
    %5480 = vmatpush1.msra.mxu0 0.0
    %5481 = vmatprep.subr.mxu0 0.0
    %5482 = vmatpush1.msra.mxu0 0.0
    %5483 = vmatprep.subr.mxu0 0.0
    %5484 = vmatpush1.msra.mxu0 0.0
    %5485 = vmatprep.subr.mxu0 0.0
    %5486 = vmatpush1.msra.mxu0 0.0
    %5487 = vmatprep.subr.mxu0 0.0
    %5488 = vmatpush1.msra.mxu0 0.0
    %5489 = vmatprep.subr.mxu0 0.0
    %5490 = vmatpush1.msra.mxu0 0.0
    %5491 = vmatprep.subr.mxu0 0.0
    %5492 = vmatpush1.msra.mxu0 0.0
    %5493 = vmatprep.subr.mxu0 0.0
    %5494 = vmatpush1.msra.mxu0 0.0
    %5495 = vmatprep.subr.mxu0 0.0
    %5496 = vmatpush1.msra.mxu0 0.0
    %5497 = vmatprep.subr.mxu0 0.0
    %5498 = vmatpush1.msra.mxu0 0.0
    %5499 = vmatprep.subr.mxu0 0.0
    %5500 = vmatpush1.msra.mxu0 0.0
    %5501 = vmatprep.subr.mxu0 0.0
    %5502 = vmatpush1.msra.mxu0 0.0
    %5503 = vmatprep.subr.mxu0 0.0
    %5504 = vmatpush1.msra.mxu0 0.0
    %5505 = vmatprep.subr.mxu0 0.0
    %5506 = vmatpush1.msra.mxu0 0.0
    %5507 = vmatprep.subr.mxu0 0.0
    %5508 = vmatpush1.msra.mxu0 0.0
    %5509 = vmatprep.subr.mxu0 0.0
    %5510 = vmatpush1.msra.mxu0 0.0
    %5511 = vmatprep.subr.mxu0 0.0
    %5512 = vmatpush1.msra.mxu0 0.0
    %5513 = vmatprep.subr.mxu0 0.0
    %5514 = vmatpush1.msra.mxu0 0.0
    %5515 = vmatprep.subr.mxu0 0.0
    %5516 = vmatpush1.msra.mxu0 0.0
    %5517 = vmatprep.subr.mxu0 0.0
    %5518 = vmatpush1.msra.mxu0 0.0
    %5519 = vmatprep.subr.mxu0 0.0
    %5520 = vmatpush1.msra.mxu0 0.0
    %5521 = vmatprep.subr.mxu0 0.0
    %5522 = vmatpush1.msra.mxu0 0.0
    %5523 = vmatprep.mubr.f32.mxu0 0.0
    %5524 = vmatmul.mubr.f32.gmra.mrb[0].mxu0 %v5457
    %v5525 = vpop.f32.mrb[0].mxu0
    %v5526 = vadd.f32 %v4867, %v5525
    %v5527 = vpop.f32.mrb[0].mxu0
    %5528 = vdwg.mxu0
    %v5529 = vmax.f32 %v5526, 0.0
    %v5531 = vsel %vm1396, %v5529, 0
    %5533 = vmatprep.subr.mxu0 0.0
    %5534 = vmatpush1.msra.mxu0 %v4857
    %5535 = vmatprep.subr.mxu0 0.0
    %5536 = vmatpush1.msra.mxu0 %v4858
    %5537 = vmatprep.subr.mxu0 0.0
    %5538 = vmatpush1.msra.mxu0 %v4859
    %5539 = vmatprep.subr.mxu0 0.0
    %5540 = vmatpush1.msra.mxu0 %v4860
    %5541 = vmatprep.subr.mxu0 0.0
    %5542 = vmatpush1.msra.mxu0 0.0
    %5543 = vmatprep.subr.mxu0 0.0
    %5544 = vmatpush1.msra.mxu0 0.0
    %5545 = vmatprep.subr.mxu0 0.0
    %5546 = vmatpush1.msra.mxu0 0.0
    %5547 = vmatprep.subr.mxu0 0.0
    %5548 = vmatpush1.msra.mxu0 0.0
    %5549 = vmatprep.subr.mxu0 0.0
    %5550 = vmatpush1.msra.mxu0 0.0
    %5551 = vmatprep.subr.mxu0 0.0
    %5552 = vmatpush1.msra.mxu0 0.0
    %5553 = vmatprep.subr.mxu0 0.0
    %5554 = vmatpush1.msra.mxu0 0.0
    %5555 = vmatprep.subr.mxu0 0.0
    %5556 = vmatpush1.msra.mxu0 0.0
    %5557 = vmatprep.subr.mxu0 0.0
    %5558 = vmatpush1.msra.mxu0 0.0
    %5559 = vmatprep.subr.mxu0 0.0
    %5560 = vmatpush1.msra.mxu0 0.0
    %5561 = vmatprep.subr.mxu0 0.0
    %5562 = vmatpush1.msra.mxu0 0.0
    %5563 = vmatprep.subr.mxu0 0.0
    %5564 = vmatpush1.msra.mxu0 0.0
    %5565 = vmatprep.subr.mxu0 0.0
    %5566 = vmatpush1.msra.mxu0 0.0
    %5567 = vmatprep.subr.mxu0 0.0
    %5568 = vmatpush1.msra.mxu0 0.0
    %5569 = vmatprep.subr.mxu0 0.0
    %5570 = vmatpush1.msra.mxu0 0.0
    %5571 = vmatprep.subr.mxu0 0.0
    %5572 = vmatpush1.msra.mxu0 0.0
    %5573 = vmatprep.subr.mxu0 0.0
    %5574 = vmatpush1.msra.mxu0 0.0
    %5575 = vmatprep.subr.mxu0 0.0
    %5576 = vmatpush1.msra.mxu0 0.0
    %5577 = vmatprep.subr.mxu0 0.0
    %5578 = vmatpush1.msra.mxu0 0.0
    %5579 = vmatprep.subr.mxu0 0.0
    %5580 = vmatpush1.msra.mxu0 0.0
    %5581 = vmatprep.subr.mxu0 0.0
    %5582 = vmatpush1.msra.mxu0 0.0
    %5583 = vmatprep.subr.mxu0 0.0
    %5584 = vmatpush1.msra.mxu0 0.0
    %5585 = vmatprep.subr.mxu0 0.0
    %5586 = vmatpush1.msra.mxu0 0.0
    %5587 = vmatprep.subr.mxu0 0.0
    %5588 = vmatpush1.msra.mxu0 0.0
    %5589 = vmatprep.subr.mxu0 0.0
    %5590 = vmatpush1.msra.mxu0 0.0
    %5591 = vmatprep.subr.mxu0 0.0
    %5592 = vmatpush1.msra.mxu0 0.0
    %5593 = vmatprep.subr.mxu0 0.0
    %5594 = vmatpush1.msra.mxu0 0.0
    %5595 = vmatprep.subr.mxu0 0.0
    %5596 = vmatpush1.msra.mxu0 0.0
    %5597 = vmatprep.mubr.f32.mxu0 0.0
    %5598 = vmatmul.mubr.f32.gmra.mrb[0].mxu0 %v5531
    %v5599 = vpop.f32.mrb[0].mxu0
    %v5600 = vadd.f32 %v4945, %v5599
    %v5601 = vpop.f32.mrb[0].mxu0
    %5602 = vdwg.mxu0
    %v5603 = vmax.f32 %v5600, 0.0
    %v5604 = vand.u32 2147483647, %v5600
    %v5605 = vsub.f32 0.0, %v5604
    %v5606 = vmul.f32 %v5605, 1.442695
    %v5607 = vpow.pop %v5606
    %v5608 = vadd.f32 %v5607, 1.0
    %v5609 = vlog2.pop %v5608
    %v5610 = vmul.f32 %v5609, 0.6931472
    %v5611 = vmul.f32 -0.5, %v5607
    %v5612 = vadd.f32 %v5611, 1.0
    %v5613 = vmul.f32 %v5612, %v5607
    %v5614 = vand.u32 2147483647, %v5607
    %vm5615 = vcmp.lt.f32.partialorder %v5614, 0.0004427343
    %v5616 = vsel %vm5615, %v5613, %v5610
    %v5617 = vadd.f32 %v5603, %v5616
    %v5618 = vadd.f32 %v5617, 0.1
    %v5619 = vmul.f32 %v5618, %v5455
    %5621 = vrot.lane.b32.xlu0 %v5619, 112
    %v5622 = vpop.permute.xlu0 %5621
    %v5624 = vadd.f32 %v5600, %v5622
    %v5625 = vld [vmem:[%s3090] sm:$0x3]
    %5627 = vrot.lane.b32.xlu0 %v5624, 32
    %v5628 = vpop.permute.xlu0 %5627
    %5631 = vrot.lane.b32.xlu0 %v5600, 48
    %v5632 = vpop.permute.xlu0 %5631
    %5635 = vrot.lane.b32.xlu0 %v5618, 48
    %v5636 = vpop.permute.xlu0 %5635
    %5639 = vrot.lane.b32.xlu0 %v5625, 80
    %v5640 = vpop.permute.xlu0 %5639
    %v5642 = vsel %vm1396, %v5454, %v5628
    %v5643 = vsel %vm5059, %v5642, %v5632
    %v5644 = vsel %vm5061, %v5643, %v5636
    %v5645 = vsel %vm5063, %v5644, %v5640
    %s5646 = scalar_lea.vmem [#allocation11], 6
    %5647 = vst [vmem:[%s5646] sm:$0x3] %v5645
    %v5648 = vld [vmem:[%s3518] sm:$0x3]
    %v5649 = vld [vmem:[%s696] sm:$0x3]
    %v5651 = vsel %vm1396, %v5648, 0
    %5653 = vmatprep.subr.mxu0 0.0
    %5654 = vmatpush1.msra.mxu0 %v4852
    %5655 = vmatprep.subr.mxu0 0.0
    %5656 = vmatpush1.msra.mxu0 %v4853
    %5657 = vmatprep.subr.mxu0 0.0
    %5658 = vmatpush1.msra.mxu0 %v4854
    %5659 = vmatprep.subr.mxu0 0.0
    %5660 = vmatpush1.msra.mxu0 %v4855
    %5661 = vmatprep.subr.mxu0 0.0
    %5662 = vmatpush1.msra.mxu0 0.0
    %5663 = vmatprep.subr.mxu0 0.0
    %5664 = vmatpush1.msra.mxu0 0.0
    %5665 = vmatprep.subr.mxu0 0.0
    %5666 = vmatpush1.msra.mxu0 0.0
    %5667 = vmatprep.subr.mxu0 0.0
    %5668 = vmatpush1.msra.mxu0 0.0
    %5669 = vmatprep.subr.mxu0 0.0
    %5670 = vmatpush1.msra.mxu0 0.0
    %5671 = vmatprep.subr.mxu0 0.0
    %5672 = vmatpush1.msra.mxu0 0.0
    %5673 = vmatprep.subr.mxu0 0.0
    %5674 = vmatpush1.msra.mxu0 0.0
    %5675 = vmatprep.subr.mxu0 0.0
    %5676 = vmatpush1.msra.mxu0 0.0
    %5677 = vmatprep.subr.mxu0 0.0
    %5678 = vmatpush1.msra.mxu0 0.0
    %5679 = vmatprep.subr.mxu0 0.0
    %5680 = vmatpush1.msra.mxu0 0.0
    %5681 = vmatprep.subr.mxu0 0.0
    %5682 = vmatpush1.msra.mxu0 0.0
    %5683 = vmatprep.subr.mxu0 0.0
    %5684 = vmatpush1.msra.mxu0 0.0
    %5685 = vmatprep.subr.mxu0 0.0
    %5686 = vmatpush1.msra.mxu0 0.0
    %5687 = vmatprep.subr.mxu0 0.0
    %5688 = vmatpush1.msra.mxu0 0.0
    %5689 = vmatprep.subr.mxu0 0.0
    %5690 = vmatpush1.msra.mxu0 0.0
    %5691 = vmatprep.subr.mxu0 0.0
    %5692 = vmatpush1.msra.mxu0 0.0
    %5693 = vmatprep.subr.mxu0 0.0
    %5694 = vmatpush1.msra.mxu0 0.0
    %5695 = vmatprep.subr.mxu0 0.0
    %5696 = vmatpush1.msra.mxu0 0.0
    %5697 = vmatprep.subr.mxu0 0.0
    %5698 = vmatpush1.msra.mxu0 0.0
    %5699 = vmatprep.subr.mxu0 0.0
    %5700 = vmatpush1.msra.mxu0 0.0
    %5701 = vmatprep.subr.mxu0 0.0
    %5702 = vmatpush1.msra.mxu0 0.0
    %5703 = vmatprep.subr.mxu0 0.0
    %5704 = vmatpush1.msra.mxu0 0.0
    %5705 = vmatprep.subr.mxu0 0.0
    %5706 = vmatpush1.msra.mxu0 0.0
    %5707 = vmatprep.subr.mxu0 0.0
    %5708 = vmatpush1.msra.mxu0 0.0
    %5709 = vmatprep.subr.mxu0 0.0
    %5710 = vmatpush1.msra.mxu0 0.0
    %5711 = vmatprep.subr.mxu0 0.0
    %5712 = vmatpush1.msra.mxu0 0.0
    %5713 = vmatprep.subr.mxu0 0.0
    %5714 = vmatpush1.msra.mxu0 0.0
    %5715 = vmatprep.subr.mxu0 0.0
    %5716 = vmatpush1.msra.mxu0 0.0
    %5717 = vmatprep.mubr.f32.mxu0 0.0
    %5718 = vmatmul.mubr.f32.gmra.mrb[0].mxu0 %v5651
    %v5719 = vpop.f32.mrb[0].mxu0
    %v5720 = vadd.f32 %v4867, %v5719
    %v5721 = vpop.f32.mrb[0].mxu0
    %5722 = vdwg.mxu0
    %v5723 = vmax.f32 %v5720, 0.0
    %v5725 = vsel %vm1396, %v5723, 0
    %5727 = vmatprep.subr.mxu0 0.0
    %5728 = vmatpush1.msra.mxu0 %v4857
    %5729 = vmatprep.subr.mxu0 0.0
    %5730 = vmatpush1.msra.mxu0 %v4858
    %5731 = vmatprep.subr.mxu0 0.0
    %5732 = vmatpush1.msra.mxu0 %v4859
    %5733 = vmatprep.subr.mxu0 0.0
    %5734 = vmatpush1.msra.mxu0 %v4860
    %5735 = vmatprep.subr.mxu0 0.0
    %5736 = vmatpush1.msra.mxu0 0.0
    %5737 = vmatprep.subr.mxu0 0.0
    %5738 = vmatpush1.msra.mxu0 0.0
    %5739 = vmatprep.subr.mxu0 0.0
    %5740 = vmatpush1.msra.mxu0 0.0
    %5741 = vmatprep.subr.mxu0 0.0
    %5742 = vmatpush1.msra.mxu0 0.0
    %5743 = vmatprep.subr.mxu0 0.0
    %5744 = vmatpush1.msra.mxu0 0.0
    %5745 = vmatprep.subr.mxu0 0.0
    %5746 = vmatpush1.msra.mxu0 0.0
    %5747 = vmatprep.subr.mxu0 0.0
    %5748 = vmatpush1.msra.mxu0 0.0
    %5749 = vmatprep.subr.mxu0 0.0
    %5750 = vmatpush1.msra.mxu0 0.0
    %5751 = vmatprep.subr.mxu0 0.0
    %5752 = vmatpush1.msra.mxu0 0.0
    %5753 = vmatprep.subr.mxu0 0.0
    %5754 = vmatpush1.msra.mxu0 0.0
    %5755 = vmatprep.subr.mxu0 0.0
    %5756 = vmatpush1.msra.mxu0 0.0
    %5757 = vmatprep.subr.mxu0 0.0
    %5758 = vmatpush1.msra.mxu0 0.0
    %5759 = vmatprep.subr.mxu0 0.0
    %5760 = vmatpush1.msra.mxu0 0.0
    %5761 = vmatprep.subr.mxu0 0.0
    %5762 = vmatpush1.msra.mxu0 0.0
    %5763 = vmatprep.subr.mxu0 0.0
    %5764 = vmatpush1.msra.mxu0 0.0
    %5765 = vmatprep.subr.mxu0 0.0
    %5766 = vmatpush1.msra.mxu0 0.0
    %5767 = vmatprep.subr.mxu0 0.0
    %5768 = vmatpush1.msra.mxu0 0.0
    %5769 = vmatprep.subr.mxu0 0.0
    %5770 = vmatpush1.msra.mxu0 0.0
    %5771 = vmatprep.subr.mxu0 0.0
    %5772 = vmatpush1.msra.mxu0 0.0
    %5773 = vmatprep.subr.mxu0 0.0
    %5774 = vmatpush1.msra.mxu0 0.0
    %5775 = vmatprep.subr.mxu0 0.0
    %5776 = vmatpush1.msra.mxu0 0.0
    %5777 = vmatprep.subr.mxu0 0.0
    %5778 = vmatpush1.msra.mxu0 0.0
    %5779 = vmatprep.subr.mxu0 0.0
    %5780 = vmatpush1.msra.mxu0 0.0
    %5781 = vmatprep.subr.mxu0 0.0
    %5782 = vmatpush1.msra.mxu0 0.0
    %5783 = vmatprep.subr.mxu0 0.0
    %5784 = vmatpush1.msra.mxu0 0.0
    %5785 = vmatprep.subr.mxu0 0.0
    %5786 = vmatpush1.msra.mxu0 0.0
    %5787 = vmatprep.subr.mxu0 0.0
    %5788 = vmatpush1.msra.mxu0 0.0
    %5789 = vmatprep.subr.mxu0 0.0
    %5790 = vmatpush1.msra.mxu0 0.0
    %5791 = vmatprep.mubr.f32.mxu0 0.0
    %5792 = vmatmul.mubr.f32.gmra.mrb[0].mxu0 %v5725
    %v5793 = vpop.f32.mrb[0].mxu0
    %v5794 = vadd.f32 %v4945, %v5793
    %v5795 = vpop.f32.mrb[0].mxu0
    %5796 = vdwg.mxu0
    %v5797 = vmax.f32 %v5794, 0.0
    %v5798 = vand.u32 2147483647, %v5794
    %v5799 = vsub.f32 0.0, %v5798
    %v5800 = vmul.f32 %v5799, 1.442695
    %v5801 = vpow.pop %v5800
    %v5802 = vadd.f32 %v5801, 1.0
    %v5803 = vlog2.pop %v5802
    %v5804 = vmul.f32 %v5803, 0.6931472
    %v5805 = vmul.f32 -0.5, %v5801
    %v5806 = vadd.f32 %v5805, 1.0
    %v5807 = vmul.f32 %v5806, %v5801
    %v5808 = vand.u32 2147483647, %v5801
    %vm5809 = vcmp.lt.f32.partialorder %v5808, 0.0004427343
    %v5810 = vsel %vm5809, %v5807, %v5804
    %v5811 = vadd.f32 %v5797, %v5810
    %v5812 = vadd.f32 %v5811, 0.1
    %v5813 = vmul.f32 %v5812, %v5649
    %5815 = vrot.lane.b32.xlu0 %v5813, 112
    %v5816 = vpop.permute.xlu0 %5815
    %v5818 = vadd.f32 %v5794, %v5816
    %v5819 = vld [vmem:[%s3530] sm:$0x3]
    %5821 = vrot.lane.b32.xlu0 %v5818, 32
    %v5822 = vpop.permute.xlu0 %5821
    %5825 = vrot.lane.b32.xlu0 %v5794, 48
    %v5826 = vpop.permute.xlu0 %5825
    %5829 = vrot.lane.b32.xlu0 %v5812, 48
    %v5830 = vpop.permute.xlu0 %5829
    %5833 = vrot.lane.b32.xlu0 %v5819, 80
    %v5834 = vpop.permute.xlu0 %5833
    %v5836 = vsel %vm1396, %v5648, %v5822
    %v5837 = vsel %vm5059, %v5836, %v5826
    %v5838 = vsel %vm5061, %v5837, %v5830
    %v5839 = vsel %vm5063, %v5838, %v5834
    %s5840 = scalar_lea.vmem [#allocation11], 8
    %5841 = vst [vmem:[%s5840] sm:$0x3] %v5839
    %v5842 = vld [vmem:[%s3958] sm:$0x3]
    %v5843 = vld [vmem:[%s849] sm:$0x3]
    %v5845 = vsel %vm1396, %v5842, 0
    %5847 = vmatprep.subr.mxu0 0.0
    %5848 = vmatpush1.msra.mxu0 %v4852
    %5849 = vmatprep.subr.mxu0 0.0
    %5850 = vmatpush1.msra.mxu0 %v4853
    %5851 = vmatprep.subr.mxu0 0.0
    %5852 = vmatpush1.msra.mxu0 %v4854
    %5853 = vmatprep.subr.mxu0 0.0
    %5854 = vmatpush1.msra.mxu0 %v4855
    %5855 = vmatprep.subr.mxu0 0.0
    %5856 = vmatpush1.msra.mxu0 0.0
    %5857 = vmatprep.subr.mxu0 0.0
    %5858 = vmatpush1.msra.mxu0 0.0
    %5859 = vmatprep.subr.mxu0 0.0
    %5860 = vmatpush1.msra.mxu0 0.0
    %5861 = vmatprep.subr.mxu0 0.0
    %5862 = vmatpush1.msra.mxu0 0.0
    %5863 = vmatprep.subr.mxu0 0.0
    %5864 = vmatpush1.msra.mxu0 0.0
    %5865 = vmatprep.subr.mxu0 0.0
    %5866 = vmatpush1.msra.mxu0 0.0
    %5867 = vmatprep.subr.mxu0 0.0
    %5868 = vmatpush1.msra.mxu0 0.0
    %5869 = vmatprep.subr.mxu0 0.0
    %5870 = vmatpush1.msra.mxu0 0.0
    %5871 = vmatprep.subr.mxu0 0.0
    %5872 = vmatpush1.msra.mxu0 0.0
    %5873 = vmatprep.subr.mxu0 0.0
    %5874 = vmatpush1.msra.mxu0 0.0
    %5875 = vmatprep.subr.mxu0 0.0
    %5876 = vmatpush1.msra.mxu0 0.0
    %5877 = vmatprep.subr.mxu0 0.0
    %5878 = vmatpush1.msra.mxu0 0.0
    %5879 = vmatprep.subr.mxu0 0.0
    %5880 = vmatpush1.msra.mxu0 0.0
    %5881 = vmatprep.subr.mxu0 0.0
    %5882 = vmatpush1.msra.mxu0 0.0
    %5883 = vmatprep.subr.mxu0 0.0
    %5884 = vmatpush1.msra.mxu0 0.0
    %5885 = vmatprep.subr.mxu0 0.0
    %5886 = vmatpush1.msra.mxu0 0.0
    %5887 = vmatprep.subr.mxu0 0.0
    %5888 = vmatpush1.msra.mxu0 0.0
    %5889 = vmatprep.subr.mxu0 0.0
    %5890 = vmatpush1.msra.mxu0 0.0
    %5891 = vmatprep.subr.mxu0 0.0
    %5892 = vmatpush1.msra.mxu0 0.0
    %5893 = vmatprep.subr.mxu0 0.0
    %5894 = vmatpush1.msra.mxu0 0.0
    %5895 = vmatprep.subr.mxu0 0.0
    %5896 = vmatpush1.msra.mxu0 0.0
    %5897 = vmatprep.subr.mxu0 0.0
    %5898 = vmatpush1.msra.mxu0 0.0
    %5899 = vmatprep.subr.mxu0 0.0
    %5900 = vmatpush1.msra.mxu0 0.0
    %5901 = vmatprep.subr.mxu0 0.0
    %5902 = vmatpush1.msra.mxu0 0.0
    %5903 = vmatprep.subr.mxu0 0.0
    %5904 = vmatpush1.msra.mxu0 0.0
    %5905 = vmatprep.subr.mxu0 0.0
    %5906 = vmatpush1.msra.mxu0 0.0
    %5907 = vmatprep.subr.mxu0 0.0
    %5908 = vmatpush1.msra.mxu0 0.0
    %5909 = vmatprep.subr.mxu0 0.0
    %5910 = vmatpush1.msra.mxu0 0.0
    %5911 = vmatprep.mubr.f32.mxu0 0.0
    %5912 = vmatmul.mubr.f32.gmra.mrb[0].mxu0 %v5845
    %v5913 = vpop.f32.mrb[0].mxu0
    %v5914 = vadd.f32 %v4867, %v5913
    %v5915 = vpop.f32.mrb[0].mxu0
    %5916 = vdwg.mxu0
    %v5917 = vmax.f32 %v5914, 0.0
    %v5919 = vsel %vm1396, %v5917, 0
    %5921 = vmatprep.subr.mxu0 0.0
    %5922 = vmatpush1.msra.mxu0 %v4857
    %5923 = vmatprep.subr.mxu0 0.0
    %5924 = vmatpush1.msra.mxu0 %v4858
    %5925 = vmatprep.subr.mxu0 0.0
    %5926 = vmatpush1.msra.mxu0 %v4859
    %5927 = vmatprep.subr.mxu0 0.0
    %5928 = vmatpush1.msra.mxu0 %v4860
    %5929 = vmatprep.subr.mxu0 0.0
    %5930 = vmatpush1.msra.mxu0 0.0
    %5931 = vmatprep.subr.mxu0 0.0
    %5932 = vmatpush1.msra.mxu0 0.0
    %5933 = vmatprep.subr.mxu0 0.0
    %5934 = vmatpush1.msra.mxu0 0.0
    %5935 = vmatprep.subr.mxu0 0.0
    %5936 = vmatpush1.msra.mxu0 0.0
    %5937 = vmatprep.subr.mxu0 0.0
    %5938 = vmatpush1.msra.mxu0 0.0
    %5939 = vmatprep.subr.mxu0 0.0
    %5940 = vmatpush1.msra.mxu0 0.0
    %5941 = vmatprep.subr.mxu0 0.0
    %5942 = vmatpush1.msra.mxu0 0.0
    %5943 = vmatprep.subr.mxu0 0.0
    %5944 = vmatpush1.msra.mxu0 0.0
    %5945 = vmatprep.subr.mxu0 0.0
    %5946 = vmatpush1.msra.mxu0 0.0
    %5947 = vmatprep.subr.mxu0 0.0
    %5948 = vmatpush1.msra.mxu0 0.0
    %5949 = vmatprep.subr.mxu0 0.0
    %5950 = vmatpush1.msra.mxu0 0.0
    %5951 = vmatprep.subr.mxu0 0.0
    %5952 = vmatpush1.msra.mxu0 0.0
    %5953 = vmatprep.subr.mxu0 0.0
    %5954 = vmatpush1.msra.mxu0 0.0
    %5955 = vmatprep.subr.mxu0 0.0
    %5956 = vmatpush1.msra.mxu0 0.0
    %5957 = vmatprep.subr.mxu0 0.0
    %5958 = vmatpush1.msra.mxu0 0.0
    %5959 = vmatprep.subr.mxu0 0.0
    %5960 = vmatpush1.msra.mxu0 0.0
    %5961 = vmatprep.subr.mxu0 0.0
    %5962 = vmatpush1.msra.mxu0 0.0
    %5963 = vmatprep.subr.mxu0 0.0
    %5964 = vmatpush1.msra.mxu0 0.0
    %5965 = vmatprep.subr.mxu0 0.0
    %5966 = vmatpush1.msra.mxu0 0.0
    %5967 = vmatprep.subr.mxu0 0.0
    %5968 = vmatpush1.msra.mxu0 0.0
    %5969 = vmatprep.subr.mxu0 0.0
    %5970 = vmatpush1.msra.mxu0 0.0
    %5971 = vmatprep.subr.mxu0 0.0
    %5972 = vmatpush1.msra.mxu0 0.0
    %5973 = vmatprep.subr.mxu0 0.0
    %5974 = vmatpush1.msra.mxu0 0.0
    %5975 = vmatprep.subr.mxu0 0.0
    %5976 = vmatpush1.msra.mxu0 0.0
    %5977 = vmatprep.subr.mxu0 0.0
    %5978 = vmatpush1.msra.mxu0 0.0
    %5979 = vmatprep.subr.mxu0 0.0
    %5980 = vmatpush1.msra.mxu0 0.0
    %5981 = vmatprep.subr.mxu0 0.0
    %5982 = vmatpush1.msra.mxu0 0.0
    %5983 = vmatprep.subr.mxu0 0.0
    %5984 = vmatpush1.msra.mxu0 0.0
    %5985 = vmatprep.mubr.f32.mxu0 0.0
    %5986 = vmatmul.mubr.f32.gmra.mrb[0].mxu0 %v5919
    %v5987 = vpop.f32.mrb[0].mxu0
    %v5988 = vadd.f32 %v4945, %v5987
    %v5989 = vpop.f32.mrb[0].mxu0
    %5990 = vdwg.mxu0
    %v5991 = vmax.f32 %v5988, 0.0
    %v5992 = vand.u32 2147483647, %v5988
    %v5993 = vsub.f32 0.0, %v5992
    %v5994 = vmul.f32 %v5993, 1.442695
    %v5995 = vpow.pop %v5994
    %v5996 = vadd.f32 %v5995, 1.0
    %v5997 = vlog2.pop %v5996
    %v5998 = vmul.f32 %v5997, 0.6931472
    %v5999 = vmul.f32 -0.5, %v5995
    %v6000 = vadd.f32 %v5999, 1.0
    %v6001 = vmul.f32 %v6000, %v5995
    %v6002 = vand.u32 2147483647, %v5995
    %vm6003 = vcmp.lt.f32.partialorder %v6002, 0.0004427343
    %v6004 = vsel %vm6003, %v6001, %v5998
    %v6005 = vadd.f32 %v5991, %v6004
    %v6006 = vadd.f32 %v6005, 0.1
    %v6007 = vmul.f32 %v6006, %v5843
    %6009 = vrot.lane.b32.xlu0 %v6007, 112
    %v6010 = vpop.permute.xlu0 %6009
    %v6012 = vadd.f32 %v5988, %v6010
    %v6013 = vld [vmem:[%s3970] sm:$0x3]
    %6015 = vrot.lane.b32.xlu0 %v6012, 32
    %v6016 = vpop.permute.xlu0 %6015
    %6019 = vrot.lane.b32.xlu0 %v5988, 48
    %v6020 = vpop.permute.xlu0 %6019
    %6023 = vrot.lane.b32.xlu0 %v6006, 48
    %v6024 = vpop.permute.xlu0 %6023
    %6027 = vrot.lane.b32.xlu0 %v6013, 80
    %v6028 = vpop.permute.xlu0 %6027
    %v6030 = vsel %vm1396, %v5842, %v6016
    %v6031 = vsel %vm5059, %v6030, %v6020
    %v6032 = vsel %vm5061, %v6031, %v6024
    %v6033 = vsel %vm5063, %v6032, %v6028
    %s6034 = scalar_lea.vmem [#allocation11], 10
    %6035 = vst [vmem:[%s6034] sm:$0x3] %v6033
    %v6036 = vld [vmem:[%s4398] sm:$0x3]
    %v6037 = vld [vmem:[%s1002] sm:$0x3]
    %v6039 = vsel %vm1396, %v6036, 0
    %6041 = vmatprep.subr.mxu0 0.0
    %6042 = vmatpush1.msra.mxu0 %v4852
    %6043 = vmatprep.subr.mxu0 0.0
    %6044 = vmatpush1.msra.mxu0 %v4853
    %6045 = vmatprep.subr.mxu0 0.0
    %6046 = vmatpush1.msra.mxu0 %v4854
    %6047 = vmatprep.subr.mxu0 0.0
    %6048 = vmatpush1.msra.mxu0 %v4855
    %6049 = vmatprep.subr.mxu0 0.0
    %6050 = vmatpush1.msra.mxu0 0.0
    %6051 = vmatprep.subr.mxu0 0.0
    %6052 = vmatpush1.msra.mxu0 0.0
    %6053 = vmatprep.subr.mxu0 0.0
    %6054 = vmatpush1.msra.mxu0 0.0
    %6055 = vmatprep.subr.mxu0 0.0
    %6056 = vmatpush1.msra.mxu0 0.0
    %6057 = vmatprep.subr.mxu0 0.0
    %6058 = vmatpush1.msra.mxu0 0.0
    %6059 = vmatprep.subr.mxu0 0.0
    %6060 = vmatpush1.msra.mxu0 0.0
    %6061 = vmatprep.subr.mxu0 0.0
    %6062 = vmatpush1.msra.mxu0 0.0
    %6063 = vmatprep.subr.mxu0 0.0
    %6064 = vmatpush1.msra.mxu0 0.0
    %6065 = vmatprep.subr.mxu0 0.0
    %6066 = vmatpush1.msra.mxu0 0.0
    %6067 = vmatprep.subr.mxu0 0.0
    %6068 = vmatpush1.msra.mxu0 0.0
    %6069 = vmatprep.subr.mxu0 0.0
    %6070 = vmatpush1.msra.mxu0 0.0
    %6071 = vmatprep.subr.mxu0 0.0
    %6072 = vmatpush1.msra.mxu0 0.0
    %6073 = vmatprep.subr.mxu0 0.0
    %6074 = vmatpush1.msra.mxu0 0.0
    %6075 = vmatprep.subr.mxu0 0.0
    %6076 = vmatpush1.msra.mxu0 0.0
    %6077 = vmatprep.subr.mxu0 0.0
    %6078 = vmatpush1.msra.mxu0 0.0
    %6079 = vmatprep.subr.mxu0 0.0
    %6080 = vmatpush1.msra.mxu0 0.0
    %6081 = vmatprep.subr.mxu0 0.0
    %6082 = vmatpush1.msra.mxu0 0.0
    %6083 = vmatprep.subr.mxu0 0.0
    %6084 = vmatpush1.msra.mxu0 0.0
    %6085 = vmatprep.subr.mxu0 0.0
    %6086 = vmatpush1.msra.mxu0 0.0
    %6087 = vmatprep.subr.mxu0 0.0
    %6088 = vmatpush1.msra.mxu0 0.0
    %6089 = vmatprep.subr.mxu0 0.0
    %6090 = vmatpush1.msra.mxu0 0.0
    %6091 = vmatprep.subr.mxu0 0.0
    %6092 = vmatpush1.msra.mxu0 0.0
    %6093 = vmatprep.subr.mxu0 0.0
    %6094 = vmatpush1.msra.mxu0 0.0
    %6095 = vmatprep.subr.mxu0 0.0
    %6096 = vmatpush1.msra.mxu0 0.0
    %6097 = vmatprep.subr.mxu0 0.0
    %6098 = vmatpush1.msra.mxu0 0.0
    %6099 = vmatprep.subr.mxu0 0.0
    %6100 = vmatpush1.msra.mxu0 0.0
    %6101 = vmatprep.subr.mxu0 0.0
    %6102 = vmatpush1.msra.mxu0 0.0
    %6103 = vmatprep.subr.mxu0 0.0
    %6104 = vmatpush1.msra.mxu0 0.0
    %6105 = vmatprep.mubr.f32.mxu0 0.0
    %6106 = vmatmul.mubr.f32.gmra.mrb[0].mxu0 %v6039
    %v6107 = vpop.f32.mrb[0].mxu0
    %v6108 = vadd.f32 %v4867, %v6107
    %v6109 = vpop.f32.mrb[0].mxu0
    %6110 = vdwg.mxu0
    %v6111 = vmax.f32 %v6108, 0.0
    %v6113 = vsel %vm1396, %v6111, 0
    %6115 = vmatprep.subr.mxu0 0.0
    %6116 = vmatpush1.msra.mxu0 %v4857
    %6117 = vmatprep.subr.mxu0 0.0
    %6118 = vmatpush1.msra.mxu0 %v4858
    %6119 = vmatprep.subr.mxu0 0.0
    %6120 = vmatpush1.msra.mxu0 %v4859
    %6121 = vmatprep.subr.mxu0 0.0
    %6122 = vmatpush1.msra.mxu0 %v4860
    %6123 = vmatprep.subr.mxu0 0.0
    %6124 = vmatpush1.msra.mxu0 0.0
    %6125 = vmatprep.subr.mxu0 0.0
    %6126 = vmatpush1.msra.mxu0 0.0
    %6127 = vmatprep.subr.mxu0 0.0
    %6128 = vmatpush1.msra.mxu0 0.0
    %6129 = vmatprep.subr.mxu0 0.0
    %6130 = vmatpush1.msra.mxu0 0.0
    %6131 = vmatprep.subr.mxu0 0.0
    %6132 = vmatpush1.msra.mxu0 0.0
    %6133 = vmatprep.subr.mxu0 0.0
    %6134 = vmatpush1.msra.mxu0 0.0
    %6135 = vmatprep.subr.mxu0 0.0
    %6136 = vmatpush1.msra.mxu0 0.0
    %6137 = vmatprep.subr.mxu0 0.0
    %6138 = vmatpush1.msra.mxu0 0.0
    %6139 = vmatprep.subr.mxu0 0.0
    %6140 = vmatpush1.msra.mxu0 0.0
    %6141 = vmatprep.subr.mxu0 0.0
    %6142 = vmatpush1.msra.mxu0 0.0
    %6143 = vmatprep.subr.mxu0 0.0
    %6144 = vmatpush1.msra.mxu0 0.0
    %6145 = vmatprep.subr.mxu0 0.0
    %6146 = vmatpush1.msra.mxu0 0.0
    %6147 = vmatprep.subr.mxu0 0.0
    %6148 = vmatpush1.msra.mxu0 0.0
    %6149 = vmatprep.subr.mxu0 0.0
    %6150 = vmatpush1.msra.mxu0 0.0
    %6151 = vmatprep.subr.mxu0 0.0
    %6152 = vmatpush1.msra.mxu0 0.0
    %6153 = vmatprep.subr.mxu0 0.0
    %6154 = vmatpush1.msra.mxu0 0.0
    %6155 = vmatprep.subr.mxu0 0.0
    %6156 = vmatpush1.msra.mxu0 0.0
    %6157 = vmatprep.subr.mxu0 0.0
    %6158 = vmatpush1.msra.mxu0 0.0
    %6159 = vmatprep.subr.mxu0 0.0
    %6160 = vmatpush1.msra.mxu0 0.0
    %6161 = vmatprep.subr.mxu0 0.0
    %6162 = vmatpush1.msra.mxu0 0.0
    %6163 = vmatprep.subr.mxu0 0.0
    %6164 = vmatpush1.msra.mxu0 0.0
    %6165 = vmatprep.subr.mxu0 0.0
    %6166 = vmatpush1.msra.mxu0 0.0
    %6167 = vmatprep.subr.mxu0 0.0
    %6168 = vmatpush1.msra.mxu0 0.0
    %6169 = vmatprep.subr.mxu0 0.0
    %6170 = vmatpush1.msra.mxu0 0.0
    %6171 = vmatprep.subr.mxu0 0.0
    %6172 = vmatpush1.msra.mxu0 0.0
    %6173 = vmatprep.subr.mxu0 0.0
    %6174 = vmatpush1.msra.mxu0 0.0
    %6175 = vmatprep.subr.mxu0 0.0
    %6176 = vmatpush1.msra.mxu0 0.0
    %6177 = vmatprep.subr.mxu0 0.0
    %6178 = vmatpush1.msra.mxu0 0.0
    %6179 = vmatprep.mubr.f32.mxu0 0.0
    %6180 = vmatmul.mubr.f32.gmra.mrb[0].mxu0 %v6113
    %v6181 = vpop.f32.mrb[0].mxu0
    %v6182 = vadd.f32 %v4945, %v6181
    %v6183 = vpop.f32.mrb[0].mxu0
    %6184 = vdwg.mxu0
    %v6185 = vmax.f32 %v6182, 0.0
    %v6186 = vand.u32 2147483647, %v6182
    %v6187 = vsub.f32 0.0, %v6186
    %v6188 = vmul.f32 %v6187, 1.442695
    %v6189 = vpow.pop %v6188
    %v6190 = vadd.f32 %v6189, 1.0
    %v6191 = vlog2.pop %v6190
    %v6192 = vmul.f32 %v6191, 0.6931472
    %v6193 = vmul.f32 -0.5, %v6189
    %v6194 = vadd.f32 %v6193, 1.0
    %v6195 = vmul.f32 %v6194, %v6189
    %v6196 = vand.u32 2147483647, %v6189
    %vm6197 = vcmp.lt.f32.partialorder %v6196, 0.0004427343
    %v6198 = vsel %vm6197, %v6195, %v6192
    %v6199 = vadd.f32 %v6185, %v6198
    %v6200 = vadd.f32 %v6199, 0.1
    %v6201 = vmul.f32 %v6200, %v6037
    %6203 = vrot.lane.b32.xlu0 %v6201, 112
    %v6204 = vpop.permute.xlu0 %6203
    %v6206 = vadd.f32 %v6182, %v6204
    %v6207 = vld [vmem:[%s4410] sm:$0x3]
    %6209 = vrot.lane.b32.xlu0 %v6206, 32
    %v6210 = vpop.permute.xlu0 %6209
    %6213 = vrot.lane.b32.xlu0 %v6182, 48
    %v6214 = vpop.permute.xlu0 %6213
    %6217 = vrot.lane.b32.xlu0 %v6200, 48
    %v6218 = vpop.permute.xlu0 %6217
    %6221 = vrot.lane.b32.xlu0 %v6207, 80
    %v6222 = vpop.permute.xlu0 %6221
    %v6224 = vsel %vm1396, %v6036, %v6210
    %v6225 = vsel %vm5059, %v6224, %v6214
    %v6226 = vsel %vm5061, %v6225, %v6218
    %v6227 = vsel %vm5063, %v6226, %v6222
    %s6228 = scalar_lea.vmem [#allocation11], 12
    %6229 = vst [vmem:[%s6228] sm:$0x3] %v6227
    %v6230 = vld [vmem:[%s4838] sm:$0x3]
    %v6231 = vld [vmem:[%s1155] sm:$0x3]
    %v6233 = vsel %vm1396, %v6230, 0
    %6235 = vmatprep.subr.mxu0 0.0
    %6236 = vmatpush1.msra.mxu0 %v4852
    %6237 = vmatprep.subr.mxu0 0.0
    %6238 = vmatpush1.msra.mxu0 %v4853
    %6239 = vmatprep.subr.mxu0 0.0
    %6240 = vmatpush1.msra.mxu0 %v4854
    %6241 = vmatprep.subr.mxu0 0.0
    %6242 = vmatpush1.msra.mxu0 %v4855
    %6243 = vmatprep.subr.mxu0 0.0
    %6244 = vmatpush1.msra.mxu0 0.0
    %6245 = vmatprep.subr.mxu0 0.0
    %6246 = vmatpush1.msra.mxu0 0.0
    %6247 = vmatprep.subr.mxu0 0.0
    %6248 = vmatpush1.msra.mxu0 0.0
    %6249 = vmatprep.subr.mxu0 0.0
    %6250 = vmatpush1.msra.mxu0 0.0
    %6251 = vmatprep.subr.mxu0 0.0
    %6252 = vmatpush1.msra.mxu0 0.0
    %6253 = vmatprep.subr.mxu0 0.0
    %6254 = vmatpush1.msra.mxu0 0.0
    %6255 = vmatprep.subr.mxu0 0.0
    %6256 = vmatpush1.msra.mxu0 0.0
    %6257 = vmatprep.subr.mxu0 0.0
    %6258 = vmatpush1.msra.mxu0 0.0
    %6259 = vmatprep.subr.mxu0 0.0
    %6260 = vmatpush1.msra.mxu0 0.0
    %6261 = vmatprep.subr.mxu0 0.0
    %6262 = vmatpush1.msra.mxu0 0.0
    %6263 = vmatprep.subr.mxu0 0.0
    %6264 = vmatpush1.msra.mxu0 0.0
    %6265 = vmatprep.subr.mxu0 0.0
    %6266 = vmatpush1.msra.mxu0 0.0
    %6267 = vmatprep.subr.mxu0 0.0
    %6268 = vmatpush1.msra.mxu0 0.0
    %6269 = vmatprep.subr.mxu0 0.0
    %6270 = vmatpush1.msra.mxu0 0.0
    %6271 = vmatprep.subr.mxu0 0.0
    %6272 = vmatpush1.msra.mxu0 0.0
    %6273 = vmatprep.subr.mxu0 0.0
    %6274 = vmatpush1.msra.mxu0 0.0
    %6275 = vmatprep.subr.mxu0 0.0
    %6276 = vmatpush1.msra.mxu0 0.0
    %6277 = vmatprep.subr.mxu0 0.0
    %6278 = vmatpush1.msra.mxu0 0.0
    %6279 = vmatprep.subr.mxu0 0.0
    %6280 = vmatpush1.msra.mxu0 0.0
    %6281 = vmatprep.subr.mxu0 0.0
    %6282 = vmatpush1.msra.mxu0 0.0
    %6283 = vmatprep.subr.mxu0 0.0
    %6284 = vmatpush1.msra.mxu0 0.0
    %6285 = vmatprep.subr.mxu0 0.0
    %6286 = vmatpush1.msra.mxu0 0.0
    %6287 = vmatprep.subr.mxu0 0.0
    %6288 = vmatpush1.msra.mxu0 0.0
    %6289 = vmatprep.subr.mxu0 0.0
    %6290 = vmatpush1.msra.mxu0 0.0
    %6291 = vmatprep.subr.mxu0 0.0
    %6292 = vmatpush1.msra.mxu0 0.0
    %6293 = vmatprep.subr.mxu0 0.0
    %6294 = vmatpush1.msra.mxu0 0.0
    %6295 = vmatprep.subr.mxu0 0.0
    %6296 = vmatpush1.msra.mxu0 0.0
    %6297 = vmatprep.subr.mxu0 0.0
    %6298 = vmatpush1.msra.mxu0 0.0
    %6299 = vmatprep.mubr.f32.mxu0 0.0
    %6300 = vmatmul.mubr.f32.gmra.mrb[0].mxu0 %v6233
    %v6301 = vpop.f32.mrb[0].mxu0
    %v6302 = vadd.f32 %v4867, %v6301
    %v6303 = vpop.f32.mrb[0].mxu0
    %6304 = vdwg.mxu0
    %v6305 = vmax.f32 %v6302, 0.0
    %v6307 = vsel %vm1396, %v6305, 0
    %6309 = vmatprep.subr.mxu0 0.0
    %6310 = vmatpush1.msra.mxu0 %v4857
    %6311 = vmatprep.subr.mxu0 0.0
    %6312 = vmatpush1.msra.mxu0 %v4858
    %6313 = vmatprep.subr.mxu0 0.0
    %6314 = vmatpush1.msra.mxu0 %v4859
    %6315 = vmatprep.subr.mxu0 0.0
    %6316 = vmatpush1.msra.mxu0 %v4860
    %6317 = vmatprep.subr.mxu0 0.0
    %6318 = vmatpush1.msra.mxu0 0.0
    %6319 = vmatprep.subr.mxu0 0.0
    %6320 = vmatpush1.msra.mxu0 0.0
    %6321 = vmatprep.subr.mxu0 0.0
    %6322 = vmatpush1.msra.mxu0 0.0
    %6323 = vmatprep.subr.mxu0 0.0
    %6324 = vmatpush1.msra.mxu0 0.0
    %6325 = vmatprep.subr.mxu0 0.0
    %6326 = vmatpush1.msra.mxu0 0.0
    %6327 = vmatprep.subr.mxu0 0.0
    %6328 = vmatpush1.msra.mxu0 0.0
    %6329 = vmatprep.subr.mxu0 0.0
    %6330 = vmatpush1.msra.mxu0 0.0
    %6331 = vmatprep.subr.mxu0 0.0
    %6332 = vmatpush1.msra.mxu0 0.0
    %6333 = vmatprep.subr.mxu0 0.0
    %6334 = vmatpush1.msra.mxu0 0.0
    %6335 = vmatprep.subr.mxu0 0.0
    %6336 = vmatpush1.msra.mxu0 0.0
    %6337 = vmatprep.subr.mxu0 0.0
    %6338 = vmatpush1.msra.mxu0 0.0
    %6339 = vmatprep.subr.mxu0 0.0
    %6340 = vmatpush1.msra.mxu0 0.0
    %6341 = vmatprep.subr.mxu0 0.0
    %6342 = vmatpush1.msra.mxu0 0.0
    %6343 = vmatprep.subr.mxu0 0.0
    %6344 = vmatpush1.msra.mxu0 0.0
    %6345 = vmatprep.subr.mxu0 0.0
    %6346 = vmatpush1.msra.mxu0 0.0
    %6347 = vmatprep.subr.mxu0 0.0
    %6348 = vmatpush1.msra.mxu0 0.0
    %6349 = vmatprep.subr.mxu0 0.0
    %6350 = vmatpush1.msra.mxu0 0.0
    %6351 = vmatprep.subr.mxu0 0.0
    %6352 = vmatpush1.msra.mxu0 0.0
    %6353 = vmatprep.subr.mxu0 0.0
    %6354 = vmatpush1.msra.mxu0 0.0
    %6355 = vmatprep.subr.mxu0 0.0
    %6356 = vmatpush1.msra.mxu0 0.0
    %6357 = vmatprep.subr.mxu0 0.0
    %6358 = vmatpush1.msra.mxu0 0.0
    %6359 = vmatprep.subr.mxu0 0.0
    %6360 = vmatpush1.msra.mxu0 0.0
    %6361 = vmatprep.subr.mxu0 0.0
    %6362 = vmatpush1.msra.mxu0 0.0
    %6363 = vmatprep.subr.mxu0 0.0
    %6364 = vmatpush1.msra.mxu0 0.0
    %6365 = vmatprep.subr.mxu0 0.0
    %6366 = vmatpush1.msra.mxu0 0.0
    %6367 = vmatprep.subr.mxu0 0.0
    %6368 = vmatpush1.msra.mxu0 0.0
    %6369 = vmatprep.subr.mxu0 0.0
    %6370 = vmatpush1.msra.mxu0 0.0
    %6371 = vmatprep.subr.mxu0 0.0
    %6372 = vmatpush1.msra.mxu0 0.0
    %6373 = vmatprep.mubr.f32.mxu0 0.0
    %6374 = vmatmul.mubr.f32.gmra.mrb[0].mxu0 %v6307
    %v6375 = vpop.f32.mrb[0].mxu0
    %v6376 = vadd.f32 %v4945, %v6375
    %v6377 = vpop.f32.mrb[0].mxu0
    %6378 = vdwg.mxu0
    %v6379 = vmax.f32 %v6376, 0.0
    %v6380 = vand.u32 2147483647, %v6376
    %v6381 = vsub.f32 0.0, %v6380
    %v6382 = vmul.f32 %v6381, 1.442695
    %v6383 = vpow.pop %v6382
    %v6384 = vadd.f32 %v6383, 1.0
    %v6385 = vlog2.pop %v6384
    %v6386 = vmul.f32 %v6385, 0.6931472
    %v6387 = vmul.f32 -0.5, %v6383
    %v6388 = vadd.f32 %v6387, 1.0
    %v6389 = vmul.f32 %v6388, %v6383
    %v6390 = vand.u32 2147483647, %v6383
    %vm6391 = vcmp.lt.f32.partialorder %v6390, 0.0004427343
    %v6392 = vsel %vm6391, %v6389, %v6386
    %v6393 = vadd.f32 %v6379, %v6392
    %v6394 = vadd.f32 %v6393, 0.1
    %v6395 = vmul.f32 %v6394, %v6231
    %6397 = vrot.lane.b32.xlu0 %v6395, 112
    %v6398 = vpop.permute.xlu0 %6397
    %v6400 = vadd.f32 %v6376, %v6398
    %v6401 = vld [vmem:[%s4850] sm:$0x3]
    %6403 = vrot.lane.b32.xlu0 %v6400, 32
    %v6404 = vpop.permute.xlu0 %6403
    %6407 = vrot.lane.b32.xlu0 %v6376, 48
    %v6408 = vpop.permute.xlu0 %6407
    %6411 = vrot.lane.b32.xlu0 %v6394, 48
    %v6412 = vpop.permute.xlu0 %6411
    %6415 = vrot.lane.b32.xlu0 %v6401, 80
    %v6416 = vpop.permute.xlu0 %6415
    %v6418 = vsel %vm1396, %v6230, %v6404
    %v6419 = vsel %vm5059, %v6418, %v6408
    %v6420 = vsel %vm5061, %v6419, %v6412
    %v6421 = vsel %vm5063, %v6420, %v6416
    %s6422 = scalar_lea.vmem [#allocation11], 14
    %6423 = vst [vmem:[%s6422] sm:$0x3] %v6421
    // Predicated region
    $region26: #{tpu_custom_call.1} parent=1 // pred_check
      _
    $region27: #{tpu_custom_call.1} parent=1 // pred_check_branch
      %6425 = sbr.rel (0) target = $region29
    $region28: #{tpu_custom_call.1} parent=1 // pred_region
      %s6427 = ssub.s32 256, 256
      %6428 = vsyncadd [#allocation8], %s6427
      %s6429 = sshll.u32 [#allocation11], 4
      %s6430 = int_to_ptr.vmem [resolvable:$true] %s6429
      %6435 = dma.vmem_to_hbm [thread:$0]  %s6430, 256, %s4, [#allocation8], 32, 32, 2
    $region29: #{tpu_custom_call.1} parent=1 // pred_fallthru
      _
    // Predicated region
    $region30: #{tpu_custom_call.1} parent=1 // pred_check
      _
    $region31: #{tpu_custom_call.1} parent=1 // pred_check_branch
      %6437 = sbr.rel (0) target = $region33
    $region32: #{tpu_custom_call.1} parent=1 // pred_region
      %6438 = dma.done [#allocation8], 256
    $region33: #{tpu_custom_call.1} parent=1 // pred_fallthru
      _
    %6439 = vsyncpa [#allocation7], 1
    %6440 = vsyncpa [#allocation10], 1
    %6441 = vsyncpa [#allocation8], 1

</llo_original>
